<compile_context>
chip_gen: v7x
topology: tpu7x:2x2x1
jax: 0.10.0
libtpu: 0.0.40
codegen_flags: <defaults>
</compile_context>

<pallas_src>
import functools

import jax
import jax.numpy as jnp
from jax.experimental import pallas as pl
from jax.experimental.pallas import tpu as pltpu

# ----------------------------- model config ---------------------------------
VOCAB_SIZE   = 50
EMBED_DIM    = 16
KERNEL_NUM   = 8
KERNEL_SIZES = (2, 3, 4)
NUM_HIDDENS  = 32
NUM_LAYERS   = 2
CLASS_NUM    = 2
BATCH        = 2
SEQ_LEN      = 16          # W (token sequence length)


# ----------------------------- fused Pallas kernel ---------------------------
def _fused_forward_kernel(*refs, n, w):
    """Whole forward pass; every intermediate stays in VMEM / vregs.

    refs layout (all VMEM):
      tok_ref   : (N*W, 1) int32
      embed_ref : (V, D)   f32
      per conv K: cw (K*D, C)  [im2col layout], cb (1, C)
      per (layer, dir): wih (I, 4H), whh (H, 4H), b (1, 4H)  gate order i,f,g,o
      dec_w (4H, CLASS_NUM), dec_b (1, CLASS_NUM)
      out_ref   : (N, CLASS_NUM)
    """
    it = iter(refs)
    tok_ref, embed_ref = next(it), next(it)
    conv_refs = [(next(it), next(it)) for _ in KERNEL_SIZES]
    lstm_refs = [[(next(it), next(it), next(it)) for _ in range(2)]
                 for _ in range(NUM_LAYERS)]
    dec_w_ref, dec_b_ref, out_ref = next(it), next(it), next(it)

    N, W = n, w
    V, D = embed_ref.shape
    NW = N * W
    H = NUM_HIDDENS
    C = KERNEL_NUM

    # ---- embedding lookup: one-hot @ table (exact; runs on the MXU) --------
    tok = tok_ref[...]                                            # (N*W, 1)
    onehot = (tok == jax.lax.broadcasted_iota(jnp.int32, (NW, V), 1)
              ).astype(jnp.float32)                               # (N*W, V)
    x = jnp.dot(onehot, embed_ref[...],
                preferred_element_type=jnp.float32)               # (N*W, D)
    x = x.reshape(N, W, D)                                        # (N, W, D)

    # ---- convs: accumulated matmul over the K row-blocks of the im2col -----
    # weight (equivalent to one im2col matmul; keeps all ops relayout-free),
    # then bias + ReLU + max-over-time.
    pooled = []
    for (cw_ref, cb_ref), K in zip(conv_refs, KERNEL_SIZES):
        cw = cw_ref[...]                                          # (K*D, C)
        T = W - K + 1
        acc = jnp.zeros((N, T, C), jnp.float32)
        for k in range(K):                                        # static unroll
            acc += jnp.einsum("ntd,dc->ntc", x[:, k:k + T, :],
                              cw[k * D:(k + 1) * D, :],
                              preferred_element_type=jnp.float32)
        acc = jnp.maximum(acc + cb_ref[...][None, :, :], 0.0)     # bias + ReLU
        pooled.append(jnp.max(acc, axis=1))                       # (N, C)

    # PyTorch's cat(dim=1) + view(N, -1, C) + permute(1, 0, 2) collapse to:
    # LSTM input at timestep t == pooled[t]. Keep each timestep as a tuple of
    # feature chunks so bi-dir outputs never need a lane concatenation.
    xs = [(p,) for p in pooled]
    T = len(xs)

    def cell(x_chunks, w_blocks, h, c, whh, b):
        g = jnp.dot(h, whh, preferred_element_type=jnp.float32) + b
        for xc, wb in zip(x_chunks, w_blocks):
            g = g + jnp.dot(xc, wb, preferred_element_type=jnp.float32)
        i = jax.nn.sigmoid(g[:, 0 * H:1 * H])
        f = jax.nn.sigmoid(g[:, 1 * H:2 * H])
        gg = jnp.tanh(g[:, 2 * H:3 * H])
        o = jax.nn.sigmoid(g[:, 3 * H:4 * H])
        c_new = f * c + i * gg
        h_new = o * jnp.tanh(c_new)
        return h_new, c_new

    # ---- 2-layer bidirectional LSTM; both directions fused per layer -------
    for layer in range(NUM_LAYERS):
        (wf_ref, uf_ref, bf_ref), (wb_ref, ub_ref, bb_ref) = lstm_refs[layer]
        wih_f, whh_f, b_f = wf_ref[...], uf_ref[...], bf_ref[...]
        wih_b, whh_b, b_b = wb_ref[...], ub_ref[...], bb_ref[...]
        if len(xs[0]) == 1:                  # layer 0: single (N, C) chunk
            wf_blocks, wb_blocks = [wih_f], [wih_b]
        else:                                # layer 1+: chunks = (h_fwd, h_bwd)
            wf_blocks = [wih_f[:H, :], wih_f[H:, :]]
            wb_blocks = [wih_b[:H, :], wih_b[H:, :]]

        hf = jnp.zeros((N, H), jnp.float32)
        cf = jnp.zeros((N, H), jnp.float32)
        hb = jnp.zeros((N, H), jnp.float32)
        cb = jnp.zeros((N, H), jnp.float32)
        hs_f = [None] * T
        hs_b = [None] * T
        for t in range(T):                   # static unroll, T == len(KERNEL_SIZES)
            hf, cf = cell(xs[t], wf_blocks, hf, cf, whh_f, b_f)
            hs_f[t] = hf
            hb, cb = cell(xs[T - 1 - t], wb_blocks, hb, cb, whh_b, b_b)
            hs_b[T - 1 - t] = hb
        xs = [(hs_f[t], hs_b[t]) for t in range(T)]

    # ---- encoding = cat(states[0], states[-1]); decoder ---------------------
    # The concatenation is folded into the decoder matmul by row-blocking dec_w.
    dec_w = dec_w_ref[...]                                        # (4H, CLS)
    enc_chunks = (*xs[0], *xs[-1])           # (hf[0], hb[0], hf[-1], hb[-1])
    out = dec_b_ref[...]
    for j, chunk in enumerate(enc_chunks):
        out = out + jnp.dot(chunk, dec_w[j * H:(j + 1) * H, :],
                            preferred_element_type=jnp.float32)
    out_ref[...] = out


# ----------------------------- wrapper ---------------------------------------
def model_forward(tokens, params):
    N, W = tokens.shape
    tok_flat = tokens.reshape(N * W, 1)      # trivial reshape on the int input

    args = [tok_flat, params["embed"]]
    for (cw, cb) in params["convs"]:
        args += [cw, cb]
    for layer in range(NUM_LAYERS):
        for direction in range(2):           # 0 = fwd, 1 = bwd
            args += list(params["lstm"][(layer, direction)])
    args += [params["dec_w"], params["dec_b"]]

    return pl.pallas_call(
        functools.partial(_fused_forward_kernel, n=N, w=W),
        out_shape=jax.ShapeDtypeStruct((N, CLASS_NUM), jnp.float32),
        in_specs=[pl.BlockSpec(memory_space=pltpu.MemorySpace.VMEM)
                  for _ in args],
        out_specs=pl.BlockSpec(memory_space=pltpu.MemorySpace.VMEM),
    )(*args)


# ----------------------------- parameters ------------------------------------
def init_params(key):
    keys = iter(jax.random.split(key, 64))
    scale = 0.1

    def rnd(shape):
        return scale * jax.random.normal(next(keys), shape, dtype=jnp.float32)

    params = {}
    params["embed"] = rnd((VOCAB_SIZE, EMBED_DIM))
    # Conv2d(1, KERNEL_NUM, (K, EMBED_DIM)) -> stored im2col-style as (K*D, C)
    params["convs"] = [(rnd((K * EMBED_DIM, KERNEL_NUM)), rnd((1, KERNEL_NUM)))
                       for K in KERNEL_SIZES]
    # LSTM: per (layer, direction): W_ih (I, 4H), W_hh (H, 4H), bias (1, 4H)
    params["lstm"] = {}
    for layer in range(NUM_LAYERS):
        in_size = KERNEL_NUM if layer == 0 else 2 * NUM_HIDDENS
        for direction in range(2):
            params["lstm"][(layer, direction)] = (
                rnd((in_size, 4 * NUM_HIDDENS)),
                rnd((NUM_HIDDENS, 4 * NUM_HIDDENS)),
                rnd((1, 4 * NUM_HIDDENS)),                 # b_ih + b_hh combined
            )
    params["dec_w"] = rnd((NUM_HIDDENS * NUM_LAYERS * 2, CLASS_NUM))
    params["dec_b"] = rnd((1, CLASS_NUM))
    return params


# ----------------------------- pure-JAX reference ------------------------------
def reference_forward(tokens, params):
    x = jnp.take(params["embed"], tokens, axis=0)
    N, W, D = x.shape
    pooled = []
    for (w_flat, b), K in zip(params["convs"], KERNEL_SIZES):
        w = w_flat.reshape(K, D, KERNEL_NUM)
        T = W - K + 1
        acc = jnp.zeros((N, T, KERNEL_NUM), jnp.float32)
        for k in range(K):
            acc += jnp.einsum("ntd,dc->ntc", x[:, k:k + T, :], w[k])
        acc = jnp.maximum(acc + b[None, :, :], 0.0)
        pooled.append(jnp.max(acc, axis=1))
    feat = jnp.concatenate(pooled, axis=1)
    seq = jnp.transpose(feat.reshape(N, -1, KERNEL_NUM), (1, 0, 2))

    def run_dir(xseq, w_ih, w_hh, b):
        T, Nn, _ = xseq.shape
        H = w_hh.shape[0]
        h = jnp.zeros((Nn, H), jnp.float32)
        c = jnp.zeros((Nn, H), jnp.float32)
        hs = []
        for t in range(T):
            gates = xseq[t] @ w_ih + h @ w_hh + b
            i = jax.nn.sigmoid(gates[:, :H])
            f = jax.nn.sigmoid(gates[:, H:2 * H])
            g = jnp.tanh(gates[:, 2 * H:3 * H])
            o = jax.nn.sigmoid(gates[:, 3 * H:])
            c = f * c + i * g
            h = o * jnp.tanh(c)
            hs.append(h)
        return jnp.stack(hs, axis=0)

    layer_in = seq
    for layer in range(NUM_LAYERS):
        h_f = run_dir(layer_in, *params["lstm"][(layer, 0)])
        h_b = jnp.flip(run_dir(jnp.flip(layer_in, 0), *params["lstm"][(layer, 1)]), 0)
        layer_in = jnp.concatenate([h_f, h_b], axis=2)
    enc = jnp.concatenate([layer_in[0], layer_in[-1]], axis=1)
    return enc @ params["dec_w"] + params["dec_b"]


# ----------------------------- main --------------------------------------------
if __name__ == "__main__":
    key = jax.random.PRNGKey(0)
    k_tok, k_par = jax.random.split(key)
    tokens = jax.random.randint(k_tok, (BATCH, SEQ_LEN), 0, VOCAB_SIZE, dtype=jnp.int32)
    params = init_params(k_par)

    out = jax.block_until_ready(model_forward(tokens, params))
    ref = jax.block_until_ready(reference_forward(tokens, params))

    assert out.shape == (BATCH, CLASS_NUM), out.shape
    assert bool(jnp.all(jnp.isfinite(out)))
    assert bool(jnp.allclose(out, ref, atol=2e-2, rtol=2e-2)), (out, ref)

    print("KERNEL_OK")
</pallas_src>

<mosaic_0001>
module attributes {stable_mosaic.version = 11 : i64} {
  func.func @_fused_forward_kernel(%arg0: memref<32x1xi32, #tpu.memory_space<vmem>>, %arg1: memref<50x16xf32, #tpu.memory_space<vmem>>, %arg2: memref<32x8xf32, #tpu.memory_space<vmem>>, %arg3: memref<1x8xf32, #tpu.memory_space<vmem>>, %arg4: memref<48x8xf32, #tpu.memory_space<vmem>>, %arg5: memref<1x8xf32, #tpu.memory_space<vmem>>, %arg6: memref<64x8xf32, #tpu.memory_space<vmem>>, %arg7: memref<1x8xf32, #tpu.memory_space<vmem>>, %arg8: memref<8x128xf32, #tpu.memory_space<vmem>>, %arg9: memref<32x128xf32, #tpu.memory_space<vmem>>, %arg10: memref<1x128xf32, #tpu.memory_space<vmem>>, %arg11: memref<8x128xf32, #tpu.memory_space<vmem>>, %arg12: memref<32x128xf32, #tpu.memory_space<vmem>>, %arg13: memref<1x128xf32, #tpu.memory_space<vmem>>, %arg14: memref<64x128xf32, #tpu.memory_space<vmem>>, %arg15: memref<32x128xf32, #tpu.memory_space<vmem>>, %arg16: memref<1x128xf32, #tpu.memory_space<vmem>>, %arg17: memref<64x128xf32, #tpu.memory_space<vmem>>, %arg18: memref<32x128xf32, #tpu.memory_space<vmem>>, %arg19: memref<1x128xf32, #tpu.memory_space<vmem>>, %arg20: memref<128x2xf32, #tpu.memory_space<vmem>>, %arg21: memref<1x2xf32, #tpu.memory_space<vmem>>, %arg22: memref<2x2xf32, #tpu.memory_space<vmem>>) attributes {dimension_semantics = [], scalar_prefetch = 0 : i64, scratch_operands = 0 : i64, tpu.core_type = #tpu.core_type<tc>} {
    %c0 = arith.constant 0 : index
    %c0_0 = arith.constant 0 : index
    %0 = vector.load %arg0[%c0, %c0_0] : memref<32x1xi32, #tpu.memory_space<vmem>>, vector<32x1xi32>
    %1 = tpu.iota {dimensions = array<i32: 1>} : vector<32x50xi32>
    %2 = vector.broadcast %0 : vector<32x1xi32> to vector<32x50xi32>
    %3 = arith.cmpi eq, %2, %1 : vector<32x50xi32>
    %4 = arith.extui %3 : vector<32x50xi1> to vector<32x50xi32>
    %5 = arith.sitofp %4 : vector<32x50xi32> to vector<32x50xf32>
    %c0_1 = arith.constant 0 : index
    %c0_2 = arith.constant 0 : index
    %6 = vector.load %arg1[%c0_1, %c0_2] : memref<50x16xf32, #tpu.memory_space<vmem>>, vector<50x16xf32>
    %cst = arith.constant dense<0.000000e+00> : vector<32x16xf32>
    %7 = tpu.matmul %5, %6, %cst {dimension_numbers = #tpu.dot_dimension_numbers<[1], [0], [0], [1], [0, 0, 1, 1], [], []>} : vector<32x50xf32>, vector<50x16xf32>, vector<32x16xf32> -> vector<32x16xf32>
    %8 = vector.shape_cast %7 : vector<32x16xf32> to vector<2x16x16xf32>
    %c0_3 = arith.constant 0 : index
    %c0_4 = arith.constant 0 : index
    %9 = vector.load %arg2[%c0_3, %c0_4] : memref<32x8xf32, #tpu.memory_space<vmem>>, vector<32x8xf32>
    %cst_5 = arith.constant 0.000000e+00 : f32
    %10 = vector.broadcast %cst_5 : f32 to vector<2x15x8xf32>
    %11 = vector.extract_strided_slice %8 {offsets = [0, 0, 0], sizes = [2, 15, 16], strides = [1, 1, 1]} : vector<2x16x16xf32> to vector<2x15x16xf32>
    %12 = vector.extract_strided_slice %9 {offsets = [0, 0], sizes = [16, 8], strides = [1, 1]} : vector<32x8xf32> to vector<16x8xf32>
    "tpu.trace_start"() <{level = 10 : i32, message = "ntd,dc->ntc"}> : () -> ()
    %cst_6 = arith.constant dense<0.000000e+00> : vector<2x15x8xf32>
    %13 = tpu.matmul %11, %12, %cst_6 {dimension_numbers = #tpu.dot_dimension_numbers<[2], [0], [0, 1], [1], [0, 0, 0, 1, 1, 1], [], []>} : vector<2x15x16xf32>, vector<16x8xf32>, vector<2x15x8xf32> -> vector<2x15x8xf32>
    "tpu.trace_stop"() : () -> ()
    %14 = arith.addf %10, %13 : vector<2x15x8xf32>
    %15 = vector.extract_strided_slice %8 {offsets = [0, 1, 0], sizes = [2, 15, 16], strides = [1, 1, 1]} : vector<2x16x16xf32> to vector<2x15x16xf32>
    %16 = vector.extract_strided_slice %9 {offsets = [16, 0], sizes = [16, 8], strides = [1, 1]} : vector<32x8xf32> to vector<16x8xf32>
    "tpu.trace_start"() <{level = 10 : i32, message = "ntd,dc->ntc"}> : () -> ()
    %cst_7 = arith.constant dense<0.000000e+00> : vector<2x15x8xf32>
    %17 = tpu.matmul %15, %16, %cst_7 {dimension_numbers = #tpu.dot_dimension_numbers<[2], [0], [0, 1], [1], [0, 0, 0, 1, 1, 1], [], []>} : vector<2x15x16xf32>, vector<16x8xf32>, vector<2x15x8xf32> -> vector<2x15x8xf32>
    "tpu.trace_stop"() : () -> ()
    %18 = arith.addf %14, %17 : vector<2x15x8xf32>
    %c0_8 = arith.constant 0 : index
    %c0_9 = arith.constant 0 : index
    %19 = vector.load %arg3[%c0_8, %c0_9] : memref<1x8xf32, #tpu.memory_space<vmem>>, vector<1x8xf32>
    %20 = vector.shape_cast %19 : vector<1x8xf32> to vector<1x1x8xf32>
    %21 = vector.broadcast %20 : vector<1x1x8xf32> to vector<2x15x8xf32>
    %22 = arith.addf %18, %21 : vector<2x15x8xf32>
    %cst_10 = arith.constant 0.000000e+00 : f32
    %23 = vector.broadcast %cst_10 : f32 to vector<2x15x8xf32>
    %24 = arith.maximumf %22, %23 : vector<2x15x8xf32>
    %cst_11 = arith.constant dense<0xFF800000> : vector<2x8xf32>
    %25 = vector.multi_reduction <maximumf>, %24, %cst_11 [1] : vector<2x15x8xf32> to vector<2x8xf32>
    %c0_12 = arith.constant 0 : index
    %c0_13 = arith.constant 0 : index
    %26 = vector.load %arg4[%c0_12, %c0_13] : memref<48x8xf32, #tpu.memory_space<vmem>>, vector<48x8xf32>
    %cst_14 = arith.constant 0.000000e+00 : f32
    %27 = vector.broadcast %cst_14 : f32 to vector<2x14x8xf32>
    %28 = vector.extract_strided_slice %8 {offsets = [0, 0, 0], sizes = [2, 14, 16], strides = [1, 1, 1]} : vector<2x16x16xf32> to vector<2x14x16xf32>
    %29 = vector.extract_strided_slice %26 {offsets = [0, 0], sizes = [16, 8], strides = [1, 1]} : vector<48x8xf32> to vector<16x8xf32>
    "tpu.trace_start"() <{level = 10 : i32, message = "ntd,dc->ntc"}> : () -> ()
    %cst_15 = arith.constant dense<0.000000e+00> : vector<2x14x8xf32>
    %30 = tpu.matmul %28, %29, %cst_15 {dimension_numbers = #tpu.dot_dimension_numbers<[2], [0], [0, 1], [1], [0, 0, 0, 1, 1, 1], [], []>} : vector<2x14x16xf32>, vector<16x8xf32>, vector<2x14x8xf32> -> vector<2x14x8xf32>
    "tpu.trace_stop"() : () -> ()
    %31 = arith.addf %27, %30 : vector<2x14x8xf32>
    %32 = vector.extract_strided_slice %8 {offsets = [0, 1, 0], sizes = [2, 14, 16], strides = [1, 1, 1]} : vector<2x16x16xf32> to vector<2x14x16xf32>
    %33 = vector.extract_strided_slice %26 {offsets = [16, 0], sizes = [16, 8], strides = [1, 1]} : vector<48x8xf32> to vector<16x8xf32>
    "tpu.trace_start"() <{level = 10 : i32, message = "ntd,dc->ntc"}> : () -> ()
    %cst_16 = arith.constant dense<0.000000e+00> : vector<2x14x8xf32>
    %34 = tpu.matmul %32, %33, %cst_16 {dimension_numbers = #tpu.dot_dimension_numbers<[2], [0], [0, 1], [1], [0, 0, 0, 1, 1, 1], [], []>} : vector<2x14x16xf32>, vector<16x8xf32>, vector<2x14x8xf32> -> vector<2x14x8xf32>
    "tpu.trace_stop"() : () -> ()
    %35 = arith.addf %31, %34 : vector<2x14x8xf32>
    %36 = vector.extract_strided_slice %8 {offsets = [0, 2, 0], sizes = [2, 14, 16], strides = [1, 1, 1]} : vector<2x16x16xf32> to vector<2x14x16xf32>
    %37 = vector.extract_strided_slice %26 {offsets = [32, 0], sizes = [16, 8], strides = [1, 1]} : vector<48x8xf32> to vector<16x8xf32>
    "tpu.trace_start"() <{level = 10 : i32, message = "ntd,dc->ntc"}> : () -> ()
    %cst_17 = arith.constant dense<0.000000e+00> : vector<2x14x8xf32>
    %38 = tpu.matmul %36, %37, %cst_17 {dimension_numbers = #tpu.dot_dimension_numbers<[2], [0], [0, 1], [1], [0, 0, 0, 1, 1, 1], [], []>} : vector<2x14x16xf32>, vector<16x8xf32>, vector<2x14x8xf32> -> vector<2x14x8xf32>
    "tpu.trace_stop"() : () -> ()
    %39 = arith.addf %35, %38 : vector<2x14x8xf32>
    %c0_18 = arith.constant 0 : index
    %c0_19 = arith.constant 0 : index
    %40 = vector.load %arg5[%c0_18, %c0_19] : memref<1x8xf32, #tpu.memory_space<vmem>>, vector<1x8xf32>
    %41 = vector.shape_cast %40 : vector<1x8xf32> to vector<1x1x8xf32>
    %42 = vector.broadcast %41 : vector<1x1x8xf32> to vector<2x14x8xf32>
    %43 = arith.addf %39, %42 : vector<2x14x8xf32>
    %cst_20 = arith.constant 0.000000e+00 : f32
    %44 = vector.broadcast %cst_20 : f32 to vector<2x14x8xf32>
    %45 = arith.maximumf %43, %44 : vector<2x14x8xf32>
    %cst_21 = arith.constant dense<0xFF800000> : vector<2x8xf32>
    %46 = vector.multi_reduction <maximumf>, %45, %cst_21 [1] : vector<2x14x8xf32> to vector<2x8xf32>
    %c0_22 = arith.constant 0 : index
    %c0_23 = arith.constant 0 : index
    %47 = vector.load %arg6[%c0_22, %c0_23] : memref<64x8xf32, #tpu.memory_space<vmem>>, vector<64x8xf32>
    %cst_24 = arith.constant 0.000000e+00 : f32
    %48 = vector.broadcast %cst_24 : f32 to vector<2x13x8xf32>
    %49 = vector.extract_strided_slice %8 {offsets = [0, 0, 0], sizes = [2, 13, 16], strides = [1, 1, 1]} : vector<2x16x16xf32> to vector<2x13x16xf32>
    %50 = vector.extract_strided_slice %47 {offsets = [0, 0], sizes = [16, 8], strides = [1, 1]} : vector<64x8xf32> to vector<16x8xf32>
    "tpu.trace_start"() <{level = 10 : i32, message = "ntd,dc->ntc"}> : () -> ()
    %cst_25 = arith.constant dense<0.000000e+00> : vector<2x13x8xf32>
    %51 = tpu.matmul %49, %50, %cst_25 {dimension_numbers = #tpu.dot_dimension_numbers<[2], [0], [0, 1], [1], [0, 0, 0, 1, 1, 1], [], []>} : vector<2x13x16xf32>, vector<16x8xf32>, vector<2x13x8xf32> -> vector<2x13x8xf32>
    "tpu.trace_stop"() : () -> ()
    %52 = arith.addf %48, %51 : vector<2x13x8xf32>
    %53 = vector.extract_strided_slice %8 {offsets = [0, 1, 0], sizes = [2, 13, 16], strides = [1, 1, 1]} : vector<2x16x16xf32> to vector<2x13x16xf32>
    %54 = vector.extract_strided_slice %47 {offsets = [16, 0], sizes = [16, 8], strides = [1, 1]} : vector<64x8xf32> to vector<16x8xf32>
    "tpu.trace_start"() <{level = 10 : i32, message = "ntd,dc->ntc"}> : () -> ()
    %cst_26 = arith.constant dense<0.000000e+00> : vector<2x13x8xf32>
    %55 = tpu.matmul %53, %54, %cst_26 {dimension_numbers = #tpu.dot_dimension_numbers<[2], [0], [0, 1], [1], [0, 0, 0, 1, 1, 1], [], []>} : vector<2x13x16xf32>, vector<16x8xf32>, vector<2x13x8xf32> -> vector<2x13x8xf32>
    "tpu.trace_stop"() : () -> ()
    %56 = arith.addf %52, %55 : vector<2x13x8xf32>
    %57 = vector.extract_strided_slice %8 {offsets = [0, 2, 0], sizes = [2, 13, 16], strides = [1, 1, 1]} : vector<2x16x16xf32> to vector<2x13x16xf32>
    %58 = vector.extract_strided_slice %47 {offsets = [32, 0], sizes = [16, 8], strides = [1, 1]} : vector<64x8xf32> to vector<16x8xf32>
    "tpu.trace_start"() <{level = 10 : i32, message = "ntd,dc->ntc"}> : () -> ()
    %cst_27 = arith.constant dense<0.000000e+00> : vector<2x13x8xf32>
    %59 = tpu.matmul %57, %58, %cst_27 {dimension_numbers = #tpu.dot_dimension_numbers<[2], [0], [0, 1], [1], [0, 0, 0, 1, 1, 1], [], []>} : vector<2x13x16xf32>, vector<16x8xf32>, vector<2x13x8xf32> -> vector<2x13x8xf32>
    "tpu.trace_stop"() : () -> ()
    %60 = arith.addf %56, %59 : vector<2x13x8xf32>
    %61 = vector.extract_strided_slice %8 {offsets = [0, 3, 0], sizes = [2, 13, 16], strides = [1, 1, 1]} : vector<2x16x16xf32> to vector<2x13x16xf32>
    %62 = vector.extract_strided_slice %47 {offsets = [48, 0], sizes = [16, 8], strides = [1, 1]} : vector<64x8xf32> to vector<16x8xf32>
    "tpu.trace_start"() <{level = 10 : i32, message = "ntd,dc->ntc"}> : () -> ()
    %cst_28 = arith.constant dense<0.000000e+00> : vector<2x13x8xf32>
    %63 = tpu.matmul %61, %62, %cst_28 {dimension_numbers = #tpu.dot_dimension_numbers<[2], [0], [0, 1], [1], [0, 0, 0, 1, 1, 1], [], []>} : vector<2x13x16xf32>, vector<16x8xf32>, vector<2x13x8xf32> -> vector<2x13x8xf32>
    "tpu.trace_stop"() : () -> ()
    %64 = arith.addf %60, %63 : vector<2x13x8xf32>
    %c0_29 = arith.constant 0 : index
    %c0_30 = arith.constant 0 : index
    %65 = vector.load %arg7[%c0_29, %c0_30] : memref<1x8xf32, #tpu.memory_space<vmem>>, vector<1x8xf32>
    %66 = vector.shape_cast %65 : vector<1x8xf32> to vector<1x1x8xf32>
    %67 = vector.broadcast %66 : vector<1x1x8xf32> to vector<2x13x8xf32>
    %68 = arith.addf %64, %67 : vector<2x13x8xf32>
    %cst_31 = arith.constant 0.000000e+00 : f32
    %69 = vector.broadcast %cst_31 : f32 to vector<2x13x8xf32>
    %70 = arith.maximumf %68, %69 : vector<2x13x8xf32>
    %cst_32 = arith.constant dense<0xFF800000> : vector<2x8xf32>
    %71 = vector.multi_reduction <maximumf>, %70, %cst_32 [1] : vector<2x13x8xf32> to vector<2x8xf32>
    %c0_33 = arith.constant 0 : index
    %c0_34 = arith.constant 0 : index
    %72 = vector.load %arg8[%c0_33, %c0_34] : memref<8x128xf32, #tpu.memory_space<vmem>>, vector<8x128xf32>
    %c0_35 = arith.constant 0 : index
    %c0_36 = arith.constant 0 : index
    %73 = vector.load %arg9[%c0_35, %c0_36] : memref<32x128xf32, #tpu.memory_space<vmem>>, vector<32x128xf32>
    %c0_37 = arith.constant 0 : index
    %c0_38 = arith.constant 0 : index
    %74 = vector.load %arg10[%c0_37, %c0_38] : memref<1x128xf32, #tpu.memory_space<vmem>>, vector<1x128xf32>
    %c0_39 = arith.constant 0 : index
    %c0_40 = arith.constant 0 : index
    %75 = vector.load %arg11[%c0_39, %c0_40] : memref<8x128xf32, #tpu.memory_space<vmem>>, vector<8x128xf32>
    %c0_41 = arith.constant 0 : index
    %c0_42 = arith.constant 0 : index
    %76 = vector.load %arg12[%c0_41, %c0_42] : memref<32x128xf32, #tpu.memory_space<vmem>>, vector<32x128xf32>
    %c0_43 = arith.constant 0 : index
    %c0_44 = arith.constant 0 : index
    %77 = vector.load %arg13[%c0_43, %c0_44] : memref<1x128xf32, #tpu.memory_space<vmem>>, vector<1x128xf32>
    %cst_45 = arith.constant 0.000000e+00 : f32
    %78 = vector.broadcast %cst_45 : f32 to vector<2x32xf32>
    %cst_46 = arith.constant 0.000000e+00 : f32
    %79 = vector.broadcast %cst_46 : f32 to vector<2x32xf32>
    %cst_47 = arith.constant 0.000000e+00 : f32
    %80 = vector.broadcast %cst_47 : f32 to vector<2x32xf32>
    %cst_48 = arith.constant 0.000000e+00 : f32
    %81 = vector.broadcast %cst_48 : f32 to vector<2x32xf32>
    %cst_49 = arith.constant dense<0.000000e+00> : vector<2x128xf32>
    %82 = tpu.matmul %78, %73, %cst_49 {dimension_numbers = #tpu.dot_dimension_numbers<[1], [0], [0], [1], [0, 0, 1, 1], [], []>} : vector<2x32xf32>, vector<32x128xf32>, vector<2x128xf32> -> vector<2x128xf32>
    %83 = vector.broadcast %74 : vector<1x128xf32> to vector<2x128xf32>
    %84 = arith.addf %82, %83 : vector<2x128xf32>
    %cst_50 = arith.constant dense<0.000000e+00> : vector<2x128xf32>
    %85 = tpu.matmul %25, %72, %cst_50 {dimension_numbers = #tpu.dot_dimension_numbers<[1], [0], [0], [1], [0, 0, 1, 1], [], []>} : vector<2x8xf32>, vector<8x128xf32>, vector<2x128xf32> -> vector<2x128xf32>
    %86 = arith.addf %84, %85 : vector<2x128xf32>
    %87 = vector.extract_strided_slice %86 {offsets = [0, 0], sizes = [2, 32], strides = [1, 1]} : vector<2x128xf32> to vector<2x32xf32>
    %88 = arith.negf %87 : vector<2x32xf32>
    %89 = math.exp %88 : vector<2x32xf32>
    %cst_51 = arith.constant 1.000000e+00 : f32
    %90 = vector.broadcast %cst_51 : f32 to vector<2x32xf32>
    %91 = arith.addf %90, %89 : vector<2x32xf32>
    %92 = arith.divf %90, %91 : vector<2x32xf32>
    %93 = vector.extract_strided_slice %86 {offsets = [0, 32], sizes = [2, 32], strides = [1, 1]} : vector<2x128xf32> to vector<2x32xf32>
    %94 = arith.negf %93 : vector<2x32xf32>
    %95 = math.exp %94 : vector<2x32xf32>
    %cst_52 = arith.constant 1.000000e+00 : f32
    %96 = vector.broadcast %cst_52 : f32 to vector<2x32xf32>
    %97 = arith.addf %96, %95 : vector<2x32xf32>
    %98 = arith.divf %96, %97 : vector<2x32xf32>
    %99 = vector.extract_strided_slice %86 {offsets = [0, 64], sizes = [2, 32], strides = [1, 1]} : vector<2x128xf32> to vector<2x32xf32>
    %100 = math.tanh %99 : vector<2x32xf32>
    %101 = vector.extract_strided_slice %86 {offsets = [0, 96], sizes = [2, 32], strides = [1, 1]} : vector<2x128xf32> to vector<2x32xf32>
    %102 = arith.negf %101 : vector<2x32xf32>
    %103 = math.exp %102 : vector<2x32xf32>
    %cst_53 = arith.constant 1.000000e+00 : f32
    %104 = vector.broadcast %cst_53 : f32 to vector<2x32xf32>
    %105 = arith.addf %104, %103 : vector<2x32xf32>
    %106 = arith.divf %104, %105 : vector<2x32xf32>
    %107 = arith.mulf %98, %79 : vector<2x32xf32>
    %108 = arith.mulf %92, %100 : vector<2x32xf32>
    %109 = arith.addf %107, %108 : vector<2x32xf32>
    %110 = math.tanh %109 : vector<2x32xf32>
    %111 = arith.mulf %106, %110 : vector<2x32xf32>
    %cst_54 = arith.constant dense<0.000000e+00> : vector<2x128xf32>
    %112 = tpu.matmul %80, %76, %cst_54 {dimension_numbers = #tpu.dot_dimension_numbers<[1], [0], [0], [1], [0, 0, 1, 1], [], []>} : vector<2x32xf32>, vector<32x128xf32>, vector<2x128xf32> -> vector<2x128xf32>
    %113 = vector.broadcast %77 : vector<1x128xf32> to vector<2x128xf32>
    %114 = arith.addf %112, %113 : vector<2x128xf32>
    %cst_55 = arith.constant dense<0.000000e+00> : vector<2x128xf32>
    %115 = tpu.matmul %71, %75, %cst_55 {dimension_numbers = #tpu.dot_dimension_numbers<[1], [0], [0], [1], [0, 0, 1, 1], [], []>} : vector<2x8xf32>, vector<8x128xf32>, vector<2x128xf32> -> vector<2x128xf32>
    %116 = arith.addf %114, %115 : vector<2x128xf32>
    %117 = vector.extract_strided_slice %116 {offsets = [0, 0], sizes = [2, 32], strides = [1, 1]} : vector<2x128xf32> to vector<2x32xf32>
    %118 = arith.negf %117 : vector<2x32xf32>
    %119 = math.exp %118 : vector<2x32xf32>
    %cst_56 = arith.constant 1.000000e+00 : f32
    %120 = vector.broadcast %cst_56 : f32 to vector<2x32xf32>
    %121 = arith.addf %120, %119 : vector<2x32xf32>
    %122 = arith.divf %120, %121 : vector<2x32xf32>
    %123 = vector.extract_strided_slice %116 {offsets = [0, 32], sizes = [2, 32], strides = [1, 1]} : vector<2x128xf32> to vector<2x32xf32>
    %124 = arith.negf %123 : vector<2x32xf32>
    %125 = math.exp %124 : vector<2x32xf32>
    %cst_57 = arith.constant 1.000000e+00 : f32
    %126 = vector.broadcast %cst_57 : f32 to vector<2x32xf32>
    %127 = arith.addf %126, %125 : vector<2x32xf32>
    %128 = arith.divf %126, %127 : vector<2x32xf32>
    %129 = vector.extract_strided_slice %116 {offsets = [0, 64], sizes = [2, 32], strides = [1, 1]} : vector<2x128xf32> to vector<2x32xf32>
    %130 = math.tanh %129 : vector<2x32xf32>
    %131 = vector.extract_strided_slice %116 {offsets = [0, 96], sizes = [2, 32], strides = [1, 1]} : vector<2x128xf32> to vector<2x32xf32>
    %132 = arith.negf %131 : vector<2x32xf32>
    %133 = math.exp %132 : vector<2x32xf32>
    %cst_58 = arith.constant 1.000000e+00 : f32
    %134 = vector.broadcast %cst_58 : f32 to vector<2x32xf32>
    %135 = arith.addf %134, %133 : vector<2x32xf32>
    %136 = arith.divf %134, %135 : vector<2x32xf32>
    %137 = arith.mulf %128, %81 : vector<2x32xf32>
    %138 = arith.mulf %122, %130 : vector<2x32xf32>
    %139 = arith.addf %137, %138 : vector<2x32xf32>
    %140 = math.tanh %139 : vector<2x32xf32>
    %141 = arith.mulf %136, %140 : vector<2x32xf32>
    %cst_59 = arith.constant dense<0.000000e+00> : vector<2x128xf32>
    %142 = tpu.matmul %111, %73, %cst_59 {dimension_numbers = #tpu.dot_dimension_numbers<[1], [0], [0], [1], [0, 0, 1, 1], [], []>} : vector<2x32xf32>, vector<32x128xf32>, vector<2x128xf32> -> vector<2x128xf32>
    %143 = vector.broadcast %74 : vector<1x128xf32> to vector<2x128xf32>
    %144 = arith.addf %142, %143 : vector<2x128xf32>
    %cst_60 = arith.constant dense<0.000000e+00> : vector<2x128xf32>
    %145 = tpu.matmul %46, %72, %cst_60 {dimension_numbers = #tpu.dot_dimension_numbers<[1], [0], [0], [1], [0, 0, 1, 1], [], []>} : vector<2x8xf32>, vector<8x128xf32>, vector<2x128xf32> -> vector<2x128xf32>
    %146 = arith.addf %144, %145 : vector<2x128xf32>
    %147 = vector.extract_strided_slice %146 {offsets = [0, 0], sizes = [2, 32], strides = [1, 1]} : vector<2x128xf32> to vector<2x32xf32>
    %148 = arith.negf %147 : vector<2x32xf32>
    %149 = math.exp %148 : vector<2x32xf32>
    %cst_61 = arith.constant 1.000000e+00 : f32
    %150 = vector.broadcast %cst_61 : f32 to vector<2x32xf32>
    %151 = arith.addf %150, %149 : vector<2x32xf32>
    %152 = arith.divf %150, %151 : vector<2x32xf32>
    %153 = vector.extract_strided_slice %146 {offsets = [0, 32], sizes = [2, 32], strides = [1, 1]} : vector<2x128xf32> to vector<2x32xf32>
    %154 = arith.negf %153 : vector<2x32xf32>
    %155 = math.exp %154 : vector<2x32xf32>
    %cst_62 = arith.constant 1.000000e+00 : f32
    %156 = vector.broadcast %cst_62 : f32 to vector<2x32xf32>
    %157 = arith.addf %156, %155 : vector<2x32xf32>
    %158 = arith.divf %156, %157 : vector<2x32xf32>
    %159 = vector.extract_strided_slice %146 {offsets = [0, 64], sizes = [2, 32], strides = [1, 1]} : vector<2x128xf32> to vector<2x32xf32>
    %160 = math.tanh %159 : vector<2x32xf32>
    %161 = vector.extract_strided_slice %146 {offsets = [0, 96], sizes = [2, 32], strides = [1, 1]} : vector<2x128xf32> to vector<2x32xf32>
    %162 = arith.negf %161 : vector<2x32xf32>
    %163 = math.exp %162 : vector<2x32xf32>
    %cst_63 = arith.constant 1.000000e+00 : f32
    %164 = vector.broadcast %cst_63 : f32 to vector<2x32xf32>
    %165 = arith.addf %164, %163 : vector<2x32xf32>
    %166 = arith.divf %164, %165 : vector<2x32xf32>
    %167 = arith.mulf %158, %109 : vector<2x32xf32>
    %168 = arith.mulf %152, %160 : vector<2x32xf32>
    %169 = arith.addf %167, %168 : vector<2x32xf32>
    %170 = math.tanh %169 : vector<2x32xf32>
    %171 = arith.mulf %166, %170 : vector<2x32xf32>
    %cst_64 = arith.constant dense<0.000000e+00> : vector<2x128xf32>
    %172 = tpu.matmul %141, %76, %cst_64 {dimension_numbers = #tpu.dot_dimension_numbers<[1], [0], [0], [1], [0, 0, 1, 1], [], []>} : vector<2x32xf32>, vector<32x128xf32>, vector<2x128xf32> -> vector<2x128xf32>
    %173 = vector.broadcast %77 : vector<1x128xf32> to vector<2x128xf32>
    %174 = arith.addf %172, %173 : vector<2x128xf32>
    %cst_65 = arith.constant dense<0.000000e+00> : vector<2x128xf32>
    %175 = tpu.matmul %46, %75, %cst_65 {dimension_numbers = #tpu.dot_dimension_numbers<[1], [0], [0], [1], [0, 0, 1, 1], [], []>} : vector<2x8xf32>, vector<8x128xf32>, vector<2x128xf32> -> vector<2x128xf32>
    %176 = arith.addf %174, %175 : vector<2x128xf32>
    %177 = vector.extract_strided_slice %176 {offsets = [0, 0], sizes = [2, 32], strides = [1, 1]} : vector<2x128xf32> to vector<2x32xf32>
    %178 = arith.negf %177 : vector<2x32xf32>
    %179 = math.exp %178 : vector<2x32xf32>
    %cst_66 = arith.constant 1.000000e+00 : f32
    %180 = vector.broadcast %cst_66 : f32 to vector<2x32xf32>
    %181 = arith.addf %180, %179 : vector<2x32xf32>
    %182 = arith.divf %180, %181 : vector<2x32xf32>
    %183 = vector.extract_strided_slice %176 {offsets = [0, 32], sizes = [2, 32], strides = [1, 1]} : vector<2x128xf32> to vector<2x32xf32>
    %184 = arith.negf %183 : vector<2x32xf32>
    %185 = math.exp %184 : vector<2x32xf32>
    %cst_67 = arith.constant 1.000000e+00 : f32
    %186 = vector.broadcast %cst_67 : f32 to vector<2x32xf32>
    %187 = arith.addf %186, %185 : vector<2x32xf32>
    %188 = arith.divf %186, %187 : vector<2x32xf32>
    %189 = vector.extract_strided_slice %176 {offsets = [0, 64], sizes = [2, 32], strides = [1, 1]} : vector<2x128xf32> to vector<2x32xf32>
    %190 = math.tanh %189 : vector<2x32xf32>
    %191 = vector.extract_strided_slice %176 {offsets = [0, 96], sizes = [2, 32], strides = [1, 1]} : vector<2x128xf32> to vector<2x32xf32>
    %192 = arith.negf %191 : vector<2x32xf32>
    %193 = math.exp %192 : vector<2x32xf32>
    %cst_68 = arith.constant 1.000000e+00 : f32
    %194 = vector.broadcast %cst_68 : f32 to vector<2x32xf32>
    %195 = arith.addf %194, %193 : vector<2x32xf32>
    %196 = arith.divf %194, %195 : vector<2x32xf32>
    %197 = arith.mulf %188, %139 : vector<2x32xf32>
    %198 = arith.mulf %182, %190 : vector<2x32xf32>
    %199 = arith.addf %197, %198 : vector<2x32xf32>
    %200 = math.tanh %199 : vector<2x32xf32>
    %201 = arith.mulf %196, %200 : vector<2x32xf32>
    %cst_69 = arith.constant dense<0.000000e+00> : vector<2x128xf32>
    %202 = tpu.matmul %171, %73, %cst_69 {dimension_numbers = #tpu.dot_dimension_numbers<[1], [0], [0], [1], [0, 0, 1, 1], [], []>} : vector<2x32xf32>, vector<32x128xf32>, vector<2x128xf32> -> vector<2x128xf32>
    %203 = vector.broadcast %74 : vector<1x128xf32> to vector<2x128xf32>
    %204 = arith.addf %202, %203 : vector<2x128xf32>
    %cst_70 = arith.constant dense<0.000000e+00> : vector<2x128xf32>
    %205 = tpu.matmul %71, %72, %cst_70 {dimension_numbers = #tpu.dot_dimension_numbers<[1], [0], [0], [1], [0, 0, 1, 1], [], []>} : vector<2x8xf32>, vector<8x128xf32>, vector<2x128xf32> -> vector<2x128xf32>
    %206 = arith.addf %204, %205 : vector<2x128xf32>
    %207 = vector.extract_strided_slice %206 {offsets = [0, 0], sizes = [2, 32], strides = [1, 1]} : vector<2x128xf32> to vector<2x32xf32>
    %208 = arith.negf %207 : vector<2x32xf32>
    %209 = math.exp %208 : vector<2x32xf32>
    %cst_71 = arith.constant 1.000000e+00 : f32
    %210 = vector.broadcast %cst_71 : f32 to vector<2x32xf32>
    %211 = arith.addf %210, %209 : vector<2x32xf32>
    %212 = arith.divf %210, %211 : vector<2x32xf32>
    %213 = vector.extract_strided_slice %206 {offsets = [0, 32], sizes = [2, 32], strides = [1, 1]} : vector<2x128xf32> to vector<2x32xf32>
    %214 = arith.negf %213 : vector<2x32xf32>
    %215 = math.exp %214 : vector<2x32xf32>
    %cst_72 = arith.constant 1.000000e+00 : f32
    %216 = vector.broadcast %cst_72 : f32 to vector<2x32xf32>
    %217 = arith.addf %216, %215 : vector<2x32xf32>
    %218 = arith.divf %216, %217 : vector<2x32xf32>
    %219 = vector.extract_strided_slice %206 {offsets = [0, 64], sizes = [2, 32], strides = [1, 1]} : vector<2x128xf32> to vector<2x32xf32>
    %220 = math.tanh %219 : vector<2x32xf32>
    %221 = vector.extract_strided_slice %206 {offsets = [0, 96], sizes = [2, 32], strides = [1, 1]} : vector<2x128xf32> to vector<2x32xf32>
    %222 = arith.negf %221 : vector<2x32xf32>
    %223 = math.exp %222 : vector<2x32xf32>
    %cst_73 = arith.constant 1.000000e+00 : f32
    %224 = vector.broadcast %cst_73 : f32 to vector<2x32xf32>
    %225 = arith.addf %224, %223 : vector<2x32xf32>
    %226 = arith.divf %224, %225 : vector<2x32xf32>
    %227 = arith.mulf %218, %169 : vector<2x32xf32>
    %228 = arith.mulf %212, %220 : vector<2x32xf32>
    %229 = arith.addf %227, %228 : vector<2x32xf32>
    %230 = math.tanh %229 : vector<2x32xf32>
    %231 = arith.mulf %226, %230 : vector<2x32xf32>
    %cst_74 = arith.constant dense<0.000000e+00> : vector<2x128xf32>
    %232 = tpu.matmul %201, %76, %cst_74 {dimension_numbers = #tpu.dot_dimension_numbers<[1], [0], [0], [1], [0, 0, 1, 1], [], []>} : vector<2x32xf32>, vector<32x128xf32>, vector<2x128xf32> -> vector<2x128xf32>
    %233 = vector.broadcast %77 : vector<1x128xf32> to vector<2x128xf32>
    %234 = arith.addf %232, %233 : vector<2x128xf32>
    %cst_75 = arith.constant dense<0.000000e+00> : vector<2x128xf32>
    %235 = tpu.matmul %25, %75, %cst_75 {dimension_numbers = #tpu.dot_dimension_numbers<[1], [0], [0], [1], [0, 0, 1, 1], [], []>} : vector<2x8xf32>, vector<8x128xf32>, vector<2x128xf32> -> vector<2x128xf32>
    %236 = arith.addf %234, %235 : vector<2x128xf32>
    %237 = vector.extract_strided_slice %236 {offsets = [0, 0], sizes = [2, 32], strides = [1, 1]} : vector<2x128xf32> to vector<2x32xf32>
    %238 = arith.negf %237 : vector<2x32xf32>
    %239 = math.exp %238 : vector<2x32xf32>
    %cst_76 = arith.constant 1.000000e+00 : f32
    %240 = vector.broadcast %cst_76 : f32 to vector<2x32xf32>
    %241 = arith.addf %240, %239 : vector<2x32xf32>
    %242 = arith.divf %240, %241 : vector<2x32xf32>
    %243 = vector.extract_strided_slice %236 {offsets = [0, 32], sizes = [2, 32], strides = [1, 1]} : vector<2x128xf32> to vector<2x32xf32>
    %244 = arith.negf %243 : vector<2x32xf32>
    %245 = math.exp %244 : vector<2x32xf32>
    %cst_77 = arith.constant 1.000000e+00 : f32
    %246 = vector.broadcast %cst_77 : f32 to vector<2x32xf32>
    %247 = arith.addf %246, %245 : vector<2x32xf32>
    %248 = arith.divf %246, %247 : vector<2x32xf32>
    %249 = vector.extract_strided_slice %236 {offsets = [0, 64], sizes = [2, 32], strides = [1, 1]} : vector<2x128xf32> to vector<2x32xf32>
    %250 = math.tanh %249 : vector<2x32xf32>
    %251 = vector.extract_strided_slice %236 {offsets = [0, 96], sizes = [2, 32], strides = [1, 1]} : vector<2x128xf32> to vector<2x32xf32>
    %252 = arith.negf %251 : vector<2x32xf32>
    %253 = math.exp %252 : vector<2x32xf32>
    %cst_78 = arith.constant 1.000000e+00 : f32
    %254 = vector.broadcast %cst_78 : f32 to vector<2x32xf32>
    %255 = arith.addf %254, %253 : vector<2x32xf32>
    %256 = arith.divf %254, %255 : vector<2x32xf32>
    %257 = arith.mulf %248, %199 : vector<2x32xf32>
    %258 = arith.mulf %242, %250 : vector<2x32xf32>
    %259 = arith.addf %257, %258 : vector<2x32xf32>
    %260 = math.tanh %259 : vector<2x32xf32>
    %261 = arith.mulf %256, %260 : vector<2x32xf32>
    %c0_79 = arith.constant 0 : index
    %c0_80 = arith.constant 0 : index
    %262 = vector.load %arg14[%c0_79, %c0_80] : memref<64x128xf32, #tpu.memory_space<vmem>>, vector<64x128xf32>
    %c0_81 = arith.constant 0 : index
    %c0_82 = arith.constant 0 : index
    %263 = vector.load %arg15[%c0_81, %c0_82] : memref<32x128xf32, #tpu.memory_space<vmem>>, vector<32x128xf32>
    %c0_83 = arith.constant 0 : index
    %c0_84 = arith.constant 0 : index
    %264 = vector.load %arg16[%c0_83, %c0_84] : memref<1x128xf32, #tpu.memory_space<vmem>>, vector<1x128xf32>
    %c0_85 = arith.constant 0 : index
    %c0_86 = arith.constant 0 : index
    %265 = vector.load %arg17[%c0_85, %c0_86] : memref<64x128xf32, #tpu.memory_space<vmem>>, vector<64x128xf32>
    %c0_87 = arith.constant 0 : index
    %c0_88 = arith.constant 0 : index
    %266 = vector.load %arg18[%c0_87, %c0_88] : memref<32x128xf32, #tpu.memory_space<vmem>>, vector<32x128xf32>
    %c0_89 = arith.constant 0 : index
    %c0_90 = arith.constant 0 : index
    %267 = vector.load %arg19[%c0_89, %c0_90] : memref<1x128xf32, #tpu.memory_space<vmem>>, vector<1x128xf32>
    %268 = vector.extract_strided_slice %262 {offsets = [0, 0], sizes = [32, 128], strides = [1, 1]} : vector<64x128xf32> to vector<32x128xf32>
    %269 = vector.extract_strided_slice %262 {offsets = [32, 0], sizes = [32, 128], strides = [1, 1]} : vector<64x128xf32> to vector<32x128xf32>
    %270 = vector.extract_strided_slice %265 {offsets = [0, 0], sizes = [32, 128], strides = [1, 1]} : vector<64x128xf32> to vector<32x128xf32>
    %271 = vector.extract_strided_slice %265 {offsets = [32, 0], sizes = [32, 128], strides = [1, 1]} : vector<64x128xf32> to vector<32x128xf32>
    %cst_91 = arith.constant 0.000000e+00 : f32
    %272 = vector.broadcast %cst_91 : f32 to vector<2x32xf32>
    %cst_92 = arith.constant 0.000000e+00 : f32
    %273 = vector.broadcast %cst_92 : f32 to vector<2x32xf32>
    %cst_93 = arith.constant 0.000000e+00 : f32
    %274 = vector.broadcast %cst_93 : f32 to vector<2x32xf32>
    %cst_94 = arith.constant 0.000000e+00 : f32
    %275 = vector.broadcast %cst_94 : f32 to vector<2x32xf32>
    %cst_95 = arith.constant dense<0.000000e+00> : vector<2x128xf32>
    %276 = tpu.matmul %272, %263, %cst_95 {dimension_numbers = #tpu.dot_dimension_numbers<[1], [0], [0], [1], [0, 0, 1, 1], [], []>} : vector<2x32xf32>, vector<32x128xf32>, vector<2x128xf32> -> vector<2x128xf32>
    %277 = vector.broadcast %264 : vector<1x128xf32> to vector<2x128xf32>
    %278 = arith.addf %276, %277 : vector<2x128xf32>
    %cst_96 = arith.constant dense<0.000000e+00> : vector<2x128xf32>
    %279 = tpu.matmul %111, %268, %cst_96 {dimension_numbers = #tpu.dot_dimension_numbers<[1], [0], [0], [1], [0, 0, 1, 1], [], []>} : vector<2x32xf32>, vector<32x128xf32>, vector<2x128xf32> -> vector<2x128xf32>
    %280 = arith.addf %278, %279 : vector<2x128xf32>
    %cst_97 = arith.constant dense<0.000000e+00> : vector<2x128xf32>
    %281 = tpu.matmul %261, %269, %cst_97 {dimension_numbers = #tpu.dot_dimension_numbers<[1], [0], [0], [1], [0, 0, 1, 1], [], []>} : vector<2x32xf32>, vector<32x128xf32>, vector<2x128xf32> -> vector<2x128xf32>
    %282 = arith.addf %280, %281 : vector<2x128xf32>
    %283 = vector.extract_strided_slice %282 {offsets = [0, 0], sizes = [2, 32], strides = [1, 1]} : vector<2x128xf32> to vector<2x32xf32>
    %284 = arith.negf %283 : vector<2x32xf32>
    %285 = math.exp %284 : vector<2x32xf32>
    %cst_98 = arith.constant 1.000000e+00 : f32
    %286 = vector.broadcast %cst_98 : f32 to vector<2x32xf32>
    %287 = arith.addf %286, %285 : vector<2x32xf32>
    %288 = arith.divf %286, %287 : vector<2x32xf32>
    %289 = vector.extract_strided_slice %282 {offsets = [0, 32], sizes = [2, 32], strides = [1, 1]} : vector<2x128xf32> to vector<2x32xf32>
    %290 = arith.negf %289 : vector<2x32xf32>
    %291 = math.exp %290 : vector<2x32xf32>
    %cst_99 = arith.constant 1.000000e+00 : f32
    %292 = vector.broadcast %cst_99 : f32 to vector<2x32xf32>
    %293 = arith.addf %292, %291 : vector<2x32xf32>
    %294 = arith.divf %292, %293 : vector<2x32xf32>
    %295 = vector.extract_strided_slice %282 {offsets = [0, 64], sizes = [2, 32], strides = [1, 1]} : vector<2x128xf32> to vector<2x32xf32>
    %296 = math.tanh %295 : vector<2x32xf32>
    %297 = vector.extract_strided_slice %282 {offsets = [0, 96], sizes = [2, 32], strides = [1, 1]} : vector<2x128xf32> to vector<2x32xf32>
    %298 = arith.negf %297 : vector<2x32xf32>
    %299 = math.exp %298 : vector<2x32xf32>
    %cst_100 = arith.constant 1.000000e+00 : f32
    %300 = vector.broadcast %cst_100 : f32 to vector<2x32xf32>
    %301 = arith.addf %300, %299 : vector<2x32xf32>
    %302 = arith.divf %300, %301 : vector<2x32xf32>
    %303 = arith.mulf %294, %273 : vector<2x32xf32>
    %304 = arith.mulf %288, %296 : vector<2x32xf32>
    %305 = arith.addf %303, %304 : vector<2x32xf32>
    %306 = math.tanh %305 : vector<2x32xf32>
    %307 = arith.mulf %302, %306 : vector<2x32xf32>
    %cst_101 = arith.constant dense<0.000000e+00> : vector<2x128xf32>
    %308 = tpu.matmul %274, %266, %cst_101 {dimension_numbers = #tpu.dot_dimension_numbers<[1], [0], [0], [1], [0, 0, 1, 1], [], []>} : vector<2x32xf32>, vector<32x128xf32>, vector<2x128xf32> -> vector<2x128xf32>
    %309 = vector.broadcast %267 : vector<1x128xf32> to vector<2x128xf32>
    %310 = arith.addf %308, %309 : vector<2x128xf32>
    %cst_102 = arith.constant dense<0.000000e+00> : vector<2x128xf32>
    %311 = tpu.matmul %231, %270, %cst_102 {dimension_numbers = #tpu.dot_dimension_numbers<[1], [0], [0], [1], [0, 0, 1, 1], [], []>} : vector<2x32xf32>, vector<32x128xf32>, vector<2x128xf32> -> vector<2x128xf32>
    %312 = arith.addf %310, %311 : vector<2x128xf32>
    %cst_103 = arith.constant dense<0.000000e+00> : vector<2x128xf32>
    %313 = tpu.matmul %141, %271, %cst_103 {dimension_numbers = #tpu.dot_dimension_numbers<[1], [0], [0], [1], [0, 0, 1, 1], [], []>} : vector<2x32xf32>, vector<32x128xf32>, vector<2x128xf32> -> vector<2x128xf32>
    %314 = arith.addf %312, %313 : vector<2x128xf32>
    %315 = vector.extract_strided_slice %314 {offsets = [0, 0], sizes = [2, 32], strides = [1, 1]} : vector<2x128xf32> to vector<2x32xf32>
    %316 = arith.negf %315 : vector<2x32xf32>
    %317 = math.exp %316 : vector<2x32xf32>
    %cst_104 = arith.constant 1.000000e+00 : f32
    %318 = vector.broadcast %cst_104 : f32 to vector<2x32xf32>
    %319 = arith.addf %318, %317 : vector<2x32xf32>
    %320 = arith.divf %318, %319 : vector<2x32xf32>
    %321 = vector.extract_strided_slice %314 {offsets = [0, 32], sizes = [2, 32], strides = [1, 1]} : vector<2x128xf32> to vector<2x32xf32>
    %322 = arith.negf %321 : vector<2x32xf32>
    %323 = math.exp %322 : vector<2x32xf32>
    %cst_105 = arith.constant 1.000000e+00 : f32
    %324 = vector.broadcast %cst_105 : f32 to vector<2x32xf32>
    %325 = arith.addf %324, %323 : vector<2x32xf32>
    %326 = arith.divf %324, %325 : vector<2x32xf32>
    %327 = vector.extract_strided_slice %314 {offsets = [0, 64], sizes = [2, 32], strides = [1, 1]} : vector<2x128xf32> to vector<2x32xf32>
    %328 = math.tanh %327 : vector<2x32xf32>
    %329 = vector.extract_strided_slice %314 {offsets = [0, 96], sizes = [2, 32], strides = [1, 1]} : vector<2x128xf32> to vector<2x32xf32>
    %330 = arith.negf %329 : vector<2x32xf32>
    %331 = math.exp %330 : vector<2x32xf32>
    %cst_106 = arith.constant 1.000000e+00 : f32
    %332 = vector.broadcast %cst_106 : f32 to vector<2x32xf32>
    %333 = arith.addf %332, %331 : vector<2x32xf32>
    %334 = arith.divf %332, %333 : vector<2x32xf32>
    %335 = arith.mulf %326, %275 : vector<2x32xf32>
    %336 = arith.mulf %320, %328 : vector<2x32xf32>
    %337 = arith.addf %335, %336 : vector<2x32xf32>
    %338 = math.tanh %337 : vector<2x32xf32>
    %339 = arith.mulf %334, %338 : vector<2x32xf32>
    %cst_107 = arith.constant dense<0.000000e+00> : vector<2x128xf32>
    %340 = tpu.matmul %307, %263, %cst_107 {dimension_numbers = #tpu.dot_dimension_numbers<[1], [0], [0], [1], [0, 0, 1, 1], [], []>} : vector<2x32xf32>, vector<32x128xf32>, vector<2x128xf32> -> vector<2x128xf32>
    %341 = vector.broadcast %264 : vector<1x128xf32> to vector<2x128xf32>
    %342 = arith.addf %340, %341 : vector<2x128xf32>
    %cst_108 = arith.constant dense<0.000000e+00> : vector<2x128xf32>
    %343 = tpu.matmul %171, %268, %cst_108 {dimension_numbers = #tpu.dot_dimension_numbers<[1], [0], [0], [1], [0, 0, 1, 1], [], []>} : vector<2x32xf32>, vector<32x128xf32>, vector<2x128xf32> -> vector<2x128xf32>
    %344 = arith.addf %342, %343 : vector<2x128xf32>
    %cst_109 = arith.constant dense<0.000000e+00> : vector<2x128xf32>
    %345 = tpu.matmul %201, %269, %cst_109 {dimension_numbers = #tpu.dot_dimension_numbers<[1], [0], [0], [1], [0, 0, 1, 1], [], []>} : vector<2x32xf32>, vector<32x128xf32>, vector<2x128xf32> -> vector<2x128xf32>
    %346 = arith.addf %344, %345 : vector<2x128xf32>
    %347 = vector.extract_strided_slice %346 {offsets = [0, 0], sizes = [2, 32], strides = [1, 1]} : vector<2x128xf32> to vector<2x32xf32>
    %348 = arith.negf %347 : vector<2x32xf32>
    %349 = math.exp %348 : vector<2x32xf32>
    %cst_110 = arith.constant 1.000000e+00 : f32
    %350 = vector.broadcast %cst_110 : f32 to vector<2x32xf32>
    %351 = arith.addf %350, %349 : vector<2x32xf32>
    %352 = arith.divf %350, %351 : vector<2x32xf32>
    %353 = vector.extract_strided_slice %346 {offsets = [0, 32], sizes = [2, 32], strides = [1, 1]} : vector<2x128xf32> to vector<2x32xf32>
    %354 = arith.negf %353 : vector<2x32xf32>
    %355 = math.exp %354 : vector<2x32xf32>
    %cst_111 = arith.constant 1.000000e+00 : f32
    %356 = vector.broadcast %cst_111 : f32 to vector<2x32xf32>
    %357 = arith.addf %356, %355 : vector<2x32xf32>
    %358 = arith.divf %356, %357 : vector<2x32xf32>
    %359 = vector.extract_strided_slice %346 {offsets = [0, 64], sizes = [2, 32], strides = [1, 1]} : vector<2x128xf32> to vector<2x32xf32>
    %360 = math.tanh %359 : vector<2x32xf32>
    %361 = vector.extract_strided_slice %346 {offsets = [0, 96], sizes = [2, 32], strides = [1, 1]} : vector<2x128xf32> to vector<2x32xf32>
    %362 = arith.negf %361 : vector<2x32xf32>
    %363 = math.exp %362 : vector<2x32xf32>
    %cst_112 = arith.constant 1.000000e+00 : f32
    %364 = vector.broadcast %cst_112 : f32 to vector<2x32xf32>
    %365 = arith.addf %364, %363 : vector<2x32xf32>
    %366 = arith.divf %364, %365 : vector<2x32xf32>
    %367 = arith.mulf %358, %305 : vector<2x32xf32>
    %368 = arith.mulf %352, %360 : vector<2x32xf32>
    %369 = arith.addf %367, %368 : vector<2x32xf32>
    %370 = math.tanh %369 : vector<2x32xf32>
    %371 = arith.mulf %366, %370 : vector<2x32xf32>
    %cst_113 = arith.constant dense<0.000000e+00> : vector<2x128xf32>
    %372 = tpu.matmul %339, %266, %cst_113 {dimension_numbers = #tpu.dot_dimension_numbers<[1], [0], [0], [1], [0, 0, 1, 1], [], []>} : vector<2x32xf32>, vector<32x128xf32>, vector<2x128xf32> -> vector<2x128xf32>
    %373 = vector.broadcast %267 : vector<1x128xf32> to vector<2x128xf32>
    %374 = arith.addf %372, %373 : vector<2x128xf32>
    %cst_114 = arith.constant dense<0.000000e+00> : vector<2x128xf32>
    %375 = tpu.matmul %171, %270, %cst_114 {dimension_numbers = #tpu.dot_dimension_numbers<[1], [0], [0], [1], [0, 0, 1, 1], [], []>} : vector<2x32xf32>, vector<32x128xf32>, vector<2x128xf32> -> vector<2x128xf32>
    %376 = arith.addf %374, %375 : vector<2x128xf32>
    %cst_115 = arith.constant dense<0.000000e+00> : vector<2x128xf32>
    %377 = tpu.matmul %201, %271, %cst_115 {dimension_numbers = #tpu.dot_dimension_numbers<[1], [0], [0], [1], [0, 0, 1, 1], [], []>} : vector<2x32xf32>, vector<32x128xf32>, vector<2x128xf32> -> vector<2x128xf32>
    %378 = arith.addf %376, %377 : vector<2x128xf32>
    %379 = vector.extract_strided_slice %378 {offsets = [0, 0], sizes = [2, 32], strides = [1, 1]} : vector<2x128xf32> to vector<2x32xf32>
    %380 = arith.negf %379 : vector<2x32xf32>
    %381 = math.exp %380 : vector<2x32xf32>
    %cst_116 = arith.constant 1.000000e+00 : f32
    %382 = vector.broadcast %cst_116 : f32 to vector<2x32xf32>
    %383 = arith.addf %382, %381 : vector<2x32xf32>
    %384 = arith.divf %382, %383 : vector<2x32xf32>
    %385 = vector.extract_strided_slice %378 {offsets = [0, 32], sizes = [2, 32], strides = [1, 1]} : vector<2x128xf32> to vector<2x32xf32>
    %386 = arith.negf %385 : vector<2x32xf32>
    %387 = math.exp %386 : vector<2x32xf32>
    %cst_117 = arith.constant 1.000000e+00 : f32
    %388 = vector.broadcast %cst_117 : f32 to vector<2x32xf32>
    %389 = arith.addf %388, %387 : vector<2x32xf32>
    %390 = arith.divf %388, %389 : vector<2x32xf32>
    %391 = vector.extract_strided_slice %378 {offsets = [0, 64], sizes = [2, 32], strides = [1, 1]} : vector<2x128xf32> to vector<2x32xf32>
    %392 = math.tanh %391 : vector<2x32xf32>
    %393 = vector.extract_strided_slice %378 {offsets = [0, 96], sizes = [2, 32], strides = [1, 1]} : vector<2x128xf32> to vector<2x32xf32>
    %394 = arith.negf %393 : vector<2x32xf32>
    %395 = math.exp %394 : vector<2x32xf32>
    %cst_118 = arith.constant 1.000000e+00 : f32
    %396 = vector.broadcast %cst_118 : f32 to vector<2x32xf32>
    %397 = arith.addf %396, %395 : vector<2x32xf32>
    %398 = arith.divf %396, %397 : vector<2x32xf32>
    %399 = arith.mulf %390, %337 : vector<2x32xf32>
    %400 = arith.mulf %384, %392 : vector<2x32xf32>
    %401 = arith.addf %399, %400 : vector<2x32xf32>
    %402 = math.tanh %401 : vector<2x32xf32>
    %403 = arith.mulf %398, %402 : vector<2x32xf32>
    %cst_119 = arith.constant dense<0.000000e+00> : vector<2x128xf32>
    %404 = tpu.matmul %371, %263, %cst_119 {dimension_numbers = #tpu.dot_dimension_numbers<[1], [0], [0], [1], [0, 0, 1, 1], [], []>} : vector<2x32xf32>, vector<32x128xf32>, vector<2x128xf32> -> vector<2x128xf32>
    %405 = vector.broadcast %264 : vector<1x128xf32> to vector<2x128xf32>
    %406 = arith.addf %404, %405 : vector<2x128xf32>
    %cst_120 = arith.constant dense<0.000000e+00> : vector<2x128xf32>
    %407 = tpu.matmul %231, %268, %cst_120 {dimension_numbers = #tpu.dot_dimension_numbers<[1], [0], [0], [1], [0, 0, 1, 1], [], []>} : vector<2x32xf32>, vector<32x128xf32>, vector<2x128xf32> -> vector<2x128xf32>
    %408 = arith.addf %406, %407 : vector<2x128xf32>
    %cst_121 = arith.constant dense<0.000000e+00> : vector<2x128xf32>
    %409 = tpu.matmul %141, %269, %cst_121 {dimension_numbers = #tpu.dot_dimension_numbers<[1], [0], [0], [1], [0, 0, 1, 1], [], []>} : vector<2x32xf32>, vector<32x128xf32>, vector<2x128xf32> -> vector<2x128xf32>
    %410 = arith.addf %408, %409 : vector<2x128xf32>
    %411 = vector.extract_strided_slice %410 {offsets = [0, 0], sizes = [2, 32], strides = [1, 1]} : vector<2x128xf32> to vector<2x32xf32>
    %412 = arith.negf %411 : vector<2x32xf32>
    %413 = math.exp %412 : vector<2x32xf32>
    %cst_122 = arith.constant 1.000000e+00 : f32
    %414 = vector.broadcast %cst_122 : f32 to vector<2x32xf32>
    %415 = arith.addf %414, %413 : vector<2x32xf32>
    %416 = arith.divf %414, %415 : vector<2x32xf32>
    %417 = vector.extract_strided_slice %410 {offsets = [0, 32], sizes = [2, 32], strides = [1, 1]} : vector<2x128xf32> to vector<2x32xf32>
    %418 = arith.negf %417 : vector<2x32xf32>
    %419 = math.exp %418 : vector<2x32xf32>
    %cst_123 = arith.constant 1.000000e+00 : f32
    %420 = vector.broadcast %cst_123 : f32 to vector<2x32xf32>
    %421 = arith.addf %420, %419 : vector<2x32xf32>
    %422 = arith.divf %420, %421 : vector<2x32xf32>
    %423 = vector.extract_strided_slice %410 {offsets = [0, 64], sizes = [2, 32], strides = [1, 1]} : vector<2x128xf32> to vector<2x32xf32>
    %424 = math.tanh %423 : vector<2x32xf32>
    %425 = vector.extract_strided_slice %410 {offsets = [0, 96], sizes = [2, 32], strides = [1, 1]} : vector<2x128xf32> to vector<2x32xf32>
    %426 = arith.negf %425 : vector<2x32xf32>
    %427 = math.exp %426 : vector<2x32xf32>
    %cst_124 = arith.constant 1.000000e+00 : f32
    %428 = vector.broadcast %cst_124 : f32 to vector<2x32xf32>
    %429 = arith.addf %428, %427 : vector<2x32xf32>
    %430 = arith.divf %428, %429 : vector<2x32xf32>
    %431 = arith.mulf %422, %369 : vector<2x32xf32>
    %432 = arith.mulf %416, %424 : vector<2x32xf32>
    %433 = arith.addf %431, %432 : vector<2x32xf32>
    %434 = math.tanh %433 : vector<2x32xf32>
    %435 = arith.mulf %430, %434 : vector<2x32xf32>
    %cst_125 = arith.constant dense<0.000000e+00> : vector<2x128xf32>
    %436 = tpu.matmul %403, %266, %cst_125 {dimension_numbers = #tpu.dot_dimension_numbers<[1], [0], [0], [1], [0, 0, 1, 1], [], []>} : vector<2x32xf32>, vector<32x128xf32>, vector<2x128xf32> -> vector<2x128xf32>
    %437 = vector.broadcast %267 : vector<1x128xf32> to vector<2x128xf32>
    %438 = arith.addf %436, %437 : vector<2x128xf32>
    %cst_126 = arith.constant dense<0.000000e+00> : vector<2x128xf32>
    %439 = tpu.matmul %111, %270, %cst_126 {dimension_numbers = #tpu.dot_dimension_numbers<[1], [0], [0], [1], [0, 0, 1, 1], [], []>} : vector<2x32xf32>, vector<32x128xf32>, vector<2x128xf32> -> vector<2x128xf32>
    %440 = arith.addf %438, %439 : vector<2x128xf32>
    %cst_127 = arith.constant dense<0.000000e+00> : vector<2x128xf32>
    %441 = tpu.matmul %261, %271, %cst_127 {dimension_numbers = #tpu.dot_dimension_numbers<[1], [0], [0], [1], [0, 0, 1, 1], [], []>} : vector<2x32xf32>, vector<32x128xf32>, vector<2x128xf32> -> vector<2x128xf32>
    %442 = arith.addf %440, %441 : vector<2x128xf32>
    %443 = vector.extract_strided_slice %442 {offsets = [0, 0], sizes = [2, 32], strides = [1, 1]} : vector<2x128xf32> to vector<2x32xf32>
    %444 = arith.negf %443 : vector<2x32xf32>
    %445 = math.exp %444 : vector<2x32xf32>
    %cst_128 = arith.constant 1.000000e+00 : f32
    %446 = vector.broadcast %cst_128 : f32 to vector<2x32xf32>
    %447 = arith.addf %446, %445 : vector<2x32xf32>
    %448 = arith.divf %446, %447 : vector<2x32xf32>
    %449 = vector.extract_strided_slice %442 {offsets = [0, 32], sizes = [2, 32], strides = [1, 1]} : vector<2x128xf32> to vector<2x32xf32>
    %450 = arith.negf %449 : vector<2x32xf32>
    %451 = math.exp %450 : vector<2x32xf32>
    %cst_129 = arith.constant 1.000000e+00 : f32
    %452 = vector.broadcast %cst_129 : f32 to vector<2x32xf32>
    %453 = arith.addf %452, %451 : vector<2x32xf32>
    %454 = arith.divf %452, %453 : vector<2x32xf32>
    %455 = vector.extract_strided_slice %442 {offsets = [0, 64], sizes = [2, 32], strides = [1, 1]} : vector<2x128xf32> to vector<2x32xf32>
    %456 = math.tanh %455 : vector<2x32xf32>
    %457 = vector.extract_strided_slice %442 {offsets = [0, 96], sizes = [2, 32], strides = [1, 1]} : vector<2x128xf32> to vector<2x32xf32>
    %458 = arith.negf %457 : vector<2x32xf32>
    %459 = math.exp %458 : vector<2x32xf32>
    %cst_130 = arith.constant 1.000000e+00 : f32
    %460 = vector.broadcast %cst_130 : f32 to vector<2x32xf32>
    %461 = arith.addf %460, %459 : vector<2x32xf32>
    %462 = arith.divf %460, %461 : vector<2x32xf32>
    %463 = arith.mulf %454, %401 : vector<2x32xf32>
    %464 = arith.mulf %448, %456 : vector<2x32xf32>
    %465 = arith.addf %463, %464 : vector<2x32xf32>
    %466 = math.tanh %465 : vector<2x32xf32>
    %467 = arith.mulf %462, %466 : vector<2x32xf32>
    %c0_131 = arith.constant 0 : index
    %c0_132 = arith.constant 0 : index
    %468 = vector.load %arg20[%c0_131, %c0_132] : memref<128x2xf32, #tpu.memory_space<vmem>>, vector<128x2xf32>
    %c0_133 = arith.constant 0 : index
    %c0_134 = arith.constant 0 : index
    %469 = vector.load %arg21[%c0_133, %c0_134] : memref<1x2xf32, #tpu.memory_space<vmem>>, vector<1x2xf32>
    %470 = vector.extract_strided_slice %468 {offsets = [0, 0], sizes = [32, 2], strides = [1, 1]} : vector<128x2xf32> to vector<32x2xf32>
    %cst_135 = arith.constant dense<0.000000e+00> : vector<2x2xf32>
    %471 = tpu.matmul %307, %470, %cst_135 {dimension_numbers = #tpu.dot_dimension_numbers<[1], [0], [0], [1], [0, 0, 1, 1], [], []>} : vector<2x32xf32>, vector<32x2xf32>, vector<2x2xf32> -> vector<2x2xf32>
    %472 = vector.broadcast %469 : vector<1x2xf32> to vector<2x2xf32>
    %473 = arith.addf %472, %471 : vector<2x2xf32>
    %474 = vector.extract_strided_slice %468 {offsets = [32, 0], sizes = [32, 2], strides = [1, 1]} : vector<128x2xf32> to vector<32x2xf32>
    %cst_136 = arith.constant dense<0.000000e+00> : vector<2x2xf32>
    %475 = tpu.matmul %467, %474, %cst_136 {dimension_numbers = #tpu.dot_dimension_numbers<[1], [0], [0], [1], [0, 0, 1, 1], [], []>} : vector<2x32xf32>, vector<32x2xf32>, vector<2x2xf32> -> vector<2x2xf32>
    %476 = arith.addf %473, %475 : vector<2x2xf32>
    %477 = vector.extract_strided_slice %468 {offsets = [64, 0], sizes = [32, 2], strides = [1, 1]} : vector<128x2xf32> to vector<32x2xf32>
    %cst_137 = arith.constant dense<0.000000e+00> : vector<2x2xf32>
    %478 = tpu.matmul %435, %477, %cst_137 {dimension_numbers = #tpu.dot_dimension_numbers<[1], [0], [0], [1], [0, 0, 1, 1], [], []>} : vector<2x32xf32>, vector<32x2xf32>, vector<2x2xf32> -> vector<2x2xf32>
    %479 = arith.addf %476, %478 : vector<2x2xf32>
    %480 = vector.extract_strided_slice %468 {offsets = [96, 0], sizes = [32, 2], strides = [1, 1]} : vector<128x2xf32> to vector<32x2xf32>
    %cst_138 = arith.constant dense<0.000000e+00> : vector<2x2xf32>
    %481 = tpu.matmul %339, %480, %cst_138 {dimension_numbers = #tpu.dot_dimension_numbers<[1], [0], [0], [1], [0, 0, 1, 1], [], []>} : vector<2x32xf32>, vector<32x2xf32>, vector<2x2xf32> -> vector<2x2xf32>
    %482 = arith.addf %479, %481 : vector<2x2xf32>
    %c0_139 = arith.constant 0 : index
    %c0_140 = arith.constant 0 : index
    %483 = vector.load %arg22[%c0_139, %c0_140] : memref<2x2xf32, #tpu.memory_space<vmem>>, vector<2x2xf32>
    tpu.vector_store %arg22[%c0_139, %c0_140], %482 {strides = array<i32>} : memref<2x2xf32, #tpu.memory_space<vmem>>, vector<2x2xf32>,
    return
  }
}

</mosaic_0001>

<llo_original>
// kernel: tpu_custom_call.1
$region0: #{tpu_custom_call.1}
  #allocation0 [shape = 'u32[]', space=smem, size = 0x4, offset = 0x4, fixed_abs, tag = 'smem constant byte address 0x4 - core index']
  #allocation1 [shape = 'u32[144,128]{1,0:T(1,128)}', space=vmem, size = 0x12000, scoped, tag = 'internal scratch']
  %s0 = inlined_call_operand.vmem [shape: s32[32,1], index: 0, kind: input, shape index: {}]
  %s1 = inlined_call_operand.vmem [shape: f32[50,16], index: 1, kind: input, shape index: {}]
  %s2 = inlined_call_operand.vmem [shape: f32[32,8], index: 2, kind: input, shape index: {}]
  %s3 = inlined_call_operand.vmem [shape: f32[1,8], index: 3, kind: input, shape index: {}]
  %s4 = inlined_call_operand.vmem [shape: f32[48,8], index: 4, kind: input, shape index: {}]
  %s5 = inlined_call_operand.vmem [shape: f32[1,8], index: 5, kind: input, shape index: {}]
  %s6 = inlined_call_operand.vmem [shape: f32[64,8], index: 6, kind: input, shape index: {}]
  %s7 = inlined_call_operand.vmem [shape: f32[1,8], index: 7, kind: input, shape index: {}]
  %s8 = inlined_call_operand.vmem [shape: f32[8,128], index: 8, kind: input, shape index: {}]
  %s9 = inlined_call_operand.vmem [shape: f32[32,128], index: 9, kind: input, shape index: {}]
  %s10 = inlined_call_operand.vmem [shape: f32[1,128], index: 10, kind: input, shape index: {}]
  %s11 = inlined_call_operand.vmem [shape: f32[8,128], index: 11, kind: input, shape index: {}]
  %s12 = inlined_call_operand.vmem [shape: f32[32,128], index: 12, kind: input, shape index: {}]
  %s13 = inlined_call_operand.vmem [shape: f32[1,128], index: 13, kind: input, shape index: {}]
  %s14 = inlined_call_operand.vmem [shape: f32[64,128], index: 14, kind: input, shape index: {}]
  %s15 = inlined_call_operand.vmem [shape: f32[32,128], index: 15, kind: input, shape index: {}]
  %s16 = inlined_call_operand.vmem [shape: f32[1,128], index: 16, kind: input, shape index: {}]
  %s17 = inlined_call_operand.vmem [shape: f32[64,128], index: 17, kind: input, shape index: {}]
  %s18 = inlined_call_operand.vmem [shape: f32[32,128], index: 18, kind: input, shape index: {}]
  %s19 = inlined_call_operand.vmem [shape: f32[1,128], index: 19, kind: input, shape index: {}]
  %s20 = inlined_call_operand.vmem [shape: f32[128,2], index: 20, kind: input, shape index: {}]
  %s21 = inlined_call_operand.vmem [shape: f32[1,2], index: 21, kind: input, shape index: {}]
  %s22 = inlined_call_operand.hbm [shape: f32[2,2], index: 22, kind: output, shape index: {}]
  %s23 = sld [smem:[#allocation0]]
  $region98: #{tpu_custom_call.1} parent=0
    _
  %s25 = ssub.s32 1, %s23
  %s26 = scalar_select 0, %s25, %s23
  $region1: #{tpu_custom_call.1} parent=0
    #allocation2 [shape = 'u8[1024]{0}', space=vmem, size = 0x400, scoped, tag = 'output window, operand 0, single buffered']
    #allocation3 [shape = 's32[1]{0}', space=sflag, size = 0x4, scoped, tag = 'scoped memory for tpu_custom_call.1']
    %27 = vsyncpa [#allocation3], 0
    // Predicated region
    $region2: #{tpu_custom_call.1} parent=1 // pred_check
      _
    $region3: #{tpu_custom_call.1} parent=1 // pred_check_branch
      %29 = sbr.rel (0) target = $region5
    $region4: #{tpu_custom_call.1} parent=1 // pred_region
      _
    $region5: #{tpu_custom_call.1} parent=1 // pred_fallthru
      _
    // Predicated region
    $region6: #{tpu_custom_call.1} parent=1 // pred_check
      _
    $region7: #{tpu_custom_call.1} parent=1 // pred_check_branch
      %31 = sbr.rel (0) target = $region9
    $region8: #{tpu_custom_call.1} parent=1 // pred_region
      _
    $region9: #{tpu_custom_call.1} parent=1 // pred_fallthru
      _
    // Predicated region
    $region10: #{tpu_custom_call.1} parent=1 // pred_check
      _
    $region11: #{tpu_custom_call.1} parent=1 // pred_check_branch
      %33 = sbr.rel (0) target = $region13
    $region12: #{tpu_custom_call.1} parent=1 // pred_region
      _
    $region13: #{tpu_custom_call.1} parent=1 // pred_fallthru
      _
    // Predicated region
    $region14: #{tpu_custom_call.1} parent=1 // pred_check
      _
    $region15: #{tpu_custom_call.1} parent=1 // pred_check_branch
      %35 = sbr.rel (0) target = $region17
    $region16: #{tpu_custom_call.1} parent=1 // pred_region
      _
    $region17: #{tpu_custom_call.1} parent=1 // pred_fallthru
      _
    // Predicated region
    $region18: #{tpu_custom_call.1} parent=1 // pred_check
      _
    $region19: #{tpu_custom_call.1} parent=1 // pred_check_branch
      %37 = sbr.rel (0) target = $region21
    $region20: #{tpu_custom_call.1} parent=1 // pred_region
      _
    $region21: #{tpu_custom_call.1} parent=1 // pred_fallthru
      _
    // Predicated region
    $region22: #{tpu_custom_call.1} parent=1 // pred_check
      _
    $region23: #{tpu_custom_call.1} parent=1 // pred_check_branch
      %39 = sbr.rel (0) target = $region25
    $region24: #{tpu_custom_call.1} parent=1 // pred_region
      _
    $region25: #{tpu_custom_call.1} parent=1 // pred_fallthru
      _
    // Predicated region
    $region26: #{tpu_custom_call.1} parent=1 // pred_check
      _
    $region27: #{tpu_custom_call.1} parent=1 // pred_check_branch
      %41 = sbr.rel (0) target = $region29
    $region28: #{tpu_custom_call.1} parent=1 // pred_region
      _
    $region29: #{tpu_custom_call.1} parent=1 // pred_fallthru
      _
    // Predicated region
    $region30: #{tpu_custom_call.1} parent=1 // pred_check
      _
    $region31: #{tpu_custom_call.1} parent=1 // pred_check_branch
      %43 = sbr.rel (0) target = $region33
    $region32: #{tpu_custom_call.1} parent=1 // pred_region
      _
    $region33: #{tpu_custom_call.1} parent=1 // pred_fallthru
      _
    // Predicated region
    $region34: #{tpu_custom_call.1} parent=1 // pred_check
      _
    $region35: #{tpu_custom_call.1} parent=1 // pred_check_branch
      %45 = sbr.rel (0) target = $region37
    $region36: #{tpu_custom_call.1} parent=1 // pred_region
      _
    $region37: #{tpu_custom_call.1} parent=1 // pred_fallthru
      _
    // Predicated region
    $region38: #{tpu_custom_call.1} parent=1 // pred_check
      _
    $region39: #{tpu_custom_call.1} parent=1 // pred_check_branch
      %47 = sbr.rel (0) target = $region41
    $region40: #{tpu_custom_call.1} parent=1 // pred_region
      _
    $region41: #{tpu_custom_call.1} parent=1 // pred_fallthru
      _
    // Predicated region
    $region42: #{tpu_custom_call.1} parent=1 // pred_check
      _
    $region43: #{tpu_custom_call.1} parent=1 // pred_check_branch
      %49 = sbr.rel (0) target = $region45
    $region44: #{tpu_custom_call.1} parent=1 // pred_region
      _
    $region45: #{tpu_custom_call.1} parent=1 // pred_fallthru
      _
    // Predicated region
    $region46: #{tpu_custom_call.1} parent=1 // pred_check
      _
    $region47: #{tpu_custom_call.1} parent=1 // pred_check_branch
      %51 = sbr.rel (0) target = $region49
    $region48: #{tpu_custom_call.1} parent=1 // pred_region
      _
    $region49: #{tpu_custom_call.1} parent=1 // pred_fallthru
      _
    // Predicated region
    $region50: #{tpu_custom_call.1} parent=1 // pred_check
      _
    $region51: #{tpu_custom_call.1} parent=1 // pred_check_branch
      %53 = sbr.rel (0) target = $region53
    $region52: #{tpu_custom_call.1} parent=1 // pred_region
      _
    $region53: #{tpu_custom_call.1} parent=1 // pred_fallthru
      _
    // Predicated region
    $region54: #{tpu_custom_call.1} parent=1 // pred_check
      _
    $region55: #{tpu_custom_call.1} parent=1 // pred_check_branch
      %55 = sbr.rel (0) target = $region57
    $region56: #{tpu_custom_call.1} parent=1 // pred_region
      _
    $region57: #{tpu_custom_call.1} parent=1 // pred_fallthru
      _
    // Predicated region
    $region58: #{tpu_custom_call.1} parent=1 // pred_check
      _
    $region59: #{tpu_custom_call.1} parent=1 // pred_check_branch
      %57 = sbr.rel (0) target = $region61
    $region60: #{tpu_custom_call.1} parent=1 // pred_region
      _
    $region61: #{tpu_custom_call.1} parent=1 // pred_fallthru
      _
    // Predicated region
    $region62: #{tpu_custom_call.1} parent=1 // pred_check
      _
    $region63: #{tpu_custom_call.1} parent=1 // pred_check_branch
      %59 = sbr.rel (0) target = $region65
    $region64: #{tpu_custom_call.1} parent=1 // pred_region
      _
    $region65: #{tpu_custom_call.1} parent=1 // pred_fallthru
      _
    // Predicated region
    $region66: #{tpu_custom_call.1} parent=1 // pred_check
      _
    $region67: #{tpu_custom_call.1} parent=1 // pred_check_branch
      %61 = sbr.rel (0) target = $region69
    $region68: #{tpu_custom_call.1} parent=1 // pred_region
      _
    $region69: #{tpu_custom_call.1} parent=1 // pred_fallthru
      _
    // Predicated region
    $region70: #{tpu_custom_call.1} parent=1 // pred_check
      _
    $region71: #{tpu_custom_call.1} parent=1 // pred_check_branch
      %63 = sbr.rel (0) target = $region73
    $region72: #{tpu_custom_call.1} parent=1 // pred_region
      _
    $region73: #{tpu_custom_call.1} parent=1 // pred_fallthru
      _
    // Predicated region
    $region74: #{tpu_custom_call.1} parent=1 // pred_check
      _
    $region75: #{tpu_custom_call.1} parent=1 // pred_check_branch
      %65 = sbr.rel (0) target = $region77
    $region76: #{tpu_custom_call.1} parent=1 // pred_region
      _
    $region77: #{tpu_custom_call.1} parent=1 // pred_fallthru
      _
    // Predicated region
    $region78: #{tpu_custom_call.1} parent=1 // pred_check
      _
    $region79: #{tpu_custom_call.1} parent=1 // pred_check_branch
      %67 = sbr.rel (0) target = $region81
    $region80: #{tpu_custom_call.1} parent=1 // pred_region
      _
    $region81: #{tpu_custom_call.1} parent=1 // pred_fallthru
      _
    // Predicated region
    $region82: #{tpu_custom_call.1} parent=1 // pred_check
      _
    $region83: #{tpu_custom_call.1} parent=1 // pred_check_branch
      %69 = sbr.rel (0) target = $region85
    $region84: #{tpu_custom_call.1} parent=1 // pred_region
      _
    $region85: #{tpu_custom_call.1} parent=1 // pred_fallthru
      _
    // Predicated region
    $region86: #{tpu_custom_call.1} parent=1 // pred_check
      _
    $region87: #{tpu_custom_call.1} parent=1 // pred_check_branch
      %71 = sbr.rel (0) target = $region89
    $region88: #{tpu_custom_call.1} parent=1 // pred_region
      _
    $region89: #{tpu_custom_call.1} parent=1 // pred_fallthru
      _
    %v72 = vld [vmem:[%s0] sm:$0xff]
    %v73 = vld [vmem:[%s0 + $0x8] sm:$0xff]
    %v74 = vld [vmem:[%s0 + $0x10] sm:$0xff]
    %v75 = vld [vmem:[%s0 + $0x18] sm:$0xff]
    %v76 = vlaneseq
    %v77 = vand.u32 %v76, 127
    %78 = vset.pattern.permute.xlu0 0
    %79 = vperm.xlu0 %78, %v72
    %v80 = vpop.permute.xlu0 %79
    %81 = vset.pattern.permute.xlu0 0
    %82 = vperm.xlu0 %81, %v73
    %v83 = vpop.permute.xlu0 %82
    %84 = vset.pattern.permute.xlu0 0
    %85 = vperm.xlu0 %84, %v74
    %v86 = vpop.permute.xlu0 %85
    %87 = vset.pattern.permute.xlu0 0
    %88 = vperm.xlu0 %87, %v75
    %v89 = vpop.permute.xlu0 %88
    %vm90 = vcmp.eq.s32.totalorder %v80, %v77
    %vm91 = vcmp.eq.s32.totalorder %v83, %v77
    %vm92 = vcmp.eq.s32.totalorder %v86, %v77
    %vm93 = vcmp.eq.s32.totalorder %v89, %v77
    %v94 = vsel %vm90, 1, 0
    %v95 = vsel %vm91, 1, 0
    %v96 = vsel %vm92, 1, 0
    %v97 = vsel %vm93, 1, 0
    %v98 = vcvt.s32.f32 %v94
    %v99 = vcvt.s32.f32 %v95
    %v100 = vcvt.s32.f32 %v96
    %v101 = vcvt.s32.f32 %v97
    %v102 = vld [vmem:[%s1] sm:$0xff]
    %v103 = vld [vmem:[%s1 + $0x8] sm:$0xff]
    %v104 = vld [vmem:[%s1 + $0x10] sm:$0xff]
    %v105 = vld [vmem:[%s1 + $0x18] sm:$0xff]
    %v106 = vld [vmem:[%s1 + $0x20] sm:$0xff]
    %v107 = vld [vmem:[%s1 + $0x28] sm:$0xff]
    %v108 = vld [vmem:[%s1 + $0x30] sm:$0x3]
    %vm109 = vcmask 408576
    %v111 = vsel %vm109, %v98, 0
    %v114 = vsel %vm109, %v99, 0
    %v117 = vsel %vm109, %v100, 0
    %v120 = vsel %vm109, %v101, 0
    %vm122 = vcmask 1041408
    %v124 = vsel %vm122, %v108, 0
    %126 = vmatprep.subr.mxu0 0.0
    %127 = vmatpush1.msra.mxu0 %v102
    %128 = vmatprep.subr.mxu0 0.0
    %129 = vmatpush1.msra.mxu0 %v103
    %130 = vmatprep.subr.mxu0 0.0
    %131 = vmatpush1.msra.mxu0 %v104
    %132 = vmatprep.subr.mxu0 0.0
    %133 = vmatpush1.msra.mxu0 %v105
    %134 = vmatprep.subr.mxu0 0.0
    %135 = vmatpush1.msra.mxu0 %v106
    %136 = vmatprep.subr.mxu0 0.0
    %137 = vmatpush1.msra.mxu0 %v107
    %138 = vmatprep.subr.mxu0 0.0
    %139 = vmatpush1.msra.mxu0 %v124
    %140 = vmatprep.subr.mxu0 0.0
    %141 = vmatpush1.msra.mxu0 0.0
    %142 = vmatprep.subr.mxu0 0.0
    %143 = vmatpush1.msra.mxu0 0.0
    %144 = vmatprep.subr.mxu0 0.0
    %145 = vmatpush1.msra.mxu0 0.0
    %146 = vmatprep.subr.mxu0 0.0
    %147 = vmatpush1.msra.mxu0 0.0
    %148 = vmatprep.subr.mxu0 0.0
    %149 = vmatpush1.msra.mxu0 0.0
    %150 = vmatprep.subr.mxu0 0.0
    %151 = vmatpush1.msra.mxu0 0.0
    %152 = vmatprep.subr.mxu0 0.0
    %153 = vmatpush1.msra.mxu0 0.0
    %154 = vmatprep.subr.mxu0 0.0
    %155 = vmatpush1.msra.mxu0 0.0
    %156 = vmatprep.subr.mxu0 0.0
    %157 = vmatpush1.msra.mxu0 0.0
    %158 = vmatprep.subr.mxu0 0.0
    %159 = vmatpush1.msra.mxu0 0.0
    %160 = vmatprep.subr.mxu0 0.0
    %161 = vmatpush1.msra.mxu0 0.0
    %162 = vmatprep.subr.mxu0 0.0
    %163 = vmatpush1.msra.mxu0 0.0
    %164 = vmatprep.subr.mxu0 0.0
    %165 = vmatpush1.msra.mxu0 0.0
    %166 = vmatprep.subr.mxu0 0.0
    %167 = vmatpush1.msra.mxu0 0.0
    %168 = vmatprep.subr.mxu0 0.0
    %169 = vmatpush1.msra.mxu0 0.0
    %170 = vmatprep.subr.mxu0 0.0
    %171 = vmatpush1.msra.mxu0 0.0
    %172 = vmatprep.subr.mxu0 0.0
    %173 = vmatpush1.msra.mxu0 0.0
    %174 = vmatprep.subr.mxu0 0.0
    %175 = vmatpush1.msra.mxu0 0.0
    %176 = vmatprep.subr.mxu0 0.0
    %177 = vmatpush1.msra.mxu0 0.0
    %178 = vmatprep.subr.mxu0 0.0
    %179 = vmatpush1.msra.mxu0 0.0
    %180 = vmatprep.subr.mxu0 0.0
    %181 = vmatpush1.msra.mxu0 0.0
    %182 = vmatprep.subr.mxu0 0.0
    %183 = vmatpush1.msra.mxu0 0.0
    %184 = vmatprep.subr.mxu0 0.0
    %185 = vmatpush1.msra.mxu0 0.0
    %186 = vmatprep.subr.mxu0 0.0
    %187 = vmatpush1.msra.mxu0 0.0
    %188 = vmatprep.subr.mxu0 0.0
    %189 = vmatpush1.msra.mxu0 0.0
    %190 = vmatprep.mubr.f32.mxu0 0.0
    %191 = vmatmul.mubr.f32.gmra.mrb[0].mxu0 %v111
    %v192 = vpop.f32.mrb[0].mxu0
    %v193 = vadd.f32 0.0, %v192
    %v194 = vpop.f32.mrb[0].mxu0
    %195 = vmatprep.mubr.f32.mxu0 0.0
    %196 = vmatmul.mubr.f32.gmra.mrb[0].mxu0 %v114
    %v197 = vpop.f32.mrb[0].mxu0
    %v198 = vadd.f32 0.0, %v197
    %v199 = vpop.f32.mrb[0].mxu0
    %200 = vmatprep.mubr.f32.mxu0 0.0
    %201 = vmatmul.mubr.f32.gmra.mrb[0].mxu0 %v117
    %v202 = vpop.f32.mrb[0].mxu0
    %v203 = vadd.f32 0.0, %v202
    %v204 = vpop.f32.mrb[0].mxu0
    %205 = vmatprep.mubr.f32.mxu0 0.0
    %206 = vmatmul.mubr.f32.gmra.mrb[0].mxu0 %v120
    %v207 = vpop.f32.mrb[0].mxu0
    %v208 = vadd.f32 0.0, %v207
    %v209 = vpop.f32.mrb[0].mxu0
    %210 = vdwg.mxu0
    %v211 = vld [vmem:[%s2] sm:$0xff]
    %v212 = vld [vmem:[%s2 + $0x8] sm:$0xff]
    %v213 = vld [vmem:[%s2 + $0x10] sm:$0xff]
    %v214 = vld [vmem:[%s2 + $0x18] sm:$0xff]
    %v219 = vcombine.high %v193, %v193
    %v221 = vunpack.c.l.s4 1966171168
    %v222 = vunpack.c.0.s8 %v221
    %v223 = vlaneseq
    %v224 = vshrl.u32 %v223, 7
    %v225 = vsub.s32 %v222, %v224
    %v226 = vrot.slane %v193, %v225
    %v228 = vunpack.c.l.s4 1966171168
    %v229 = vunpack.c.0.s8 %v228
    %v230 = vlaneseq
    %v231 = vshrl.u32 %v230, 7
    %v232 = vsub.s32 %v229, %v231
    %v233 = vrot.slane %v219, %v232
    %v234 = vcombine.high %v226, %v226
    %v235 = vcombine.high %v233, %v233
    %v237 = vunpack.c.l.s4 1966171168
    %v238 = vunpack.c.0.s8 %v237
    %v239 = vlaneseq
    %v240 = vshrl.u32 %v239, 7
    %v241 = vsub.s32 %v238, %v240
    %v242 = vrot.slane %v226, %v241
    %v244 = vunpack.c.l.s4 1966171168
    %v245 = vunpack.c.0.s8 %v244
    %v246 = vlaneseq
    %v247 = vshrl.u32 %v246, 7
    %v248 = vsub.s32 %v245, %v247
    %v249 = vrot.slane %v233, %v248
    %v251 = vunpack.c.l.s4 1966171168
    %v252 = vunpack.c.0.s8 %v251
    %v253 = vlaneseq
    %v254 = vshrl.u32 %v253, 7
    %v255 = vsub.s32 %v252, %v254
    %v256 = vrot.slane %v234, %v255
    %v258 = vunpack.c.l.s4 1966171168
    %v259 = vunpack.c.0.s8 %v258
    %v260 = vlaneseq
    %v261 = vshrl.u32 %v260, 7
    %v262 = vsub.s32 %v259, %v261
    %v263 = vrot.slane %v235, %v262
    %v264 = vcombine.high %v242, %v242
    %v265 = vcombine.high %v249, %v249
    %v266 = vcombine.high %v256, %v256
    %v267 = vcombine.high %v263, %v263
    %v268 = vcombine.high %v198, %v198
    %v270 = vunpack.c.l.s4 1966171168
    %v271 = vunpack.c.0.s8 %v270
    %v272 = vlaneseq
    %v273 = vshrl.u32 %v272, 7
    %v274 = vsub.s32 %v271, %v273
    %v275 = vrot.slane %v198, %v274
    %v277 = vunpack.c.l.s4 1966171168
    %v278 = vunpack.c.0.s8 %v277
    %v279 = vlaneseq
    %v280 = vshrl.u32 %v279, 7
    %v281 = vsub.s32 %v278, %v280
    %v282 = vrot.slane %v268, %v281
    %v283 = vcombine.high %v275, %v275
    %v284 = vcombine.high %v282, %v282
    %v286 = vunpack.c.l.s4 1966171168
    %v287 = vunpack.c.0.s8 %v286
    %v288 = vlaneseq
    %v289 = vshrl.u32 %v288, 7
    %v290 = vsub.s32 %v287, %v289
    %v291 = vrot.slane %v275, %v290
    %v293 = vunpack.c.l.s4 1966171168
    %v294 = vunpack.c.0.s8 %v293
    %v295 = vlaneseq
    %v296 = vshrl.u32 %v295, 7
    %v297 = vsub.s32 %v294, %v296
    %v298 = vrot.slane %v282, %v297
    %v300 = vunpack.c.l.s4 1966171168
    %v301 = vunpack.c.0.s8 %v300
    %v302 = vlaneseq
    %v303 = vshrl.u32 %v302, 7
    %v304 = vsub.s32 %v301, %v303
    %v305 = vrot.slane %v283, %v304
    %v307 = vunpack.c.l.s4 1966171168
    %v308 = vunpack.c.0.s8 %v307
    %v309 = vlaneseq
    %v310 = vshrl.u32 %v309, 7
    %v311 = vsub.s32 %v308, %v310
    %v312 = vrot.slane %v284, %v311
    %v313 = vcombine.high %v291, %v291
    %v314 = vcombine.high %v298, %v298
    %v315 = vcombine.high %v305, %v305
    %v316 = vcombine.high %v312, %v312
    %v317 = vcombine.high %v203, %v203
    %v319 = vunpack.c.l.s4 1966171168
    %v320 = vunpack.c.0.s8 %v319
    %v321 = vlaneseq
    %v322 = vshrl.u32 %v321, 7
    %v323 = vsub.s32 %v320, %v322
    %v324 = vrot.slane %v203, %v323
    %v326 = vunpack.c.l.s4 1966171168
    %v327 = vunpack.c.0.s8 %v326
    %v328 = vlaneseq
    %v329 = vshrl.u32 %v328, 7
    %v330 = vsub.s32 %v327, %v329
    %v331 = vrot.slane %v317, %v330
    %v332 = vcombine.high %v324, %v324
    %v333 = vcombine.high %v331, %v331
    %v335 = vunpack.c.l.s4 1966171168
    %v336 = vunpack.c.0.s8 %v335
    %v337 = vlaneseq
    %v338 = vshrl.u32 %v337, 7
    %v339 = vsub.s32 %v336, %v338
    %v340 = vrot.slane %v324, %v339
    %v342 = vunpack.c.l.s4 1966171168
    %v343 = vunpack.c.0.s8 %v342
    %v344 = vlaneseq
    %v345 = vshrl.u32 %v344, 7
    %v346 = vsub.s32 %v343, %v345
    %v347 = vrot.slane %v331, %v346
    %v349 = vunpack.c.l.s4 1966171168
    %v350 = vunpack.c.0.s8 %v349
    %v351 = vlaneseq
    %v352 = vshrl.u32 %v351, 7
    %v353 = vsub.s32 %v350, %v352
    %v354 = vrot.slane %v332, %v353
    %v356 = vunpack.c.l.s4 1966171168
    %v357 = vunpack.c.0.s8 %v356
    %v358 = vlaneseq
    %v359 = vshrl.u32 %v358, 7
    %v360 = vsub.s32 %v357, %v359
    %v361 = vrot.slane %v333, %v360
    %v362 = vcombine.high %v340, %v340
    %v363 = vcombine.high %v347, %v347
    %v364 = vcombine.high %v354, %v354
    %v365 = vcombine.high %v361, %v361
    %v366 = vcombine.high %v208, %v208
    %v368 = vunpack.c.l.s4 1966171168
    %v369 = vunpack.c.0.s8 %v368
    %v370 = vlaneseq
    %v371 = vshrl.u32 %v370, 7
    %v372 = vsub.s32 %v369, %v371
    %v373 = vrot.slane %v208, %v372
    %v375 = vunpack.c.l.s4 1966171168
    %v376 = vunpack.c.0.s8 %v375
    %v377 = vlaneseq
    %v378 = vshrl.u32 %v377, 7
    %v379 = vsub.s32 %v376, %v378
    %v380 = vrot.slane %v366, %v379
    %v381 = vcombine.high %v373, %v373
    %v382 = vcombine.high %v380, %v380
    %v384 = vunpack.c.l.s4 1966171168
    %v385 = vunpack.c.0.s8 %v384
    %v386 = vlaneseq
    %v387 = vshrl.u32 %v386, 7
    %v388 = vsub.s32 %v385, %v387
    %v389 = vrot.slane %v373, %v388
    %v391 = vunpack.c.l.s4 1966171168
    %v392 = vunpack.c.0.s8 %v391
    %v393 = vlaneseq
    %v394 = vshrl.u32 %v393, 7
    %v395 = vsub.s32 %v392, %v394
    %v396 = vrot.slane %v380, %v395
    %v398 = vunpack.c.l.s4 1966171168
    %v399 = vunpack.c.0.s8 %v398
    %v400 = vlaneseq
    %v401 = vshrl.u32 %v400, 7
    %v402 = vsub.s32 %v399, %v401
    %v403 = vrot.slane %v381, %v402
    %v405 = vunpack.c.l.s4 1966171168
    %v406 = vunpack.c.0.s8 %v405
    %v407 = vlaneseq
    %v408 = vshrl.u32 %v407, 7
    %v409 = vsub.s32 %v406, %v408
    %v410 = vrot.slane %v382, %v409
    %v411 = vcombine.high %v389, %v389
    %v412 = vcombine.high %v396, %v396
    %v413 = vcombine.high %v403, %v403
    %v414 = vcombine.high %v410, %v410
    %v415 = vcombine.low %v256, %v264
    %v416 = vcombine.low %v266, %v249
    %v417 = vcombine.low %v263, %v265
    %v418 = vcombine.low %v267, %v291
    %v420 = vunpack.c.l.s4 1966171168
    %v421 = vunpack.c.0.s8 %v420
    %v422 = vlaneseq
    %v423 = vshrl.u32 %v422, 7
    %v424 = vsub.s32 %v421, %v423
    %v425 = vrot.slane %v415, %v424
    %v427 = vunpack.c.l.s4 1966171168
    %v428 = vunpack.c.0.s8 %v427
    %v429 = vlaneseq
    %v430 = vshrl.u32 %v429, 7
    %v431 = vsub.s32 %v428, %v430
    %v432 = vrot.slane %v416, %v431
    %v434 = vunpack.c.l.s4 1966171168
    %v435 = vunpack.c.0.s8 %v434
    %v436 = vlaneseq
    %v437 = vshrl.u32 %v436, 7
    %v438 = vsub.s32 %v435, %v437
    %v439 = vrot.slane %v417, %v438
    %v441 = vunpack.c.l.s4 1966171168
    %v442 = vunpack.c.0.s8 %v441
    %v443 = vlaneseq
    %v444 = vshrl.u32 %v443, 7
    %v445 = vsub.s32 %v442, %v444
    %v446 = vrot.slane %v418, %v445
    %v447 = vcombine.low %v425, %v432
    %v448 = vcombine.low %v439, %v446
    %v450 = vunpack.c.l.s4 1966171168
    %v451 = vunpack.c.0.s8 %v450
    %v452 = vlaneseq
    %v453 = vshrl.u32 %v452, 7
    %v454 = vsub.s32 %v451, %v453
    %v455 = vrot.slane %v447, %v454
    %v457 = vunpack.c.l.s4 1966171168
    %v458 = vunpack.c.0.s8 %v457
    %v459 = vlaneseq
    %v460 = vshrl.u32 %v459, 7
    %v461 = vsub.s32 %v458, %v460
    %v462 = vrot.slane %v448, %v461
    %v463 = vcombine.low %v455, %v462
    %v464 = vcombine.low %v305, %v313
    %v465 = vcombine.low %v315, %v298
    %v466 = vcombine.low %v312, %v314
    %v467 = vcombine.low %v316, %v354
    %v469 = vunpack.c.l.s4 1966171168
    %v470 = vunpack.c.0.s8 %v469
    %v471 = vlaneseq
    %v472 = vshrl.u32 %v471, 7
    %v473 = vsub.s32 %v470, %v472
    %v474 = vrot.slane %v464, %v473
    %v476 = vunpack.c.l.s4 1966171168
    %v477 = vunpack.c.0.s8 %v476
    %v478 = vlaneseq
    %v479 = vshrl.u32 %v478, 7
    %v480 = vsub.s32 %v477, %v479
    %v481 = vrot.slane %v465, %v480
    %v483 = vunpack.c.l.s4 1966171168
    %v484 = vunpack.c.0.s8 %v483
    %v485 = vlaneseq
    %v486 = vshrl.u32 %v485, 7
    %v487 = vsub.s32 %v484, %v486
    %v488 = vrot.slane %v466, %v487
    %v490 = vunpack.c.l.s4 1966171168
    %v491 = vunpack.c.0.s8 %v490
    %v492 = vlaneseq
    %v493 = vshrl.u32 %v492, 7
    %v494 = vsub.s32 %v491, %v493
    %v495 = vrot.slane %v467, %v494
    %v496 = vcombine.low %v474, %v481
    %v497 = vcombine.low %v488, %v495
    %v499 = vunpack.c.l.s4 1966171168
    %v500 = vunpack.c.0.s8 %v499
    %v501 = vlaneseq
    %v502 = vshrl.u32 %v501, 7
    %v503 = vsub.s32 %v500, %v502
    %v504 = vrot.slane %v496, %v503
    %v506 = vunpack.c.l.s4 1966171168
    %v507 = vunpack.c.0.s8 %v506
    %v508 = vlaneseq
    %v509 = vshrl.u32 %v508, 7
    %v510 = vsub.s32 %v507, %v509
    %v511 = vrot.slane %v497, %v510
    %v512 = vcombine.low %v504, %v511
    %v513 = vcombine.low %v362, %v364
    %v514 = vcombine.low %v347, %v361
    %v515 = vcombine.low %v363, %v365
    %v516 = vcombine.low %v389, %v403
    %v518 = vunpack.c.l.s4 1966171168
    %v519 = vunpack.c.0.s8 %v518
    %v520 = vlaneseq
    %v521 = vshrl.u32 %v520, 7
    %v522 = vsub.s32 %v519, %v521
    %v523 = vrot.slane %v513, %v522
    %v525 = vunpack.c.l.s4 1966171168
    %v526 = vunpack.c.0.s8 %v525
    %v527 = vlaneseq
    %v528 = vshrl.u32 %v527, 7
    %v529 = vsub.s32 %v526, %v528
    %v530 = vrot.slane %v514, %v529
    %v532 = vunpack.c.l.s4 1966171168
    %v533 = vunpack.c.0.s8 %v532
    %v534 = vlaneseq
    %v535 = vshrl.u32 %v534, 7
    %v536 = vsub.s32 %v533, %v535
    %v537 = vrot.slane %v515, %v536
    %v539 = vunpack.c.l.s4 1966171168
    %v540 = vunpack.c.0.s8 %v539
    %v541 = vlaneseq
    %v542 = vshrl.u32 %v541, 7
    %v543 = vsub.s32 %v540, %v542
    %v544 = vrot.slane %v516, %v543
    %v545 = vcombine.low %v523, %v530
    %v546 = vcombine.low %v537, %v544
    %v548 = vunpack.c.l.s4 1966171168
    %v549 = vunpack.c.0.s8 %v548
    %v550 = vlaneseq
    %v551 = vshrl.u32 %v550, 7
    %v552 = vsub.s32 %v549, %v551
    %v553 = vrot.slane %v545, %v552
    %v555 = vunpack.c.l.s4 1966171168
    %v556 = vunpack.c.0.s8 %v555
    %v557 = vlaneseq
    %v558 = vshrl.u32 %v557, 7
    %v559 = vsub.s32 %v556, %v558
    %v560 = vrot.slane %v546, %v559
    %v561 = vcombine.low %v553, %v560
    %v562 = vcombine.low %v411, %v413
    %v563 = vcombine.low %v396, %v410
    %v564 = vcombine.low %v412, %v414
    %v566 = vunpack.c.l.s4 1966171168
    %v567 = vunpack.c.0.s8 %v566
    %v568 = vlaneseq
    %v569 = vshrl.u32 %v568, 7
    %v570 = vsub.s32 %v567, %v569
    %v571 = vrot.slane %v562, %v570
    %v573 = vunpack.c.l.s4 1966171168
    %v574 = vunpack.c.0.s8 %v573
    %v575 = vlaneseq
    %v576 = vshrl.u32 %v575, 7
    %v577 = vsub.s32 %v574, %v576
    %v578 = vrot.slane %v563, %v577
    %v580 = vunpack.c.l.s4 1966171168
    %v581 = vunpack.c.0.s8 %v580
    %v582 = vlaneseq
    %v583 = vshrl.u32 %v582, 7
    %v584 = vsub.s32 %v581, %v583
    %v585 = vrot.slane %v564, %v584
    %v586 = vcombine.low %v571, %v578
    %v588 = vunpack.c.l.s4 1966171168
    %v589 = vunpack.c.0.s8 %v588
    %v590 = vlaneseq
    %v591 = vshrl.u32 %v590, 7
    %v592 = vsub.s32 %v589, %v591
    %v593 = vrot.slane %v586, %v592
    %v595 = vunpack.c.l.s4 1966171168
    %v596 = vunpack.c.0.s8 %v595
    %v597 = vlaneseq
    %v598 = vshrl.u32 %v597, 7
    %v599 = vsub.s32 %v596, %v598
    %v600 = vrot.slane %v585, %v599
    %v601 = vcombine.low %v593, %v600
    %vm602 = vcmask 130048
    %v603 = vsel %vm602, %v463, 0
    %v605 = vsel %vm602, %v512, 0
    %v607 = vsel %vm602, %v561, 0
    %v609 = vsel %vm602, %v601, 0
    %611 = vmatprep.subr.mxu0 0.0
    %612 = vmatpush1.msra.mxu0 %v213
    %613 = vmatprep.subr.mxu0 0.0
    %614 = vmatpush1.msra.mxu0 %v214
    %615 = vmatprep.subr.mxu0 0.0
    %616 = vmatpush1.msra.mxu0 0.0
    %617 = vmatprep.subr.mxu0 0.0
    %618 = vmatpush1.msra.mxu0 0.0
    %619 = vmatprep.subr.mxu0 0.0
    %620 = vmatpush1.msra.mxu0 0.0
    %621 = vmatprep.subr.mxu0 0.0
    %622 = vmatpush1.msra.mxu0 0.0
    %623 = vmatprep.subr.mxu0 0.0
    %624 = vmatpush1.msra.mxu0 0.0
    %625 = vmatprep.subr.mxu0 0.0
    %626 = vmatpush1.msra.mxu0 0.0
    %627 = vmatprep.subr.mxu0 0.0
    %628 = vmatpush1.msra.mxu0 0.0
    %629 = vmatprep.subr.mxu0 0.0
    %630 = vmatpush1.msra.mxu0 0.0
    %631 = vmatprep.subr.mxu0 0.0
    %632 = vmatpush1.msra.mxu0 0.0
    %633 = vmatprep.subr.mxu0 0.0
    %634 = vmatpush1.msra.mxu0 0.0
    %635 = vmatprep.subr.mxu0 0.0
    %636 = vmatpush1.msra.mxu0 0.0
    %637 = vmatprep.subr.mxu0 0.0
    %638 = vmatpush1.msra.mxu0 0.0
    %639 = vmatprep.subr.mxu0 0.0
    %640 = vmatpush1.msra.mxu0 0.0
    %641 = vmatprep.subr.mxu0 0.0
    %642 = vmatpush1.msra.mxu0 0.0
    %643 = vmatprep.subr.mxu0 0.0
    %644 = vmatpush1.msra.mxu0 0.0
    %645 = vmatprep.subr.mxu0 0.0
    %646 = vmatpush1.msra.mxu0 0.0
    %647 = vmatprep.subr.mxu0 0.0
    %648 = vmatpush1.msra.mxu0 0.0
    %649 = vmatprep.subr.mxu0 0.0
    %650 = vmatpush1.msra.mxu0 0.0
    %651 = vmatprep.subr.mxu0 0.0
    %652 = vmatpush1.msra.mxu0 0.0
    %653 = vmatprep.subr.mxu0 0.0
    %654 = vmatpush1.msra.mxu0 0.0
    %655 = vmatprep.subr.mxu0 0.0
    %656 = vmatpush1.msra.mxu0 0.0
    %657 = vmatprep.subr.mxu0 0.0
    %658 = vmatpush1.msra.mxu0 0.0
    %659 = vmatprep.subr.mxu0 0.0
    %660 = vmatpush1.msra.mxu0 0.0
    %661 = vmatprep.subr.mxu0 0.0
    %662 = vmatpush1.msra.mxu0 0.0
    %663 = vmatprep.subr.mxu0 0.0
    %664 = vmatpush1.msra.mxu0 0.0
    %665 = vmatprep.subr.mxu0 0.0
    %666 = vmatpush1.msra.mxu0 0.0
    %667 = vmatprep.subr.mxu0 0.0
    %668 = vmatpush1.msra.mxu0 0.0
    %669 = vmatprep.subr.mxu0 0.0
    %670 = vmatpush1.msra.mxu0 0.0
    %671 = vmatprep.subr.mxu0 0.0
    %672 = vmatpush1.msra.mxu0 0.0
    %673 = vmatprep.subr.mxu0 0.0
    %674 = vmatpush1.msra.mxu0 0.0
    %675 = vmatprep.mubr.f32.mxu0 0.0
    %676 = vmatmul.mubr.f32.gmra.mrb[0].mxu0 %v603
    %v677 = vpop.f32.mrb[0].mxu0
    %v678 = vadd.f32 0.0, %v677
    %v679 = vpop.f32.mrb[0].mxu0
    %680 = vmatprep.mubr.f32.mxu0 0.0
    %681 = vmatmul.mubr.f32.gmra.mrb[0].mxu0 %v605
    %v682 = vpop.f32.mrb[0].mxu0
    %v683 = vadd.f32 0.0, %v682
    %v684 = vpop.f32.mrb[0].mxu0
    %685 = vmatprep.mubr.f32.mxu0 0.0
    %686 = vmatmul.mubr.f32.gmra.mrb[0].mxu0 %v607
    %v687 = vpop.f32.mrb[0].mxu0
    %v688 = vadd.f32 0.0, %v687
    %v689 = vpop.f32.mrb[0].mxu0
    %690 = vmatprep.mubr.f32.mxu0 0.0
    %691 = vmatmul.mubr.f32.gmra.mrb[0].mxu0 %v609
    %v692 = vpop.f32.mrb[0].mxu0
    %v693 = vadd.f32 0.0, %v692
    %v694 = vpop.f32.mrb[0].mxu0
    %695 = vdwg.mxu0
    %v696 = vcombine.low %v242, %v256
    %v697 = vcombine.low %v264, %v266
    %v698 = vcombine.low %v249, %v263
    %v699 = vcombine.low %v265, %v267
    %v701 = vunpack.c.l.s4 1966171168
    %v702 = vunpack.c.0.s8 %v701
    %v703 = vlaneseq
    %v704 = vshrl.u32 %v703, 7
    %v705 = vsub.s32 %v702, %v704
    %v706 = vrot.slane %v696, %v705
    %v708 = vunpack.c.l.s4 1966171168
    %v709 = vunpack.c.0.s8 %v708
    %v710 = vlaneseq
    %v711 = vshrl.u32 %v710, 7
    %v712 = vsub.s32 %v709, %v711
    %v713 = vrot.slane %v697, %v712
    %v715 = vunpack.c.l.s4 1966171168
    %v716 = vunpack.c.0.s8 %v715
    %v717 = vlaneseq
    %v718 = vshrl.u32 %v717, 7
    %v719 = vsub.s32 %v716, %v718
    %v720 = vrot.slane %v698, %v719
    %v722 = vunpack.c.l.s4 1966171168
    %v723 = vunpack.c.0.s8 %v722
    %v724 = vlaneseq
    %v725 = vshrl.u32 %v724, 7
    %v726 = vsub.s32 %v723, %v725
    %v727 = vrot.slane %v699, %v726
    %v728 = vcombine.low %v706, %v713
    %v729 = vcombine.low %v720, %v727
    %v731 = vunpack.c.l.s4 1966171168
    %v732 = vunpack.c.0.s8 %v731
    %v733 = vlaneseq
    %v734 = vshrl.u32 %v733, 7
    %v735 = vsub.s32 %v732, %v734
    %v736 = vrot.slane %v728, %v735
    %v738 = vunpack.c.l.s4 1966171168
    %v739 = vunpack.c.0.s8 %v738
    %v740 = vlaneseq
    %v741 = vshrl.u32 %v740, 7
    %v742 = vsub.s32 %v739, %v741
    %v743 = vrot.slane %v729, %v742
    %v744 = vcombine.low %v736, %v743
    %v745 = vcombine.low %v291, %v305
    %v746 = vcombine.low %v313, %v315
    %v747 = vcombine.low %v298, %v312
    %v748 = vcombine.low %v314, %v340
    %v750 = vunpack.c.l.s4 1966171168
    %v751 = vunpack.c.0.s8 %v750
    %v752 = vlaneseq
    %v753 = vshrl.u32 %v752, 7
    %v754 = vsub.s32 %v751, %v753
    %v755 = vrot.slane %v745, %v754
    %v757 = vunpack.c.l.s4 1966171168
    %v758 = vunpack.c.0.s8 %v757
    %v759 = vlaneseq
    %v760 = vshrl.u32 %v759, 7
    %v761 = vsub.s32 %v758, %v760
    %v762 = vrot.slane %v746, %v761
    %v764 = vunpack.c.l.s4 1966171168
    %v765 = vunpack.c.0.s8 %v764
    %v766 = vlaneseq
    %v767 = vshrl.u32 %v766, 7
    %v768 = vsub.s32 %v765, %v767
    %v769 = vrot.slane %v747, %v768
    %v771 = vunpack.c.l.s4 1966171168
    %v772 = vunpack.c.0.s8 %v771
    %v773 = vlaneseq
    %v774 = vshrl.u32 %v773, 7
    %v775 = vsub.s32 %v772, %v774
    %v776 = vrot.slane %v748, %v775
    %v777 = vcombine.low %v755, %v762
    %v778 = vcombine.low %v769, %v776
    %v780 = vunpack.c.l.s4 1966171168
    %v781 = vunpack.c.0.s8 %v780
    %v782 = vlaneseq
    %v783 = vshrl.u32 %v782, 7
    %v784 = vsub.s32 %v781, %v783
    %v785 = vrot.slane %v777, %v784
    %v787 = vunpack.c.l.s4 1966171168
    %v788 = vunpack.c.0.s8 %v787
    %v789 = vlaneseq
    %v790 = vshrl.u32 %v789, 7
    %v791 = vsub.s32 %v788, %v790
    %v792 = vrot.slane %v778, %v791
    %v793 = vcombine.low %v785, %v792
    %v794 = vcombine.low %v354, %v362
    %v795 = vcombine.low %v364, %v347
    %v796 = vcombine.low %v361, %v363
    %v797 = vcombine.low %v365, %v389
    %v799 = vunpack.c.l.s4 1966171168
    %v800 = vunpack.c.0.s8 %v799
    %v801 = vlaneseq
    %v802 = vshrl.u32 %v801, 7
    %v803 = vsub.s32 %v800, %v802
    %v804 = vrot.slane %v794, %v803
    %v806 = vunpack.c.l.s4 1966171168
    %v807 = vunpack.c.0.s8 %v806
    %v808 = vlaneseq
    %v809 = vshrl.u32 %v808, 7
    %v810 = vsub.s32 %v807, %v809
    %v811 = vrot.slane %v795, %v810
    %v813 = vunpack.c.l.s4 1966171168
    %v814 = vunpack.c.0.s8 %v813
    %v815 = vlaneseq
    %v816 = vshrl.u32 %v815, 7
    %v817 = vsub.s32 %v814, %v816
    %v818 = vrot.slane %v796, %v817
    %v820 = vunpack.c.l.s4 1966171168
    %v821 = vunpack.c.0.s8 %v820
    %v822 = vlaneseq
    %v823 = vshrl.u32 %v822, 7
    %v824 = vsub.s32 %v821, %v823
    %v825 = vrot.slane %v797, %v824
    %v826 = vcombine.low %v804, %v811
    %v827 = vcombine.low %v818, %v825
    %v829 = vunpack.c.l.s4 1966171168
    %v830 = vunpack.c.0.s8 %v829
    %v831 = vlaneseq
    %v832 = vshrl.u32 %v831, 7
    %v833 = vsub.s32 %v830, %v832
    %v834 = vrot.slane %v826, %v833
    %v836 = vunpack.c.l.s4 1966171168
    %v837 = vunpack.c.0.s8 %v836
    %v838 = vlaneseq
    %v839 = vshrl.u32 %v838, 7
    %v840 = vsub.s32 %v837, %v839
    %v841 = vrot.slane %v827, %v840
    %v842 = vcombine.low %v834, %v841
    %v843 = vcombine.low %v403, %v411
    %v844 = vcombine.low %v413, %v396
    %v845 = vcombine.low %v410, %v412
    %v847 = vunpack.c.l.s4 1966171168
    %v848 = vunpack.c.0.s8 %v847
    %v849 = vlaneseq
    %v850 = vshrl.u32 %v849, 7
    %v851 = vsub.s32 %v848, %v850
    %v852 = vrot.slane %v843, %v851
    %v854 = vunpack.c.l.s4 1966171168
    %v855 = vunpack.c.0.s8 %v854
    %v856 = vlaneseq
    %v857 = vshrl.u32 %v856, 7
    %v858 = vsub.s32 %v855, %v857
    %v859 = vrot.slane %v844, %v858
    %v861 = vunpack.c.l.s4 1966171168
    %v862 = vunpack.c.0.s8 %v861
    %v863 = vlaneseq
    %v864 = vshrl.u32 %v863, 7
    %v865 = vsub.s32 %v862, %v864
    %v866 = vrot.slane %v845, %v865
    %v867 = vcombine.low %v852, %v859
    %v869 = vunpack.c.l.s4 1966171168
    %v870 = vunpack.c.0.s8 %v869
    %v871 = vlaneseq
    %v872 = vshrl.u32 %v871, 7
    %v873 = vsub.s32 %v870, %v872
    %v874 = vrot.slane %v867, %v873
    %v876 = vunpack.c.l.s4 1966171168
    %v877 = vunpack.c.0.s8 %v876
    %v878 = vlaneseq
    %v879 = vshrl.u32 %v878, 7
    %v880 = vsub.s32 %v877, %v879
    %v881 = vrot.slane %v866, %v880
    %v882 = vcombine.low %v874, %v881
    %v883 = vsel %vm602, %v744, 0
    %v885 = vsel %vm602, %v793, 0
    %v887 = vsel %vm602, %v842, 0
    %v889 = vsel %vm602, %v882, 0
    %891 = vmatprep.subr.mxu0 0.0
    %892 = vmatpush1.msra.mxu0 %v211
    %893 = vmatprep.subr.mxu0 0.0
    %894 = vmatpush1.msra.mxu0 %v212
    %895 = vmatprep.subr.mxu0 0.0
    %896 = vmatpush1.msra.mxu0 0.0
    %897 = vmatprep.subr.mxu0 0.0
    %898 = vmatpush1.msra.mxu0 0.0
    %899 = vmatprep.subr.mxu0 0.0
    %900 = vmatpush1.msra.mxu0 0.0
    %901 = vmatprep.subr.mxu0 0.0
    %902 = vmatpush1.msra.mxu0 0.0
    %903 = vmatprep.subr.mxu0 0.0
    %904 = vmatpush1.msra.mxu0 0.0
    %905 = vmatprep.subr.mxu0 0.0
    %906 = vmatpush1.msra.mxu0 0.0
    %907 = vmatprep.subr.mxu0 0.0
    %908 = vmatpush1.msra.mxu0 0.0
    %909 = vmatprep.subr.mxu0 0.0
    %910 = vmatpush1.msra.mxu0 0.0
    %911 = vmatprep.subr.mxu0 0.0
    %912 = vmatpush1.msra.mxu0 0.0
    %913 = vmatprep.subr.mxu0 0.0
    %914 = vmatpush1.msra.mxu0 0.0
    %915 = vmatprep.subr.mxu0 0.0
    %916 = vmatpush1.msra.mxu0 0.0
    %917 = vmatprep.subr.mxu0 0.0
    %918 = vmatpush1.msra.mxu0 0.0
    %919 = vmatprep.subr.mxu0 0.0
    %920 = vmatpush1.msra.mxu0 0.0
    %921 = vmatprep.subr.mxu0 0.0
    %922 = vmatpush1.msra.mxu0 0.0
    %923 = vmatprep.subr.mxu0 0.0
    %924 = vmatpush1.msra.mxu0 0.0
    %925 = vmatprep.subr.mxu0 0.0
    %926 = vmatpush1.msra.mxu0 0.0
    %927 = vmatprep.subr.mxu0 0.0
    %928 = vmatpush1.msra.mxu0 0.0
    %929 = vmatprep.subr.mxu0 0.0
    %930 = vmatpush1.msra.mxu0 0.0
    %931 = vmatprep.subr.mxu0 0.0
    %932 = vmatpush1.msra.mxu0 0.0
    %933 = vmatprep.subr.mxu0 0.0
    %934 = vmatpush1.msra.mxu0 0.0
    %935 = vmatprep.subr.mxu0 0.0
    %936 = vmatpush1.msra.mxu0 0.0
    %937 = vmatprep.subr.mxu0 0.0
    %938 = vmatpush1.msra.mxu0 0.0
    %939 = vmatprep.subr.mxu0 0.0
    %940 = vmatpush1.msra.mxu0 0.0
    %941 = vmatprep.subr.mxu0 0.0
    %942 = vmatpush1.msra.mxu0 0.0
    %943 = vmatprep.subr.mxu0 0.0
    %944 = vmatpush1.msra.mxu0 0.0
    %945 = vmatprep.subr.mxu0 0.0
    %946 = vmatpush1.msra.mxu0 0.0
    %947 = vmatprep.subr.mxu0 0.0
    %948 = vmatpush1.msra.mxu0 0.0
    %949 = vmatprep.subr.mxu0 0.0
    %950 = vmatpush1.msra.mxu0 0.0
    %951 = vmatprep.subr.mxu0 0.0
    %952 = vmatpush1.msra.mxu0 0.0
    %953 = vmatprep.subr.mxu0 0.0
    %954 = vmatpush1.msra.mxu0 0.0
    %955 = vmatprep.mubr.f32.mxu0 0.0
    %956 = vmatmul.mubr.f32.gmra.mrb[0].mxu0 %v883
    %v957 = vpop.f32.mrb[0].mxu0
    %v958 = vadd.f32 %v678, %v957
    %v959 = vpop.f32.mrb[0].mxu0
    %960 = vmatprep.mubr.f32.mxu0 0.0
    %961 = vmatmul.mubr.f32.gmra.mrb[0].mxu0 %v885
    %v962 = vpop.f32.mrb[0].mxu0
    %v963 = vadd.f32 %v683, %v962
    %v964 = vpop.f32.mrb[0].mxu0
    %965 = vmatprep.mubr.f32.mxu0 0.0
    %966 = vmatmul.mubr.f32.gmra.mrb[0].mxu0 %v887
    %v967 = vpop.f32.mrb[0].mxu0
    %v968 = vadd.f32 %v688, %v967
    %v969 = vpop.f32.mrb[0].mxu0
    %970 = vmatprep.mubr.f32.mxu0 0.0
    %971 = vmatmul.mubr.f32.gmra.mrb[0].mxu0 %v889
    %v972 = vpop.f32.mrb[0].mxu0
    %v973 = vadd.f32 %v693, %v972
    %v974 = vpop.f32.mrb[0].mxu0
    %975 = vdwg.mxu0
    %v980 = vcombine.high %v958, %v958
    %v982 = vunpack.c.l.s4 1966171168
    %v983 = vunpack.c.0.s8 %v982
    %v984 = vlaneseq
    %v985 = vshrl.u32 %v984, 7
    %v986 = vsub.s32 %v983, %v985
    %v987 = vrot.slane %v958, %v986
    %v989 = vunpack.c.l.s4 1966171168
    %v990 = vunpack.c.0.s8 %v989
    %v991 = vlaneseq
    %v992 = vshrl.u32 %v991, 7
    %v993 = vsub.s32 %v990, %v992
    %v994 = vrot.slane %v980, %v993
    %v995 = vcombine.high %v987, %v987
    %v996 = vcombine.high %v994, %v994
    %v998 = vunpack.c.l.s4 1966171168
    %v999 = vunpack.c.0.s8 %v998
    %v1000 = vlaneseq
    %v1001 = vshrl.u32 %v1000, 7
    %v1002 = vsub.s32 %v999, %v1001
    %v1003 = vrot.slane %v987, %v1002
    %v1005 = vunpack.c.l.s4 1966171168
    %v1006 = vunpack.c.0.s8 %v1005
    %v1007 = vlaneseq
    %v1008 = vshrl.u32 %v1007, 7
    %v1009 = vsub.s32 %v1006, %v1008
    %v1010 = vrot.slane %v994, %v1009
    %v1012 = vunpack.c.l.s4 1966171168
    %v1013 = vunpack.c.0.s8 %v1012
    %v1014 = vlaneseq
    %v1015 = vshrl.u32 %v1014, 7
    %v1016 = vsub.s32 %v1013, %v1015
    %v1017 = vrot.slane %v995, %v1016
    %v1019 = vunpack.c.l.s4 1966171168
    %v1020 = vunpack.c.0.s8 %v1019
    %v1021 = vlaneseq
    %v1022 = vshrl.u32 %v1021, 7
    %v1023 = vsub.s32 %v1020, %v1022
    %v1024 = vrot.slane %v996, %v1023
    %v1025 = vcombine.high %v1003, %v1003
    %v1026 = vcombine.high %v1010, %v1010
    %v1027 = vcombine.high %v1017, %v1017
    %v1028 = vcombine.high %v1024, %v1024
    %v1029 = vcombine.high %v963, %v963
    %v1031 = vunpack.c.l.s4 1966171168
    %v1032 = vunpack.c.0.s8 %v1031
    %v1033 = vlaneseq
    %v1034 = vshrl.u32 %v1033, 7
    %v1035 = vsub.s32 %v1032, %v1034
    %v1036 = vrot.slane %v963, %v1035
    %v1038 = vunpack.c.l.s4 1966171168
    %v1039 = vunpack.c.0.s8 %v1038
    %v1040 = vlaneseq
    %v1041 = vshrl.u32 %v1040, 7
    %v1042 = vsub.s32 %v1039, %v1041
    %v1043 = vrot.slane %v1029, %v1042
    %v1044 = vcombine.high %v1036, %v1036
    %v1045 = vcombine.high %v1043, %v1043
    %v1047 = vunpack.c.l.s4 1966171168
    %v1048 = vunpack.c.0.s8 %v1047
    %v1049 = vlaneseq
    %v1050 = vshrl.u32 %v1049, 7
    %v1051 = vsub.s32 %v1048, %v1050
    %v1052 = vrot.slane %v1036, %v1051
    %v1054 = vunpack.c.l.s4 1966171168
    %v1055 = vunpack.c.0.s8 %v1054
    %v1056 = vlaneseq
    %v1057 = vshrl.u32 %v1056, 7
    %v1058 = vsub.s32 %v1055, %v1057
    %v1059 = vrot.slane %v1043, %v1058
    %v1061 = vunpack.c.l.s4 1966171168
    %v1062 = vunpack.c.0.s8 %v1061
    %v1063 = vlaneseq
    %v1064 = vshrl.u32 %v1063, 7
    %v1065 = vsub.s32 %v1062, %v1064
    %v1066 = vrot.slane %v1044, %v1065
    %v1068 = vunpack.c.l.s4 1966171168
    %v1069 = vunpack.c.0.s8 %v1068
    %v1070 = vlaneseq
    %v1071 = vshrl.u32 %v1070, 7
    %v1072 = vsub.s32 %v1069, %v1071
    %v1073 = vrot.slane %v1045, %v1072
    %v1074 = vcombine.high %v1052, %v1052
    %v1075 = vcombine.high %v1059, %v1059
    %v1076 = vcombine.high %v1066, %v1066
    %v1077 = vcombine.high %v1073, %v1073
    %v1078 = vcombine.high %v968, %v968
    %v1080 = vunpack.c.l.s4 1966171168
    %v1081 = vunpack.c.0.s8 %v1080
    %v1082 = vlaneseq
    %v1083 = vshrl.u32 %v1082, 7
    %v1084 = vsub.s32 %v1081, %v1083
    %v1085 = vrot.slane %v968, %v1084
    %v1087 = vunpack.c.l.s4 1966171168
    %v1088 = vunpack.c.0.s8 %v1087
    %v1089 = vlaneseq
    %v1090 = vshrl.u32 %v1089, 7
    %v1091 = vsub.s32 %v1088, %v1090
    %v1092 = vrot.slane %v1078, %v1091
    %v1093 = vcombine.high %v1085, %v1085
    %v1094 = vcombine.high %v1092, %v1092
    %v1096 = vunpack.c.l.s4 1966171168
    %v1097 = vunpack.c.0.s8 %v1096
    %v1098 = vlaneseq
    %v1099 = vshrl.u32 %v1098, 7
    %v1100 = vsub.s32 %v1097, %v1099
    %v1101 = vrot.slane %v1085, %v1100
    %v1103 = vunpack.c.l.s4 1966171168
    %v1104 = vunpack.c.0.s8 %v1103
    %v1105 = vlaneseq
    %v1106 = vshrl.u32 %v1105, 7
    %v1107 = vsub.s32 %v1104, %v1106
    %v1108 = vrot.slane %v1092, %v1107
    %v1110 = vunpack.c.l.s4 1966171168
    %v1111 = vunpack.c.0.s8 %v1110
    %v1112 = vlaneseq
    %v1113 = vshrl.u32 %v1112, 7
    %v1114 = vsub.s32 %v1111, %v1113
    %v1115 = vrot.slane %v1093, %v1114
    %v1117 = vunpack.c.l.s4 1966171168
    %v1118 = vunpack.c.0.s8 %v1117
    %v1119 = vlaneseq
    %v1120 = vshrl.u32 %v1119, 7
    %v1121 = vsub.s32 %v1118, %v1120
    %v1122 = vrot.slane %v1094, %v1121
    %v1123 = vcombine.high %v1101, %v1101
    %v1124 = vcombine.high %v1108, %v1108
    %v1125 = vcombine.high %v1115, %v1115
    %v1126 = vcombine.high %v1122, %v1122
    %v1127 = vcombine.high %v973, %v973
    %v1129 = vunpack.c.l.s4 1966171168
    %v1130 = vunpack.c.0.s8 %v1129
    %v1131 = vlaneseq
    %v1132 = vshrl.u32 %v1131, 7
    %v1133 = vsub.s32 %v1130, %v1132
    %v1134 = vrot.slane %v973, %v1133
    %v1136 = vunpack.c.l.s4 1966171168
    %v1137 = vunpack.c.0.s8 %v1136
    %v1138 = vlaneseq
    %v1139 = vshrl.u32 %v1138, 7
    %v1140 = vsub.s32 %v1137, %v1139
    %v1141 = vrot.slane %v1127, %v1140
    %v1142 = vcombine.high %v1134, %v1134
    %v1143 = vcombine.high %v1141, %v1141
    %v1145 = vunpack.c.l.s4 1966171168
    %v1146 = vunpack.c.0.s8 %v1145
    %v1147 = vlaneseq
    %v1148 = vshrl.u32 %v1147, 7
    %v1149 = vsub.s32 %v1146, %v1148
    %v1150 = vrot.slane %v1134, %v1149
    %v1152 = vunpack.c.l.s4 1966171168
    %v1153 = vunpack.c.0.s8 %v1152
    %v1154 = vlaneseq
    %v1155 = vshrl.u32 %v1154, 7
    %v1156 = vsub.s32 %v1153, %v1155
    %v1157 = vrot.slane %v1141, %v1156
    %v1159 = vunpack.c.l.s4 1966171168
    %v1160 = vunpack.c.0.s8 %v1159
    %v1161 = vlaneseq
    %v1162 = vshrl.u32 %v1161, 7
    %v1163 = vsub.s32 %v1160, %v1162
    %v1164 = vrot.slane %v1142, %v1163
    %v1166 = vunpack.c.l.s4 1966171168
    %v1167 = vunpack.c.0.s8 %v1166
    %v1168 = vlaneseq
    %v1169 = vshrl.u32 %v1168, 7
    %v1170 = vsub.s32 %v1167, %v1169
    %v1171 = vrot.slane %v1143, %v1170
    %v1172 = vcombine.high %v1150, %v1150
    %v1173 = vcombine.high %v1164, %v1164
    %v1204 = vld [vmem:[%s3] sm:$0x1]
    %v1206 = vlaneseq
    %v1207 = vshrl.u32 %v1206, 7
    %v1208 = vsub.s32 0, %v1207
    %v1209 = vrot.slane %v1204, %v1208
    %v1210 = vcombine.high %v1209, %v1209
    %v1212 = vunpack.c.l.s4 1966171168
    %v1213 = vunpack.c.0.s8 %v1212
    %v1214 = vlaneseq
    %v1215 = vshrl.u32 %v1214, 7
    %v1216 = vsub.s32 %v1213, %v1215
    %v1217 = vrot.slane %v1209, %v1216
    %v1219 = vunpack.c.l.s4 1966171168
    %v1220 = vunpack.c.0.s8 %v1219
    %v1221 = vlaneseq
    %v1222 = vshrl.u32 %v1221, 7
    %v1223 = vsub.s32 %v1220, %v1222
    %v1224 = vrot.slane %v1210, %v1223
    %v1225 = vcombine.high %v1217, %v1217
    %v1226 = vcombine.high %v1224, %v1224
    %v1228 = vunpack.c.l.s4 1966171168
    %v1229 = vunpack.c.0.s8 %v1228
    %v1230 = vlaneseq
    %v1231 = vshrl.u32 %v1230, 7
    %v1232 = vsub.s32 %v1229, %v1231
    %v1233 = vrot.slane %v1217, %v1232
    %v1235 = vunpack.c.l.s4 1966171168
    %v1236 = vunpack.c.0.s8 %v1235
    %v1237 = vlaneseq
    %v1238 = vshrl.u32 %v1237, 7
    %v1239 = vsub.s32 %v1236, %v1238
    %v1240 = vrot.slane %v1224, %v1239
    %v1242 = vunpack.c.l.s4 1966171168
    %v1243 = vunpack.c.0.s8 %v1242
    %v1244 = vlaneseq
    %v1245 = vshrl.u32 %v1244, 7
    %v1246 = vsub.s32 %v1243, %v1245
    %v1247 = vrot.slane %v1225, %v1246
    %v1249 = vunpack.c.l.s4 1966171168
    %v1250 = vunpack.c.0.s8 %v1249
    %v1251 = vlaneseq
    %v1252 = vshrl.u32 %v1251, 7
    %v1253 = vsub.s32 %v1250, %v1252
    %v1254 = vrot.slane %v1226, %v1253
    %v1255 = vcombine.high %v1233, %v1233
    %v1256 = vcombine.high %v1240, %v1240
    %v1257 = vcombine.high %v1247, %v1247
    %v1258 = vcombine.high %v1254, %v1254
    %v1267 = vadd.f32 %v1003, %v1233
    %v1268 = vadd.f32 %v1017, %v1247
    %v1269 = vadd.f32 %v1025, %v1255
    %v1270 = vadd.f32 %v1027, %v1257
    %v1271 = vadd.f32 %v1010, %v1240
    %v1272 = vadd.f32 %v1024, %v1254
    %v1273 = vadd.f32 %v1026, %v1256
    %v1274 = vadd.f32 %v1028, %v1258
    %v1275 = vadd.f32 %v1052, %v1233
    %v1276 = vadd.f32 %v1066, %v1247
    %v1277 = vadd.f32 %v1074, %v1255
    %v1278 = vadd.f32 %v1076, %v1257
    %v1279 = vadd.f32 %v1059, %v1240
    %v1280 = vadd.f32 %v1073, %v1254
    %v1281 = vadd.f32 %v1075, %v1256
    %v1282 = vadd.f32 %v1077, %v1233
    %v1283 = vadd.f32 %v1101, %v1247
    %v1284 = vadd.f32 %v1115, %v1255
    %v1285 = vadd.f32 %v1123, %v1257
    %v1286 = vadd.f32 %v1125, %v1240
    %v1287 = vadd.f32 %v1108, %v1254
    %v1288 = vadd.f32 %v1122, %v1256
    %v1289 = vadd.f32 %v1124, %v1258
    %v1290 = vadd.f32 %v1126, %v1233
    %v1291 = vadd.f32 %v1150, %v1247
    %v1292 = vadd.f32 %v1164, %v1255
    %v1293 = vadd.f32 %v1172, %v1257
    %v1294 = vadd.f32 %v1173, %v1240
    %v1295 = vadd.f32 %v1157, %v1254
    %v1296 = vadd.f32 %v1171, %v1256
    %v1297 = vmax.f32 %v1267, 0.0
    %v1298 = vmax.f32 %v1268, 0.0
    %v1299 = vmax.f32 %v1269, 0.0
    %v1300 = vmax.f32 %v1270, 0.0
    %v1301 = vmax.f32 %v1271, 0.0
    %v1302 = vmax.f32 %v1272, 0.0
    %v1303 = vmax.f32 %v1273, 0.0
    %v1304 = vmax.f32 %v1274, 0.0
    %v1305 = vmax.f32 %v1275, 0.0
    %v1306 = vmax.f32 %v1276, 0.0
    %v1307 = vmax.f32 %v1277, 0.0
    %v1308 = vmax.f32 %v1278, 0.0
    %v1309 = vmax.f32 %v1279, 0.0
    %v1310 = vmax.f32 %v1280, 0.0
    %v1311 = vmax.f32 %v1281, 0.0
    %v1312 = vmax.f32 %v1282, 0.0
    %v1313 = vmax.f32 %v1283, 0.0
    %v1314 = vmax.f32 %v1284, 0.0
    %v1315 = vmax.f32 %v1285, 0.0
    %v1316 = vmax.f32 %v1286, 0.0
    %v1317 = vmax.f32 %v1287, 0.0
    %v1318 = vmax.f32 %v1288, 0.0
    %v1319 = vmax.f32 %v1289, 0.0
    %v1320 = vmax.f32 %v1290, 0.0
    %v1321 = vmax.f32 %v1291, 0.0
    %v1322 = vmax.f32 %v1292, 0.0
    %v1323 = vmax.f32 %v1293, 0.0
    %v1324 = vmax.f32 %v1294, 0.0
    %v1325 = vmax.f32 %v1295, 0.0
    %v1326 = vmax.f32 %v1296, 0.0
    %v1357 = vcombine.low %v1297, %v1298
    %v1358 = vcombine.low %v1299, %v1300
    %v1359 = vcombine.low %v1301, %v1302
    %v1360 = vcombine.low %v1303, %v1304
    %v1362 = vunpack.c.l.s4 1966171168
    %v1363 = vunpack.c.0.s8 %v1362
    %v1364 = vlaneseq
    %v1365 = vshrl.u32 %v1364, 7
    %v1366 = vsub.s32 %v1363, %v1365
    %v1367 = vrot.slane %v1357, %v1366
    %v1369 = vunpack.c.l.s4 1966171168
    %v1370 = vunpack.c.0.s8 %v1369
    %v1371 = vlaneseq
    %v1372 = vshrl.u32 %v1371, 7
    %v1373 = vsub.s32 %v1370, %v1372
    %v1374 = vrot.slane %v1358, %v1373
    %v1376 = vunpack.c.l.s4 1966171168
    %v1377 = vunpack.c.0.s8 %v1376
    %v1378 = vlaneseq
    %v1379 = vshrl.u32 %v1378, 7
    %v1380 = vsub.s32 %v1377, %v1379
    %v1381 = vrot.slane %v1359, %v1380
    %v1383 = vunpack.c.l.s4 1966171168
    %v1384 = vunpack.c.0.s8 %v1383
    %v1385 = vlaneseq
    %v1386 = vshrl.u32 %v1385, 7
    %v1387 = vsub.s32 %v1384, %v1386
    %v1388 = vrot.slane %v1360, %v1387
    %v1389 = vcombine.low %v1367, %v1374
    %v1390 = vcombine.low %v1381, %v1388
    %v1392 = vunpack.c.l.s4 1966171168
    %v1393 = vunpack.c.0.s8 %v1392
    %v1394 = vlaneseq
    %v1395 = vshrl.u32 %v1394, 7
    %v1396 = vsub.s32 %v1393, %v1395
    %v1397 = vrot.slane %v1389, %v1396
    %v1399 = vunpack.c.l.s4 1966171168
    %v1400 = vunpack.c.0.s8 %v1399
    %v1401 = vlaneseq
    %v1402 = vshrl.u32 %v1401, 7
    %v1403 = vsub.s32 %v1400, %v1402
    %v1404 = vrot.slane %v1390, %v1403
    %v1405 = vcombine.low %v1397, %v1404
    %v1406 = vcombine.low %v1305, %v1306
    %v1407 = vcombine.low %v1307, %v1308
    %v1408 = vcombine.low %v1309, %v1310
    %v1410 = vunpack.c.l.s4 1966171168
    %v1411 = vunpack.c.0.s8 %v1410
    %v1412 = vlaneseq
    %v1413 = vshrl.u32 %v1412, 7
    %v1414 = vsub.s32 %v1411, %v1413
    %v1415 = vrot.slane %v1406, %v1414
    %v1417 = vunpack.c.l.s4 1966171168
    %v1418 = vunpack.c.0.s8 %v1417
    %v1419 = vlaneseq
    %v1420 = vshrl.u32 %v1419, 7
    %v1421 = vsub.s32 %v1418, %v1420
    %v1422 = vrot.slane %v1407, %v1421
    %v1424 = vunpack.c.l.s4 1966171168
    %v1425 = vunpack.c.0.s8 %v1424
    %v1426 = vlaneseq
    %v1427 = vshrl.u32 %v1426, 7
    %v1428 = vsub.s32 %v1425, %v1427
    %v1429 = vrot.slane %v1408, %v1428
    %v1431 = vunpack.c.l.s4 1966171168
    %v1432 = vunpack.c.0.s8 %v1431
    %v1433 = vlaneseq
    %v1434 = vshrl.u32 %v1433, 7
    %v1435 = vsub.s32 %v1432, %v1434
    %v1436 = vrot.slane %v1311, %v1435
    %v1437 = vcombine.low %v1415, %v1422
    %v1438 = vcombine.low %v1429, %v1436
    %v1440 = vunpack.c.l.s4 1966171168
    %v1441 = vunpack.c.0.s8 %v1440
    %v1442 = vlaneseq
    %v1443 = vshrl.u32 %v1442, 7
    %v1444 = vsub.s32 %v1441, %v1443
    %v1445 = vrot.slane %v1437, %v1444
    %v1447 = vunpack.c.l.s4 1966171168
    %v1448 = vunpack.c.0.s8 %v1447
    %v1449 = vlaneseq
    %v1450 = vshrl.u32 %v1449, 7
    %v1451 = vsub.s32 %v1448, %v1450
    %v1452 = vrot.slane %v1438, %v1451
    %v1453 = vcombine.low %v1445, %v1452
    %v1454 = vcombine.low %v1312, %v1313
    %v1455 = vcombine.low %v1314, %v1315
    %v1456 = vcombine.low %v1316, %v1317
    %v1457 = vcombine.low %v1318, %v1319
    %v1459 = vunpack.c.l.s4 1966171168
    %v1460 = vunpack.c.0.s8 %v1459
    %v1461 = vlaneseq
    %v1462 = vshrl.u32 %v1461, 7
    %v1463 = vsub.s32 %v1460, %v1462
    %v1464 = vrot.slane %v1454, %v1463
    %v1466 = vunpack.c.l.s4 1966171168
    %v1467 = vunpack.c.0.s8 %v1466
    %v1468 = vlaneseq
    %v1469 = vshrl.u32 %v1468, 7
    %v1470 = vsub.s32 %v1467, %v1469
    %v1471 = vrot.slane %v1455, %v1470
    %v1473 = vunpack.c.l.s4 1966171168
    %v1474 = vunpack.c.0.s8 %v1473
    %v1475 = vlaneseq
    %v1476 = vshrl.u32 %v1475, 7
    %v1477 = vsub.s32 %v1474, %v1476
    %v1478 = vrot.slane %v1456, %v1477
    %v1480 = vunpack.c.l.s4 1966171168
    %v1481 = vunpack.c.0.s8 %v1480
    %v1482 = vlaneseq
    %v1483 = vshrl.u32 %v1482, 7
    %v1484 = vsub.s32 %v1481, %v1483
    %v1485 = vrot.slane %v1457, %v1484
    %v1486 = vcombine.low %v1464, %v1471
    %v1487 = vcombine.low %v1478, %v1485
    %v1489 = vunpack.c.l.s4 1966171168
    %v1490 = vunpack.c.0.s8 %v1489
    %v1491 = vlaneseq
    %v1492 = vshrl.u32 %v1491, 7
    %v1493 = vsub.s32 %v1490, %v1492
    %v1494 = vrot.slane %v1486, %v1493
    %v1496 = vunpack.c.l.s4 1966171168
    %v1497 = vunpack.c.0.s8 %v1496
    %v1498 = vlaneseq
    %v1499 = vshrl.u32 %v1498, 7
    %v1500 = vsub.s32 %v1497, %v1499
    %v1501 = vrot.slane %v1487, %v1500
    %v1502 = vcombine.low %v1494, %v1501
    %v1503 = vcombine.low %v1320, %v1321
    %v1504 = vcombine.low %v1322, %v1323
    %v1505 = vcombine.low %v1324, %v1325
    %v1507 = vunpack.c.l.s4 1966171168
    %v1508 = vunpack.c.0.s8 %v1507
    %v1509 = vlaneseq
    %v1510 = vshrl.u32 %v1509, 7
    %v1511 = vsub.s32 %v1508, %v1510
    %v1512 = vrot.slane %v1503, %v1511
    %v1514 = vunpack.c.l.s4 1966171168
    %v1515 = vunpack.c.0.s8 %v1514
    %v1516 = vlaneseq
    %v1517 = vshrl.u32 %v1516, 7
    %v1518 = vsub.s32 %v1515, %v1517
    %v1519 = vrot.slane %v1504, %v1518
    %v1521 = vunpack.c.l.s4 1966171168
    %v1522 = vunpack.c.0.s8 %v1521
    %v1523 = vlaneseq
    %v1524 = vshrl.u32 %v1523, 7
    %v1525 = vsub.s32 %v1522, %v1524
    %v1526 = vrot.slane %v1505, %v1525
    %v1528 = vunpack.c.l.s4 1966171168
    %v1529 = vunpack.c.0.s8 %v1528
    %v1530 = vlaneseq
    %v1531 = vshrl.u32 %v1530, 7
    %v1532 = vsub.s32 %v1529, %v1531
    %v1533 = vrot.slane %v1326, %v1532
    %v1534 = vcombine.low %v1512, %v1519
    %v1535 = vcombine.low %v1526, %v1533
    %v1537 = vunpack.c.l.s4 1966171168
    %v1538 = vunpack.c.0.s8 %v1537
    %v1539 = vlaneseq
    %v1540 = vshrl.u32 %v1539, 7
    %v1541 = vsub.s32 %v1538, %v1540
    %v1542 = vrot.slane %v1534, %v1541
    %v1544 = vunpack.c.l.s4 1966171168
    %v1545 = vunpack.c.0.s8 %v1544
    %v1546 = vlaneseq
    %v1547 = vshrl.u32 %v1546, 7
    %v1548 = vsub.s32 %v1545, %v1547
    %v1549 = vrot.slane %v1535, %v1548
    %v1550 = vcombine.low %v1542, %v1549
    %vm1555 = vcmask 64512
    %v1556 = vsel %vm1555, %v1405, -inf
    %vm1557 = vcmask 63488
    %v1558 = vsel %vm1557, %v1453, -inf
    %v1559 = vmax.f32 %v1556, %v1558
    %v1560 = vrot.slane %v1559, 4
    %v1561 = vmax.f32 %v1559, %v1560
    %v1562 = vrot.slane %v1561, 2
    %v1563 = vmax.f32 %v1561, %v1562
    %v1564 = vrot.slane %v1563, 1
    %v1565 = vmax.f32 %v1563, %v1564
    %v1566 = vsel %vm1555, %v1502, -inf
    %v1567 = vsel %vm1557, %v1550, -inf
    %v1568 = vmax.f32 %v1566, %v1567
    %v1569 = vrot.slane %v1568, 4
    %v1570 = vmax.f32 %v1568, %v1569
    %v1571 = vrot.slane %v1570, 2
    %v1572 = vmax.f32 %v1570, %v1571
    %v1573 = vrot.slane %v1572, 1
    %v1574 = vmax.f32 %v1572, %v1573
    %v1575 = vld [vmem:[%s4] sm:$0xff]
    %v1576 = vld [vmem:[%s4 + $0x8] sm:$0xff]
    %v1577 = vld [vmem:[%s4 + $0x10] sm:$0xff]
    %v1578 = vld [vmem:[%s4 + $0x18] sm:$0xff]
    %v1579 = vld [vmem:[%s4 + $0x20] sm:$0xff]
    %v1580 = vld [vmem:[%s4 + $0x28] sm:$0xff]
    %v1582 = vunpack.c.l.s4 1983009808
    %v1583 = vunpack.c.0.s8 %v1582
    %v1584 = vlaneseq
    %v1585 = vshrl.u32 %v1584, 7
    %v1586 = vsub.s32 %v1583, %v1585
    %v1587 = vrot.slane %v193, %v1586
    %v1589 = vunpack.c.l.s4 1983009808
    %v1590 = vunpack.c.0.s8 %v1589
    %v1591 = vlaneseq
    %v1592 = vshrl.u32 %v1591, 7
    %v1593 = vsub.s32 %v1590, %v1592
    %v1594 = vrot.slane %v219, %v1593
    %v1595 = vcombine.high %v1587, %v1587
    %v1596 = vcombine.high %v1594, %v1594
    %v1598 = vunpack.c.l.s4 1983009808
    %v1599 = vunpack.c.0.s8 %v1598
    %v1600 = vlaneseq
    %v1601 = vshrl.u32 %v1600, 7
    %v1602 = vsub.s32 %v1599, %v1601
    %v1603 = vrot.slane %v198, %v1602
    %v1605 = vunpack.c.l.s4 1983009808
    %v1606 = vunpack.c.0.s8 %v1605
    %v1607 = vlaneseq
    %v1608 = vshrl.u32 %v1607, 7
    %v1609 = vsub.s32 %v1606, %v1608
    %v1610 = vrot.slane %v268, %v1609
    %v1611 = vcombine.high %v1603, %v1603
    %v1612 = vcombine.high %v1610, %v1610
    %v1614 = vunpack.c.l.s4 1983009808
    %v1615 = vunpack.c.0.s8 %v1614
    %v1616 = vlaneseq
    %v1617 = vshrl.u32 %v1616, 7
    %v1618 = vsub.s32 %v1615, %v1617
    %v1619 = vrot.slane %v203, %v1618
    %v1621 = vunpack.c.l.s4 1983009808
    %v1622 = vunpack.c.0.s8 %v1621
    %v1623 = vlaneseq
    %v1624 = vshrl.u32 %v1623, 7
    %v1625 = vsub.s32 %v1622, %v1624
    %v1626 = vrot.slane %v317, %v1625
    %v1627 = vcombine.high %v1619, %v1619
    %v1628 = vcombine.high %v1626, %v1626
    %v1630 = vunpack.c.l.s4 1983009808
    %v1631 = vunpack.c.0.s8 %v1630
    %v1632 = vlaneseq
    %v1633 = vshrl.u32 %v1632, 7
    %v1634 = vsub.s32 %v1631, %v1633
    %v1635 = vrot.slane %v208, %v1634
    %v1637 = vunpack.c.l.s4 1983009808
    %v1638 = vunpack.c.0.s8 %v1637
    %v1639 = vlaneseq
    %v1640 = vshrl.u32 %v1639, 7
    %v1641 = vsub.s32 %v1638, %v1640
    %v1642 = vrot.slane %v366, %v1641
    %v1643 = vcombine.high %v1635, %v1635
    %v1644 = vcombine.high %v1642, %v1642
    %vm1645 = vcmask 1040384
    %vm1646 = vcmask 1042434
    %vm1647 = vmor %vm1645, %vm1646
    %vm1648 = vcmask 1044484
    %vm1649 = vmor %vm1647, %vm1648
    %vm1650 = vcmask 1046534
    %vm1651 = vmor %vm1649, %vm1650
    %v1652 = vrot.slane %v1587, 7
    %v1653 = vrot.slane %v1652, 2
    %v1654 = vrot.slane %v1595, 7
    %v1655 = vsel %vm1651, %v1653, %v1654
    %v1656 = vrot.slane %v1654, 2
    %v1657 = vrot.slane %v1594, 7
    %v1658 = vsel %vm1651, %v1656, %v1657
    %v1659 = vrot.slane %v1657, 2
    %v1660 = vrot.slane %v1596, 7
    %v1661 = vsel %vm1651, %v1659, %v1660
    %v1662 = vrot.slane %v1660, 2
    %v1663 = vrot.slane %v1603, 7
    %v1664 = vsel %vm1651, %v1662, %v1663
    %v1665 = vrot.slane %v1663, 2
    %v1666 = vrot.slane %v1611, 7
    %v1667 = vsel %vm1651, %v1665, %v1666
    %v1668 = vrot.slane %v1666, 2
    %v1669 = vrot.slane %v1610, 7
    %v1670 = vsel %vm1651, %v1668, %v1669
    %v1671 = vrot.slane %v1669, 2
    %v1672 = vrot.slane %v1612, 7
    %v1673 = vsel %vm1651, %v1671, %v1672
    %v1674 = vrot.slane %v1619, 7
    %v1675 = vrot.slane %v1674, 2
    %v1676 = vrot.slane %v1627, 7
    %v1677 = vsel %vm1651, %v1675, %v1676
    %v1678 = vrot.slane %v1676, 2
    %v1679 = vrot.slane %v1626, 7
    %v1680 = vsel %vm1651, %v1678, %v1679
    %v1681 = vrot.slane %v1679, 2
    %v1682 = vrot.slane %v1628, 7
    %v1683 = vsel %vm1651, %v1681, %v1682
    %v1684 = vrot.slane %v1682, 2
    %v1685 = vrot.slane %v1635, 7
    %v1686 = vsel %vm1651, %v1684, %v1685
    %v1687 = vrot.slane %v1685, 2
    %v1688 = vrot.slane %v1643, 7
    %v1689 = vsel %vm1651, %v1687, %v1688
    %v1690 = vrot.slane %v1688, 2
    %v1691 = vrot.slane %v1642, 7
    %v1692 = vsel %vm1651, %v1690, %v1691
    %v1693 = vrot.slane %v1691, 2
    %v1694 = vrot.slane %v1644, 7
    %v1695 = vsel %vm1651, %v1693, %v1694
    %v1696 = vcombine.low %v1655, %v1658
    %v1697 = vcombine.low %v1661, %v1664
    %v1699 = vunpack.c.l.s4 1983009808
    %v1700 = vunpack.c.0.s8 %v1699
    %v1701 = vlaneseq
    %v1702 = vshrl.u32 %v1701, 7
    %v1703 = vsub.s32 %v1700, %v1702
    %v1704 = vrot.slane %v1696, %v1703
    %v1706 = vunpack.c.l.s4 1983009808
    %v1707 = vunpack.c.0.s8 %v1706
    %v1708 = vlaneseq
    %v1709 = vshrl.u32 %v1708, 7
    %v1710 = vsub.s32 %v1707, %v1709
    %v1711 = vrot.slane %v1697, %v1710
    %v1712 = vcombine.low %v1704, %v1711
    %v1713 = vcombine.low %v1667, %v1670
    %v1714 = vcombine.low %v1673, %v1677
    %v1716 = vunpack.c.l.s4 1983009808
    %v1717 = vunpack.c.0.s8 %v1716
    %v1718 = vlaneseq
    %v1719 = vshrl.u32 %v1718, 7
    %v1720 = vsub.s32 %v1717, %v1719
    %v1721 = vrot.slane %v1713, %v1720
    %v1723 = vunpack.c.l.s4 1983009808
    %v1724 = vunpack.c.0.s8 %v1723
    %v1725 = vlaneseq
    %v1726 = vshrl.u32 %v1725, 7
    %v1727 = vsub.s32 %v1724, %v1726
    %v1728 = vrot.slane %v1714, %v1727
    %v1729 = vcombine.low %v1721, %v1728
    %v1730 = vcombine.low %v1680, %v1683
    %v1731 = vcombine.low %v1686, %v1689
    %v1733 = vunpack.c.l.s4 1983009808
    %v1734 = vunpack.c.0.s8 %v1733
    %v1735 = vlaneseq
    %v1736 = vshrl.u32 %v1735, 7
    %v1737 = vsub.s32 %v1734, %v1736
    %v1738 = vrot.slane %v1730, %v1737
    %v1740 = vunpack.c.l.s4 1983009808
    %v1741 = vunpack.c.0.s8 %v1740
    %v1742 = vlaneseq
    %v1743 = vshrl.u32 %v1742, 7
    %v1744 = vsub.s32 %v1741, %v1743
    %v1745 = vrot.slane %v1731, %v1744
    %v1746 = vcombine.low %v1738, %v1745
    %v1747 = vcombine.low %v1692, %v1695
    %v1749 = vunpack.c.l.s4 1983009808
    %v1750 = vunpack.c.0.s8 %v1749
    %v1751 = vlaneseq
    %v1752 = vshrl.u32 %v1751, 7
    %v1753 = vsub.s32 %v1750, %v1752
    %v1754 = vrot.slane %v1747, %v1753
    %v1755 = vsel %vm602, %v1712, 0
    %v1757 = vsel %vm602, %v1729, 0
    %v1759 = vsel %vm602, %v1746, 0
    %v1761 = vsel %vm602, %v1754, 0
    %1763 = vmatprep.subr.mxu0 0.0
    %1764 = vmatpush1.msra.mxu0 %v1577
    %1765 = vmatprep.subr.mxu0 0.0
    %1766 = vmatpush1.msra.mxu0 %v1578
    %1767 = vmatprep.subr.mxu0 0.0
    %1768 = vmatpush1.msra.mxu0 0.0
    %1769 = vmatprep.subr.mxu0 0.0
    %1770 = vmatpush1.msra.mxu0 0.0
    %1771 = vmatprep.subr.mxu0 0.0
    %1772 = vmatpush1.msra.mxu0 0.0
    %1773 = vmatprep.subr.mxu0 0.0
    %1774 = vmatpush1.msra.mxu0 0.0
    %1775 = vmatprep.subr.mxu0 0.0
    %1776 = vmatpush1.msra.mxu0 0.0
    %1777 = vmatprep.subr.mxu0 0.0
    %1778 = vmatpush1.msra.mxu0 0.0
    %1779 = vmatprep.subr.mxu0 0.0
    %1780 = vmatpush1.msra.mxu0 0.0
    %1781 = vmatprep.subr.mxu0 0.0
    %1782 = vmatpush1.msra.mxu0 0.0
    %1783 = vmatprep.subr.mxu0 0.0
    %1784 = vmatpush1.msra.mxu0 0.0
    %1785 = vmatprep.subr.mxu0 0.0
    %1786 = vmatpush1.msra.mxu0 0.0
    %1787 = vmatprep.subr.mxu0 0.0
    %1788 = vmatpush1.msra.mxu0 0.0
    %1789 = vmatprep.subr.mxu0 0.0
    %1790 = vmatpush1.msra.mxu0 0.0
    %1791 = vmatprep.subr.mxu0 0.0
    %1792 = vmatpush1.msra.mxu0 0.0
    %1793 = vmatprep.subr.mxu0 0.0
    %1794 = vmatpush1.msra.mxu0 0.0
    %1795 = vmatprep.subr.mxu0 0.0
    %1796 = vmatpush1.msra.mxu0 0.0
    %1797 = vmatprep.subr.mxu0 0.0
    %1798 = vmatpush1.msra.mxu0 0.0
    %1799 = vmatprep.subr.mxu0 0.0
    %1800 = vmatpush1.msra.mxu0 0.0
    %1801 = vmatprep.subr.mxu0 0.0
    %1802 = vmatpush1.msra.mxu0 0.0
    %1803 = vmatprep.subr.mxu0 0.0
    %1804 = vmatpush1.msra.mxu0 0.0
    %1805 = vmatprep.subr.mxu0 0.0
    %1806 = vmatpush1.msra.mxu0 0.0
    %1807 = vmatprep.subr.mxu0 0.0
    %1808 = vmatpush1.msra.mxu0 0.0
    %1809 = vmatprep.subr.mxu0 0.0
    %1810 = vmatpush1.msra.mxu0 0.0
    %1811 = vmatprep.subr.mxu0 0.0
    %1812 = vmatpush1.msra.mxu0 0.0
    %1813 = vmatprep.subr.mxu0 0.0
    %1814 = vmatpush1.msra.mxu0 0.0
    %1815 = vmatprep.subr.mxu0 0.0
    %1816 = vmatpush1.msra.mxu0 0.0
    %1817 = vmatprep.subr.mxu0 0.0
    %1818 = vmatpush1.msra.mxu0 0.0
    %1819 = vmatprep.subr.mxu0 0.0
    %1820 = vmatpush1.msra.mxu0 0.0
    %1821 = vmatprep.subr.mxu0 0.0
    %1822 = vmatpush1.msra.mxu0 0.0
    %1823 = vmatprep.subr.mxu0 0.0
    %1824 = vmatpush1.msra.mxu0 0.0
    %1825 = vmatprep.subr.mxu0 0.0
    %1826 = vmatpush1.msra.mxu0 0.0
    %1827 = vmatprep.mubr.f32.mxu0 0.0
    %1828 = vmatmul.mubr.f32.gmra.mrb[0].mxu0 %v1755
    %v1829 = vpop.f32.mrb[0].mxu0
    %v1830 = vadd.f32 0.0, %v1829
    %v1831 = vpop.f32.mrb[0].mxu0
    %1832 = vmatprep.mubr.f32.mxu0 0.0
    %1833 = vmatmul.mubr.f32.gmra.mrb[0].mxu0 %v1757
    %v1834 = vpop.f32.mrb[0].mxu0
    %v1835 = vadd.f32 0.0, %v1834
    %v1836 = vpop.f32.mrb[0].mxu0
    %1837 = vmatprep.mubr.f32.mxu0 0.0
    %1838 = vmatmul.mubr.f32.gmra.mrb[0].mxu0 %v1759
    %v1839 = vpop.f32.mrb[0].mxu0
    %v1840 = vadd.f32 0.0, %v1839
    %v1841 = vpop.f32.mrb[0].mxu0
    %1842 = vmatprep.mubr.f32.mxu0 0.0
    %1843 = vmatmul.mubr.f32.gmra.mrb[0].mxu0 %v1761
    %v1844 = vpop.f32.mrb[0].mxu0
    %v1845 = vadd.f32 0.0, %v1844
    %v1846 = vpop.f32.mrb[0].mxu0
    %1847 = vdwg.mxu0
    %v1848 = vcombine.low %v1587, %v1595
    %v1849 = vcombine.low %v1594, %v1596
    %v1851 = vunpack.c.l.s4 1983009808
    %v1852 = vunpack.c.0.s8 %v1851
    %v1853 = vlaneseq
    %v1854 = vshrl.u32 %v1853, 7
    %v1855 = vsub.s32 %v1852, %v1854
    %v1856 = vrot.slane %v1848, %v1855
    %v1858 = vunpack.c.l.s4 1983009808
    %v1859 = vunpack.c.0.s8 %v1858
    %v1860 = vlaneseq
    %v1861 = vshrl.u32 %v1860, 7
    %v1862 = vsub.s32 %v1859, %v1861
    %v1863 = vrot.slane %v1849, %v1862
    %v1864 = vcombine.low %v1856, %v1863
    %v1865 = vcombine.low %v1603, %v1611
    %v1866 = vcombine.low %v1610, %v1619
    %v1868 = vunpack.c.l.s4 1983009808
    %v1869 = vunpack.c.0.s8 %v1868
    %v1870 = vlaneseq
    %v1871 = vshrl.u32 %v1870, 7
    %v1872 = vsub.s32 %v1869, %v1871
    %v1873 = vrot.slane %v1865, %v1872
    %v1875 = vunpack.c.l.s4 1983009808
    %v1876 = vunpack.c.0.s8 %v1875
    %v1877 = vlaneseq
    %v1878 = vshrl.u32 %v1877, 7
    %v1879 = vsub.s32 %v1876, %v1878
    %v1880 = vrot.slane %v1866, %v1879
    %v1881 = vcombine.low %v1873, %v1880
    %v1882 = vcombine.low %v1627, %v1626
    %v1883 = vcombine.low %v1628, %v1635
    %v1885 = vunpack.c.l.s4 1983009808
    %v1886 = vunpack.c.0.s8 %v1885
    %v1887 = vlaneseq
    %v1888 = vshrl.u32 %v1887, 7
    %v1889 = vsub.s32 %v1886, %v1888
    %v1890 = vrot.slane %v1882, %v1889
    %v1892 = vunpack.c.l.s4 1983009808
    %v1893 = vunpack.c.0.s8 %v1892
    %v1894 = vlaneseq
    %v1895 = vshrl.u32 %v1894, 7
    %v1896 = vsub.s32 %v1893, %v1895
    %v1897 = vrot.slane %v1883, %v1896
    %v1898 = vcombine.low %v1890, %v1897
    %v1899 = vcombine.low %v1643, %v1642
    %v1901 = vunpack.c.l.s4 1983009808
    %v1902 = vunpack.c.0.s8 %v1901
    %v1903 = vlaneseq
    %v1904 = vshrl.u32 %v1903, 7
    %v1905 = vsub.s32 %v1902, %v1904
    %v1906 = vrot.slane %v1899, %v1905
    %v1907 = vsel %vm602, %v1864, 0
    %v1909 = vsel %vm602, %v1881, 0
    %v1911 = vsel %vm602, %v1898, 0
    %v1913 = vsel %vm602, %v1906, 0
    %1915 = vmatprep.subr.mxu0 0.0
    %1916 = vmatpush1.msra.mxu0 %v1575
    %1917 = vmatprep.subr.mxu0 0.0
    %1918 = vmatpush1.msra.mxu0 %v1576
    %1919 = vmatprep.subr.mxu0 0.0
    %1920 = vmatpush1.msra.mxu0 0.0
    %1921 = vmatprep.subr.mxu0 0.0
    %1922 = vmatpush1.msra.mxu0 0.0
    %1923 = vmatprep.subr.mxu0 0.0
    %1924 = vmatpush1.msra.mxu0 0.0
    %1925 = vmatprep.subr.mxu0 0.0
    %1926 = vmatpush1.msra.mxu0 0.0
    %1927 = vmatprep.subr.mxu0 0.0
    %1928 = vmatpush1.msra.mxu0 0.0
    %1929 = vmatprep.subr.mxu0 0.0
    %1930 = vmatpush1.msra.mxu0 0.0
    %1931 = vmatprep.subr.mxu0 0.0
    %1932 = vmatpush1.msra.mxu0 0.0
    %1933 = vmatprep.subr.mxu0 0.0
    %1934 = vmatpush1.msra.mxu0 0.0
    %1935 = vmatprep.subr.mxu0 0.0
    %1936 = vmatpush1.msra.mxu0 0.0
    %1937 = vmatprep.subr.mxu0 0.0
    %1938 = vmatpush1.msra.mxu0 0.0
    %1939 = vmatprep.subr.mxu0 0.0
    %1940 = vmatpush1.msra.mxu0 0.0
    %1941 = vmatprep.subr.mxu0 0.0
    %1942 = vmatpush1.msra.mxu0 0.0
    %1943 = vmatprep.subr.mxu0 0.0
    %1944 = vmatpush1.msra.mxu0 0.0
    %1945 = vmatprep.subr.mxu0 0.0
    %1946 = vmatpush1.msra.mxu0 0.0
    %1947 = vmatprep.subr.mxu0 0.0
    %1948 = vmatpush1.msra.mxu0 0.0
    %1949 = vmatprep.subr.mxu0 0.0
    %1950 = vmatpush1.msra.mxu0 0.0
    %1951 = vmatprep.subr.mxu0 0.0
    %1952 = vmatpush1.msra.mxu0 0.0
    %1953 = vmatprep.subr.mxu0 0.0
    %1954 = vmatpush1.msra.mxu0 0.0
    %1955 = vmatprep.subr.mxu0 0.0
    %1956 = vmatpush1.msra.mxu0 0.0
    %1957 = vmatprep.subr.mxu0 0.0
    %1958 = vmatpush1.msra.mxu0 0.0
    %1959 = vmatprep.subr.mxu0 0.0
    %1960 = vmatpush1.msra.mxu0 0.0
    %1961 = vmatprep.subr.mxu0 0.0
    %1962 = vmatpush1.msra.mxu0 0.0
    %1963 = vmatprep.subr.mxu0 0.0
    %1964 = vmatpush1.msra.mxu0 0.0
    %1965 = vmatprep.subr.mxu0 0.0
    %1966 = vmatpush1.msra.mxu0 0.0
    %1967 = vmatprep.subr.mxu0 0.0
    %1968 = vmatpush1.msra.mxu0 0.0
    %1969 = vmatprep.subr.mxu0 0.0
    %1970 = vmatpush1.msra.mxu0 0.0
    %1971 = vmatprep.subr.mxu0 0.0
    %1972 = vmatpush1.msra.mxu0 0.0
    %1973 = vmatprep.subr.mxu0 0.0
    %1974 = vmatpush1.msra.mxu0 0.0
    %1975 = vmatprep.subr.mxu0 0.0
    %1976 = vmatpush1.msra.mxu0 0.0
    %1977 = vmatprep.subr.mxu0 0.0
    %1978 = vmatpush1.msra.mxu0 0.0
    %1979 = vmatprep.mubr.f32.mxu0 0.0
    %1980 = vmatmul.mubr.f32.gmra.mrb[0].mxu0 %v1907
    %v1981 = vpop.f32.mrb[0].mxu0
    %v1982 = vadd.f32 %v1830, %v1981
    %v1983 = vpop.f32.mrb[0].mxu0
    %1984 = vmatprep.mubr.f32.mxu0 0.0
    %1985 = vmatmul.mubr.f32.gmra.mrb[0].mxu0 %v1909
    %v1986 = vpop.f32.mrb[0].mxu0
    %v1987 = vadd.f32 %v1835, %v1986
    %v1988 = vpop.f32.mrb[0].mxu0
    %1989 = vmatprep.mubr.f32.mxu0 0.0
    %1990 = vmatmul.mubr.f32.gmra.mrb[0].mxu0 %v1911
    %v1991 = vpop.f32.mrb[0].mxu0
    %v1992 = vadd.f32 %v1840, %v1991
    %v1993 = vpop.f32.mrb[0].mxu0
    %1994 = vmatprep.mubr.f32.mxu0 0.0
    %1995 = vmatmul.mubr.f32.gmra.mrb[0].mxu0 %v1913
    %v1996 = vpop.f32.mrb[0].mxu0
    %v1997 = vadd.f32 %v1845, %v1996
    %v1998 = vpop.f32.mrb[0].mxu0
    %1999 = vdwg.mxu0
    %v2004 = vcombine.high %v1982, %v1982
    %v2006 = vunpack.c.l.s4 1983009808
    %v2007 = vunpack.c.0.s8 %v2006
    %v2008 = vlaneseq
    %v2009 = vshrl.u32 %v2008, 7
    %v2010 = vsub.s32 %v2007, %v2009
    %v2011 = vrot.slane %v1982, %v2010
    %v2013 = vunpack.c.l.s4 1983009808
    %v2014 = vunpack.c.0.s8 %v2013
    %v2015 = vlaneseq
    %v2016 = vshrl.u32 %v2015, 7
    %v2017 = vsub.s32 %v2014, %v2016
    %v2018 = vrot.slane %v2004, %v2017
    %v2019 = vcombine.high %v2011, %v2011
    %v2020 = vcombine.high %v2018, %v2018
    %v2021 = vcombine.high %v1987, %v1987
    %v2023 = vunpack.c.l.s4 1983009808
    %v2024 = vunpack.c.0.s8 %v2023
    %v2025 = vlaneseq
    %v2026 = vshrl.u32 %v2025, 7
    %v2027 = vsub.s32 %v2024, %v2026
    %v2028 = vrot.slane %v1987, %v2027
    %v2030 = vunpack.c.l.s4 1983009808
    %v2031 = vunpack.c.0.s8 %v2030
    %v2032 = vlaneseq
    %v2033 = vshrl.u32 %v2032, 7
    %v2034 = vsub.s32 %v2031, %v2033
    %v2035 = vrot.slane %v2021, %v2034
    %v2036 = vcombine.high %v2028, %v2028
    %v2037 = vcombine.high %v2035, %v2035
    %v2038 = vcombine.high %v1992, %v1992
    %v2040 = vunpack.c.l.s4 1983009808
    %v2041 = vunpack.c.0.s8 %v2040
    %v2042 = vlaneseq
    %v2043 = vshrl.u32 %v2042, 7
    %v2044 = vsub.s32 %v2041, %v2043
    %v2045 = vrot.slane %v1992, %v2044
    %v2047 = vunpack.c.l.s4 1983009808
    %v2048 = vunpack.c.0.s8 %v2047
    %v2049 = vlaneseq
    %v2050 = vshrl.u32 %v2049, 7
    %v2051 = vsub.s32 %v2048, %v2050
    %v2052 = vrot.slane %v2038, %v2051
    %v2053 = vcombine.high %v2045, %v2045
    %v2054 = vcombine.high %v2052, %v2052
    %v2056 = vunpack.c.l.s4 1983009808
    %v2057 = vunpack.c.0.s8 %v2056
    %v2058 = vlaneseq
    %v2059 = vshrl.u32 %v2058, 7
    %v2060 = vsub.s32 %v2057, %v2059
    %v2061 = vrot.slane %v1997, %v2060
    %v2062 = vcombine.high %v2061, %v2061
    %v2077 = vcombine.low %v1595, %v1594
    %v2078 = vcombine.low %v1596, %v1603
    %v2080 = vunpack.c.l.s4 1983009808
    %v2081 = vunpack.c.0.s8 %v2080
    %v2082 = vlaneseq
    %v2083 = vshrl.u32 %v2082, 7
    %v2084 = vsub.s32 %v2081, %v2083
    %v2085 = vrot.slane %v2077, %v2084
    %v2087 = vunpack.c.l.s4 1983009808
    %v2088 = vunpack.c.0.s8 %v2087
    %v2089 = vlaneseq
    %v2090 = vshrl.u32 %v2089, 7
    %v2091 = vsub.s32 %v2088, %v2090
    %v2092 = vrot.slane %v2078, %v2091
    %v2093 = vcombine.low %v2085, %v2092
    %v2094 = vcombine.low %v1611, %v1610
    %v2095 = vcombine.low %v1612, %v1627
    %v2097 = vunpack.c.l.s4 1983009808
    %v2098 = vunpack.c.0.s8 %v2097
    %v2099 = vlaneseq
    %v2100 = vshrl.u32 %v2099, 7
    %v2101 = vsub.s32 %v2098, %v2100
    %v2102 = vrot.slane %v2094, %v2101
    %v2104 = vunpack.c.l.s4 1983009808
    %v2105 = vunpack.c.0.s8 %v2104
    %v2106 = vlaneseq
    %v2107 = vshrl.u32 %v2106, 7
    %v2108 = vsub.s32 %v2105, %v2107
    %v2109 = vrot.slane %v2095, %v2108
    %v2110 = vcombine.low %v2102, %v2109
    %v2111 = vcombine.low %v1626, %v1628
    %v2112 = vcombine.low %v1635, %v1643
    %v2114 = vunpack.c.l.s4 1983009808
    %v2115 = vunpack.c.0.s8 %v2114
    %v2116 = vlaneseq
    %v2117 = vshrl.u32 %v2116, 7
    %v2118 = vsub.s32 %v2115, %v2117
    %v2119 = vrot.slane %v2111, %v2118
    %v2121 = vunpack.c.l.s4 1983009808
    %v2122 = vunpack.c.0.s8 %v2121
    %v2123 = vlaneseq
    %v2124 = vshrl.u32 %v2123, 7
    %v2125 = vsub.s32 %v2122, %v2124
    %v2126 = vrot.slane %v2112, %v2125
    %v2127 = vcombine.low %v2119, %v2126
    %v2128 = vcombine.low %v1642, %v1644
    %v2130 = vunpack.c.l.s4 1983009808
    %v2131 = vunpack.c.0.s8 %v2130
    %v2132 = vlaneseq
    %v2133 = vshrl.u32 %v2132, 7
    %v2134 = vsub.s32 %v2131, %v2133
    %v2135 = vrot.slane %v2128, %v2134
    %v2136 = vsel %vm602, %v2093, 0
    %v2138 = vsel %vm602, %v2110, 0
    %v2140 = vsel %vm602, %v2127, 0
    %v2142 = vsel %vm602, %v2135, 0
    %2144 = vmatprep.subr.mxu0 0.0
    %2145 = vmatpush1.msra.mxu0 %v1579
    %2146 = vmatprep.subr.mxu0 0.0
    %2147 = vmatpush1.msra.mxu0 %v1580
    %2148 = vmatprep.subr.mxu0 0.0
    %2149 = vmatpush1.msra.mxu0 0.0
    %2150 = vmatprep.subr.mxu0 0.0
    %2151 = vmatpush1.msra.mxu0 0.0
    %2152 = vmatprep.subr.mxu0 0.0
    %2153 = vmatpush1.msra.mxu0 0.0
    %2154 = vmatprep.subr.mxu0 0.0
    %2155 = vmatpush1.msra.mxu0 0.0
    %2156 = vmatprep.subr.mxu0 0.0
    %2157 = vmatpush1.msra.mxu0 0.0
    %2158 = vmatprep.subr.mxu0 0.0
    %2159 = vmatpush1.msra.mxu0 0.0
    %2160 = vmatprep.subr.mxu0 0.0
    %2161 = vmatpush1.msra.mxu0 0.0
    %2162 = vmatprep.subr.mxu0 0.0
    %2163 = vmatpush1.msra.mxu0 0.0
    %2164 = vmatprep.subr.mxu0 0.0
    %2165 = vmatpush1.msra.mxu0 0.0
    %2166 = vmatprep.subr.mxu0 0.0
    %2167 = vmatpush1.msra.mxu0 0.0
    %2168 = vmatprep.subr.mxu0 0.0
    %2169 = vmatpush1.msra.mxu0 0.0
    %2170 = vmatprep.subr.mxu0 0.0
    %2171 = vmatpush1.msra.mxu0 0.0
    %2172 = vmatprep.subr.mxu0 0.0
    %2173 = vmatpush1.msra.mxu0 0.0
    %2174 = vmatprep.subr.mxu0 0.0
    %2175 = vmatpush1.msra.mxu0 0.0
    %2176 = vmatprep.subr.mxu0 0.0
    %2177 = vmatpush1.msra.mxu0 0.0
    %2178 = vmatprep.subr.mxu0 0.0
    %2179 = vmatpush1.msra.mxu0 0.0
    %2180 = vmatprep.subr.mxu0 0.0
    %2181 = vmatpush1.msra.mxu0 0.0
    %2182 = vmatprep.subr.mxu0 0.0
    %2183 = vmatpush1.msra.mxu0 0.0
    %2184 = vmatprep.subr.mxu0 0.0
    %2185 = vmatpush1.msra.mxu0 0.0
    %2186 = vmatprep.subr.mxu0 0.0
    %2187 = vmatpush1.msra.mxu0 0.0
    %2188 = vmatprep.subr.mxu0 0.0
    %2189 = vmatpush1.msra.mxu0 0.0
    %2190 = vmatprep.subr.mxu0 0.0
    %2191 = vmatpush1.msra.mxu0 0.0
    %2192 = vmatprep.subr.mxu0 0.0
    %2193 = vmatpush1.msra.mxu0 0.0
    %2194 = vmatprep.subr.mxu0 0.0
    %2195 = vmatpush1.msra.mxu0 0.0
    %2196 = vmatprep.subr.mxu0 0.0
    %2197 = vmatpush1.msra.mxu0 0.0
    %2198 = vmatprep.subr.mxu0 0.0
    %2199 = vmatpush1.msra.mxu0 0.0
    %2200 = vmatprep.subr.mxu0 0.0
    %2201 = vmatpush1.msra.mxu0 0.0
    %2202 = vmatprep.subr.mxu0 0.0
    %2203 = vmatpush1.msra.mxu0 0.0
    %2204 = vmatprep.subr.mxu0 0.0
    %2205 = vmatpush1.msra.mxu0 0.0
    %2206 = vmatprep.subr.mxu0 0.0
    %2207 = vmatpush1.msra.mxu0 0.0
    %2208 = vmatprep.mubr.f32.mxu0 0.0
    %2209 = vmatmul.mubr.f32.gmra.mrb[0].mxu0 %v2136
    %v2210 = vpop.f32.mrb[0].mxu0
    %v2211 = vadd.f32 0.0, %v2210
    %v2212 = vpop.f32.mrb[0].mxu0
    %2213 = vmatprep.mubr.f32.mxu0 0.0
    %2214 = vmatmul.mubr.f32.gmra.mrb[0].mxu0 %v2138
    %v2215 = vpop.f32.mrb[0].mxu0
    %v2216 = vadd.f32 0.0, %v2215
    %v2217 = vpop.f32.mrb[0].mxu0
    %2218 = vmatprep.mubr.f32.mxu0 0.0
    %2219 = vmatmul.mubr.f32.gmra.mrb[0].mxu0 %v2140
    %v2220 = vpop.f32.mrb[0].mxu0
    %v2221 = vadd.f32 0.0, %v2220
    %v2222 = vpop.f32.mrb[0].mxu0
    %2223 = vmatprep.mubr.f32.mxu0 0.0
    %2224 = vmatmul.mubr.f32.gmra.mrb[0].mxu0 %v2142
    %v2225 = vpop.f32.mrb[0].mxu0
    %v2226 = vadd.f32 0.0, %v2225
    %v2227 = vpop.f32.mrb[0].mxu0
    %2228 = vdwg.mxu0
    %v2233 = vcombine.high %v2211, %v2211
    %v2235 = vunpack.c.l.s4 1983009808
    %v2236 = vunpack.c.0.s8 %v2235
    %v2237 = vlaneseq
    %v2238 = vshrl.u32 %v2237, 7
    %v2239 = vsub.s32 %v2236, %v2238
    %v2240 = vrot.slane %v2211, %v2239
    %v2242 = vunpack.c.l.s4 1983009808
    %v2243 = vunpack.c.0.s8 %v2242
    %v2244 = vlaneseq
    %v2245 = vshrl.u32 %v2244, 7
    %v2246 = vsub.s32 %v2243, %v2245
    %v2247 = vrot.slane %v2233, %v2246
    %v2248 = vcombine.high %v2240, %v2240
    %v2249 = vcombine.high %v2247, %v2247
    %v2250 = vcombine.high %v2216, %v2216
    %v2252 = vunpack.c.l.s4 1983009808
    %v2253 = vunpack.c.0.s8 %v2252
    %v2254 = vlaneseq
    %v2255 = vshrl.u32 %v2254, 7
    %v2256 = vsub.s32 %v2253, %v2255
    %v2257 = vrot.slane %v2216, %v2256
    %v2259 = vunpack.c.l.s4 1983009808
    %v2260 = vunpack.c.0.s8 %v2259
    %v2261 = vlaneseq
    %v2262 = vshrl.u32 %v2261, 7
    %v2263 = vsub.s32 %v2260, %v2262
    %v2264 = vrot.slane %v2250, %v2263
    %v2265 = vcombine.high %v2257, %v2257
    %v2266 = vcombine.high %v2264, %v2264
    %v2267 = vcombine.high %v2221, %v2221
    %v2269 = vunpack.c.l.s4 1983009808
    %v2270 = vunpack.c.0.s8 %v2269
    %v2271 = vlaneseq
    %v2272 = vshrl.u32 %v2271, 7
    %v2273 = vsub.s32 %v2270, %v2272
    %v2274 = vrot.slane %v2221, %v2273
    %v2276 = vunpack.c.l.s4 1983009808
    %v2277 = vunpack.c.0.s8 %v2276
    %v2278 = vlaneseq
    %v2279 = vshrl.u32 %v2278, 7
    %v2280 = vsub.s32 %v2277, %v2279
    %v2281 = vrot.slane %v2267, %v2280
    %v2282 = vcombine.high %v2274, %v2274
    %v2283 = vcombine.high %v2281, %v2281
    %v2285 = vunpack.c.l.s4 1983009808
    %v2286 = vunpack.c.0.s8 %v2285
    %v2287 = vlaneseq
    %v2288 = vshrl.u32 %v2287, 7
    %v2289 = vsub.s32 %v2286, %v2288
    %v2290 = vrot.slane %v2226, %v2289
    %v2291 = vcombine.high %v2290, %v2290
    %v2306 = vadd.f32 %v2011, %v2240
    %v2307 = vadd.f32 %v2019, %v2248
    %v2308 = vadd.f32 %v2018, %v2247
    %v2309 = vadd.f32 %v2020, %v2249
    %v2310 = vadd.f32 %v2028, %v2257
    %v2311 = vadd.f32 %v2036, %v2265
    %v2312 = vadd.f32 %v2035, %v2264
    %v2313 = vadd.f32 %v2037, %v2266
    %v2314 = vadd.f32 %v2045, %v2274
    %v2315 = vadd.f32 %v2053, %v2282
    %v2316 = vadd.f32 %v2052, %v2281
    %v2317 = vadd.f32 %v2054, %v2283
    %v2318 = vadd.f32 %v2061, %v2290
    %v2319 = vadd.f32 %v2062, %v2291
    %v2320 = vld [vmem:[%s5] sm:$0x1]
    %v2322 = vlaneseq
    %v2323 = vshrl.u32 %v2322, 7
    %v2324 = vsub.s32 0, %v2323
    %v2325 = vrot.slane %v2320, %v2324
    %v2326 = vcombine.high %v2325, %v2325
    %v2328 = vunpack.c.l.s4 1983009808
    %v2329 = vunpack.c.0.s8 %v2328
    %v2330 = vlaneseq
    %v2331 = vshrl.u32 %v2330, 7
    %v2332 = vsub.s32 %v2329, %v2331
    %v2333 = vrot.slane %v2325, %v2332
    %v2335 = vunpack.c.l.s4 1983009808
    %v2336 = vunpack.c.0.s8 %v2335
    %v2337 = vlaneseq
    %v2338 = vshrl.u32 %v2337, 7
    %v2339 = vsub.s32 %v2336, %v2338
    %v2340 = vrot.slane %v2326, %v2339
    %v2341 = vcombine.high %v2333, %v2333
    %v2342 = vcombine.high %v2340, %v2340
    %v2347 = vadd.f32 %v2306, %v2333
    %v2348 = vadd.f32 %v2307, %v2341
    %v2349 = vadd.f32 %v2308, %v2340
    %v2350 = vadd.f32 %v2309, %v2342
    %v2351 = vadd.f32 %v2310, %v2333
    %v2352 = vadd.f32 %v2311, %v2341
    %v2353 = vadd.f32 %v2312, %v2340
    %v2354 = vadd.f32 %v2313, %v2333
    %v2355 = vadd.f32 %v2314, %v2341
    %v2356 = vadd.f32 %v2315, %v2340
    %v2357 = vadd.f32 %v2316, %v2342
    %v2358 = vadd.f32 %v2317, %v2333
    %v2359 = vadd.f32 %v2318, %v2341
    %v2360 = vadd.f32 %v2319, %v2340
    %v2361 = vmax.f32 %v2347, 0.0
    %v2362 = vmax.f32 %v2348, 0.0
    %v2363 = vmax.f32 %v2349, 0.0
    %v2364 = vmax.f32 %v2350, 0.0
    %v2365 = vmax.f32 %v2351, 0.0
    %v2366 = vmax.f32 %v2352, 0.0
    %v2367 = vmax.f32 %v2353, 0.0
    %v2368 = vmax.f32 %v2354, 0.0
    %v2369 = vmax.f32 %v2355, 0.0
    %v2370 = vmax.f32 %v2356, 0.0
    %v2371 = vmax.f32 %v2357, 0.0
    %v2372 = vmax.f32 %v2358, 0.0
    %v2373 = vmax.f32 %v2359, 0.0
    %v2374 = vmax.f32 %v2360, 0.0
    %v2389 = vcombine.low %v2361, %v2362
    %v2390 = vcombine.low %v2363, %v2364
    %v2392 = vunpack.c.l.s4 1983009808
    %v2393 = vunpack.c.0.s8 %v2392
    %v2394 = vlaneseq
    %v2395 = vshrl.u32 %v2394, 7
    %v2396 = vsub.s32 %v2393, %v2395
    %v2397 = vrot.slane %v2389, %v2396
    %v2399 = vunpack.c.l.s4 1983009808
    %v2400 = vunpack.c.0.s8 %v2399
    %v2401 = vlaneseq
    %v2402 = vshrl.u32 %v2401, 7
    %v2403 = vsub.s32 %v2400, %v2402
    %v2404 = vrot.slane %v2390, %v2403
    %v2405 = vcombine.low %v2397, %v2404
    %v2406 = vcombine.low %v2365, %v2366
    %v2408 = vunpack.c.l.s4 1983009808
    %v2409 = vunpack.c.0.s8 %v2408
    %v2410 = vlaneseq
    %v2411 = vshrl.u32 %v2410, 7
    %v2412 = vsub.s32 %v2409, %v2411
    %v2413 = vrot.slane %v2406, %v2412
    %v2415 = vunpack.c.l.s4 1983009808
    %v2416 = vunpack.c.0.s8 %v2415
    %v2417 = vlaneseq
    %v2418 = vshrl.u32 %v2417, 7
    %v2419 = vsub.s32 %v2416, %v2418
    %v2420 = vrot.slane %v2367, %v2419
    %v2421 = vcombine.low %v2413, %v2420
    %v2422 = vcombine.low %v2368, %v2369
    %v2423 = vcombine.low %v2370, %v2371
    %v2425 = vunpack.c.l.s4 1983009808
    %v2426 = vunpack.c.0.s8 %v2425
    %v2427 = vlaneseq
    %v2428 = vshrl.u32 %v2427, 7
    %v2429 = vsub.s32 %v2426, %v2428
    %v2430 = vrot.slane %v2422, %v2429
    %v2432 = vunpack.c.l.s4 1983009808
    %v2433 = vunpack.c.0.s8 %v2432
    %v2434 = vlaneseq
    %v2435 = vshrl.u32 %v2434, 7
    %v2436 = vsub.s32 %v2433, %v2435
    %v2437 = vrot.slane %v2423, %v2436
    %v2438 = vcombine.low %v2430, %v2437
    %v2439 = vcombine.low %v2372, %v2373
    %v2441 = vunpack.c.l.s4 1983009808
    %v2442 = vunpack.c.0.s8 %v2441
    %v2443 = vlaneseq
    %v2444 = vshrl.u32 %v2443, 7
    %v2445 = vsub.s32 %v2442, %v2444
    %v2446 = vrot.slane %v2439, %v2445
    %v2448 = vunpack.c.l.s4 1983009808
    %v2449 = vunpack.c.0.s8 %v2448
    %v2450 = vlaneseq
    %v2451 = vshrl.u32 %v2450, 7
    %v2452 = vsub.s32 %v2449, %v2451
    %v2453 = vrot.slane %v2374, %v2452
    %v2454 = vcombine.low %v2446, %v2453
    %v2459 = vsel %vm1555, %v2405, -inf
    %vm2460 = vcmask 62464
    %v2461 = vsel %vm2460, %v2421, -inf
    %v2462 = vmax.f32 %v2459, %v2461
    %v2463 = vrot.slane %v2462, 4
    %v2464 = vmax.f32 %v2462, %v2463
    %v2465 = vrot.slane %v2464, 2
    %v2466 = vmax.f32 %v2464, %v2465
    %v2467 = vrot.slane %v2466, 1
    %v2468 = vmax.f32 %v2466, %v2467
    %v2469 = vsel %vm1555, %v2438, -inf
    %v2470 = vsel %vm2460, %v2454, -inf
    %v2471 = vmax.f32 %v2469, %v2470
    %v2472 = vrot.slane %v2471, 4
    %v2473 = vmax.f32 %v2471, %v2472
    %v2474 = vrot.slane %v2473, 2
    %v2475 = vmax.f32 %v2473, %v2474
    %v2476 = vrot.slane %v2475, 1
    %v2477 = vmax.f32 %v2475, %v2476
    %v2478 = vld [vmem:[%s6] sm:$0xff]
    %v2479 = vld [vmem:[%s6 + $0x8] sm:$0xff]
    %v2480 = vld [vmem:[%s6 + $0x10] sm:$0xff]
    %v2481 = vld [vmem:[%s6 + $0x18] sm:$0xff]
    %v2482 = vld [vmem:[%s6 + $0x20] sm:$0xff]
    %v2483 = vld [vmem:[%s6 + $0x28] sm:$0xff]
    %v2484 = vld [vmem:[%s6 + $0x30] sm:$0xff]
    %v2485 = vld [vmem:[%s6 + $0x38] sm:$0xff]
    %v2486 = vcombine.low %v312, %v354
    %v2488 = vunpack.c.l.s4 1966171168
    %v2489 = vunpack.c.0.s8 %v2488
    %v2490 = vlaneseq
    %v2491 = vshrl.u32 %v2490, 7
    %v2492 = vsub.s32 %v2489, %v2491
    %v2493 = vrot.slane %v2486, %v2492
    %v2494 = vcombine.low %v2493, %v523
    %v2496 = vunpack.c.l.s4 1966171168
    %v2497 = vunpack.c.0.s8 %v2496
    %v2498 = vlaneseq
    %v2499 = vshrl.u32 %v2498, 7
    %v2500 = vsub.s32 %v2497, %v2499
    %v2501 = vrot.slane %v2494, %v2500
    %v2502 = vcombine.low %v504, %v2501
    %v2503 = vcombine.low %v530, %v537
    %v2504 = vcombine.low %v544, %v571
    %v2506 = vunpack.c.l.s4 1966171168
    %v2507 = vunpack.c.0.s8 %v2506
    %v2508 = vlaneseq
    %v2509 = vshrl.u32 %v2508, 7
    %v2510 = vsub.s32 %v2507, %v2509
    %v2511 = vrot.slane %v2503, %v2510
    %v2513 = vunpack.c.l.s4 1966171168
    %v2514 = vunpack.c.0.s8 %v2513
    %v2515 = vlaneseq
    %v2516 = vshrl.u32 %v2515, 7
    %v2517 = vsub.s32 %v2514, %v2516
    %v2518 = vrot.slane %v2504, %v2517
    %v2519 = vcombine.low %v2511, %v2518
    %v2521 = vunpack.c.l.s4 1966171168
    %v2522 = vunpack.c.0.s8 %v2521
    %v2523 = vlaneseq
    %v2524 = vshrl.u32 %v2523, 7
    %v2525 = vsub.s32 %v2522, %v2524
    %v2526 = vrot.slane %v578, %v2525
    %v2527 = vsel %vm602, %v2502, 0
    %v2529 = vsel %vm602, %v2519, 0
    %v2531 = vsel %vm602, %v2526, 0
    %2533 = vmatprep.subr.mxu0 0.0
    %2534 = vmatpush1.msra.mxu0 %v2480
    %2535 = vmatprep.subr.mxu0 0.0
    %2536 = vmatpush1.msra.mxu0 %v2481
    %2537 = vmatprep.subr.mxu0 0.0
    %2538 = vmatpush1.msra.mxu0 0.0
    %2539 = vmatprep.subr.mxu0 0.0
    %2540 = vmatpush1.msra.mxu0 0.0
    %2541 = vmatprep.subr.mxu0 0.0
    %2542 = vmatpush1.msra.mxu0 0.0
    %2543 = vmatprep.subr.mxu0 0.0
    %2544 = vmatpush1.msra.mxu0 0.0
    %2545 = vmatprep.subr.mxu0 0.0
    %2546 = vmatpush1.msra.mxu0 0.0
    %2547 = vmatprep.subr.mxu0 0.0
    %2548 = vmatpush1.msra.mxu0 0.0
    %2549 = vmatprep.subr.mxu0 0.0
    %2550 = vmatpush1.msra.mxu0 0.0
    %2551 = vmatprep.subr.mxu0 0.0
    %2552 = vmatpush1.msra.mxu0 0.0
    %2553 = vmatprep.subr.mxu0 0.0
    %2554 = vmatpush1.msra.mxu0 0.0
    %2555 = vmatprep.subr.mxu0 0.0
    %2556 = vmatpush1.msra.mxu0 0.0
    %2557 = vmatprep.subr.mxu0 0.0
    %2558 = vmatpush1.msra.mxu0 0.0
    %2559 = vmatprep.subr.mxu0 0.0
    %2560 = vmatpush1.msra.mxu0 0.0
    %2561 = vmatprep.subr.mxu0 0.0
    %2562 = vmatpush1.msra.mxu0 0.0
    %2563 = vmatprep.subr.mxu0 0.0
    %2564 = vmatpush1.msra.mxu0 0.0
    %2565 = vmatprep.subr.mxu0 0.0
    %2566 = vmatpush1.msra.mxu0 0.0
    %2567 = vmatprep.subr.mxu0 0.0
    %2568 = vmatpush1.msra.mxu0 0.0
    %2569 = vmatprep.subr.mxu0 0.0
    %2570 = vmatpush1.msra.mxu0 0.0
    %2571 = vmatprep.subr.mxu0 0.0
    %2572 = vmatpush1.msra.mxu0 0.0
    %2573 = vmatprep.subr.mxu0 0.0
    %2574 = vmatpush1.msra.mxu0 0.0
    %2575 = vmatprep.subr.mxu0 0.0
    %2576 = vmatpush1.msra.mxu0 0.0
    %2577 = vmatprep.subr.mxu0 0.0
    %2578 = vmatpush1.msra.mxu0 0.0
    %2579 = vmatprep.subr.mxu0 0.0
    %2580 = vmatpush1.msra.mxu0 0.0
    %2581 = vmatprep.subr.mxu0 0.0
    %2582 = vmatpush1.msra.mxu0 0.0
    %2583 = vmatprep.subr.mxu0 0.0
    %2584 = vmatpush1.msra.mxu0 0.0
    %2585 = vmatprep.subr.mxu0 0.0
    %2586 = vmatpush1.msra.mxu0 0.0
    %2587 = vmatprep.subr.mxu0 0.0
    %2588 = vmatpush1.msra.mxu0 0.0
    %2589 = vmatprep.subr.mxu0 0.0
    %2590 = vmatpush1.msra.mxu0 0.0
    %2591 = vmatprep.subr.mxu0 0.0
    %2592 = vmatpush1.msra.mxu0 0.0
    %2593 = vmatprep.subr.mxu0 0.0
    %2594 = vmatpush1.msra.mxu0 0.0
    %2595 = vmatprep.subr.mxu0 0.0
    %2596 = vmatpush1.msra.mxu0 0.0
    %2597 = vmatprep.mubr.f32.mxu0 0.0
    %2598 = vmatmul.mubr.f32.gmra.mrb[0].mxu0 %v603
    %v2599 = vpop.f32.mrb[0].mxu0
    %v2600 = vadd.f32 0.0, %v2599
    %v2601 = vpop.f32.mrb[0].mxu0
    %2602 = vmatprep.mubr.f32.mxu0 0.0
    %2603 = vmatmul.mubr.f32.gmra.mrb[0].mxu0 %v2527
    %v2604 = vpop.f32.mrb[0].mxu0
    %v2605 = vadd.f32 0.0, %v2604
    %v2606 = vpop.f32.mrb[0].mxu0
    %2607 = vmatprep.mubr.f32.mxu0 0.0
    %2608 = vmatmul.mubr.f32.gmra.mrb[0].mxu0 %v2529
    %v2609 = vpop.f32.mrb[0].mxu0
    %v2610 = vadd.f32 0.0, %v2609
    %v2611 = vpop.f32.mrb[0].mxu0
    %2612 = vmatprep.mubr.f32.mxu0 0.0
    %2613 = vmatmul.mubr.f32.gmra.mrb[0].mxu0 %v2531
    %v2614 = vpop.f32.mrb[0].mxu0
    %v2615 = vadd.f32 0.0, %v2614
    %v2616 = vpop.f32.mrb[0].mxu0
    %2617 = vdwg.mxu0
    %v2618 = vcombine.low %v298, %v340
    %v2620 = vunpack.c.l.s4 1966171168
    %v2621 = vunpack.c.0.s8 %v2620
    %v2622 = vlaneseq
    %v2623 = vshrl.u32 %v2622, 7
    %v2624 = vsub.s32 %v2621, %v2623
    %v2625 = vrot.slane %v2618, %v2624
    %v2626 = vcombine.low %v2625, %v804
    %v2628 = vunpack.c.l.s4 1966171168
    %v2629 = vunpack.c.0.s8 %v2628
    %v2630 = vlaneseq
    %v2631 = vshrl.u32 %v2630, 7
    %v2632 = vsub.s32 %v2629, %v2631
    %v2633 = vrot.slane %v2626, %v2632
    %v2634 = vcombine.low %v785, %v2633
    %v2635 = vcombine.low %v811, %v818
    %v2636 = vcombine.low %v825, %v852
    %v2638 = vunpack.c.l.s4 1966171168
    %v2639 = vunpack.c.0.s8 %v2638
    %v2640 = vlaneseq
    %v2641 = vshrl.u32 %v2640, 7
    %v2642 = vsub.s32 %v2639, %v2641
    %v2643 = vrot.slane %v2635, %v2642
    %v2645 = vunpack.c.l.s4 1966171168
    %v2646 = vunpack.c.0.s8 %v2645
    %v2647 = vlaneseq
    %v2648 = vshrl.u32 %v2647, 7
    %v2649 = vsub.s32 %v2646, %v2648
    %v2650 = vrot.slane %v2636, %v2649
    %v2651 = vcombine.low %v2643, %v2650
    %v2653 = vunpack.c.l.s4 1966171168
    %v2654 = vunpack.c.0.s8 %v2653
    %v2655 = vlaneseq
    %v2656 = vshrl.u32 %v2655, 7
    %v2657 = vsub.s32 %v2654, %v2656
    %v2658 = vrot.slane %v859, %v2657
    %v2659 = vsel %vm602, %v2634, 0
    %v2661 = vsel %vm602, %v2651, 0
    %v2663 = vsel %vm602, %v2658, 0
    %2665 = vmatprep.subr.mxu0 0.0
    %2666 = vmatpush1.msra.mxu0 %v2478
    %2667 = vmatprep.subr.mxu0 0.0
    %2668 = vmatpush1.msra.mxu0 %v2479
    %2669 = vmatprep.subr.mxu0 0.0
    %2670 = vmatpush1.msra.mxu0 0.0
    %2671 = vmatprep.subr.mxu0 0.0
    %2672 = vmatpush1.msra.mxu0 0.0
    %2673 = vmatprep.subr.mxu0 0.0
    %2674 = vmatpush1.msra.mxu0 0.0
    %2675 = vmatprep.subr.mxu0 0.0
    %2676 = vmatpush1.msra.mxu0 0.0
    %2677 = vmatprep.subr.mxu0 0.0
    %2678 = vmatpush1.msra.mxu0 0.0
    %2679 = vmatprep.subr.mxu0 0.0
    %2680 = vmatpush1.msra.mxu0 0.0
    %2681 = vmatprep.subr.mxu0 0.0
    %2682 = vmatpush1.msra.mxu0 0.0
    %2683 = vmatprep.subr.mxu0 0.0
    %2684 = vmatpush1.msra.mxu0 0.0
    %2685 = vmatprep.subr.mxu0 0.0
    %2686 = vmatpush1.msra.mxu0 0.0
    %2687 = vmatprep.subr.mxu0 0.0
    %2688 = vmatpush1.msra.mxu0 0.0
    %2689 = vmatprep.subr.mxu0 0.0
    %2690 = vmatpush1.msra.mxu0 0.0
    %2691 = vmatprep.subr.mxu0 0.0
    %2692 = vmatpush1.msra.mxu0 0.0
    %2693 = vmatprep.subr.mxu0 0.0
    %2694 = vmatpush1.msra.mxu0 0.0
    %2695 = vmatprep.subr.mxu0 0.0
    %2696 = vmatpush1.msra.mxu0 0.0
    %2697 = vmatprep.subr.mxu0 0.0
    %2698 = vmatpush1.msra.mxu0 0.0
    %2699 = vmatprep.subr.mxu0 0.0
    %2700 = vmatpush1.msra.mxu0 0.0
    %2701 = vmatprep.subr.mxu0 0.0
    %2702 = vmatpush1.msra.mxu0 0.0
    %2703 = vmatprep.subr.mxu0 0.0
    %2704 = vmatpush1.msra.mxu0 0.0
    %2705 = vmatprep.subr.mxu0 0.0
    %2706 = vmatpush1.msra.mxu0 0.0
    %2707 = vmatprep.subr.mxu0 0.0
    %2708 = vmatpush1.msra.mxu0 0.0
    %2709 = vmatprep.subr.mxu0 0.0
    %2710 = vmatpush1.msra.mxu0 0.0
    %2711 = vmatprep.subr.mxu0 0.0
    %2712 = vmatpush1.msra.mxu0 0.0
    %2713 = vmatprep.subr.mxu0 0.0
    %2714 = vmatpush1.msra.mxu0 0.0
    %2715 = vmatprep.subr.mxu0 0.0
    %2716 = vmatpush1.msra.mxu0 0.0
    %2717 = vmatprep.subr.mxu0 0.0
    %2718 = vmatpush1.msra.mxu0 0.0
    %2719 = vmatprep.subr.mxu0 0.0
    %2720 = vmatpush1.msra.mxu0 0.0
    %2721 = vmatprep.subr.mxu0 0.0
    %2722 = vmatpush1.msra.mxu0 0.0
    %2723 = vmatprep.subr.mxu0 0.0
    %2724 = vmatpush1.msra.mxu0 0.0
    %2725 = vmatprep.subr.mxu0 0.0
    %2726 = vmatpush1.msra.mxu0 0.0
    %2727 = vmatprep.subr.mxu0 0.0
    %2728 = vmatpush1.msra.mxu0 0.0
    %2729 = vmatprep.mubr.f32.mxu0 0.0
    %2730 = vmatmul.mubr.f32.gmra.mrb[0].mxu0 %v883
    %v2731 = vpop.f32.mrb[0].mxu0
    %v2732 = vadd.f32 %v2600, %v2731
    %v2733 = vpop.f32.mrb[0].mxu0
    %2734 = vmatprep.mubr.f32.mxu0 0.0
    %2735 = vmatmul.mubr.f32.gmra.mrb[0].mxu0 %v2659
    %v2736 = vpop.f32.mrb[0].mxu0
    %v2737 = vadd.f32 %v2605, %v2736
    %v2738 = vpop.f32.mrb[0].mxu0
    %2739 = vmatprep.mubr.f32.mxu0 0.0
    %2740 = vmatmul.mubr.f32.gmra.mrb[0].mxu0 %v2661
    %v2741 = vpop.f32.mrb[0].mxu0
    %v2742 = vadd.f32 %v2610, %v2741
    %v2743 = vpop.f32.mrb[0].mxu0
    %2744 = vmatprep.mubr.f32.mxu0 0.0
    %2745 = vmatmul.mubr.f32.gmra.mrb[0].mxu0 %v2663
    %v2746 = vpop.f32.mrb[0].mxu0
    %v2747 = vadd.f32 %v2615, %v2746
    %v2748 = vpop.f32.mrb[0].mxu0
    %2749 = vdwg.mxu0
    %v2754 = vcombine.high %v2732, %v2732
    %v2756 = vunpack.c.l.s4 1966171168
    %v2757 = vunpack.c.0.s8 %v2756
    %v2758 = vlaneseq
    %v2759 = vshrl.u32 %v2758, 7
    %v2760 = vsub.s32 %v2757, %v2759
    %v2761 = vrot.slane %v2732, %v2760
    %v2763 = vunpack.c.l.s4 1966171168
    %v2764 = vunpack.c.0.s8 %v2763
    %v2765 = vlaneseq
    %v2766 = vshrl.u32 %v2765, 7
    %v2767 = vsub.s32 %v2764, %v2766
    %v2768 = vrot.slane %v2754, %v2767
    %v2769 = vcombine.high %v2761, %v2761
    %v2770 = vcombine.high %v2768, %v2768
    %v2772 = vunpack.c.l.s4 1966171168
    %v2773 = vunpack.c.0.s8 %v2772
    %v2774 = vlaneseq
    %v2775 = vshrl.u32 %v2774, 7
    %v2776 = vsub.s32 %v2773, %v2775
    %v2777 = vrot.slane %v2761, %v2776
    %v2779 = vunpack.c.l.s4 1966171168
    %v2780 = vunpack.c.0.s8 %v2779
    %v2781 = vlaneseq
    %v2782 = vshrl.u32 %v2781, 7
    %v2783 = vsub.s32 %v2780, %v2782
    %v2784 = vrot.slane %v2768, %v2783
    %v2786 = vunpack.c.l.s4 1966171168
    %v2787 = vunpack.c.0.s8 %v2786
    %v2788 = vlaneseq
    %v2789 = vshrl.u32 %v2788, 7
    %v2790 = vsub.s32 %v2787, %v2789
    %v2791 = vrot.slane %v2769, %v2790
    %v2793 = vunpack.c.l.s4 1966171168
    %v2794 = vunpack.c.0.s8 %v2793
    %v2795 = vlaneseq
    %v2796 = vshrl.u32 %v2795, 7
    %v2797 = vsub.s32 %v2794, %v2796
    %v2798 = vrot.slane %v2770, %v2797
    %v2799 = vcombine.high %v2777, %v2777
    %v2800 = vcombine.high %v2784, %v2784
    %v2801 = vcombine.high %v2791, %v2791
    %v2802 = vcombine.high %v2798, %v2798
    %v2803 = vcombine.high %v2737, %v2737
    %v2805 = vunpack.c.l.s4 1966171168
    %v2806 = vunpack.c.0.s8 %v2805
    %v2807 = vlaneseq
    %v2808 = vshrl.u32 %v2807, 7
    %v2809 = vsub.s32 %v2806, %v2808
    %v2810 = vrot.slane %v2737, %v2809
    %v2812 = vunpack.c.l.s4 1966171168
    %v2813 = vunpack.c.0.s8 %v2812
    %v2814 = vlaneseq
    %v2815 = vshrl.u32 %v2814, 7
    %v2816 = vsub.s32 %v2813, %v2815
    %v2817 = vrot.slane %v2803, %v2816
    %v2818 = vcombine.high %v2810, %v2810
    %v2819 = vcombine.high %v2817, %v2817
    %v2821 = vunpack.c.l.s4 1966171168
    %v2822 = vunpack.c.0.s8 %v2821
    %v2823 = vlaneseq
    %v2824 = vshrl.u32 %v2823, 7
    %v2825 = vsub.s32 %v2822, %v2824
    %v2826 = vrot.slane %v2810, %v2825
    %v2828 = vunpack.c.l.s4 1966171168
    %v2829 = vunpack.c.0.s8 %v2828
    %v2830 = vlaneseq
    %v2831 = vshrl.u32 %v2830, 7
    %v2832 = vsub.s32 %v2829, %v2831
    %v2833 = vrot.slane %v2817, %v2832
    %v2835 = vunpack.c.l.s4 1966171168
    %v2836 = vunpack.c.0.s8 %v2835
    %v2837 = vlaneseq
    %v2838 = vshrl.u32 %v2837, 7
    %v2839 = vsub.s32 %v2836, %v2838
    %v2840 = vrot.slane %v2818, %v2839
    %v2842 = vunpack.c.l.s4 1966171168
    %v2843 = vunpack.c.0.s8 %v2842
    %v2844 = vlaneseq
    %v2845 = vshrl.u32 %v2844, 7
    %v2846 = vsub.s32 %v2843, %v2845
    %v2847 = vrot.slane %v2819, %v2846
    %v2848 = vcombine.high %v2826, %v2826
    %v2849 = vcombine.high %v2833, %v2833
    %v2850 = vcombine.high %v2840, %v2840
    %v2851 = vcombine.high %v2847, %v2847
    %v2852 = vcombine.high %v2742, %v2742
    %v2854 = vunpack.c.l.s4 1966171168
    %v2855 = vunpack.c.0.s8 %v2854
    %v2856 = vlaneseq
    %v2857 = vshrl.u32 %v2856, 7
    %v2858 = vsub.s32 %v2855, %v2857
    %v2859 = vrot.slane %v2742, %v2858
    %v2861 = vunpack.c.l.s4 1966171168
    %v2862 = vunpack.c.0.s8 %v2861
    %v2863 = vlaneseq
    %v2864 = vshrl.u32 %v2863, 7
    %v2865 = vsub.s32 %v2862, %v2864
    %v2866 = vrot.slane %v2852, %v2865
    %v2867 = vcombine.high %v2859, %v2859
    %v2868 = vcombine.high %v2866, %v2866
    %v2870 = vunpack.c.l.s4 1966171168
    %v2871 = vunpack.c.0.s8 %v2870
    %v2872 = vlaneseq
    %v2873 = vshrl.u32 %v2872, 7
    %v2874 = vsub.s32 %v2871, %v2873
    %v2875 = vrot.slane %v2859, %v2874
    %v2877 = vunpack.c.l.s4 1966171168
    %v2878 = vunpack.c.0.s8 %v2877
    %v2879 = vlaneseq
    %v2880 = vshrl.u32 %v2879, 7
    %v2881 = vsub.s32 %v2878, %v2880
    %v2882 = vrot.slane %v2866, %v2881
    %v2884 = vunpack.c.l.s4 1966171168
    %v2885 = vunpack.c.0.s8 %v2884
    %v2886 = vlaneseq
    %v2887 = vshrl.u32 %v2886, 7
    %v2888 = vsub.s32 %v2885, %v2887
    %v2889 = vrot.slane %v2867, %v2888
    %v2891 = vunpack.c.l.s4 1966171168
    %v2892 = vunpack.c.0.s8 %v2891
    %v2893 = vlaneseq
    %v2894 = vshrl.u32 %v2893, 7
    %v2895 = vsub.s32 %v2892, %v2894
    %v2896 = vrot.slane %v2868, %v2895
    %v2897 = vcombine.high %v2875, %v2875
    %v2898 = vcombine.high %v2882, %v2882
    %v2899 = vcombine.high %v2889, %v2889
    %v2900 = vcombine.high %v2896, %v2896
    %v2902 = vunpack.c.l.s4 1966171168
    %v2903 = vunpack.c.0.s8 %v2902
    %v2904 = vlaneseq
    %v2905 = vshrl.u32 %v2904, 7
    %v2906 = vsub.s32 %v2903, %v2905
    %v2907 = vrot.slane %v2747, %v2906
    %v2908 = vcombine.high %v2907, %v2907
    %v2910 = vunpack.c.l.s4 1966171168
    %v2911 = vunpack.c.0.s8 %v2910
    %v2912 = vlaneseq
    %v2913 = vshrl.u32 %v2912, 7
    %v2914 = vsub.s32 %v2911, %v2913
    %v2915 = vrot.slane %v2907, %v2914
    %v2917 = vunpack.c.l.s4 1966171168
    %v2918 = vunpack.c.0.s8 %v2917
    %v2919 = vlaneseq
    %v2920 = vshrl.u32 %v2919, 7
    %v2921 = vsub.s32 %v2918, %v2920
    %v2922 = vrot.slane %v2908, %v2921
    %v2949 = vcombine.low %v713, %v720
    %v2950 = vcombine.low %v727, %v755
    %v2952 = vunpack.c.l.s4 1966171168
    %v2953 = vunpack.c.0.s8 %v2952
    %v2954 = vlaneseq
    %v2955 = vshrl.u32 %v2954, 7
    %v2956 = vsub.s32 %v2953, %v2955
    %v2957 = vrot.slane %v2949, %v2956
    %v2959 = vunpack.c.l.s4 1966171168
    %v2960 = vunpack.c.0.s8 %v2959
    %v2961 = vlaneseq
    %v2962 = vshrl.u32 %v2961, 7
    %v2963 = vsub.s32 %v2960, %v2962
    %v2964 = vrot.slane %v2950, %v2963
    %v2965 = vcombine.low %v2957, %v2964
    %v2966 = vcombine.low %v314, %v362
    %v2968 = vunpack.c.l.s4 1966171168
    %v2969 = vunpack.c.0.s8 %v2968
    %v2970 = vlaneseq
    %v2971 = vshrl.u32 %v2970, 7
    %v2972 = vsub.s32 %v2969, %v2971
    %v2973 = vrot.slane %v2966, %v2972
    %v2974 = vcombine.low %v762, %v769
    %v2975 = vcombine.low %v2973, %v811
    %v2977 = vunpack.c.l.s4 1966171168
    %v2978 = vunpack.c.0.s8 %v2977
    %v2979 = vlaneseq
    %v2980 = vshrl.u32 %v2979, 7
    %v2981 = vsub.s32 %v2978, %v2980
    %v2982 = vrot.slane %v2974, %v2981
    %v2984 = vunpack.c.l.s4 1966171168
    %v2985 = vunpack.c.0.s8 %v2984
    %v2986 = vlaneseq
    %v2987 = vshrl.u32 %v2986, 7
    %v2988 = vsub.s32 %v2985, %v2987
    %v2989 = vrot.slane %v2975, %v2988
    %v2990 = vcombine.low %v2982, %v2989
    %v2991 = vcombine.low %v841, %v874
    %v2992 = vsel %vm602, %v2965, 0
    %v2994 = vsel %vm602, %v2990, 0
    %v2996 = vsel %vm602, %v2991, 0
    %v2998 = vsel %vm602, %v881, 0
    %3000 = vmatprep.subr.mxu0 0.0
    %3001 = vmatpush1.msra.mxu0 %v2482
    %3002 = vmatprep.subr.mxu0 0.0
    %3003 = vmatpush1.msra.mxu0 %v2483
    %3004 = vmatprep.subr.mxu0 0.0
    %3005 = vmatpush1.msra.mxu0 0.0
    %3006 = vmatprep.subr.mxu0 0.0
    %3007 = vmatpush1.msra.mxu0 0.0
    %3008 = vmatprep.subr.mxu0 0.0
    %3009 = vmatpush1.msra.mxu0 0.0
    %3010 = vmatprep.subr.mxu0 0.0
    %3011 = vmatpush1.msra.mxu0 0.0
    %3012 = vmatprep.subr.mxu0 0.0
    %3013 = vmatpush1.msra.mxu0 0.0
    %3014 = vmatprep.subr.mxu0 0.0
    %3015 = vmatpush1.msra.mxu0 0.0
    %3016 = vmatprep.subr.mxu0 0.0
    %3017 = vmatpush1.msra.mxu0 0.0
    %3018 = vmatprep.subr.mxu0 0.0
    %3019 = vmatpush1.msra.mxu0 0.0
    %3020 = vmatprep.subr.mxu0 0.0
    %3021 = vmatpush1.msra.mxu0 0.0
    %3022 = vmatprep.subr.mxu0 0.0
    %3023 = vmatpush1.msra.mxu0 0.0
    %3024 = vmatprep.subr.mxu0 0.0
    %3025 = vmatpush1.msra.mxu0 0.0
    %3026 = vmatprep.subr.mxu0 0.0
    %3027 = vmatpush1.msra.mxu0 0.0
    %3028 = vmatprep.subr.mxu0 0.0
    %3029 = vmatpush1.msra.mxu0 0.0
    %3030 = vmatprep.subr.mxu0 0.0
    %3031 = vmatpush1.msra.mxu0 0.0
    %3032 = vmatprep.subr.mxu0 0.0
    %3033 = vmatpush1.msra.mxu0 0.0
    %3034 = vmatprep.subr.mxu0 0.0
    %3035 = vmatpush1.msra.mxu0 0.0
    %3036 = vmatprep.subr.mxu0 0.0
    %3037 = vmatpush1.msra.mxu0 0.0
    %3038 = vmatprep.subr.mxu0 0.0
    %3039 = vmatpush1.msra.mxu0 0.0
    %3040 = vmatprep.subr.mxu0 0.0
    %3041 = vmatpush1.msra.mxu0 0.0
    %3042 = vmatprep.subr.mxu0 0.0
    %3043 = vmatpush1.msra.mxu0 0.0
    %3044 = vmatprep.subr.mxu0 0.0
    %3045 = vmatpush1.msra.mxu0 0.0
    %3046 = vmatprep.subr.mxu0 0.0
    %3047 = vmatpush1.msra.mxu0 0.0
    %3048 = vmatprep.subr.mxu0 0.0
    %3049 = vmatpush1.msra.mxu0 0.0
    %3050 = vmatprep.subr.mxu0 0.0
    %3051 = vmatpush1.msra.mxu0 0.0
    %3052 = vmatprep.subr.mxu0 0.0
    %3053 = vmatpush1.msra.mxu0 0.0
    %3054 = vmatprep.subr.mxu0 0.0
    %3055 = vmatpush1.msra.mxu0 0.0
    %3056 = vmatprep.subr.mxu0 0.0
    %3057 = vmatpush1.msra.mxu0 0.0
    %3058 = vmatprep.subr.mxu0 0.0
    %3059 = vmatpush1.msra.mxu0 0.0
    %3060 = vmatprep.subr.mxu0 0.0
    %3061 = vmatpush1.msra.mxu0 0.0
    %3062 = vmatprep.subr.mxu0 0.0
    %3063 = vmatpush1.msra.mxu0 0.0
    %3064 = vmatprep.mubr.f32.mxu0 0.0
    %3065 = vmatmul.mubr.f32.gmra.mrb[0].mxu0 %v2992
    %v3066 = vpop.f32.mrb[0].mxu0
    %v3067 = vadd.f32 0.0, %v3066
    %v3068 = vpop.f32.mrb[0].mxu0
    %3069 = vmatprep.mubr.f32.mxu0 0.0
    %3070 = vmatmul.mubr.f32.gmra.mrb[0].mxu0 %v2994
    %v3071 = vpop.f32.mrb[0].mxu0
    %v3072 = vadd.f32 0.0, %v3071
    %v3073 = vpop.f32.mrb[0].mxu0
    %3074 = vmatprep.mubr.f32.mxu0 0.0
    %3075 = vmatmul.mubr.f32.gmra.mrb[0].mxu0 %v2996
    %v3076 = vpop.f32.mrb[0].mxu0
    %v3077 = vadd.f32 0.0, %v3076
    %v3078 = vpop.f32.mrb[0].mxu0
    %3079 = vmatprep.mubr.f32.mxu0 0.0
    %3080 = vmatmul.mubr.f32.gmra.mrb[0].mxu0 %v2998
    %v3081 = vpop.f32.mrb[0].mxu0
    %v3082 = vadd.f32 0.0, %v3081
    %v3083 = vpop.f32.mrb[0].mxu0
    %3084 = vdwg.mxu0
    %v3089 = vcombine.high %v3067, %v3067
    %v3091 = vunpack.c.l.s4 1966171168
    %v3092 = vunpack.c.0.s8 %v3091
    %v3093 = vlaneseq
    %v3094 = vshrl.u32 %v3093, 7
    %v3095 = vsub.s32 %v3092, %v3094
    %v3096 = vrot.slane %v3067, %v3095
    %v3098 = vunpack.c.l.s4 1966171168
    %v3099 = vunpack.c.0.s8 %v3098
    %v3100 = vlaneseq
    %v3101 = vshrl.u32 %v3100, 7
    %v3102 = vsub.s32 %v3099, %v3101
    %v3103 = vrot.slane %v3089, %v3102
    %v3104 = vcombine.high %v3096, %v3096
    %v3105 = vcombine.high %v3103, %v3103
    %v3107 = vunpack.c.l.s4 1966171168
    %v3108 = vunpack.c.0.s8 %v3107
    %v3109 = vlaneseq
    %v3110 = vshrl.u32 %v3109, 7
    %v3111 = vsub.s32 %v3108, %v3110
    %v3112 = vrot.slane %v3096, %v3111
    %v3114 = vunpack.c.l.s4 1966171168
    %v3115 = vunpack.c.0.s8 %v3114
    %v3116 = vlaneseq
    %v3117 = vshrl.u32 %v3116, 7
    %v3118 = vsub.s32 %v3115, %v3117
    %v3119 = vrot.slane %v3103, %v3118
    %v3121 = vunpack.c.l.s4 1966171168
    %v3122 = vunpack.c.0.s8 %v3121
    %v3123 = vlaneseq
    %v3124 = vshrl.u32 %v3123, 7
    %v3125 = vsub.s32 %v3122, %v3124
    %v3126 = vrot.slane %v3104, %v3125
    %v3128 = vunpack.c.l.s4 1966171168
    %v3129 = vunpack.c.0.s8 %v3128
    %v3130 = vlaneseq
    %v3131 = vshrl.u32 %v3130, 7
    %v3132 = vsub.s32 %v3129, %v3131
    %v3133 = vrot.slane %v3105, %v3132
    %v3134 = vcombine.high %v3112, %v3112
    %v3135 = vcombine.high %v3119, %v3119
    %v3136 = vcombine.high %v3126, %v3126
    %v3137 = vcombine.high %v3133, %v3133
    %v3138 = vcombine.high %v3072, %v3072
    %v3140 = vunpack.c.l.s4 1966171168
    %v3141 = vunpack.c.0.s8 %v3140
    %v3142 = vlaneseq
    %v3143 = vshrl.u32 %v3142, 7
    %v3144 = vsub.s32 %v3141, %v3143
    %v3145 = vrot.slane %v3072, %v3144
    %v3147 = vunpack.c.l.s4 1966171168
    %v3148 = vunpack.c.0.s8 %v3147
    %v3149 = vlaneseq
    %v3150 = vshrl.u32 %v3149, 7
    %v3151 = vsub.s32 %v3148, %v3150
    %v3152 = vrot.slane %v3138, %v3151
    %v3153 = vcombine.high %v3145, %v3145
    %v3154 = vcombine.high %v3152, %v3152
    %v3156 = vunpack.c.l.s4 1966171168
    %v3157 = vunpack.c.0.s8 %v3156
    %v3158 = vlaneseq
    %v3159 = vshrl.u32 %v3158, 7
    %v3160 = vsub.s32 %v3157, %v3159
    %v3161 = vrot.slane %v3145, %v3160
    %v3163 = vunpack.c.l.s4 1966171168
    %v3164 = vunpack.c.0.s8 %v3163
    %v3165 = vlaneseq
    %v3166 = vshrl.u32 %v3165, 7
    %v3167 = vsub.s32 %v3164, %v3166
    %v3168 = vrot.slane %v3152, %v3167
    %v3170 = vunpack.c.l.s4 1966171168
    %v3171 = vunpack.c.0.s8 %v3170
    %v3172 = vlaneseq
    %v3173 = vshrl.u32 %v3172, 7
    %v3174 = vsub.s32 %v3171, %v3173
    %v3175 = vrot.slane %v3153, %v3174
    %v3177 = vunpack.c.l.s4 1966171168
    %v3178 = vunpack.c.0.s8 %v3177
    %v3179 = vlaneseq
    %v3180 = vshrl.u32 %v3179, 7
    %v3181 = vsub.s32 %v3178, %v3180
    %v3182 = vrot.slane %v3154, %v3181
    %v3183 = vcombine.high %v3161, %v3161
    %v3184 = vcombine.high %v3168, %v3168
    %v3185 = vcombine.high %v3175, %v3175
    %v3186 = vcombine.high %v3182, %v3182
    %v3187 = vcombine.high %v3077, %v3077
    %v3189 = vunpack.c.l.s4 1966171168
    %v3190 = vunpack.c.0.s8 %v3189
    %v3191 = vlaneseq
    %v3192 = vshrl.u32 %v3191, 7
    %v3193 = vsub.s32 %v3190, %v3192
    %v3194 = vrot.slane %v3077, %v3193
    %v3196 = vunpack.c.l.s4 1966171168
    %v3197 = vunpack.c.0.s8 %v3196
    %v3198 = vlaneseq
    %v3199 = vshrl.u32 %v3198, 7
    %v3200 = vsub.s32 %v3197, %v3199
    %v3201 = vrot.slane %v3187, %v3200
    %v3202 = vcombine.high %v3194, %v3194
    %v3203 = vcombine.high %v3201, %v3201
    %v3205 = vunpack.c.l.s4 1966171168
    %v3206 = vunpack.c.0.s8 %v3205
    %v3207 = vlaneseq
    %v3208 = vshrl.u32 %v3207, 7
    %v3209 = vsub.s32 %v3206, %v3208
    %v3210 = vrot.slane %v3194, %v3209
    %v3212 = vunpack.c.l.s4 1966171168
    %v3213 = vunpack.c.0.s8 %v3212
    %v3214 = vlaneseq
    %v3215 = vshrl.u32 %v3214, 7
    %v3216 = vsub.s32 %v3213, %v3215
    %v3217 = vrot.slane %v3201, %v3216
    %v3219 = vunpack.c.l.s4 1966171168
    %v3220 = vunpack.c.0.s8 %v3219
    %v3221 = vlaneseq
    %v3222 = vshrl.u32 %v3221, 7
    %v3223 = vsub.s32 %v3220, %v3222
    %v3224 = vrot.slane %v3202, %v3223
    %v3226 = vunpack.c.l.s4 1966171168
    %v3227 = vunpack.c.0.s8 %v3226
    %v3228 = vlaneseq
    %v3229 = vshrl.u32 %v3228, 7
    %v3230 = vsub.s32 %v3227, %v3229
    %v3231 = vrot.slane %v3203, %v3230
    %v3232 = vcombine.high %v3210, %v3210
    %v3233 = vcombine.high %v3217, %v3217
    %v3234 = vcombine.high %v3224, %v3224
    %v3235 = vcombine.high %v3231, %v3231
    %v3237 = vunpack.c.l.s4 1966171168
    %v3238 = vunpack.c.0.s8 %v3237
    %v3239 = vlaneseq
    %v3240 = vshrl.u32 %v3239, 7
    %v3241 = vsub.s32 %v3238, %v3240
    %v3242 = vrot.slane %v3082, %v3241
    %v3243 = vcombine.high %v3242, %v3242
    %v3245 = vunpack.c.l.s4 1966171168
    %v3246 = vunpack.c.0.s8 %v3245
    %v3247 = vlaneseq
    %v3248 = vshrl.u32 %v3247, 7
    %v3249 = vsub.s32 %v3246, %v3248
    %v3250 = vrot.slane %v3242, %v3249
    %v3252 = vunpack.c.l.s4 1966171168
    %v3253 = vunpack.c.0.s8 %v3252
    %v3254 = vlaneseq
    %v3255 = vshrl.u32 %v3254, 7
    %v3256 = vsub.s32 %v3253, %v3255
    %v3257 = vrot.slane %v3243, %v3256
    %v3284 = vadd.f32 %v2777, %v3112
    %v3285 = vadd.f32 %v2791, %v3126
    %v3286 = vadd.f32 %v2799, %v3134
    %v3287 = vadd.f32 %v2801, %v3136
    %v3288 = vadd.f32 %v2784, %v3119
    %v3289 = vadd.f32 %v2798, %v3133
    %v3290 = vadd.f32 %v2800, %v3135
    %v3291 = vadd.f32 %v2802, %v3137
    %v3292 = vadd.f32 %v2826, %v3161
    %v3293 = vadd.f32 %v2840, %v3175
    %v3294 = vadd.f32 %v2848, %v3183
    %v3295 = vadd.f32 %v2850, %v3185
    %v3296 = vadd.f32 %v2833, %v3168
    %v3297 = vadd.f32 %v2847, %v3182
    %v3298 = vadd.f32 %v2849, %v3184
    %v3299 = vadd.f32 %v2851, %v3186
    %v3300 = vadd.f32 %v2875, %v3210
    %v3301 = vadd.f32 %v2889, %v3224
    %v3302 = vadd.f32 %v2897, %v3232
    %v3303 = vadd.f32 %v2899, %v3234
    %v3304 = vadd.f32 %v2882, %v3217
    %v3305 = vadd.f32 %v2896, %v3231
    %v3306 = vadd.f32 %v2898, %v3233
    %v3307 = vadd.f32 %v2900, %v3235
    %v3308 = vadd.f32 %v2915, %v3250
    %v3309 = vadd.f32 %v2922, %v3257
    %v3310 = vcombine.low %v432, %v439
    %v3311 = vcombine.low %v446, %v474
    %v3313 = vunpack.c.l.s4 1966171168
    %v3314 = vunpack.c.0.s8 %v3313
    %v3315 = vlaneseq
    %v3316 = vshrl.u32 %v3315, 7
    %v3317 = vsub.s32 %v3314, %v3316
    %v3318 = vrot.slane %v3310, %v3317
    %v3320 = vunpack.c.l.s4 1966171168
    %v3321 = vunpack.c.0.s8 %v3320
    %v3322 = vlaneseq
    %v3323 = vshrl.u32 %v3322, 7
    %v3324 = vsub.s32 %v3321, %v3323
    %v3325 = vrot.slane %v3311, %v3324
    %v3326 = vcombine.low %v3318, %v3325
    %v3327 = vcombine.low %v316, %v364
    %v3329 = vunpack.c.l.s4 1966171168
    %v3330 = vunpack.c.0.s8 %v3329
    %v3331 = vlaneseq
    %v3332 = vshrl.u32 %v3331, 7
    %v3333 = vsub.s32 %v3330, %v3332
    %v3334 = vrot.slane %v3327, %v3333
    %v3335 = vcombine.low %v481, %v488
    %v3336 = vcombine.low %v3334, %v530
    %v3338 = vunpack.c.l.s4 1966171168
    %v3339 = vunpack.c.0.s8 %v3338
    %v3340 = vlaneseq
    %v3341 = vshrl.u32 %v3340, 7
    %v3342 = vsub.s32 %v3339, %v3341
    %v3343 = vrot.slane %v3335, %v3342
    %v3345 = vunpack.c.l.s4 1966171168
    %v3346 = vunpack.c.0.s8 %v3345
    %v3347 = vlaneseq
    %v3348 = vshrl.u32 %v3347, 7
    %v3349 = vsub.s32 %v3346, %v3348
    %v3350 = vrot.slane %v3336, %v3349
    %v3351 = vcombine.low %v3343, %v3350
    %v3352 = vcombine.low %v560, %v593
    %v3353 = vsel %vm602, %v3326, 0
    %v3355 = vsel %vm602, %v3351, 0
    %v3357 = vsel %vm602, %v3352, 0
    %v3359 = vsel %vm602, %v600, 0
    %3361 = vmatprep.subr.mxu0 0.0
    %3362 = vmatpush1.msra.mxu0 %v2484
    %3363 = vmatprep.subr.mxu0 0.0
    %3364 = vmatpush1.msra.mxu0 %v2485
    %3365 = vmatprep.subr.mxu0 0.0
    %3366 = vmatpush1.msra.mxu0 0.0
    %3367 = vmatprep.subr.mxu0 0.0
    %3368 = vmatpush1.msra.mxu0 0.0
    %3369 = vmatprep.subr.mxu0 0.0
    %3370 = vmatpush1.msra.mxu0 0.0
    %3371 = vmatprep.subr.mxu0 0.0
    %3372 = vmatpush1.msra.mxu0 0.0
    %3373 = vmatprep.subr.mxu0 0.0
    %3374 = vmatpush1.msra.mxu0 0.0
    %3375 = vmatprep.subr.mxu0 0.0
    %3376 = vmatpush1.msra.mxu0 0.0
    %3377 = vmatprep.subr.mxu0 0.0
    %3378 = vmatpush1.msra.mxu0 0.0
    %3379 = vmatprep.subr.mxu0 0.0
    %3380 = vmatpush1.msra.mxu0 0.0
    %3381 = vmatprep.subr.mxu0 0.0
    %3382 = vmatpush1.msra.mxu0 0.0
    %3383 = vmatprep.subr.mxu0 0.0
    %3384 = vmatpush1.msra.mxu0 0.0
    %3385 = vmatprep.subr.mxu0 0.0
    %3386 = vmatpush1.msra.mxu0 0.0
    %3387 = vmatprep.subr.mxu0 0.0
    %3388 = vmatpush1.msra.mxu0 0.0
    %3389 = vmatprep.subr.mxu0 0.0
    %3390 = vmatpush1.msra.mxu0 0.0
    %3391 = vmatprep.subr.mxu0 0.0
    %3392 = vmatpush1.msra.mxu0 0.0
    %3393 = vmatprep.subr.mxu0 0.0
    %3394 = vmatpush1.msra.mxu0 0.0
    %3395 = vmatprep.subr.mxu0 0.0
    %3396 = vmatpush1.msra.mxu0 0.0
    %3397 = vmatprep.subr.mxu0 0.0
    %3398 = vmatpush1.msra.mxu0 0.0
    %3399 = vmatprep.subr.mxu0 0.0
    %3400 = vmatpush1.msra.mxu0 0.0
    %3401 = vmatprep.subr.mxu0 0.0
    %3402 = vmatpush1.msra.mxu0 0.0
    %3403 = vmatprep.subr.mxu0 0.0
    %3404 = vmatpush1.msra.mxu0 0.0
    %3405 = vmatprep.subr.mxu0 0.0
    %3406 = vmatpush1.msra.mxu0 0.0
    %3407 = vmatprep.subr.mxu0 0.0
    %3408 = vmatpush1.msra.mxu0 0.0
    %3409 = vmatprep.subr.mxu0 0.0
    %3410 = vmatpush1.msra.mxu0 0.0
    %3411 = vmatprep.subr.mxu0 0.0
    %3412 = vmatpush1.msra.mxu0 0.0
    %3413 = vmatprep.subr.mxu0 0.0
    %3414 = vmatpush1.msra.mxu0 0.0
    %3415 = vmatprep.subr.mxu0 0.0
    %3416 = vmatpush1.msra.mxu0 0.0
    %3417 = vmatprep.subr.mxu0 0.0
    %3418 = vmatpush1.msra.mxu0 0.0
    %3419 = vmatprep.subr.mxu0 0.0
    %3420 = vmatpush1.msra.mxu0 0.0
    %3421 = vmatprep.subr.mxu0 0.0
    %3422 = vmatpush1.msra.mxu0 0.0
    %3423 = vmatprep.subr.mxu0 0.0
    %3424 = vmatpush1.msra.mxu0 0.0
    %3425 = vmatprep.mubr.f32.mxu0 0.0
    %3426 = vmatmul.mubr.f32.gmra.mrb[0].mxu0 %v3353
    %v3427 = vpop.f32.mrb[0].mxu0
    %v3428 = vadd.f32 0.0, %v3427
    %v3429 = vpop.f32.mrb[0].mxu0
    %3430 = vmatprep.mubr.f32.mxu0 0.0
    %3431 = vmatmul.mubr.f32.gmra.mrb[0].mxu0 %v3355
    %v3432 = vpop.f32.mrb[0].mxu0
    %v3433 = vadd.f32 0.0, %v3432
    %v3434 = vpop.f32.mrb[0].mxu0
    %3435 = vmatprep.mubr.f32.mxu0 0.0
    %3436 = vmatmul.mubr.f32.gmra.mrb[0].mxu0 %v3357
    %v3437 = vpop.f32.mrb[0].mxu0
    %v3438 = vadd.f32 0.0, %v3437
    %v3439 = vpop.f32.mrb[0].mxu0
    %3440 = vmatprep.mubr.f32.mxu0 0.0
    %3441 = vmatmul.mubr.f32.gmra.mrb[0].mxu0 %v3359
    %v3442 = vpop.f32.mrb[0].mxu0
    %v3443 = vadd.f32 0.0, %v3442
    %v3444 = vpop.f32.mrb[0].mxu0
    %3445 = vdwg.mxu0
    %v3450 = vcombine.high %v3428, %v3428
    %v3452 = vunpack.c.l.s4 1966171168
    %v3453 = vunpack.c.0.s8 %v3452
    %v3454 = vlaneseq
    %v3455 = vshrl.u32 %v3454, 7
    %v3456 = vsub.s32 %v3453, %v3455
    %v3457 = vrot.slane %v3428, %v3456
    %v3459 = vunpack.c.l.s4 1966171168
    %v3460 = vunpack.c.0.s8 %v3459
    %v3461 = vlaneseq
    %v3462 = vshrl.u32 %v3461, 7
    %v3463 = vsub.s32 %v3460, %v3462
    %v3464 = vrot.slane %v3450, %v3463
    %v3465 = vcombine.high %v3457, %v3457
    %v3466 = vcombine.high %v3464, %v3464
    %v3468 = vunpack.c.l.s4 1966171168
    %v3469 = vunpack.c.0.s8 %v3468
    %v3470 = vlaneseq
    %v3471 = vshrl.u32 %v3470, 7
    %v3472 = vsub.s32 %v3469, %v3471
    %v3473 = vrot.slane %v3457, %v3472
    %v3475 = vunpack.c.l.s4 1966171168
    %v3476 = vunpack.c.0.s8 %v3475
    %v3477 = vlaneseq
    %v3478 = vshrl.u32 %v3477, 7
    %v3479 = vsub.s32 %v3476, %v3478
    %v3480 = vrot.slane %v3464, %v3479
    %v3482 = vunpack.c.l.s4 1966171168
    %v3483 = vunpack.c.0.s8 %v3482
    %v3484 = vlaneseq
    %v3485 = vshrl.u32 %v3484, 7
    %v3486 = vsub.s32 %v3483, %v3485
    %v3487 = vrot.slane %v3465, %v3486
    %v3489 = vunpack.c.l.s4 1966171168
    %v3490 = vunpack.c.0.s8 %v3489
    %v3491 = vlaneseq
    %v3492 = vshrl.u32 %v3491, 7
    %v3493 = vsub.s32 %v3490, %v3492
    %v3494 = vrot.slane %v3466, %v3493
    %v3495 = vcombine.high %v3473, %v3473
    %v3496 = vcombine.high %v3480, %v3480
    %v3497 = vcombine.high %v3487, %v3487
    %v3498 = vcombine.high %v3494, %v3494
    %v3499 = vcombine.high %v3433, %v3433
    %v3501 = vunpack.c.l.s4 1966171168
    %v3502 = vunpack.c.0.s8 %v3501
    %v3503 = vlaneseq
    %v3504 = vshrl.u32 %v3503, 7
    %v3505 = vsub.s32 %v3502, %v3504
    %v3506 = vrot.slane %v3433, %v3505
    %v3508 = vunpack.c.l.s4 1966171168
    %v3509 = vunpack.c.0.s8 %v3508
    %v3510 = vlaneseq
    %v3511 = vshrl.u32 %v3510, 7
    %v3512 = vsub.s32 %v3509, %v3511
    %v3513 = vrot.slane %v3499, %v3512
    %v3514 = vcombine.high %v3506, %v3506
    %v3515 = vcombine.high %v3513, %v3513
    %v3517 = vunpack.c.l.s4 1966171168
    %v3518 = vunpack.c.0.s8 %v3517
    %v3519 = vlaneseq
    %v3520 = vshrl.u32 %v3519, 7
    %v3521 = vsub.s32 %v3518, %v3520
    %v3522 = vrot.slane %v3506, %v3521
    %v3524 = vunpack.c.l.s4 1966171168
    %v3525 = vunpack.c.0.s8 %v3524
    %v3526 = vlaneseq
    %v3527 = vshrl.u32 %v3526, 7
    %v3528 = vsub.s32 %v3525, %v3527
    %v3529 = vrot.slane %v3513, %v3528
    %v3531 = vunpack.c.l.s4 1966171168
    %v3532 = vunpack.c.0.s8 %v3531
    %v3533 = vlaneseq
    %v3534 = vshrl.u32 %v3533, 7
    %v3535 = vsub.s32 %v3532, %v3534
    %v3536 = vrot.slane %v3514, %v3535
    %v3538 = vunpack.c.l.s4 1966171168
    %v3539 = vunpack.c.0.s8 %v3538
    %v3540 = vlaneseq
    %v3541 = vshrl.u32 %v3540, 7
    %v3542 = vsub.s32 %v3539, %v3541
    %v3543 = vrot.slane %v3515, %v3542
    %v3544 = vcombine.high %v3522, %v3522
    %v3545 = vcombine.high %v3529, %v3529
    %v3546 = vcombine.high %v3536, %v3536
    %v3547 = vcombine.high %v3543, %v3543
    %v3548 = vcombine.high %v3438, %v3438
    %v3550 = vunpack.c.l.s4 1966171168
    %v3551 = vunpack.c.0.s8 %v3550
    %v3552 = vlaneseq
    %v3553 = vshrl.u32 %v3552, 7
    %v3554 = vsub.s32 %v3551, %v3553
    %v3555 = vrot.slane %v3438, %v3554
    %v3557 = vunpack.c.l.s4 1966171168
    %v3558 = vunpack.c.0.s8 %v3557
    %v3559 = vlaneseq
    %v3560 = vshrl.u32 %v3559, 7
    %v3561 = vsub.s32 %v3558, %v3560
    %v3562 = vrot.slane %v3548, %v3561
    %v3563 = vcombine.high %v3555, %v3555
    %v3564 = vcombine.high %v3562, %v3562
    %v3566 = vunpack.c.l.s4 1966171168
    %v3567 = vunpack.c.0.s8 %v3566
    %v3568 = vlaneseq
    %v3569 = vshrl.u32 %v3568, 7
    %v3570 = vsub.s32 %v3567, %v3569
    %v3571 = vrot.slane %v3555, %v3570
    %v3573 = vunpack.c.l.s4 1966171168
    %v3574 = vunpack.c.0.s8 %v3573
    %v3575 = vlaneseq
    %v3576 = vshrl.u32 %v3575, 7
    %v3577 = vsub.s32 %v3574, %v3576
    %v3578 = vrot.slane %v3562, %v3577
    %v3580 = vunpack.c.l.s4 1966171168
    %v3581 = vunpack.c.0.s8 %v3580
    %v3582 = vlaneseq
    %v3583 = vshrl.u32 %v3582, 7
    %v3584 = vsub.s32 %v3581, %v3583
    %v3585 = vrot.slane %v3563, %v3584
    %v3587 = vunpack.c.l.s4 1966171168
    %v3588 = vunpack.c.0.s8 %v3587
    %v3589 = vlaneseq
    %v3590 = vshrl.u32 %v3589, 7
    %v3591 = vsub.s32 %v3588, %v3590
    %v3592 = vrot.slane %v3564, %v3591
    %v3593 = vcombine.high %v3571, %v3571
    %v3594 = vcombine.high %v3578, %v3578
    %v3595 = vcombine.high %v3585, %v3585
    %v3596 = vcombine.high %v3592, %v3592
    %v3598 = vunpack.c.l.s4 1966171168
    %v3599 = vunpack.c.0.s8 %v3598
    %v3600 = vlaneseq
    %v3601 = vshrl.u32 %v3600, 7
    %v3602 = vsub.s32 %v3599, %v3601
    %v3603 = vrot.slane %v3443, %v3602
    %v3604 = vcombine.high %v3603, %v3603
    %v3606 = vunpack.c.l.s4 1966171168
    %v3607 = vunpack.c.0.s8 %v3606
    %v3608 = vlaneseq
    %v3609 = vshrl.u32 %v3608, 7
    %v3610 = vsub.s32 %v3607, %v3609
    %v3611 = vrot.slane %v3603, %v3610
    %v3613 = vunpack.c.l.s4 1966171168
    %v3614 = vunpack.c.0.s8 %v3613
    %v3615 = vlaneseq
    %v3616 = vshrl.u32 %v3615, 7
    %v3617 = vsub.s32 %v3614, %v3616
    %v3618 = vrot.slane %v3604, %v3617
    %v3645 = vadd.f32 %v3284, %v3473
    %v3646 = vadd.f32 %v3285, %v3487
    %v3647 = vadd.f32 %v3286, %v3495
    %v3648 = vadd.f32 %v3287, %v3497
    %v3649 = vadd.f32 %v3288, %v3480
    %v3650 = vadd.f32 %v3289, %v3494
    %v3651 = vadd.f32 %v3290, %v3496
    %v3652 = vadd.f32 %v3291, %v3498
    %v3653 = vadd.f32 %v3292, %v3522
    %v3654 = vadd.f32 %v3293, %v3536
    %v3655 = vadd.f32 %v3294, %v3544
    %v3656 = vadd.f32 %v3295, %v3546
    %v3657 = vadd.f32 %v3296, %v3529
    %v3658 = vadd.f32 %v3297, %v3543
    %v3659 = vadd.f32 %v3298, %v3545
    %v3660 = vadd.f32 %v3299, %v3547
    %v3661 = vadd.f32 %v3300, %v3571
    %v3662 = vadd.f32 %v3301, %v3585
    %v3663 = vadd.f32 %v3302, %v3593
    %v3664 = vadd.f32 %v3303, %v3595
    %v3665 = vadd.f32 %v3304, %v3578
    %v3666 = vadd.f32 %v3305, %v3592
    %v3667 = vadd.f32 %v3306, %v3594
    %v3668 = vadd.f32 %v3307, %v3596
    %v3669 = vadd.f32 %v3308, %v3611
    %v3670 = vadd.f32 %v3309, %v3618
    %v3671 = vld [vmem:[%s7] sm:$0x1]
    %v3673 = vlaneseq
    %v3674 = vshrl.u32 %v3673, 7
    %v3675 = vsub.s32 0, %v3674
    %v3676 = vrot.slane %v3671, %v3675
    %v3677 = vcombine.high %v3676, %v3676
    %v3679 = vunpack.c.l.s4 1966171168
    %v3680 = vunpack.c.0.s8 %v3679
    %v3681 = vlaneseq
    %v3682 = vshrl.u32 %v3681, 7
    %v3683 = vsub.s32 %v3680, %v3682
    %v3684 = vrot.slane %v3676, %v3683
    %v3686 = vunpack.c.l.s4 1966171168
    %v3687 = vunpack.c.0.s8 %v3686
    %v3688 = vlaneseq
    %v3689 = vshrl.u32 %v3688, 7
    %v3690 = vsub.s32 %v3687, %v3689
    %v3691 = vrot.slane %v3677, %v3690
    %v3692 = vcombine.high %v3684, %v3684
    %v3693 = vcombine.high %v3691, %v3691
    %v3695 = vunpack.c.l.s4 1966171168
    %v3696 = vunpack.c.0.s8 %v3695
    %v3697 = vlaneseq
    %v3698 = vshrl.u32 %v3697, 7
    %v3699 = vsub.s32 %v3696, %v3698
    %v3700 = vrot.slane %v3684, %v3699
    %v3702 = vunpack.c.l.s4 1966171168
    %v3703 = vunpack.c.0.s8 %v3702
    %v3704 = vlaneseq
    %v3705 = vshrl.u32 %v3704, 7
    %v3706 = vsub.s32 %v3703, %v3705
    %v3707 = vrot.slane %v3691, %v3706
    %v3709 = vunpack.c.l.s4 1966171168
    %v3710 = vunpack.c.0.s8 %v3709
    %v3711 = vlaneseq
    %v3712 = vshrl.u32 %v3711, 7
    %v3713 = vsub.s32 %v3710, %v3712
    %v3714 = vrot.slane %v3692, %v3713
    %v3716 = vunpack.c.l.s4 1966171168
    %v3717 = vunpack.c.0.s8 %v3716
    %v3718 = vlaneseq
    %v3719 = vshrl.u32 %v3718, 7
    %v3720 = vsub.s32 %v3717, %v3719
    %v3721 = vrot.slane %v3693, %v3720
    %v3722 = vcombine.high %v3700, %v3700
    %v3723 = vcombine.high %v3707, %v3707
    %v3724 = vcombine.high %v3714, %v3714
    %v3725 = vcombine.high %v3721, %v3721
    %v3734 = vadd.f32 %v3645, %v3700
    %v3735 = vadd.f32 %v3646, %v3714
    %v3736 = vadd.f32 %v3647, %v3722
    %v3737 = vadd.f32 %v3648, %v3724
    %v3738 = vadd.f32 %v3649, %v3707
    %v3739 = vadd.f32 %v3650, %v3721
    %v3740 = vadd.f32 %v3651, %v3723
    %v3741 = vadd.f32 %v3652, %v3725
    %v3742 = vadd.f32 %v3653, %v3700
    %v3743 = vadd.f32 %v3654, %v3714
    %v3744 = vadd.f32 %v3655, %v3722
    %v3745 = vadd.f32 %v3656, %v3724
    %v3746 = vadd.f32 %v3657, %v3707
    %v3747 = vadd.f32 %v3658, %v3700
    %v3748 = vadd.f32 %v3659, %v3714
    %v3749 = vadd.f32 %v3660, %v3722
    %v3750 = vadd.f32 %v3661, %v3724
    %v3751 = vadd.f32 %v3662, %v3707
    %v3752 = vadd.f32 %v3663, %v3721
    %v3753 = vadd.f32 %v3664, %v3723
    %v3754 = vadd.f32 %v3665, %v3725
    %v3755 = vadd.f32 %v3666, %v3700
    %v3756 = vadd.f32 %v3667, %v3714
    %v3757 = vadd.f32 %v3668, %v3722
    %v3758 = vadd.f32 %v3669, %v3724
    %v3759 = vadd.f32 %v3670, %v3707
    %v3760 = vmax.f32 %v3734, 0.0
    %v3761 = vmax.f32 %v3735, 0.0
    %v3762 = vmax.f32 %v3736, 0.0
    %v3763 = vmax.f32 %v3737, 0.0
    %v3764 = vmax.f32 %v3738, 0.0
    %v3765 = vmax.f32 %v3739, 0.0
    %v3766 = vmax.f32 %v3740, 0.0
    %v3767 = vmax.f32 %v3741, 0.0
    %v3768 = vmax.f32 %v3742, 0.0
    %v3769 = vmax.f32 %v3743, 0.0
    %v3770 = vmax.f32 %v3744, 0.0
    %v3771 = vmax.f32 %v3745, 0.0
    %v3772 = vmax.f32 %v3746, 0.0
    %v3773 = vmax.f32 %v3747, 0.0
    %v3774 = vmax.f32 %v3748, 0.0
    %v3775 = vmax.f32 %v3749, 0.0
    %v3776 = vmax.f32 %v3750, 0.0
    %v3777 = vmax.f32 %v3751, 0.0
    %v3778 = vmax.f32 %v3752, 0.0
    %v3779 = vmax.f32 %v3753, 0.0
    %v3780 = vmax.f32 %v3754, 0.0
    %v3781 = vmax.f32 %v3755, 0.0
    %v3782 = vmax.f32 %v3756, 0.0
    %v3783 = vmax.f32 %v3757, 0.0
    %v3784 = vmax.f32 %v3758, 0.0
    %v3785 = vmax.f32 %v3759, 0.0
    %v3812 = vcombine.low %v3760, %v3761
    %v3813 = vcombine.low %v3762, %v3763
    %v3814 = vcombine.low %v3764, %v3765
    %v3815 = vcombine.low %v3766, %v3767
    %v3817 = vunpack.c.l.s4 1966171168
    %v3818 = vunpack.c.0.s8 %v3817
    %v3819 = vlaneseq
    %v3820 = vshrl.u32 %v3819, 7
    %v3821 = vsub.s32 %v3818, %v3820
    %v3822 = vrot.slane %v3812, %v3821
    %v3824 = vunpack.c.l.s4 1966171168
    %v3825 = vunpack.c.0.s8 %v3824
    %v3826 = vlaneseq
    %v3827 = vshrl.u32 %v3826, 7
    %v3828 = vsub.s32 %v3825, %v3827
    %v3829 = vrot.slane %v3813, %v3828
    %v3831 = vunpack.c.l.s4 1966171168
    %v3832 = vunpack.c.0.s8 %v3831
    %v3833 = vlaneseq
    %v3834 = vshrl.u32 %v3833, 7
    %v3835 = vsub.s32 %v3832, %v3834
    %v3836 = vrot.slane %v3814, %v3835
    %v3838 = vunpack.c.l.s4 1966171168
    %v3839 = vunpack.c.0.s8 %v3838
    %v3840 = vlaneseq
    %v3841 = vshrl.u32 %v3840, 7
    %v3842 = vsub.s32 %v3839, %v3841
    %v3843 = vrot.slane %v3815, %v3842
    %v3844 = vcombine.low %v3822, %v3829
    %v3845 = vcombine.low %v3836, %v3843
    %v3847 = vunpack.c.l.s4 1966171168
    %v3848 = vunpack.c.0.s8 %v3847
    %v3849 = vlaneseq
    %v3850 = vshrl.u32 %v3849, 7
    %v3851 = vsub.s32 %v3848, %v3850
    %v3852 = vrot.slane %v3844, %v3851
    %v3854 = vunpack.c.l.s4 1966171168
    %v3855 = vunpack.c.0.s8 %v3854
    %v3856 = vlaneseq
    %v3857 = vshrl.u32 %v3856, 7
    %v3858 = vsub.s32 %v3855, %v3857
    %v3859 = vrot.slane %v3845, %v3858
    %v3860 = vcombine.low %v3852, %v3859
    %v3861 = vcombine.low %v3768, %v3769
    %v3862 = vcombine.low %v3770, %v3771
    %v3864 = vunpack.c.l.s4 1966171168
    %v3865 = vunpack.c.0.s8 %v3864
    %v3866 = vlaneseq
    %v3867 = vshrl.u32 %v3866, 7
    %v3868 = vsub.s32 %v3865, %v3867
    %v3869 = vrot.slane %v3861, %v3868
    %v3871 = vunpack.c.l.s4 1966171168
    %v3872 = vunpack.c.0.s8 %v3871
    %v3873 = vlaneseq
    %v3874 = vshrl.u32 %v3873, 7
    %v3875 = vsub.s32 %v3872, %v3874
    %v3876 = vrot.slane %v3862, %v3875
    %v3878 = vunpack.c.l.s4 1966171168
    %v3879 = vunpack.c.0.s8 %v3878
    %v3880 = vlaneseq
    %v3881 = vshrl.u32 %v3880, 7
    %v3882 = vsub.s32 %v3879, %v3881
    %v3883 = vrot.slane %v3772, %v3882
    %v3884 = vcombine.low %v3869, %v3876
    %v3886 = vunpack.c.l.s4 1966171168
    %v3887 = vunpack.c.0.s8 %v3886
    %v3888 = vlaneseq
    %v3889 = vshrl.u32 %v3888, 7
    %v3890 = vsub.s32 %v3887, %v3889
    %v3891 = vrot.slane %v3884, %v3890
    %v3893 = vunpack.c.l.s4 1966171168
    %v3894 = vunpack.c.0.s8 %v3893
    %v3895 = vlaneseq
    %v3896 = vshrl.u32 %v3895, 7
    %v3897 = vsub.s32 %v3894, %v3896
    %v3898 = vrot.slane %v3883, %v3897
    %v3899 = vcombine.low %v3891, %v3898
    %v3900 = vcombine.low %v3773, %v3774
    %v3901 = vcombine.low %v3775, %v3776
    %v3902 = vcombine.low %v3777, %v3778
    %v3903 = vcombine.low %v3779, %v3780
    %v3905 = vunpack.c.l.s4 1966171168
    %v3906 = vunpack.c.0.s8 %v3905
    %v3907 = vlaneseq
    %v3908 = vshrl.u32 %v3907, 7
    %v3909 = vsub.s32 %v3906, %v3908
    %v3910 = vrot.slane %v3900, %v3909
    %v3912 = vunpack.c.l.s4 1966171168
    %v3913 = vunpack.c.0.s8 %v3912
    %v3914 = vlaneseq
    %v3915 = vshrl.u32 %v3914, 7
    %v3916 = vsub.s32 %v3913, %v3915
    %v3917 = vrot.slane %v3901, %v3916
    %v3919 = vunpack.c.l.s4 1966171168
    %v3920 = vunpack.c.0.s8 %v3919
    %v3921 = vlaneseq
    %v3922 = vshrl.u32 %v3921, 7
    %v3923 = vsub.s32 %v3920, %v3922
    %v3924 = vrot.slane %v3902, %v3923
    %v3926 = vunpack.c.l.s4 1966171168
    %v3927 = vunpack.c.0.s8 %v3926
    %v3928 = vlaneseq
    %v3929 = vshrl.u32 %v3928, 7
    %v3930 = vsub.s32 %v3927, %v3929
    %v3931 = vrot.slane %v3903, %v3930
    %v3932 = vcombine.low %v3910, %v3917
    %v3933 = vcombine.low %v3924, %v3931
    %v3935 = vunpack.c.l.s4 1966171168
    %v3936 = vunpack.c.0.s8 %v3935
    %v3937 = vlaneseq
    %v3938 = vshrl.u32 %v3937, 7
    %v3939 = vsub.s32 %v3936, %v3938
    %v3940 = vrot.slane %v3932, %v3939
    %v3942 = vunpack.c.l.s4 1966171168
    %v3943 = vunpack.c.0.s8 %v3942
    %v3944 = vlaneseq
    %v3945 = vshrl.u32 %v3944, 7
    %v3946 = vsub.s32 %v3943, %v3945
    %v3947 = vrot.slane %v3933, %v3946
    %v3948 = vcombine.low %v3940, %v3947
    %v3949 = vcombine.low %v3781, %v3782
    %v3950 = vcombine.low %v3783, %v3784
    %v3952 = vunpack.c.l.s4 1966171168
    %v3953 = vunpack.c.0.s8 %v3952
    %v3954 = vlaneseq
    %v3955 = vshrl.u32 %v3954, 7
    %v3956 = vsub.s32 %v3953, %v3955
    %v3957 = vrot.slane %v3949, %v3956
    %v3959 = vunpack.c.l.s4 1966171168
    %v3960 = vunpack.c.0.s8 %v3959
    %v3961 = vlaneseq
    %v3962 = vshrl.u32 %v3961, 7
    %v3963 = vsub.s32 %v3960, %v3962
    %v3964 = vrot.slane %v3950, %v3963
    %v3966 = vunpack.c.l.s4 1966171168
    %v3967 = vunpack.c.0.s8 %v3966
    %v3968 = vlaneseq
    %v3969 = vshrl.u32 %v3968, 7
    %v3970 = vsub.s32 %v3967, %v3969
    %v3971 = vrot.slane %v3785, %v3970
    %v3972 = vcombine.low %v3957, %v3964
    %v3974 = vunpack.c.l.s4 1966171168
    %v3975 = vunpack.c.0.s8 %v3974
    %v3976 = vlaneseq
    %v3977 = vshrl.u32 %v3976, 7
    %v3978 = vsub.s32 %v3975, %v3977
    %v3979 = vrot.slane %v3972, %v3978
    %v3981 = vunpack.c.l.s4 1966171168
    %v3982 = vunpack.c.0.s8 %v3981
    %v3983 = vlaneseq
    %v3984 = vshrl.u32 %v3983, 7
    %v3985 = vsub.s32 %v3982, %v3984
    %v3986 = vrot.slane %v3971, %v3985
    %v3987 = vcombine.low %v3979, %v3986
    %v3992 = vsel %vm1555, %v3860, -inf
    %vm3993 = vcmask 61440
    %v3994 = vsel %vm3993, %v3899, -inf
    %v3995 = vmax.f32 %v3992, %v3994
    %v3996 = vrot.slane %v3995, 4
    %v3997 = vmax.f32 %v3995, %v3996
    %v3998 = vrot.slane %v3997, 2
    %v3999 = vmax.f32 %v3997, %v3998
    %v4000 = vrot.slane %v3999, 1
    %v4001 = vmax.f32 %v3999, %v4000
    %v4002 = vsel %vm1555, %v3948, -inf
    %v4003 = vsel %vm3993, %v3987, -inf
    %v4004 = vmax.f32 %v4002, %v4003
    %v4005 = vrot.slane %v4004, 4
    %v4006 = vmax.f32 %v4004, %v4005
    %v4007 = vrot.slane %v4006, 2
    %v4008 = vmax.f32 %v4006, %v4007
    %v4009 = vrot.slane %v4008, 1
    %v4010 = vmax.f32 %v4008, %v4009
    %v4011 = vld [vmem:[%s8] sm:$0xff]
    %v4012 = vld [vmem:[%s9] sm:$0xff]
    %v4013 = vld [vmem:[%s9 + $0x8] sm:$0xff]
    %v4014 = vld [vmem:[%s9 + $0x10] sm:$0xff]
    %v4015 = vld [vmem:[%s9 + $0x18] sm:$0xff]
    %v4016 = vld [vmem:[%s10] sm:$0x1]
    %v4017 = vld [vmem:[%s11] sm:$0xff]
    %v4018 = vld [vmem:[%s12] sm:$0xff]
    %v4019 = vld [vmem:[%s12 + $0x8] sm:$0xff]
    %v4020 = vld [vmem:[%s12 + $0x10] sm:$0xff]
    %v4021 = vld [vmem:[%s12 + $0x18] sm:$0xff]
    %v4022 = vld [vmem:[%s13] sm:$0x1]
    %v4024 = vlaneseq
    %v4025 = vshrl.u32 %v4024, 7
    %v4026 = vsub.s32 0, %v4025
    %v4027 = vrot.slane %v4016, %v4026
    %vm4029 = vcmask 261120
    %v4031 = vsel %vm4029, 0.0, 0
    %4033 = vmatprep.subr.mxu0 0.0
    %4034 = vmatpush1.msra.mxu0 %v4012
    %4035 = vmatprep.subr.mxu0 0.0
    %4036 = vmatpush1.msra.mxu0 %v4013
    %4037 = vmatprep.subr.mxu0 0.0
    %4038 = vmatpush1.msra.mxu0 %v4014
    %4039 = vmatprep.subr.mxu0 0.0
    %4040 = vmatpush1.msra.mxu0 %v4015
    %4041 = vmatprep.subr.mxu0 0.0
    %4042 = vmatpush1.msra.mxu0 0.0
    %4043 = vmatprep.subr.mxu0 0.0
    %4044 = vmatpush1.msra.mxu0 0.0
    %4045 = vmatprep.subr.mxu0 0.0
    %4046 = vmatpush1.msra.mxu0 0.0
    %4047 = vmatprep.subr.mxu0 0.0
    %4048 = vmatpush1.msra.mxu0 0.0
    %4049 = vmatprep.subr.mxu0 0.0
    %4050 = vmatpush1.msra.mxu0 0.0
    %4051 = vmatprep.subr.mxu0 0.0
    %4052 = vmatpush1.msra.mxu0 0.0
    %4053 = vmatprep.subr.mxu0 0.0
    %4054 = vmatpush1.msra.mxu0 0.0
    %4055 = vmatprep.subr.mxu0 0.0
    %4056 = vmatpush1.msra.mxu0 0.0
    %4057 = vmatprep.subr.mxu0 0.0
    %4058 = vmatpush1.msra.mxu0 0.0
    %4059 = vmatprep.subr.mxu0 0.0
    %4060 = vmatpush1.msra.mxu0 0.0
    %4061 = vmatprep.subr.mxu0 0.0
    %4062 = vmatpush1.msra.mxu0 0.0
    %4063 = vmatprep.subr.mxu0 0.0
    %4064 = vmatpush1.msra.mxu0 0.0
    %4065 = vmatprep.subr.mxu0 0.0
    %4066 = vmatpush1.msra.mxu0 0.0
    %4067 = vmatprep.subr.mxu0 0.0
    %4068 = vmatpush1.msra.mxu0 0.0
    %4069 = vmatprep.subr.mxu0 0.0
    %4070 = vmatpush1.msra.mxu0 0.0
    %4071 = vmatprep.subr.mxu0 0.0
    %4072 = vmatpush1.msra.mxu0 0.0
    %4073 = vmatprep.subr.mxu0 0.0
    %4074 = vmatpush1.msra.mxu0 0.0
    %4075 = vmatprep.subr.mxu0 0.0
    %4076 = vmatpush1.msra.mxu0 0.0
    %4077 = vmatprep.subr.mxu0 0.0
    %4078 = vmatpush1.msra.mxu0 0.0
    %4079 = vmatprep.subr.mxu0 0.0
    %4080 = vmatpush1.msra.mxu0 0.0
    %4081 = vmatprep.subr.mxu0 0.0
    %4082 = vmatpush1.msra.mxu0 0.0
    %4083 = vmatprep.subr.mxu0 0.0
    %4084 = vmatpush1.msra.mxu0 0.0
    %4085 = vmatprep.subr.mxu0 0.0
    %4086 = vmatpush1.msra.mxu0 0.0
    %4087 = vmatprep.subr.mxu0 0.0
    %4088 = vmatpush1.msra.mxu0 0.0
    %4089 = vmatprep.subr.mxu0 0.0
    %4090 = vmatpush1.msra.mxu0 0.0
    %4091 = vmatprep.subr.mxu0 0.0
    %4092 = vmatpush1.msra.mxu0 0.0
    %4093 = vmatprep.subr.mxu0 0.0
    %4094 = vmatpush1.msra.mxu0 0.0
    %4095 = vmatprep.subr.mxu0 0.0
    %4096 = vmatpush1.msra.mxu0 0.0
    %4097 = vmatprep.mubr.f32.mxu0 0.0
    %4098 = vmatmul.mubr.f32.gmra.mrb[0].mxu0 %v4031
    %v4099 = vpop.f32.mrb[0].mxu0
    %v4100 = vadd.f32 %v4027, %v4099
    %v4101 = vpop.f32.mrb[0].mxu0
    %4102 = vdwg.mxu0
    %vm4105 = vcmask 1041409
    %v4106 = vsel %vm4105, %v1574, %v1565
    %v4107 = vsel %vm1555, %v4106, 0
    %4109 = vmatprep.subr.mxu0 0.0
    %4110 = vmatpush1.msra.mxu0 %v4011
    %4111 = vmatprep.subr.mxu0 0.0
    %4112 = vmatpush1.msra.mxu0 0.0
    %4113 = vmatprep.subr.mxu0 0.0
    %4114 = vmatpush1.msra.mxu0 0.0
    %4115 = vmatprep.subr.mxu0 0.0
    %4116 = vmatpush1.msra.mxu0 0.0
    %4117 = vmatprep.subr.mxu0 0.0
    %4118 = vmatpush1.msra.mxu0 0.0
    %4119 = vmatprep.subr.mxu0 0.0
    %4120 = vmatpush1.msra.mxu0 0.0
    %4121 = vmatprep.subr.mxu0 0.0
    %4122 = vmatpush1.msra.mxu0 0.0
    %4123 = vmatprep.subr.mxu0 0.0
    %4124 = vmatpush1.msra.mxu0 0.0
    %4125 = vmatprep.subr.mxu0 0.0
    %4126 = vmatpush1.msra.mxu0 0.0
    %4127 = vmatprep.subr.mxu0 0.0
    %4128 = vmatpush1.msra.mxu0 0.0
    %4129 = vmatprep.subr.mxu0 0.0
    %4130 = vmatpush1.msra.mxu0 0.0
    %4131 = vmatprep.subr.mxu0 0.0
    %4132 = vmatpush1.msra.mxu0 0.0
    %4133 = vmatprep.subr.mxu0 0.0
    %4134 = vmatpush1.msra.mxu0 0.0
    %4135 = vmatprep.subr.mxu0 0.0
    %4136 = vmatpush1.msra.mxu0 0.0
    %4137 = vmatprep.subr.mxu0 0.0
    %4138 = vmatpush1.msra.mxu0 0.0
    %4139 = vmatprep.subr.mxu0 0.0
    %4140 = vmatpush1.msra.mxu0 0.0
    %4141 = vmatprep.subr.mxu0 0.0
    %4142 = vmatpush1.msra.mxu0 0.0
    %4143 = vmatprep.subr.mxu0 0.0
    %4144 = vmatpush1.msra.mxu0 0.0
    %4145 = vmatprep.subr.mxu0 0.0
    %4146 = vmatpush1.msra.mxu0 0.0
    %4147 = vmatprep.subr.mxu0 0.0
    %4148 = vmatpush1.msra.mxu0 0.0
    %4149 = vmatprep.subr.mxu0 0.0
    %4150 = vmatpush1.msra.mxu0 0.0
    %4151 = vmatprep.subr.mxu0 0.0
    %4152 = vmatpush1.msra.mxu0 0.0
    %4153 = vmatprep.subr.mxu0 0.0
    %4154 = vmatpush1.msra.mxu0 0.0
    %4155 = vmatprep.subr.mxu0 0.0
    %4156 = vmatpush1.msra.mxu0 0.0
    %4157 = vmatprep.subr.mxu0 0.0
    %4158 = vmatpush1.msra.mxu0 0.0
    %4159 = vmatprep.subr.mxu0 0.0
    %4160 = vmatpush1.msra.mxu0 0.0
    %4161 = vmatprep.subr.mxu0 0.0
    %4162 = vmatpush1.msra.mxu0 0.0
    %4163 = vmatprep.subr.mxu0 0.0
    %4164 = vmatpush1.msra.mxu0 0.0
    %4165 = vmatprep.subr.mxu0 0.0
    %4166 = vmatpush1.msra.mxu0 0.0
    %4167 = vmatprep.subr.mxu0 0.0
    %4168 = vmatpush1.msra.mxu0 0.0
    %4169 = vmatprep.subr.mxu0 0.0
    %4170 = vmatpush1.msra.mxu0 0.0
    %4171 = vmatprep.subr.mxu0 0.0
    %4172 = vmatpush1.msra.mxu0 0.0
    %4173 = vmatprep.mubr.f32.mxu0 0.0
    %4174 = vmatmul.mubr.f32.gmra.mrb[0].mxu0 %v4107
    %v4175 = vpop.f32.mrb[0].mxu0
    %v4176 = vadd.f32 0.0, %v4175
    %v4177 = vpop.f32.mrb[0].mxu0
    %4178 = vdwg.mxu0
    %v4179 = vadd.f32 %v4100, %v4176
    %v4180 = vxor.u32 %v4179, 2147483648
    %v4181 = vmul.f32 %v4180, 1.442695
    %v4182 = vpow.pop %v4181
    %v4183 = vadd.f32 %v4182, 1.0
    %v4184 = vrcp.pop %v4183
    %v4185 = vmul.f32 1.0, %v4184
    %v4186 = vtanh.pop %v4179
    %v4187 = vmul.f32 %v4185, 0.0
    %4189 = vrot.lane.b32.xlu0 %v4186, 64
    %v4190 = vpop.permute.xlu0 %4189
    %v4192 = vmul.f32 %v4185, %v4190
    %4194 = vrot.lane.b32.xlu0 %v4192, 32
    %v4195 = vpop.permute.xlu0 %4194
    %v4197 = vadd.f32 %v4187, %v4195
    %v4198 = vtanh.pop %v4197
    %4200 = vrot.lane.b32.xlu0 %v4198, 64
    %v4201 = vpop.permute.xlu0 %4200
    %v4203 = vmul.f32 %v4185, %v4201
    %v4205 = vlaneseq
    %v4206 = vshrl.u32 %v4205, 7
    %v4207 = vsub.s32 0, %v4206
    %v4208 = vrot.slane %v4022, %v4207
    %4210 = vmatprep.subr.mxu0 0.0
    %4211 = vmatpush1.msra.mxu0 %v4018
    %4212 = vmatprep.subr.mxu0 0.0
    %4213 = vmatpush1.msra.mxu0 %v4019
    %4214 = vmatprep.subr.mxu0 0.0
    %4215 = vmatpush1.msra.mxu0 %v4020
    %4216 = vmatprep.subr.mxu0 0.0
    %4217 = vmatpush1.msra.mxu0 %v4021
    %4218 = vmatprep.subr.mxu0 0.0
    %4219 = vmatpush1.msra.mxu0 0.0
    %4220 = vmatprep.subr.mxu0 0.0
    %4221 = vmatpush1.msra.mxu0 0.0
    %4222 = vmatprep.subr.mxu0 0.0
    %4223 = vmatpush1.msra.mxu0 0.0
    %4224 = vmatprep.subr.mxu0 0.0
    %4225 = vmatpush1.msra.mxu0 0.0
    %4226 = vmatprep.subr.mxu0 0.0
    %4227 = vmatpush1.msra.mxu0 0.0
    %4228 = vmatprep.subr.mxu0 0.0
    %4229 = vmatpush1.msra.mxu0 0.0
    %4230 = vmatprep.subr.mxu0 0.0
    %4231 = vmatpush1.msra.mxu0 0.0
    %4232 = vmatprep.subr.mxu0 0.0
    %4233 = vmatpush1.msra.mxu0 0.0
    %4234 = vmatprep.subr.mxu0 0.0
    %4235 = vmatpush1.msra.mxu0 0.0
    %4236 = vmatprep.subr.mxu0 0.0
    %4237 = vmatpush1.msra.mxu0 0.0
    %4238 = vmatprep.subr.mxu0 0.0
    %4239 = vmatpush1.msra.mxu0 0.0
    %4240 = vmatprep.subr.mxu0 0.0
    %4241 = vmatpush1.msra.mxu0 0.0
    %4242 = vmatprep.subr.mxu0 0.0
    %4243 = vmatpush1.msra.mxu0 0.0
    %4244 = vmatprep.subr.mxu0 0.0
    %4245 = vmatpush1.msra.mxu0 0.0
    %4246 = vmatprep.subr.mxu0 0.0
    %4247 = vmatpush1.msra.mxu0 0.0
    %4248 = vmatprep.subr.mxu0 0.0
    %4249 = vmatpush1.msra.mxu0 0.0
    %4250 = vmatprep.subr.mxu0 0.0
    %4251 = vmatpush1.msra.mxu0 0.0
    %4252 = vmatprep.subr.mxu0 0.0
    %4253 = vmatpush1.msra.mxu0 0.0
    %4254 = vmatprep.subr.mxu0 0.0
    %4255 = vmatpush1.msra.mxu0 0.0
    %4256 = vmatprep.subr.mxu0 0.0
    %4257 = vmatpush1.msra.mxu0 0.0
    %4258 = vmatprep.subr.mxu0 0.0
    %4259 = vmatpush1.msra.mxu0 0.0
    %4260 = vmatprep.subr.mxu0 0.0
    %4261 = vmatpush1.msra.mxu0 0.0
    %4262 = vmatprep.subr.mxu0 0.0
    %4263 = vmatpush1.msra.mxu0 0.0
    %4264 = vmatprep.subr.mxu0 0.0
    %4265 = vmatpush1.msra.mxu0 0.0
    %4266 = vmatprep.subr.mxu0 0.0
    %4267 = vmatpush1.msra.mxu0 0.0
    %4268 = vmatprep.subr.mxu0 0.0
    %4269 = vmatpush1.msra.mxu0 0.0
    %4270 = vmatprep.subr.mxu0 0.0
    %4271 = vmatpush1.msra.mxu0 0.0
    %4272 = vmatprep.subr.mxu0 0.0
    %4273 = vmatpush1.msra.mxu0 0.0
    %4274 = vmatprep.mubr.f32.mxu0 0.0
    %4275 = vmatmul.mubr.f32.gmra.mrb[0].mxu0 %v4031
    %v4276 = vpop.f32.mrb[0].mxu0
    %v4277 = vadd.f32 %v4208, %v4276
    %v4278 = vpop.f32.mrb[0].mxu0
    %4279 = vdwg.mxu0
    %v4282 = vsel %vm4105, %v4010, %v4001
    %v4283 = vsel %vm1555, %v4282, 0
    %4285 = vmatprep.subr.mxu0 0.0
    %4286 = vmatpush1.msra.mxu0 %v4017
    %4287 = vmatprep.subr.mxu0 0.0
    %4288 = vmatpush1.msra.mxu0 0.0
    %4289 = vmatprep.subr.mxu0 0.0
    %4290 = vmatpush1.msra.mxu0 0.0
    %4291 = vmatprep.subr.mxu0 0.0
    %4292 = vmatpush1.msra.mxu0 0.0
    %4293 = vmatprep.subr.mxu0 0.0
    %4294 = vmatpush1.msra.mxu0 0.0
    %4295 = vmatprep.subr.mxu0 0.0
    %4296 = vmatpush1.msra.mxu0 0.0
    %4297 = vmatprep.subr.mxu0 0.0
    %4298 = vmatpush1.msra.mxu0 0.0
    %4299 = vmatprep.subr.mxu0 0.0
    %4300 = vmatpush1.msra.mxu0 0.0
    %4301 = vmatprep.subr.mxu0 0.0
    %4302 = vmatpush1.msra.mxu0 0.0
    %4303 = vmatprep.subr.mxu0 0.0
    %4304 = vmatpush1.msra.mxu0 0.0
    %4305 = vmatprep.subr.mxu0 0.0
    %4306 = vmatpush1.msra.mxu0 0.0
    %4307 = vmatprep.subr.mxu0 0.0
    %4308 = vmatpush1.msra.mxu0 0.0
    %4309 = vmatprep.subr.mxu0 0.0
    %4310 = vmatpush1.msra.mxu0 0.0
    %4311 = vmatprep.subr.mxu0 0.0
    %4312 = vmatpush1.msra.mxu0 0.0
    %4313 = vmatprep.subr.mxu0 0.0
    %4314 = vmatpush1.msra.mxu0 0.0
    %4315 = vmatprep.subr.mxu0 0.0
    %4316 = vmatpush1.msra.mxu0 0.0
    %4317 = vmatprep.subr.mxu0 0.0
    %4318 = vmatpush1.msra.mxu0 0.0
    %4319 = vmatprep.subr.mxu0 0.0
    %4320 = vmatpush1.msra.mxu0 0.0
    %4321 = vmatprep.subr.mxu0 0.0
    %4322 = vmatpush1.msra.mxu0 0.0
    %4323 = vmatprep.subr.mxu0 0.0
    %4324 = vmatpush1.msra.mxu0 0.0
    %4325 = vmatprep.subr.mxu0 0.0
    %4326 = vmatpush1.msra.mxu0 0.0
    %4327 = vmatprep.subr.mxu0 0.0
    %4328 = vmatpush1.msra.mxu0 0.0
    %4329 = vmatprep.subr.mxu0 0.0
    %4330 = vmatpush1.msra.mxu0 0.0
    %4331 = vmatprep.subr.mxu0 0.0
    %4332 = vmatpush1.msra.mxu0 0.0
    %4333 = vmatprep.subr.mxu0 0.0
    %4334 = vmatpush1.msra.mxu0 0.0
    %4335 = vmatprep.subr.mxu0 0.0
    %4336 = vmatpush1.msra.mxu0 0.0
    %4337 = vmatprep.subr.mxu0 0.0
    %4338 = vmatpush1.msra.mxu0 0.0
    %4339 = vmatprep.subr.mxu0 0.0
    %4340 = vmatpush1.msra.mxu0 0.0
    %4341 = vmatprep.subr.mxu0 0.0
    %4342 = vmatpush1.msra.mxu0 0.0
    %4343 = vmatprep.subr.mxu0 0.0
    %4344 = vmatpush1.msra.mxu0 0.0
    %4345 = vmatprep.subr.mxu0 0.0
    %4346 = vmatpush1.msra.mxu0 0.0
    %4347 = vmatprep.subr.mxu0 0.0
    %4348 = vmatpush1.msra.mxu0 0.0
    %4349 = vmatprep.mubr.f32.mxu0 0.0
    %4350 = vmatmul.mubr.f32.gmra.mrb[0].mxu0 %v4283
    %v4351 = vpop.f32.mrb[0].mxu0
    %v4352 = vadd.f32 0.0, %v4351
    %v4353 = vpop.f32.mrb[0].mxu0
    %4354 = vdwg.mxu0
    %v4355 = vadd.f32 %v4277, %v4352
    %v4356 = vxor.u32 %v4355, 2147483648
    %v4357 = vmul.f32 %v4356, 1.442695
    %v4358 = vpow.pop %v4357
    %v4359 = vadd.f32 %v4358, 1.0
    %v4360 = vrcp.pop %v4359
    %v4361 = vmul.f32 1.0, %v4360
    %v4362 = vtanh.pop %v4355
    %v4363 = vmul.f32 %v4361, 0.0
    %4365 = vrot.lane.b32.xlu0 %v4362, 64
    %v4366 = vpop.permute.xlu0 %4365
    %v4368 = vmul.f32 %v4361, %v4366
    %4370 = vrot.lane.b32.xlu0 %v4368, 32
    %v4371 = vpop.permute.xlu0 %4370
    %v4373 = vadd.f32 %v4363, %v4371
    %v4374 = vtanh.pop %v4373
    %4376 = vrot.lane.b32.xlu0 %v4374, 64
    %v4377 = vpop.permute.xlu0 %4376
    %v4379 = vmul.f32 %v4361, %v4377
    %4381 = vrot.lane.b32.xlu0 %v4203, 32
    %v4382 = vpop.permute.xlu0 %4381
    %v4383 = vsel %vm4029, %v4382, 0
    %4385 = vmatprep.subr.mxu0 0.0
    %4386 = vmatpush1.msra.mxu0 %v4012
    %4387 = vmatprep.subr.mxu0 0.0
    %4388 = vmatpush1.msra.mxu0 %v4013
    %4389 = vmatprep.subr.mxu0 0.0
    %4390 = vmatpush1.msra.mxu0 %v4014
    %4391 = vmatprep.subr.mxu0 0.0
    %4392 = vmatpush1.msra.mxu0 %v4015
    %4393 = vmatprep.subr.mxu0 0.0
    %4394 = vmatpush1.msra.mxu0 0.0
    %4395 = vmatprep.subr.mxu0 0.0
    %4396 = vmatpush1.msra.mxu0 0.0
    %4397 = vmatprep.subr.mxu0 0.0
    %4398 = vmatpush1.msra.mxu0 0.0
    %4399 = vmatprep.subr.mxu0 0.0
    %4400 = vmatpush1.msra.mxu0 0.0
    %4401 = vmatprep.subr.mxu0 0.0
    %4402 = vmatpush1.msra.mxu0 0.0
    %4403 = vmatprep.subr.mxu0 0.0
    %4404 = vmatpush1.msra.mxu0 0.0
    %4405 = vmatprep.subr.mxu0 0.0
    %4406 = vmatpush1.msra.mxu0 0.0
    %4407 = vmatprep.subr.mxu0 0.0
    %4408 = vmatpush1.msra.mxu0 0.0
    %4409 = vmatprep.subr.mxu0 0.0
    %4410 = vmatpush1.msra.mxu0 0.0
    %4411 = vmatprep.subr.mxu0 0.0
    %4412 = vmatpush1.msra.mxu0 0.0
    %4413 = vmatprep.subr.mxu0 0.0
    %4414 = vmatpush1.msra.mxu0 0.0
    %4415 = vmatprep.subr.mxu0 0.0
    %4416 = vmatpush1.msra.mxu0 0.0
    %4417 = vmatprep.subr.mxu0 0.0
    %4418 = vmatpush1.msra.mxu0 0.0
    %4419 = vmatprep.subr.mxu0 0.0
    %4420 = vmatpush1.msra.mxu0 0.0
    %4421 = vmatprep.subr.mxu0 0.0
    %4422 = vmatpush1.msra.mxu0 0.0
    %4423 = vmatprep.subr.mxu0 0.0
    %4424 = vmatpush1.msra.mxu0 0.0
    %4425 = vmatprep.subr.mxu0 0.0
    %4426 = vmatpush1.msra.mxu0 0.0
    %4427 = vmatprep.subr.mxu0 0.0
    %4428 = vmatpush1.msra.mxu0 0.0
    %4429 = vmatprep.subr.mxu0 0.0
    %4430 = vmatpush1.msra.mxu0 0.0
    %4431 = vmatprep.subr.mxu0 0.0
    %4432 = vmatpush1.msra.mxu0 0.0
    %4433 = vmatprep.subr.mxu0 0.0
    %4434 = vmatpush1.msra.mxu0 0.0
    %4435 = vmatprep.subr.mxu0 0.0
    %4436 = vmatpush1.msra.mxu0 0.0
    %4437 = vmatprep.subr.mxu0 0.0
    %4438 = vmatpush1.msra.mxu0 0.0
    %4439 = vmatprep.subr.mxu0 0.0
    %4440 = vmatpush1.msra.mxu0 0.0
    %4441 = vmatprep.subr.mxu0 0.0
    %4442 = vmatpush1.msra.mxu0 0.0
    %4443 = vmatprep.subr.mxu0 0.0
    %4444 = vmatpush1.msra.mxu0 0.0
    %4445 = vmatprep.subr.mxu0 0.0
    %4446 = vmatpush1.msra.mxu0 0.0
    %4447 = vmatprep.subr.mxu0 0.0
    %4448 = vmatpush1.msra.mxu0 0.0
    %4449 = vmatprep.mubr.f32.mxu0 0.0
    %4450 = vmatmul.mubr.f32.gmra.mrb[0].mxu0 %v4383
    %v4451 = vpop.f32.mrb[0].mxu0
    %v4452 = vadd.f32 %v4027, %v4451
    %v4453 = vpop.f32.mrb[0].mxu0
    %4454 = vdwg.mxu0
    %v4457 = vsel %vm4105, %v2477, %v2468
    %v4458 = vsel %vm1555, %v4457, 0
    %4460 = vmatprep.subr.mxu0 0.0
    %4461 = vmatpush1.msra.mxu0 %v4011
    %4462 = vmatprep.subr.mxu0 0.0
    %4463 = vmatpush1.msra.mxu0 0.0
    %4464 = vmatprep.subr.mxu0 0.0
    %4465 = vmatpush1.msra.mxu0 0.0
    %4466 = vmatprep.subr.mxu0 0.0
    %4467 = vmatpush1.msra.mxu0 0.0
    %4468 = vmatprep.subr.mxu0 0.0
    %4469 = vmatpush1.msra.mxu0 0.0
    %4470 = vmatprep.subr.mxu0 0.0
    %4471 = vmatpush1.msra.mxu0 0.0
    %4472 = vmatprep.subr.mxu0 0.0
    %4473 = vmatpush1.msra.mxu0 0.0
    %4474 = vmatprep.subr.mxu0 0.0
    %4475 = vmatpush1.msra.mxu0 0.0
    %4476 = vmatprep.subr.mxu0 0.0
    %4477 = vmatpush1.msra.mxu0 0.0
    %4478 = vmatprep.subr.mxu0 0.0
    %4479 = vmatpush1.msra.mxu0 0.0
    %4480 = vmatprep.subr.mxu0 0.0
    %4481 = vmatpush1.msra.mxu0 0.0
    %4482 = vmatprep.subr.mxu0 0.0
    %4483 = vmatpush1.msra.mxu0 0.0
    %4484 = vmatprep.subr.mxu0 0.0
    %4485 = vmatpush1.msra.mxu0 0.0
    %4486 = vmatprep.subr.mxu0 0.0
    %4487 = vmatpush1.msra.mxu0 0.0
    %4488 = vmatprep.subr.mxu0 0.0
    %4489 = vmatpush1.msra.mxu0 0.0
    %4490 = vmatprep.subr.mxu0 0.0
    %4491 = vmatpush1.msra.mxu0 0.0
    %4492 = vmatprep.subr.mxu0 0.0
    %4493 = vmatpush1.msra.mxu0 0.0
    %4494 = vmatprep.subr.mxu0 0.0
    %4495 = vmatpush1.msra.mxu0 0.0
    %4496 = vmatprep.subr.mxu0 0.0
    %4497 = vmatpush1.msra.mxu0 0.0
    %4498 = vmatprep.subr.mxu0 0.0
    %4499 = vmatpush1.msra.mxu0 0.0
    %4500 = vmatprep.subr.mxu0 0.0
    %4501 = vmatpush1.msra.mxu0 0.0
    %4502 = vmatprep.subr.mxu0 0.0
    %4503 = vmatpush1.msra.mxu0 0.0
    %4504 = vmatprep.subr.mxu0 0.0
    %4505 = vmatpush1.msra.mxu0 0.0
    %4506 = vmatprep.subr.mxu0 0.0
    %4507 = vmatpush1.msra.mxu0 0.0
    %4508 = vmatprep.subr.mxu0 0.0
    %4509 = vmatpush1.msra.mxu0 0.0
    %4510 = vmatprep.subr.mxu0 0.0
    %4511 = vmatpush1.msra.mxu0 0.0
    %4512 = vmatprep.subr.mxu0 0.0
    %4513 = vmatpush1.msra.mxu0 0.0
    %4514 = vmatprep.subr.mxu0 0.0
    %4515 = vmatpush1.msra.mxu0 0.0
    %4516 = vmatprep.subr.mxu0 0.0
    %4517 = vmatpush1.msra.mxu0 0.0
    %4518 = vmatprep.subr.mxu0 0.0
    %4519 = vmatpush1.msra.mxu0 0.0
    %4520 = vmatprep.subr.mxu0 0.0
    %4521 = vmatpush1.msra.mxu0 0.0
    %4522 = vmatprep.subr.mxu0 0.0
    %4523 = vmatpush1.msra.mxu0 0.0
    %4524 = vmatprep.mubr.f32.mxu0 0.0
    %4525 = vmatmul.mubr.f32.gmra.mrb[0].mxu0 %v4458
    %v4526 = vpop.f32.mrb[0].mxu0
    %v4527 = vadd.f32 0.0, %v4526
    %v4528 = vpop.f32.mrb[0].mxu0
    %4529 = vdwg.mxu0
    %v4530 = vadd.f32 %v4452, %v4527
    %v4531 = vxor.u32 %v4530, 2147483648
    %v4532 = vmul.f32 %v4531, 1.442695
    %v4533 = vpow.pop %v4532
    %v4534 = vadd.f32 %v4533, 1.0
    %v4535 = vrcp.pop %v4534
    %v4536 = vmul.f32 1.0, %v4535
    %v4537 = vtanh.pop %v4530
    %v4538 = vmul.f32 %v4536, %v4197
    %4540 = vrot.lane.b32.xlu0 %v4537, 64
    %v4541 = vpop.permute.xlu0 %4540
    %v4543 = vmul.f32 %v4536, %v4541
    %4545 = vrot.lane.b32.xlu0 %v4543, 32
    %v4546 = vpop.permute.xlu0 %4545
    %v4548 = vadd.f32 %v4538, %v4546
    %v4549 = vtanh.pop %v4548
    %4551 = vrot.lane.b32.xlu0 %v4549, 64
    %v4552 = vpop.permute.xlu0 %4551
    %v4554 = vmul.f32 %v4536, %v4552
    %4556 = vrot.lane.b32.xlu0 %v4379, 32
    %v4557 = vpop.permute.xlu0 %4556
    %v4558 = vsel %vm4029, %v4557, 0
    %4560 = vmatprep.subr.mxu0 0.0
    %4561 = vmatpush1.msra.mxu0 %v4018
    %4562 = vmatprep.subr.mxu0 0.0
    %4563 = vmatpush1.msra.mxu0 %v4019
    %4564 = vmatprep.subr.mxu0 0.0
    %4565 = vmatpush1.msra.mxu0 %v4020
    %4566 = vmatprep.subr.mxu0 0.0
    %4567 = vmatpush1.msra.mxu0 %v4021
    %4568 = vmatprep.subr.mxu0 0.0
    %4569 = vmatpush1.msra.mxu0 0.0
    %4570 = vmatprep.subr.mxu0 0.0
    %4571 = vmatpush1.msra.mxu0 0.0
    %4572 = vmatprep.subr.mxu0 0.0
    %4573 = vmatpush1.msra.mxu0 0.0
    %4574 = vmatprep.subr.mxu0 0.0
    %4575 = vmatpush1.msra.mxu0 0.0
    %4576 = vmatprep.subr.mxu0 0.0
    %4577 = vmatpush1.msra.mxu0 0.0
    %4578 = vmatprep.subr.mxu0 0.0
    %4579 = vmatpush1.msra.mxu0 0.0
    %4580 = vmatprep.subr.mxu0 0.0
    %4581 = vmatpush1.msra.mxu0 0.0
    %4582 = vmatprep.subr.mxu0 0.0
    %4583 = vmatpush1.msra.mxu0 0.0
    %4584 = vmatprep.subr.mxu0 0.0
    %4585 = vmatpush1.msra.mxu0 0.0
    %4586 = vmatprep.subr.mxu0 0.0
    %4587 = vmatpush1.msra.mxu0 0.0
    %4588 = vmatprep.subr.mxu0 0.0
    %4589 = vmatpush1.msra.mxu0 0.0
    %4590 = vmatprep.subr.mxu0 0.0
    %4591 = vmatpush1.msra.mxu0 0.0
    %4592 = vmatprep.subr.mxu0 0.0
    %4593 = vmatpush1.msra.mxu0 0.0
    %4594 = vmatprep.subr.mxu0 0.0
    %4595 = vmatpush1.msra.mxu0 0.0
    %4596 = vmatprep.subr.mxu0 0.0
    %4597 = vmatpush1.msra.mxu0 0.0
    %4598 = vmatprep.subr.mxu0 0.0
    %4599 = vmatpush1.msra.mxu0 0.0
    %4600 = vmatprep.subr.mxu0 0.0
    %4601 = vmatpush1.msra.mxu0 0.0
    %4602 = vmatprep.subr.mxu0 0.0
    %4603 = vmatpush1.msra.mxu0 0.0
    %4604 = vmatprep.subr.mxu0 0.0
    %4605 = vmatpush1.msra.mxu0 0.0
    %4606 = vmatprep.subr.mxu0 0.0
    %4607 = vmatpush1.msra.mxu0 0.0
    %4608 = vmatprep.subr.mxu0 0.0
    %4609 = vmatpush1.msra.mxu0 0.0
    %4610 = vmatprep.subr.mxu0 0.0
    %4611 = vmatpush1.msra.mxu0 0.0
    %4612 = vmatprep.subr.mxu0 0.0
    %4613 = vmatpush1.msra.mxu0 0.0
    %4614 = vmatprep.subr.mxu0 0.0
    %4615 = vmatpush1.msra.mxu0 0.0
    %4616 = vmatprep.subr.mxu0 0.0
    %4617 = vmatpush1.msra.mxu0 0.0
    %4618 = vmatprep.subr.mxu0 0.0
    %4619 = vmatpush1.msra.mxu0 0.0
    %4620 = vmatprep.subr.mxu0 0.0
    %4621 = vmatpush1.msra.mxu0 0.0
    %4622 = vmatprep.subr.mxu0 0.0
    %4623 = vmatpush1.msra.mxu0 0.0
    %4624 = vmatprep.mubr.f32.mxu0 0.0
    %4625 = vmatmul.mubr.f32.gmra.mrb[0].mxu0 %v4558
    %v4626 = vpop.f32.mrb[0].mxu0
    %v4627 = vadd.f32 %v4208, %v4626
    %v4628 = vpop.f32.mrb[0].mxu0
    %4629 = vdwg.mxu0
    %4630 = vmatprep.subr.mxu0 0.0
    %4631 = vmatpush1.msra.mxu0 %v4017
    %4632 = vmatprep.subr.mxu0 0.0
    %4633 = vmatpush1.msra.mxu0 0.0
    %4634 = vmatprep.subr.mxu0 0.0
    %4635 = vmatpush1.msra.mxu0 0.0
    %4636 = vmatprep.subr.mxu0 0.0
    %4637 = vmatpush1.msra.mxu0 0.0
    %4638 = vmatprep.subr.mxu0 0.0
    %4639 = vmatpush1.msra.mxu0 0.0
    %4640 = vmatprep.subr.mxu0 0.0
    %4641 = vmatpush1.msra.mxu0 0.0
    %4642 = vmatprep.subr.mxu0 0.0
    %4643 = vmatpush1.msra.mxu0 0.0
    %4644 = vmatprep.subr.mxu0 0.0
    %4645 = vmatpush1.msra.mxu0 0.0
    %4646 = vmatprep.subr.mxu0 0.0
    %4647 = vmatpush1.msra.mxu0 0.0
    %4648 = vmatprep.subr.mxu0 0.0
    %4649 = vmatpush1.msra.mxu0 0.0
    %4650 = vmatprep.subr.mxu0 0.0
    %4651 = vmatpush1.msra.mxu0 0.0
    %4652 = vmatprep.subr.mxu0 0.0
    %4653 = vmatpush1.msra.mxu0 0.0
    %4654 = vmatprep.subr.mxu0 0.0
    %4655 = vmatpush1.msra.mxu0 0.0
    %4656 = vmatprep.subr.mxu0 0.0
    %4657 = vmatpush1.msra.mxu0 0.0
    %4658 = vmatprep.subr.mxu0 0.0
    %4659 = vmatpush1.msra.mxu0 0.0
    %4660 = vmatprep.subr.mxu0 0.0
    %4661 = vmatpush1.msra.mxu0 0.0
    %4662 = vmatprep.subr.mxu0 0.0
    %4663 = vmatpush1.msra.mxu0 0.0
    %4664 = vmatprep.subr.mxu0 0.0
    %4665 = vmatpush1.msra.mxu0 0.0
    %4666 = vmatprep.subr.mxu0 0.0
    %4667 = vmatpush1.msra.mxu0 0.0
    %4668 = vmatprep.subr.mxu0 0.0
    %4669 = vmatpush1.msra.mxu0 0.0
    %4670 = vmatprep.subr.mxu0 0.0
    %4671 = vmatpush1.msra.mxu0 0.0
    %4672 = vmatprep.subr.mxu0 0.0
    %4673 = vmatpush1.msra.mxu0 0.0
    %4674 = vmatprep.subr.mxu0 0.0
    %4675 = vmatpush1.msra.mxu0 0.0
    %4676 = vmatprep.subr.mxu0 0.0
    %4677 = vmatpush1.msra.mxu0 0.0
    %4678 = vmatprep.subr.mxu0 0.0
    %4679 = vmatpush1.msra.mxu0 0.0
    %4680 = vmatprep.subr.mxu0 0.0
    %4681 = vmatpush1.msra.mxu0 0.0
    %4682 = vmatprep.subr.mxu0 0.0
    %4683 = vmatpush1.msra.mxu0 0.0
    %4684 = vmatprep.subr.mxu0 0.0
    %4685 = vmatpush1.msra.mxu0 0.0
    %4686 = vmatprep.subr.mxu0 0.0
    %4687 = vmatpush1.msra.mxu0 0.0
    %4688 = vmatprep.subr.mxu0 0.0
    %4689 = vmatpush1.msra.mxu0 0.0
    %4690 = vmatprep.subr.mxu0 0.0
    %4691 = vmatpush1.msra.mxu0 0.0
    %4692 = vmatprep.subr.mxu0 0.0
    %4693 = vmatpush1.msra.mxu0 0.0
    %4694 = vmatprep.mubr.f32.mxu0 0.0
    %4695 = vmatmul.mubr.f32.gmra.mrb[0].mxu0 %v4458
    %v4696 = vpop.f32.mrb[0].mxu0
    %v4697 = vadd.f32 0.0, %v4696
    %v4698 = vpop.f32.mrb[0].mxu0
    %4699 = vdwg.mxu0
    %v4700 = vadd.f32 %v4627, %v4697
    %v4701 = vxor.u32 %v4700, 2147483648
    %v4702 = vmul.f32 %v4701, 1.442695
    %v4703 = vpow.pop %v4702
    %v4704 = vadd.f32 %v4703, 1.0
    %v4705 = vrcp.pop %v4704
    %v4706 = vmul.f32 1.0, %v4705
    %v4707 = vtanh.pop %v4700
    %v4708 = vmul.f32 %v4706, %v4373
    %4710 = vrot.lane.b32.xlu0 %v4707, 64
    %v4711 = vpop.permute.xlu0 %4710
    %v4713 = vmul.f32 %v4706, %v4711
    %4715 = vrot.lane.b32.xlu0 %v4713, 32
    %v4716 = vpop.permute.xlu0 %4715
    %v4718 = vadd.f32 %v4708, %v4716
    %v4719 = vtanh.pop %v4718
    %4721 = vrot.lane.b32.xlu0 %v4719, 64
    %v4722 = vpop.permute.xlu0 %4721
    %v4724 = vmul.f32 %v4706, %v4722
    %4726 = vrot.lane.b32.xlu0 %v4554, 32
    %v4727 = vpop.permute.xlu0 %4726
    %v4728 = vsel %vm4029, %v4727, 0
    %4730 = vmatprep.subr.mxu0 0.0
    %4731 = vmatpush1.msra.mxu0 %v4012
    %4732 = vmatprep.subr.mxu0 0.0
    %4733 = vmatpush1.msra.mxu0 %v4013
    %4734 = vmatprep.subr.mxu0 0.0
    %4735 = vmatpush1.msra.mxu0 %v4014
    %4736 = vmatprep.subr.mxu0 0.0
    %4737 = vmatpush1.msra.mxu0 %v4015
    %4738 = vmatprep.subr.mxu0 0.0
    %4739 = vmatpush1.msra.mxu0 0.0
    %4740 = vmatprep.subr.mxu0 0.0
    %4741 = vmatpush1.msra.mxu0 0.0
    %4742 = vmatprep.subr.mxu0 0.0
    %4743 = vmatpush1.msra.mxu0 0.0
    %4744 = vmatprep.subr.mxu0 0.0
    %4745 = vmatpush1.msra.mxu0 0.0
    %4746 = vmatprep.subr.mxu0 0.0
    %4747 = vmatpush1.msra.mxu0 0.0
    %4748 = vmatprep.subr.mxu0 0.0
    %4749 = vmatpush1.msra.mxu0 0.0
    %4750 = vmatprep.subr.mxu0 0.0
    %4751 = vmatpush1.msra.mxu0 0.0
    %4752 = vmatprep.subr.mxu0 0.0
    %4753 = vmatpush1.msra.mxu0 0.0
    %4754 = vmatprep.subr.mxu0 0.0
    %4755 = vmatpush1.msra.mxu0 0.0
    %4756 = vmatprep.subr.mxu0 0.0
    %4757 = vmatpush1.msra.mxu0 0.0
    %4758 = vmatprep.subr.mxu0 0.0
    %4759 = vmatpush1.msra.mxu0 0.0
    %4760 = vmatprep.subr.mxu0 0.0
    %4761 = vmatpush1.msra.mxu0 0.0
    %4762 = vmatprep.subr.mxu0 0.0
    %4763 = vmatpush1.msra.mxu0 0.0
    %4764 = vmatprep.subr.mxu0 0.0
    %4765 = vmatpush1.msra.mxu0 0.0
    %4766 = vmatprep.subr.mxu0 0.0
    %4767 = vmatpush1.msra.mxu0 0.0
    %4768 = vmatprep.subr.mxu0 0.0
    %4769 = vmatpush1.msra.mxu0 0.0
    %4770 = vmatprep.subr.mxu0 0.0
    %4771 = vmatpush1.msra.mxu0 0.0
    %4772 = vmatprep.subr.mxu0 0.0
    %4773 = vmatpush1.msra.mxu0 0.0
    %4774 = vmatprep.subr.mxu0 0.0
    %4775 = vmatpush1.msra.mxu0 0.0
    %4776 = vmatprep.subr.mxu0 0.0
    %4777 = vmatpush1.msra.mxu0 0.0
    %4778 = vmatprep.subr.mxu0 0.0
    %4779 = vmatpush1.msra.mxu0 0.0
    %4780 = vmatprep.subr.mxu0 0.0
    %4781 = vmatpush1.msra.mxu0 0.0
    %4782 = vmatprep.subr.mxu0 0.0
    %4783 = vmatpush1.msra.mxu0 0.0
    %4784 = vmatprep.subr.mxu0 0.0
    %4785 = vmatpush1.msra.mxu0 0.0
    %4786 = vmatprep.subr.mxu0 0.0
    %4787 = vmatpush1.msra.mxu0 0.0
    %4788 = vmatprep.subr.mxu0 0.0
    %4789 = vmatpush1.msra.mxu0 0.0
    %4790 = vmatprep.subr.mxu0 0.0
    %4791 = vmatpush1.msra.mxu0 0.0
    %4792 = vmatprep.subr.mxu0 0.0
    %4793 = vmatpush1.msra.mxu0 0.0
    %4794 = vmatprep.mubr.f32.mxu0 0.0
    %4795 = vmatmul.mubr.f32.gmra.mrb[0].mxu0 %v4728
    %v4796 = vpop.f32.mrb[0].mxu0
    %v4797 = vadd.f32 %v4027, %v4796
    %v4798 = vpop.f32.mrb[0].mxu0
    %4799 = vdwg.mxu0
    %4800 = vmatprep.subr.mxu0 0.0
    %4801 = vmatpush1.msra.mxu0 %v4011
    %4802 = vmatprep.subr.mxu0 0.0
    %4803 = vmatpush1.msra.mxu0 0.0
    %4804 = vmatprep.subr.mxu0 0.0
    %4805 = vmatpush1.msra.mxu0 0.0
    %4806 = vmatprep.subr.mxu0 0.0
    %4807 = vmatpush1.msra.mxu0 0.0
    %4808 = vmatprep.subr.mxu0 0.0
    %4809 = vmatpush1.msra.mxu0 0.0
    %4810 = vmatprep.subr.mxu0 0.0
    %4811 = vmatpush1.msra.mxu0 0.0
    %4812 = vmatprep.subr.mxu0 0.0
    %4813 = vmatpush1.msra.mxu0 0.0
    %4814 = vmatprep.subr.mxu0 0.0
    %4815 = vmatpush1.msra.mxu0 0.0
    %4816 = vmatprep.subr.mxu0 0.0
    %4817 = vmatpush1.msra.mxu0 0.0
    %4818 = vmatprep.subr.mxu0 0.0
    %4819 = vmatpush1.msra.mxu0 0.0
    %4820 = vmatprep.subr.mxu0 0.0
    %4821 = vmatpush1.msra.mxu0 0.0
    %4822 = vmatprep.subr.mxu0 0.0
    %4823 = vmatpush1.msra.mxu0 0.0
    %4824 = vmatprep.subr.mxu0 0.0
    %4825 = vmatpush1.msra.mxu0 0.0
    %4826 = vmatprep.subr.mxu0 0.0
    %4827 = vmatpush1.msra.mxu0 0.0
    %4828 = vmatprep.subr.mxu0 0.0
    %4829 = vmatpush1.msra.mxu0 0.0
    %4830 = vmatprep.subr.mxu0 0.0
    %4831 = vmatpush1.msra.mxu0 0.0
    %4832 = vmatprep.subr.mxu0 0.0
    %4833 = vmatpush1.msra.mxu0 0.0
    %4834 = vmatprep.subr.mxu0 0.0
    %4835 = vmatpush1.msra.mxu0 0.0
    %4836 = vmatprep.subr.mxu0 0.0
    %4837 = vmatpush1.msra.mxu0 0.0
    %4838 = vmatprep.subr.mxu0 0.0
    %4839 = vmatpush1.msra.mxu0 0.0
    %4840 = vmatprep.subr.mxu0 0.0
    %4841 = vmatpush1.msra.mxu0 0.0
    %4842 = vmatprep.subr.mxu0 0.0
    %4843 = vmatpush1.msra.mxu0 0.0
    %4844 = vmatprep.subr.mxu0 0.0
    %4845 = vmatpush1.msra.mxu0 0.0
    %4846 = vmatprep.subr.mxu0 0.0
    %4847 = vmatpush1.msra.mxu0 0.0
    %4848 = vmatprep.subr.mxu0 0.0
    %4849 = vmatpush1.msra.mxu0 0.0
    %4850 = vmatprep.subr.mxu0 0.0
    %4851 = vmatpush1.msra.mxu0 0.0
    %4852 = vmatprep.subr.mxu0 0.0
    %4853 = vmatpush1.msra.mxu0 0.0
    %4854 = vmatprep.subr.mxu0 0.0
    %4855 = vmatpush1.msra.mxu0 0.0
    %4856 = vmatprep.subr.mxu0 0.0
    %4857 = vmatpush1.msra.mxu0 0.0
    %4858 = vmatprep.subr.mxu0 0.0
    %4859 = vmatpush1.msra.mxu0 0.0
    %4860 = vmatprep.subr.mxu0 0.0
    %4861 = vmatpush1.msra.mxu0 0.0
    %4862 = vmatprep.subr.mxu0 0.0
    %4863 = vmatpush1.msra.mxu0 0.0
    %4864 = vmatprep.mubr.f32.mxu0 0.0
    %4865 = vmatmul.mubr.f32.gmra.mrb[0].mxu0 %v4283
    %v4866 = vpop.f32.mrb[0].mxu0
    %v4867 = vadd.f32 0.0, %v4866
    %v4868 = vpop.f32.mrb[0].mxu0
    %4869 = vdwg.mxu0
    %v4870 = vadd.f32 %v4797, %v4867
    %v4871 = vxor.u32 %v4870, 2147483648
    %v4872 = vmul.f32 %v4871, 1.442695
    %v4873 = vpow.pop %v4872
    %v4874 = vadd.f32 %v4873, 1.0
    %v4875 = vrcp.pop %v4874
    %v4876 = vmul.f32 1.0, %v4875
    %v4877 = vtanh.pop %v4870
    %v4878 = vmul.f32 %v4876, %v4548
    %4880 = vrot.lane.b32.xlu0 %v4877, 64
    %v4881 = vpop.permute.xlu0 %4880
    %v4883 = vmul.f32 %v4876, %v4881
    %4885 = vrot.lane.b32.xlu0 %v4883, 32
    %v4886 = vpop.permute.xlu0 %4885
    %v4888 = vadd.f32 %v4878, %v4886
    %v4889 = vtanh.pop %v4888
    %4891 = vrot.lane.b32.xlu0 %v4889, 64
    %v4892 = vpop.permute.xlu0 %4891
    %v4894 = vmul.f32 %v4876, %v4892
    %4896 = vrot.lane.b32.xlu0 %v4724, 32
    %v4897 = vpop.permute.xlu0 %4896
    %v4898 = vsel %vm4029, %v4897, 0
    %4900 = vmatprep.subr.mxu0 0.0
    %4901 = vmatpush1.msra.mxu0 %v4018
    %4902 = vmatprep.subr.mxu0 0.0
    %4903 = vmatpush1.msra.mxu0 %v4019
    %4904 = vmatprep.subr.mxu0 0.0
    %4905 = vmatpush1.msra.mxu0 %v4020
    %4906 = vmatprep.subr.mxu0 0.0
    %4907 = vmatpush1.msra.mxu0 %v4021
    %4908 = vmatprep.subr.mxu0 0.0
    %4909 = vmatpush1.msra.mxu0 0.0
    %4910 = vmatprep.subr.mxu0 0.0
    %4911 = vmatpush1.msra.mxu0 0.0
    %4912 = vmatprep.subr.mxu0 0.0
    %4913 = vmatpush1.msra.mxu0 0.0
    %4914 = vmatprep.subr.mxu0 0.0
    %4915 = vmatpush1.msra.mxu0 0.0
    %4916 = vmatprep.subr.mxu0 0.0
    %4917 = vmatpush1.msra.mxu0 0.0
    %4918 = vmatprep.subr.mxu0 0.0
    %4919 = vmatpush1.msra.mxu0 0.0
    %4920 = vmatprep.subr.mxu0 0.0
    %4921 = vmatpush1.msra.mxu0 0.0
    %4922 = vmatprep.subr.mxu0 0.0
    %4923 = vmatpush1.msra.mxu0 0.0
    %4924 = vmatprep.subr.mxu0 0.0
    %4925 = vmatpush1.msra.mxu0 0.0
    %4926 = vmatprep.subr.mxu0 0.0
    %4927 = vmatpush1.msra.mxu0 0.0
    %4928 = vmatprep.subr.mxu0 0.0
    %4929 = vmatpush1.msra.mxu0 0.0
    %4930 = vmatprep.subr.mxu0 0.0
    %4931 = vmatpush1.msra.mxu0 0.0
    %4932 = vmatprep.subr.mxu0 0.0
    %4933 = vmatpush1.msra.mxu0 0.0
    %4934 = vmatprep.subr.mxu0 0.0
    %4935 = vmatpush1.msra.mxu0 0.0
    %4936 = vmatprep.subr.mxu0 0.0
    %4937 = vmatpush1.msra.mxu0 0.0
    %4938 = vmatprep.subr.mxu0 0.0
    %4939 = vmatpush1.msra.mxu0 0.0
    %4940 = vmatprep.subr.mxu0 0.0
    %4941 = vmatpush1.msra.mxu0 0.0
    %4942 = vmatprep.subr.mxu0 0.0
    %4943 = vmatpush1.msra.mxu0 0.0
    %4944 = vmatprep.subr.mxu0 0.0
    %4945 = vmatpush1.msra.mxu0 0.0
    %4946 = vmatprep.subr.mxu0 0.0
    %4947 = vmatpush1.msra.mxu0 0.0
    %4948 = vmatprep.subr.mxu0 0.0
    %4949 = vmatpush1.msra.mxu0 0.0
    %4950 = vmatprep.subr.mxu0 0.0
    %4951 = vmatpush1.msra.mxu0 0.0
    %4952 = vmatprep.subr.mxu0 0.0
    %4953 = vmatpush1.msra.mxu0 0.0
    %4954 = vmatprep.subr.mxu0 0.0
    %4955 = vmatpush1.msra.mxu0 0.0
    %4956 = vmatprep.subr.mxu0 0.0
    %4957 = vmatpush1.msra.mxu0 0.0
    %4958 = vmatprep.subr.mxu0 0.0
    %4959 = vmatpush1.msra.mxu0 0.0
    %4960 = vmatprep.subr.mxu0 0.0
    %4961 = vmatpush1.msra.mxu0 0.0
    %4962 = vmatprep.subr.mxu0 0.0
    %4963 = vmatpush1.msra.mxu0 0.0
    %4964 = vmatprep.mubr.f32.mxu0 0.0
    %4965 = vmatmul.mubr.f32.gmra.mrb[0].mxu0 %v4898
    %v4966 = vpop.f32.mrb[0].mxu0
    %v4967 = vadd.f32 %v4208, %v4966
    %v4968 = vpop.f32.mrb[0].mxu0
    %4969 = vdwg.mxu0
    %4970 = vmatprep.subr.mxu0 0.0
    %4971 = vmatpush1.msra.mxu0 %v4017
    %4972 = vmatprep.subr.mxu0 0.0
    %4973 = vmatpush1.msra.mxu0 0.0
    %4974 = vmatprep.subr.mxu0 0.0
    %4975 = vmatpush1.msra.mxu0 0.0
    %4976 = vmatprep.subr.mxu0 0.0
    %4977 = vmatpush1.msra.mxu0 0.0
    %4978 = vmatprep.subr.mxu0 0.0
    %4979 = vmatpush1.msra.mxu0 0.0
    %4980 = vmatprep.subr.mxu0 0.0
    %4981 = vmatpush1.msra.mxu0 0.0
    %4982 = vmatprep.subr.mxu0 0.0
    %4983 = vmatpush1.msra.mxu0 0.0
    %4984 = vmatprep.subr.mxu0 0.0
    %4985 = vmatpush1.msra.mxu0 0.0
    %4986 = vmatprep.subr.mxu0 0.0
    %4987 = vmatpush1.msra.mxu0 0.0
    %4988 = vmatprep.subr.mxu0 0.0
    %4989 = vmatpush1.msra.mxu0 0.0
    %4990 = vmatprep.subr.mxu0 0.0
    %4991 = vmatpush1.msra.mxu0 0.0
    %4992 = vmatprep.subr.mxu0 0.0
    %4993 = vmatpush1.msra.mxu0 0.0
    %4994 = vmatprep.subr.mxu0 0.0
    %4995 = vmatpush1.msra.mxu0 0.0
    %4996 = vmatprep.subr.mxu0 0.0
    %4997 = vmatpush1.msra.mxu0 0.0
    %4998 = vmatprep.subr.mxu0 0.0
    %4999 = vmatpush1.msra.mxu0 0.0
    %5000 = vmatprep.subr.mxu0 0.0
    %5001 = vmatpush1.msra.mxu0 0.0
    %5002 = vmatprep.subr.mxu0 0.0
    %5003 = vmatpush1.msra.mxu0 0.0
    %5004 = vmatprep.subr.mxu0 0.0
    %5005 = vmatpush1.msra.mxu0 0.0
    %5006 = vmatprep.subr.mxu0 0.0
    %5007 = vmatpush1.msra.mxu0 0.0
    %5008 = vmatprep.subr.mxu0 0.0
    %5009 = vmatpush1.msra.mxu0 0.0
    %5010 = vmatprep.subr.mxu0 0.0
    %5011 = vmatpush1.msra.mxu0 0.0
    %5012 = vmatprep.subr.mxu0 0.0
    %5013 = vmatpush1.msra.mxu0 0.0
    %5014 = vmatprep.subr.mxu0 0.0
    %5015 = vmatpush1.msra.mxu0 0.0
    %5016 = vmatprep.subr.mxu0 0.0
    %5017 = vmatpush1.msra.mxu0 0.0
    %5018 = vmatprep.subr.mxu0 0.0
    %5019 = vmatpush1.msra.mxu0 0.0
    %5020 = vmatprep.subr.mxu0 0.0
    %5021 = vmatpush1.msra.mxu0 0.0
    %5022 = vmatprep.subr.mxu0 0.0
    %5023 = vmatpush1.msra.mxu0 0.0
    %5024 = vmatprep.subr.mxu0 0.0
    %5025 = vmatpush1.msra.mxu0 0.0
    %5026 = vmatprep.subr.mxu0 0.0
    %5027 = vmatpush1.msra.mxu0 0.0
    %5028 = vmatprep.subr.mxu0 0.0
    %5029 = vmatpush1.msra.mxu0 0.0
    %5030 = vmatprep.subr.mxu0 0.0
    %5031 = vmatpush1.msra.mxu0 0.0
    %5032 = vmatprep.subr.mxu0 0.0
    %5033 = vmatpush1.msra.mxu0 0.0
    %5034 = vmatprep.mubr.f32.mxu0 0.0
    %5035 = vmatmul.mubr.f32.gmra.mrb[0].mxu0 %v4107
    %v5036 = vpop.f32.mrb[0].mxu0
    %v5037 = vadd.f32 0.0, %v5036
    %v5038 = vpop.f32.mrb[0].mxu0
    %5039 = vdwg.mxu0
    %v5040 = vadd.f32 %v4967, %v5037
    %v5041 = vxor.u32 %v5040, 2147483648
    %v5042 = vmul.f32 %v5041, 1.442695
    %v5043 = vpow.pop %v5042
    %v5044 = vadd.f32 %v5043, 1.0
    %v5045 = vrcp.pop %v5044
    %v5046 = vmul.f32 1.0, %v5045
    %v5047 = vtanh.pop %v5040
    %v5048 = vmul.f32 %v5046, %v4718
    %5050 = vrot.lane.b32.xlu0 %v5047, 64
    %v5051 = vpop.permute.xlu0 %5050
    %v5053 = vmul.f32 %v5046, %v5051
    %5055 = vrot.lane.b32.xlu0 %v5053, 32
    %v5056 = vpop.permute.xlu0 %5055
    %v5058 = vadd.f32 %v5048, %v5056
    %v5059 = vtanh.pop %v5058
    %5061 = vrot.lane.b32.xlu0 %v5059, 64
    %v5062 = vpop.permute.xlu0 %5061
    %v5064 = vmul.f32 %v5046, %v5062
    %v5065 = vld [vmem:[%s14] sm:$0xff]
    %v5066 = vld [vmem:[%s14 + $0x8] sm:$0xff]
    %v5067 = vld [vmem:[%s14 + $0x10] sm:$0xff]
    %v5068 = vld [vmem:[%s14 + $0x18] sm:$0xff]
    %v5069 = vld [vmem:[%s14 + $0x20] sm:$0xff]
    %v5070 = vld [vmem:[%s14 + $0x28] sm:$0xff]
    %v5071 = vld [vmem:[%s14 + $0x30] sm:$0xff]
    %v5072 = vld [vmem:[%s14 + $0x38] sm:$0xff]
    %v5073 = vld [vmem:[%s15] sm:$0xff]
    %v5074 = vld [vmem:[%s15 + $0x8] sm:$0xff]
    %v5075 = vld [vmem:[%s15 + $0x10] sm:$0xff]
    %v5076 = vld [vmem:[%s15 + $0x18] sm:$0xff]
    %v5077 = vld [vmem:[%s16] sm:$0x1]
    %v5078 = vld [vmem:[%s17] sm:$0xff]
    %v5079 = vld [vmem:[%s17 + $0x8] sm:$0xff]
    %v5080 = vld [vmem:[%s17 + $0x10] sm:$0xff]
    %v5081 = vld [vmem:[%s17 + $0x18] sm:$0xff]
    %v5082 = vld [vmem:[%s17 + $0x20] sm:$0xff]
    %v5083 = vld [vmem:[%s17 + $0x28] sm:$0xff]
    %v5084 = vld [vmem:[%s17 + $0x30] sm:$0xff]
    %v5085 = vld [vmem:[%s17 + $0x38] sm:$0xff]
    %v5086 = vld [vmem:[%s18] sm:$0xff]
    %v5087 = vld [vmem:[%s18 + $0x8] sm:$0xff]
    %v5088 = vld [vmem:[%s18 + $0x10] sm:$0xff]
    %v5089 = vld [vmem:[%s18 + $0x18] sm:$0xff]
    %v5090 = vld [vmem:[%s19] sm:$0x1]
    %v5092 = vlaneseq
    %v5093 = vshrl.u32 %v5092, 7
    %v5094 = vsub.s32 0, %v5093
    %v5095 = vrot.slane %v5077, %v5094
    %5097 = vmatprep.subr.mxu0 0.0
    %5098 = vmatpush1.msra.mxu0 %v5073
    %5099 = vmatprep.subr.mxu0 0.0
    %5100 = vmatpush1.msra.mxu0 %v5074
    %5101 = vmatprep.subr.mxu0 0.0
    %5102 = vmatpush1.msra.mxu0 %v5075
    %5103 = vmatprep.subr.mxu0 0.0
    %5104 = vmatpush1.msra.mxu0 %v5076
    %5105 = vmatprep.subr.mxu0 0.0
    %5106 = vmatpush1.msra.mxu0 0.0
    %5107 = vmatprep.subr.mxu0 0.0
    %5108 = vmatpush1.msra.mxu0 0.0
    %5109 = vmatprep.subr.mxu0 0.0
    %5110 = vmatpush1.msra.mxu0 0.0
    %5111 = vmatprep.subr.mxu0 0.0
    %5112 = vmatpush1.msra.mxu0 0.0
    %5113 = vmatprep.subr.mxu0 0.0
    %5114 = vmatpush1.msra.mxu0 0.0
    %5115 = vmatprep.subr.mxu0 0.0
    %5116 = vmatpush1.msra.mxu0 0.0
    %5117 = vmatprep.subr.mxu0 0.0
    %5118 = vmatpush1.msra.mxu0 0.0
    %5119 = vmatprep.subr.mxu0 0.0
    %5120 = vmatpush1.msra.mxu0 0.0
    %5121 = vmatprep.subr.mxu0 0.0
    %5122 = vmatpush1.msra.mxu0 0.0
    %5123 = vmatprep.subr.mxu0 0.0
    %5124 = vmatpush1.msra.mxu0 0.0
    %5125 = vmatprep.subr.mxu0 0.0
    %5126 = vmatpush1.msra.mxu0 0.0
    %5127 = vmatprep.subr.mxu0 0.0
    %5128 = vmatpush1.msra.mxu0 0.0
    %5129 = vmatprep.subr.mxu0 0.0
    %5130 = vmatpush1.msra.mxu0 0.0
    %5131 = vmatprep.subr.mxu0 0.0
    %5132 = vmatpush1.msra.mxu0 0.0
    %5133 = vmatprep.subr.mxu0 0.0
    %5134 = vmatpush1.msra.mxu0 0.0
    %5135 = vmatprep.subr.mxu0 0.0
    %5136 = vmatpush1.msra.mxu0 0.0
    %5137 = vmatprep.subr.mxu0 0.0
    %5138 = vmatpush1.msra.mxu0 0.0
    %5139 = vmatprep.subr.mxu0 0.0
    %5140 = vmatpush1.msra.mxu0 0.0
    %5141 = vmatprep.subr.mxu0 0.0
    %5142 = vmatpush1.msra.mxu0 0.0
    %5143 = vmatprep.subr.mxu0 0.0
    %5144 = vmatpush1.msra.mxu0 0.0
    %5145 = vmatprep.subr.mxu0 0.0
    %5146 = vmatpush1.msra.mxu0 0.0
    %5147 = vmatprep.subr.mxu0 0.0
    %5148 = vmatpush1.msra.mxu0 0.0
    %5149 = vmatprep.subr.mxu0 0.0
    %5150 = vmatpush1.msra.mxu0 0.0
    %5151 = vmatprep.subr.mxu0 0.0
    %5152 = vmatpush1.msra.mxu0 0.0
    %5153 = vmatprep.subr.mxu0 0.0
    %5154 = vmatpush1.msra.mxu0 0.0
    %5155 = vmatprep.subr.mxu0 0.0
    %5156 = vmatpush1.msra.mxu0 0.0
    %5157 = vmatprep.subr.mxu0 0.0
    %5158 = vmatpush1.msra.mxu0 0.0
    %5159 = vmatprep.subr.mxu0 0.0
    %5160 = vmatpush1.msra.mxu0 0.0
    %5161 = vmatprep.mubr.f32.mxu0 0.0
    %5162 = vmatmul.mubr.f32.gmra.mrb[0].mxu0 %v4031
    %v5163 = vpop.f32.mrb[0].mxu0
    %v5164 = vadd.f32 %v5095, %v5163
    %v5165 = vpop.f32.mrb[0].mxu0
    %5166 = vdwg.mxu0
    %5167 = vmatprep.subr.mxu0 0.0
    %5168 = vmatpush1.msra.mxu0 %v5065
    %5169 = vmatprep.subr.mxu0 0.0
    %5170 = vmatpush1.msra.mxu0 %v5066
    %5171 = vmatprep.subr.mxu0 0.0
    %5172 = vmatpush1.msra.mxu0 %v5067
    %5173 = vmatprep.subr.mxu0 0.0
    %5174 = vmatpush1.msra.mxu0 %v5068
    %5175 = vmatprep.subr.mxu0 0.0
    %5176 = vmatpush1.msra.mxu0 0.0
    %5177 = vmatprep.subr.mxu0 0.0
    %5178 = vmatpush1.msra.mxu0 0.0
    %5179 = vmatprep.subr.mxu0 0.0
    %5180 = vmatpush1.msra.mxu0 0.0
    %5181 = vmatprep.subr.mxu0 0.0
    %5182 = vmatpush1.msra.mxu0 0.0
    %5183 = vmatprep.subr.mxu0 0.0
    %5184 = vmatpush1.msra.mxu0 0.0
    %5185 = vmatprep.subr.mxu0 0.0
    %5186 = vmatpush1.msra.mxu0 0.0
    %5187 = vmatprep.subr.mxu0 0.0
    %5188 = vmatpush1.msra.mxu0 0.0
    %5189 = vmatprep.subr.mxu0 0.0
    %5190 = vmatpush1.msra.mxu0 0.0
    %5191 = vmatprep.subr.mxu0 0.0
    %5192 = vmatpush1.msra.mxu0 0.0
    %5193 = vmatprep.subr.mxu0 0.0
    %5194 = vmatpush1.msra.mxu0 0.0
    %5195 = vmatprep.subr.mxu0 0.0
    %5196 = vmatpush1.msra.mxu0 0.0
    %5197 = vmatprep.subr.mxu0 0.0
    %5198 = vmatpush1.msra.mxu0 0.0
    %5199 = vmatprep.subr.mxu0 0.0
    %5200 = vmatpush1.msra.mxu0 0.0
    %5201 = vmatprep.subr.mxu0 0.0
    %5202 = vmatpush1.msra.mxu0 0.0
    %5203 = vmatprep.subr.mxu0 0.0
    %5204 = vmatpush1.msra.mxu0 0.0
    %5205 = vmatprep.subr.mxu0 0.0
    %5206 = vmatpush1.msra.mxu0 0.0
    %5207 = vmatprep.subr.mxu0 0.0
    %5208 = vmatpush1.msra.mxu0 0.0
    %5209 = vmatprep.subr.mxu0 0.0
    %5210 = vmatpush1.msra.mxu0 0.0
    %5211 = vmatprep.subr.mxu0 0.0
    %5212 = vmatpush1.msra.mxu0 0.0
    %5213 = vmatprep.subr.mxu0 0.0
    %5214 = vmatpush1.msra.mxu0 0.0
    %5215 = vmatprep.subr.mxu0 0.0
    %5216 = vmatpush1.msra.mxu0 0.0
    %5217 = vmatprep.subr.mxu0 0.0
    %5218 = vmatpush1.msra.mxu0 0.0
    %5219 = vmatprep.subr.mxu0 0.0
    %5220 = vmatpush1.msra.mxu0 0.0
    %5221 = vmatprep.subr.mxu0 0.0
    %5222 = vmatpush1.msra.mxu0 0.0
    %5223 = vmatprep.subr.mxu0 0.0
    %5224 = vmatpush1.msra.mxu0 0.0
    %5225 = vmatprep.subr.mxu0 0.0
    %5226 = vmatpush1.msra.mxu0 0.0
    %5227 = vmatprep.subr.mxu0 0.0
    %5228 = vmatpush1.msra.mxu0 0.0
    %5229 = vmatprep.subr.mxu0 0.0
    %5230 = vmatpush1.msra.mxu0 0.0
    %5231 = vmatprep.mubr.f32.mxu0 0.0
    %5232 = vmatmul.mubr.f32.gmra.mrb[0].mxu0 %v4383
    %v5233 = vpop.f32.mrb[0].mxu0
    %v5234 = vadd.f32 0.0, %v5233
    %v5235 = vpop.f32.mrb[0].mxu0
    %5236 = vdwg.mxu0
    %v5237 = vadd.f32 %v5164, %v5234
    %5239 = vrot.lane.b32.xlu0 %v5064, 32
    %v5240 = vpop.permute.xlu0 %5239
    %v5241 = vsel %vm4029, %v5240, 0
    %5243 = vmatprep.subr.mxu0 0.0
    %5244 = vmatpush1.msra.mxu0 %v5069
    %5245 = vmatprep.subr.mxu0 0.0
    %5246 = vmatpush1.msra.mxu0 %v5070
    %5247 = vmatprep.subr.mxu0 0.0
    %5248 = vmatpush1.msra.mxu0 %v5071
    %5249 = vmatprep.subr.mxu0 0.0
    %5250 = vmatpush1.msra.mxu0 %v5072
    %5251 = vmatprep.subr.mxu0 0.0
    %5252 = vmatpush1.msra.mxu0 0.0
    %5253 = vmatprep.subr.mxu0 0.0
    %5254 = vmatpush1.msra.mxu0 0.0
    %5255 = vmatprep.subr.mxu0 0.0
    %5256 = vmatpush1.msra.mxu0 0.0
    %5257 = vmatprep.subr.mxu0 0.0
    %5258 = vmatpush1.msra.mxu0 0.0
    %5259 = vmatprep.subr.mxu0 0.0
    %5260 = vmatpush1.msra.mxu0 0.0
    %5261 = vmatprep.subr.mxu0 0.0
    %5262 = vmatpush1.msra.mxu0 0.0
    %5263 = vmatprep.subr.mxu0 0.0
    %5264 = vmatpush1.msra.mxu0 0.0
    %5265 = vmatprep.subr.mxu0 0.0
    %5266 = vmatpush1.msra.mxu0 0.0
    %5267 = vmatprep.subr.mxu0 0.0
    %5268 = vmatpush1.msra.mxu0 0.0
    %5269 = vmatprep.subr.mxu0 0.0
    %5270 = vmatpush1.msra.mxu0 0.0
    %5271 = vmatprep.subr.mxu0 0.0
    %5272 = vmatpush1.msra.mxu0 0.0
    %5273 = vmatprep.subr.mxu0 0.0
    %5274 = vmatpush1.msra.mxu0 0.0
    %5275 = vmatprep.subr.mxu0 0.0
    %5276 = vmatpush1.msra.mxu0 0.0
    %5277 = vmatprep.subr.mxu0 0.0
    %5278 = vmatpush1.msra.mxu0 0.0
    %5279 = vmatprep.subr.mxu0 0.0
    %5280 = vmatpush1.msra.mxu0 0.0
    %5281 = vmatprep.subr.mxu0 0.0
    %5282 = vmatpush1.msra.mxu0 0.0
    %5283 = vmatprep.subr.mxu0 0.0
    %5284 = vmatpush1.msra.mxu0 0.0
    %5285 = vmatprep.subr.mxu0 0.0
    %5286 = vmatpush1.msra.mxu0 0.0
    %5287 = vmatprep.subr.mxu0 0.0
    %5288 = vmatpush1.msra.mxu0 0.0
    %5289 = vmatprep.subr.mxu0 0.0
    %5290 = vmatpush1.msra.mxu0 0.0
    %5291 = vmatprep.subr.mxu0 0.0
    %5292 = vmatpush1.msra.mxu0 0.0
    %5293 = vmatprep.subr.mxu0 0.0
    %5294 = vmatpush1.msra.mxu0 0.0
    %5295 = vmatprep.subr.mxu0 0.0
    %5296 = vmatpush1.msra.mxu0 0.0
    %5297 = vmatprep.subr.mxu0 0.0
    %5298 = vmatpush1.msra.mxu0 0.0
    %5299 = vmatprep.subr.mxu0 0.0
    %5300 = vmatpush1.msra.mxu0 0.0
    %5301 = vmatprep.subr.mxu0 0.0
    %5302 = vmatpush1.msra.mxu0 0.0
    %5303 = vmatprep.subr.mxu0 0.0
    %5304 = vmatpush1.msra.mxu0 0.0
    %5305 = vmatprep.subr.mxu0 0.0
    %5306 = vmatpush1.msra.mxu0 0.0
    %5307 = vmatprep.mubr.f32.mxu0 0.0
    %5308 = vmatmul.mubr.f32.gmra.mrb[0].mxu0 %v5241
    %v5309 = vpop.f32.mrb[0].mxu0
    %v5310 = vadd.f32 0.0, %v5309
    %v5311 = vpop.f32.mrb[0].mxu0
    %5312 = vdwg.mxu0
    %v5313 = vadd.f32 %v5237, %v5310
    %v5314 = vxor.u32 %v5313, 2147483648
    %v5315 = vmul.f32 %v5314, 1.442695
    %v5316 = vpow.pop %v5315
    %v5317 = vadd.f32 %v5316, 1.0
    %v5318 = vrcp.pop %v5317
    %v5319 = vmul.f32 1.0, %v5318
    %v5320 = vtanh.pop %v5313
    %v5321 = vmul.f32 %v5319, 0.0
    %5323 = vrot.lane.b32.xlu0 %v5320, 64
    %v5324 = vpop.permute.xlu0 %5323
    %v5326 = vmul.f32 %v5319, %v5324
    %5328 = vrot.lane.b32.xlu0 %v5326, 32
    %v5329 = vpop.permute.xlu0 %5328
    %v5331 = vadd.f32 %v5321, %v5329
    %v5332 = vtanh.pop %v5331
    %5334 = vrot.lane.b32.xlu0 %v5332, 64
    %v5335 = vpop.permute.xlu0 %5334
    %v5337 = vmul.f32 %v5319, %v5335
    %v5339 = vlaneseq
    %v5340 = vshrl.u32 %v5339, 7
    %v5341 = vsub.s32 0, %v5340
    %v5342 = vrot.slane %v5090, %v5341
    %5344 = vmatprep.subr.mxu0 0.0
    %5345 = vmatpush1.msra.mxu0 %v5086
    %5346 = vmatprep.subr.mxu0 0.0
    %5347 = vmatpush1.msra.mxu0 %v5087
    %5348 = vmatprep.subr.mxu0 0.0
    %5349 = vmatpush1.msra.mxu0 %v5088
    %5350 = vmatprep.subr.mxu0 0.0
    %5351 = vmatpush1.msra.mxu0 %v5089
    %5352 = vmatprep.subr.mxu0 0.0
    %5353 = vmatpush1.msra.mxu0 0.0
    %5354 = vmatprep.subr.mxu0 0.0
    %5355 = vmatpush1.msra.mxu0 0.0
    %5356 = vmatprep.subr.mxu0 0.0
    %5357 = vmatpush1.msra.mxu0 0.0
    %5358 = vmatprep.subr.mxu0 0.0
    %5359 = vmatpush1.msra.mxu0 0.0
    %5360 = vmatprep.subr.mxu0 0.0
    %5361 = vmatpush1.msra.mxu0 0.0
    %5362 = vmatprep.subr.mxu0 0.0
    %5363 = vmatpush1.msra.mxu0 0.0
    %5364 = vmatprep.subr.mxu0 0.0
    %5365 = vmatpush1.msra.mxu0 0.0
    %5366 = vmatprep.subr.mxu0 0.0
    %5367 = vmatpush1.msra.mxu0 0.0
    %5368 = vmatprep.subr.mxu0 0.0
    %5369 = vmatpush1.msra.mxu0 0.0
    %5370 = vmatprep.subr.mxu0 0.0
    %5371 = vmatpush1.msra.mxu0 0.0
    %5372 = vmatprep.subr.mxu0 0.0
    %5373 = vmatpush1.msra.mxu0 0.0
    %5374 = vmatprep.subr.mxu0 0.0
    %5375 = vmatpush1.msra.mxu0 0.0
    %5376 = vmatprep.subr.mxu0 0.0
    %5377 = vmatpush1.msra.mxu0 0.0
    %5378 = vmatprep.subr.mxu0 0.0
    %5379 = vmatpush1.msra.mxu0 0.0
    %5380 = vmatprep.subr.mxu0 0.0
    %5381 = vmatpush1.msra.mxu0 0.0
    %5382 = vmatprep.subr.mxu0 0.0
    %5383 = vmatpush1.msra.mxu0 0.0
    %5384 = vmatprep.subr.mxu0 0.0
    %5385 = vmatpush1.msra.mxu0 0.0
    %5386 = vmatprep.subr.mxu0 0.0
    %5387 = vmatpush1.msra.mxu0 0.0
    %5388 = vmatprep.subr.mxu0 0.0
    %5389 = vmatpush1.msra.mxu0 0.0
    %5390 = vmatprep.subr.mxu0 0.0
    %5391 = vmatpush1.msra.mxu0 0.0
    %5392 = vmatprep.subr.mxu0 0.0
    %5393 = vmatpush1.msra.mxu0 0.0
    %5394 = vmatprep.subr.mxu0 0.0
    %5395 = vmatpush1.msra.mxu0 0.0
    %5396 = vmatprep.subr.mxu0 0.0
    %5397 = vmatpush1.msra.mxu0 0.0
    %5398 = vmatprep.subr.mxu0 0.0
    %5399 = vmatpush1.msra.mxu0 0.0
    %5400 = vmatprep.subr.mxu0 0.0
    %5401 = vmatpush1.msra.mxu0 0.0
    %5402 = vmatprep.subr.mxu0 0.0
    %5403 = vmatpush1.msra.mxu0 0.0
    %5404 = vmatprep.subr.mxu0 0.0
    %5405 = vmatpush1.msra.mxu0 0.0
    %5406 = vmatprep.subr.mxu0 0.0
    %5407 = vmatpush1.msra.mxu0 0.0
    %5408 = vmatprep.mubr.f32.mxu0 0.0
    %5409 = vmatmul.mubr.f32.gmra.mrb[0].mxu0 %v4031
    %v5410 = vpop.f32.mrb[0].mxu0
    %v5411 = vadd.f32 %v5342, %v5410
    %v5412 = vpop.f32.mrb[0].mxu0
    %5413 = vdwg.mxu0
    %5415 = vrot.lane.b32.xlu0 %v4894, 32
    %v5416 = vpop.permute.xlu0 %5415
    %v5417 = vsel %vm4029, %v5416, 0
    %5419 = vmatprep.subr.mxu0 0.0
    %5420 = vmatpush1.msra.mxu0 %v5078
    %5421 = vmatprep.subr.mxu0 0.0
    %5422 = vmatpush1.msra.mxu0 %v5079
    %5423 = vmatprep.subr.mxu0 0.0
    %5424 = vmatpush1.msra.mxu0 %v5080
    %5425 = vmatprep.subr.mxu0 0.0
    %5426 = vmatpush1.msra.mxu0 %v5081
    %5427 = vmatprep.subr.mxu0 0.0
    %5428 = vmatpush1.msra.mxu0 0.0
    %5429 = vmatprep.subr.mxu0 0.0
    %5430 = vmatpush1.msra.mxu0 0.0
    %5431 = vmatprep.subr.mxu0 0.0
    %5432 = vmatpush1.msra.mxu0 0.0
    %5433 = vmatprep.subr.mxu0 0.0
    %5434 = vmatpush1.msra.mxu0 0.0
    %5435 = vmatprep.subr.mxu0 0.0
    %5436 = vmatpush1.msra.mxu0 0.0
    %5437 = vmatprep.subr.mxu0 0.0
    %5438 = vmatpush1.msra.mxu0 0.0
    %5439 = vmatprep.subr.mxu0 0.0
    %5440 = vmatpush1.msra.mxu0 0.0
    %5441 = vmatprep.subr.mxu0 0.0
    %5442 = vmatpush1.msra.mxu0 0.0
    %5443 = vmatprep.subr.mxu0 0.0
    %5444 = vmatpush1.msra.mxu0 0.0
    %5445 = vmatprep.subr.mxu0 0.0
    %5446 = vmatpush1.msra.mxu0 0.0
    %5447 = vmatprep.subr.mxu0 0.0
    %5448 = vmatpush1.msra.mxu0 0.0
    %5449 = vmatprep.subr.mxu0 0.0
    %5450 = vmatpush1.msra.mxu0 0.0
    %5451 = vmatprep.subr.mxu0 0.0
    %5452 = vmatpush1.msra.mxu0 0.0
    %5453 = vmatprep.subr.mxu0 0.0
    %5454 = vmatpush1.msra.mxu0 0.0
    %5455 = vmatprep.subr.mxu0 0.0
    %5456 = vmatpush1.msra.mxu0 0.0
    %5457 = vmatprep.subr.mxu0 0.0
    %5458 = vmatpush1.msra.mxu0 0.0
    %5459 = vmatprep.subr.mxu0 0.0
    %5460 = vmatpush1.msra.mxu0 0.0
    %5461 = vmatprep.subr.mxu0 0.0
    %5462 = vmatpush1.msra.mxu0 0.0
    %5463 = vmatprep.subr.mxu0 0.0
    %5464 = vmatpush1.msra.mxu0 0.0
    %5465 = vmatprep.subr.mxu0 0.0
    %5466 = vmatpush1.msra.mxu0 0.0
    %5467 = vmatprep.subr.mxu0 0.0
    %5468 = vmatpush1.msra.mxu0 0.0
    %5469 = vmatprep.subr.mxu0 0.0
    %5470 = vmatpush1.msra.mxu0 0.0
    %5471 = vmatprep.subr.mxu0 0.0
    %5472 = vmatpush1.msra.mxu0 0.0
    %5473 = vmatprep.subr.mxu0 0.0
    %5474 = vmatpush1.msra.mxu0 0.0
    %5475 = vmatprep.subr.mxu0 0.0
    %5476 = vmatpush1.msra.mxu0 0.0
    %5477 = vmatprep.subr.mxu0 0.0
    %5478 = vmatpush1.msra.mxu0 0.0
    %5479 = vmatprep.subr.mxu0 0.0
    %5480 = vmatpush1.msra.mxu0 0.0
    %5481 = vmatprep.subr.mxu0 0.0
    %5482 = vmatpush1.msra.mxu0 0.0
    %5483 = vmatprep.mubr.f32.mxu0 0.0
    %5484 = vmatmul.mubr.f32.gmra.mrb[0].mxu0 %v5417
    %v5485 = vpop.f32.mrb[0].mxu0
    %v5486 = vadd.f32 0.0, %v5485
    %v5487 = vpop.f32.mrb[0].mxu0
    %5488 = vdwg.mxu0
    %v5489 = vadd.f32 %v5411, %v5486
    %5490 = vmatprep.subr.mxu0 0.0
    %5491 = vmatpush1.msra.mxu0 %v5082
    %5492 = vmatprep.subr.mxu0 0.0
    %5493 = vmatpush1.msra.mxu0 %v5083
    %5494 = vmatprep.subr.mxu0 0.0
    %5495 = vmatpush1.msra.mxu0 %v5084
    %5496 = vmatprep.subr.mxu0 0.0
    %5497 = vmatpush1.msra.mxu0 %v5085
    %5498 = vmatprep.subr.mxu0 0.0
    %5499 = vmatpush1.msra.mxu0 0.0
    %5500 = vmatprep.subr.mxu0 0.0
    %5501 = vmatpush1.msra.mxu0 0.0
    %5502 = vmatprep.subr.mxu0 0.0
    %5503 = vmatpush1.msra.mxu0 0.0
    %5504 = vmatprep.subr.mxu0 0.0
    %5505 = vmatpush1.msra.mxu0 0.0
    %5506 = vmatprep.subr.mxu0 0.0
    %5507 = vmatpush1.msra.mxu0 0.0
    %5508 = vmatprep.subr.mxu0 0.0
    %5509 = vmatpush1.msra.mxu0 0.0
    %5510 = vmatprep.subr.mxu0 0.0
    %5511 = vmatpush1.msra.mxu0 0.0
    %5512 = vmatprep.subr.mxu0 0.0
    %5513 = vmatpush1.msra.mxu0 0.0
    %5514 = vmatprep.subr.mxu0 0.0
    %5515 = vmatpush1.msra.mxu0 0.0
    %5516 = vmatprep.subr.mxu0 0.0
    %5517 = vmatpush1.msra.mxu0 0.0
    %5518 = vmatprep.subr.mxu0 0.0
    %5519 = vmatpush1.msra.mxu0 0.0
    %5520 = vmatprep.subr.mxu0 0.0
    %5521 = vmatpush1.msra.mxu0 0.0
    %5522 = vmatprep.subr.mxu0 0.0
    %5523 = vmatpush1.msra.mxu0 0.0
    %5524 = vmatprep.subr.mxu0 0.0
    %5525 = vmatpush1.msra.mxu0 0.0
    %5526 = vmatprep.subr.mxu0 0.0
    %5527 = vmatpush1.msra.mxu0 0.0
    %5528 = vmatprep.subr.mxu0 0.0
    %5529 = vmatpush1.msra.mxu0 0.0
    %5530 = vmatprep.subr.mxu0 0.0
    %5531 = vmatpush1.msra.mxu0 0.0
    %5532 = vmatprep.subr.mxu0 0.0
    %5533 = vmatpush1.msra.mxu0 0.0
    %5534 = vmatprep.subr.mxu0 0.0
    %5535 = vmatpush1.msra.mxu0 0.0
    %5536 = vmatprep.subr.mxu0 0.0
    %5537 = vmatpush1.msra.mxu0 0.0
    %5538 = vmatprep.subr.mxu0 0.0
    %5539 = vmatpush1.msra.mxu0 0.0
    %5540 = vmatprep.subr.mxu0 0.0
    %5541 = vmatpush1.msra.mxu0 0.0
    %5542 = vmatprep.subr.mxu0 0.0
    %5543 = vmatpush1.msra.mxu0 0.0
    %5544 = vmatprep.subr.mxu0 0.0
    %5545 = vmatpush1.msra.mxu0 0.0
    %5546 = vmatprep.subr.mxu0 0.0
    %5547 = vmatpush1.msra.mxu0 0.0
    %5548 = vmatprep.subr.mxu0 0.0
    %5549 = vmatpush1.msra.mxu0 0.0
    %5550 = vmatprep.subr.mxu0 0.0
    %5551 = vmatpush1.msra.mxu0 0.0
    %5552 = vmatprep.subr.mxu0 0.0
    %5553 = vmatpush1.msra.mxu0 0.0
    %5554 = vmatprep.mubr.f32.mxu0 0.0
    %5555 = vmatmul.mubr.f32.gmra.mrb[0].mxu0 %v4558
    %v5556 = vpop.f32.mrb[0].mxu0
    %v5557 = vadd.f32 0.0, %v5556
    %v5558 = vpop.f32.mrb[0].mxu0
    %5559 = vdwg.mxu0
    %v5560 = vadd.f32 %v5489, %v5557
    %v5561 = vxor.u32 %v5560, 2147483648
    %v5562 = vmul.f32 %v5561, 1.442695
    %v5563 = vpow.pop %v5562
    %v5564 = vadd.f32 %v5563, 1.0
    %v5565 = vrcp.pop %v5564
    %v5566 = vmul.f32 1.0, %v5565
    %v5567 = vtanh.pop %v5560
    %v5568 = vmul.f32 %v5566, 0.0
    %5570 = vrot.lane.b32.xlu0 %v5567, 64
    %v5571 = vpop.permute.xlu0 %5570
    %v5573 = vmul.f32 %v5566, %v5571
    %5575 = vrot.lane.b32.xlu0 %v5573, 32
    %v5576 = vpop.permute.xlu0 %5575
    %v5578 = vadd.f32 %v5568, %v5576
    %v5579 = vtanh.pop %v5578
    %5581 = vrot.lane.b32.xlu0 %v5579, 64
    %v5582 = vpop.permute.xlu0 %5581
    %v5584 = vmul.f32 %v5566, %v5582
    %5586 = vrot.lane.b32.xlu0 %v5337, 32
    %v5587 = vpop.permute.xlu0 %5586
    %v5588 = vsel %vm4029, %v5587, 0
    %5590 = vmatprep.subr.mxu0 0.0
    %5591 = vmatpush1.msra.mxu0 %v5073
    %5592 = vmatprep.subr.mxu0 0.0
    %5593 = vmatpush1.msra.mxu0 %v5074
    %5594 = vmatprep.subr.mxu0 0.0
    %5595 = vmatpush1.msra.mxu0 %v5075
    %5596 = vmatprep.subr.mxu0 0.0
    %5597 = vmatpush1.msra.mxu0 %v5076
    %5598 = vmatprep.subr.mxu0 0.0
    %5599 = vmatpush1.msra.mxu0 0.0
    %5600 = vmatprep.subr.mxu0 0.0
    %5601 = vmatpush1.msra.mxu0 0.0
    %5602 = vmatprep.subr.mxu0 0.0
    %5603 = vmatpush1.msra.mxu0 0.0
    %5604 = vmatprep.subr.mxu0 0.0
    %5605 = vmatpush1.msra.mxu0 0.0
    %5606 = vmatprep.subr.mxu0 0.0
    %5607 = vmatpush1.msra.mxu0 0.0
    %5608 = vmatprep.subr.mxu0 0.0
    %5609 = vmatpush1.msra.mxu0 0.0
    %5610 = vmatprep.subr.mxu0 0.0
    %5611 = vmatpush1.msra.mxu0 0.0
    %5612 = vmatprep.subr.mxu0 0.0
    %5613 = vmatpush1.msra.mxu0 0.0
    %5614 = vmatprep.subr.mxu0 0.0
    %5615 = vmatpush1.msra.mxu0 0.0
    %5616 = vmatprep.subr.mxu0 0.0
    %5617 = vmatpush1.msra.mxu0 0.0
    %5618 = vmatprep.subr.mxu0 0.0
    %5619 = vmatpush1.msra.mxu0 0.0
    %5620 = vmatprep.subr.mxu0 0.0
    %5621 = vmatpush1.msra.mxu0 0.0
    %5622 = vmatprep.subr.mxu0 0.0
    %5623 = vmatpush1.msra.mxu0 0.0
    %5624 = vmatprep.subr.mxu0 0.0
    %5625 = vmatpush1.msra.mxu0 0.0
    %5626 = vmatprep.subr.mxu0 0.0
    %5627 = vmatpush1.msra.mxu0 0.0
    %5628 = vmatprep.subr.mxu0 0.0
    %5629 = vmatpush1.msra.mxu0 0.0
    %5630 = vmatprep.subr.mxu0 0.0
    %5631 = vmatpush1.msra.mxu0 0.0
    %5632 = vmatprep.subr.mxu0 0.0
    %5633 = vmatpush1.msra.mxu0 0.0
    %5634 = vmatprep.subr.mxu0 0.0
    %5635 = vmatpush1.msra.mxu0 0.0
    %5636 = vmatprep.subr.mxu0 0.0
    %5637 = vmatpush1.msra.mxu0 0.0
    %5638 = vmatprep.subr.mxu0 0.0
    %5639 = vmatpush1.msra.mxu0 0.0
    %5640 = vmatprep.subr.mxu0 0.0
    %5641 = vmatpush1.msra.mxu0 0.0
    %5642 = vmatprep.subr.mxu0 0.0
    %5643 = vmatpush1.msra.mxu0 0.0
    %5644 = vmatprep.subr.mxu0 0.0
    %5645 = vmatpush1.msra.mxu0 0.0
    %5646 = vmatprep.subr.mxu0 0.0
    %5647 = vmatpush1.msra.mxu0 0.0
    %5648 = vmatprep.subr.mxu0 0.0
    %5649 = vmatpush1.msra.mxu0 0.0
    %5650 = vmatprep.subr.mxu0 0.0
    %5651 = vmatpush1.msra.mxu0 0.0
    %5652 = vmatprep.subr.mxu0 0.0
    %5653 = vmatpush1.msra.mxu0 0.0
    %5654 = vmatprep.mubr.f32.mxu0 0.0
    %5655 = vmatmul.mubr.f32.gmra.mrb[0].mxu0 %v5588
    %v5656 = vpop.f32.mrb[0].mxu0
    %v5657 = vadd.f32 %v5095, %v5656
    %v5658 = vpop.f32.mrb[0].mxu0
    %5659 = vdwg.mxu0
    %5660 = vmatprep.subr.mxu0 0.0
    %5661 = vmatpush1.msra.mxu0 %v5065
    %5662 = vmatprep.subr.mxu0 0.0
    %5663 = vmatpush1.msra.mxu0 %v5066
    %5664 = vmatprep.subr.mxu0 0.0
    %5665 = vmatpush1.msra.mxu0 %v5067
    %5666 = vmatprep.subr.mxu0 0.0
    %5667 = vmatpush1.msra.mxu0 %v5068
    %5668 = vmatprep.subr.mxu0 0.0
    %5669 = vmatpush1.msra.mxu0 0.0
    %5670 = vmatprep.subr.mxu0 0.0
    %5671 = vmatpush1.msra.mxu0 0.0
    %5672 = vmatprep.subr.mxu0 0.0
    %5673 = vmatpush1.msra.mxu0 0.0
    %5674 = vmatprep.subr.mxu0 0.0
    %5675 = vmatpush1.msra.mxu0 0.0
    %5676 = vmatprep.subr.mxu0 0.0
    %5677 = vmatpush1.msra.mxu0 0.0
    %5678 = vmatprep.subr.mxu0 0.0
    %5679 = vmatpush1.msra.mxu0 0.0
    %5680 = vmatprep.subr.mxu0 0.0
    %5681 = vmatpush1.msra.mxu0 0.0
    %5682 = vmatprep.subr.mxu0 0.0
    %5683 = vmatpush1.msra.mxu0 0.0
    %5684 = vmatprep.subr.mxu0 0.0
    %5685 = vmatpush1.msra.mxu0 0.0
    %5686 = vmatprep.subr.mxu0 0.0
    %5687 = vmatpush1.msra.mxu0 0.0
    %5688 = vmatprep.subr.mxu0 0.0
    %5689 = vmatpush1.msra.mxu0 0.0
    %5690 = vmatprep.subr.mxu0 0.0
    %5691 = vmatpush1.msra.mxu0 0.0
    %5692 = vmatprep.subr.mxu0 0.0
    %5693 = vmatpush1.msra.mxu0 0.0
    %5694 = vmatprep.subr.mxu0 0.0
    %5695 = vmatpush1.msra.mxu0 0.0
    %5696 = vmatprep.subr.mxu0 0.0
    %5697 = vmatpush1.msra.mxu0 0.0
    %5698 = vmatprep.subr.mxu0 0.0
    %5699 = vmatpush1.msra.mxu0 0.0
    %5700 = vmatprep.subr.mxu0 0.0
    %5701 = vmatpush1.msra.mxu0 0.0
    %5702 = vmatprep.subr.mxu0 0.0
    %5703 = vmatpush1.msra.mxu0 0.0
    %5704 = vmatprep.subr.mxu0 0.0
    %5705 = vmatpush1.msra.mxu0 0.0
    %5706 = vmatprep.subr.mxu0 0.0
    %5707 = vmatpush1.msra.mxu0 0.0
    %5708 = vmatprep.subr.mxu0 0.0
    %5709 = vmatpush1.msra.mxu0 0.0
    %5710 = vmatprep.subr.mxu0 0.0
    %5711 = vmatpush1.msra.mxu0 0.0
    %5712 = vmatprep.subr.mxu0 0.0
    %5713 = vmatpush1.msra.mxu0 0.0
    %5714 = vmatprep.subr.mxu0 0.0
    %5715 = vmatpush1.msra.mxu0 0.0
    %5716 = vmatprep.subr.mxu0 0.0
    %5717 = vmatpush1.msra.mxu0 0.0
    %5718 = vmatprep.subr.mxu0 0.0
    %5719 = vmatpush1.msra.mxu0 0.0
    %5720 = vmatprep.subr.mxu0 0.0
    %5721 = vmatpush1.msra.mxu0 0.0
    %5722 = vmatprep.subr.mxu0 0.0
    %5723 = vmatpush1.msra.mxu0 0.0
    %5724 = vmatprep.mubr.f32.mxu0 0.0
    %5725 = vmatmul.mubr.f32.gmra.mrb[0].mxu0 %v4728
    %v5726 = vpop.f32.mrb[0].mxu0
    %v5727 = vadd.f32 0.0, %v5726
    %v5728 = vpop.f32.mrb[0].mxu0
    %5729 = vdwg.mxu0
    %v5730 = vadd.f32 %v5657, %v5727
    %5731 = vmatprep.subr.mxu0 0.0
    %5732 = vmatpush1.msra.mxu0 %v5069
    %5733 = vmatprep.subr.mxu0 0.0
    %5734 = vmatpush1.msra.mxu0 %v5070
    %5735 = vmatprep.subr.mxu0 0.0
    %5736 = vmatpush1.msra.mxu0 %v5071
    %5737 = vmatprep.subr.mxu0 0.0
    %5738 = vmatpush1.msra.mxu0 %v5072
    %5739 = vmatprep.subr.mxu0 0.0
    %5740 = vmatpush1.msra.mxu0 0.0
    %5741 = vmatprep.subr.mxu0 0.0
    %5742 = vmatpush1.msra.mxu0 0.0
    %5743 = vmatprep.subr.mxu0 0.0
    %5744 = vmatpush1.msra.mxu0 0.0
    %5745 = vmatprep.subr.mxu0 0.0
    %5746 = vmatpush1.msra.mxu0 0.0
    %5747 = vmatprep.subr.mxu0 0.0
    %5748 = vmatpush1.msra.mxu0 0.0
    %5749 = vmatprep.subr.mxu0 0.0
    %5750 = vmatpush1.msra.mxu0 0.0
    %5751 = vmatprep.subr.mxu0 0.0
    %5752 = vmatpush1.msra.mxu0 0.0
    %5753 = vmatprep.subr.mxu0 0.0
    %5754 = vmatpush1.msra.mxu0 0.0
    %5755 = vmatprep.subr.mxu0 0.0
    %5756 = vmatpush1.msra.mxu0 0.0
    %5757 = vmatprep.subr.mxu0 0.0
    %5758 = vmatpush1.msra.mxu0 0.0
    %5759 = vmatprep.subr.mxu0 0.0
    %5760 = vmatpush1.msra.mxu0 0.0
    %5761 = vmatprep.subr.mxu0 0.0
    %5762 = vmatpush1.msra.mxu0 0.0
    %5763 = vmatprep.subr.mxu0 0.0
    %5764 = vmatpush1.msra.mxu0 0.0
    %5765 = vmatprep.subr.mxu0 0.0
    %5766 = vmatpush1.msra.mxu0 0.0
    %5767 = vmatprep.subr.mxu0 0.0
    %5768 = vmatpush1.msra.mxu0 0.0
    %5769 = vmatprep.subr.mxu0 0.0
    %5770 = vmatpush1.msra.mxu0 0.0
    %5771 = vmatprep.subr.mxu0 0.0
    %5772 = vmatpush1.msra.mxu0 0.0
    %5773 = vmatprep.subr.mxu0 0.0
    %5774 = vmatpush1.msra.mxu0 0.0
    %5775 = vmatprep.subr.mxu0 0.0
    %5776 = vmatpush1.msra.mxu0 0.0
    %5777 = vmatprep.subr.mxu0 0.0
    %5778 = vmatpush1.msra.mxu0 0.0
    %5779 = vmatprep.subr.mxu0 0.0
    %5780 = vmatpush1.msra.mxu0 0.0
    %5781 = vmatprep.subr.mxu0 0.0
    %5782 = vmatpush1.msra.mxu0 0.0
    %5783 = vmatprep.subr.mxu0 0.0
    %5784 = vmatpush1.msra.mxu0 0.0
    %5785 = vmatprep.subr.mxu0 0.0
    %5786 = vmatpush1.msra.mxu0 0.0
    %5787 = vmatprep.subr.mxu0 0.0
    %5788 = vmatpush1.msra.mxu0 0.0
    %5789 = vmatprep.subr.mxu0 0.0
    %5790 = vmatpush1.msra.mxu0 0.0
    %5791 = vmatprep.subr.mxu0 0.0
    %5792 = vmatpush1.msra.mxu0 0.0
    %5793 = vmatprep.subr.mxu0 0.0
    %5794 = vmatpush1.msra.mxu0 0.0
    %5795 = vmatprep.mubr.f32.mxu0 0.0
    %5796 = vmatmul.mubr.f32.gmra.mrb[0].mxu0 %v4898
    %v5797 = vpop.f32.mrb[0].mxu0
    %v5798 = vadd.f32 0.0, %v5797
    %v5799 = vpop.f32.mrb[0].mxu0
    %5800 = vdwg.mxu0
    %v5801 = vadd.f32 %v5730, %v5798
    %v5802 = vxor.u32 %v5801, 2147483648
    %v5803 = vmul.f32 %v5802, 1.442695
    %v5804 = vpow.pop %v5803
    %v5805 = vadd.f32 %v5804, 1.0
    %v5806 = vrcp.pop %v5805
    %v5807 = vmul.f32 1.0, %v5806
    %v5808 = vtanh.pop %v5801
    %v5809 = vmul.f32 %v5807, %v5331
    %5811 = vrot.lane.b32.xlu0 %v5808, 64
    %v5812 = vpop.permute.xlu0 %5811
    %v5814 = vmul.f32 %v5807, %v5812
    %5816 = vrot.lane.b32.xlu0 %v5814, 32
    %v5817 = vpop.permute.xlu0 %5816
    %v5819 = vadd.f32 %v5809, %v5817
    %v5820 = vtanh.pop %v5819
    %5822 = vrot.lane.b32.xlu0 %v5820, 64
    %v5823 = vpop.permute.xlu0 %5822
    %v5825 = vmul.f32 %v5807, %v5823
    %5827 = vrot.lane.b32.xlu0 %v5584, 32
    %v5828 = vpop.permute.xlu0 %5827
    %v5829 = vsel %vm4029, %v5828, 0
    %5831 = vmatprep.subr.mxu0 0.0
    %5832 = vmatpush1.msra.mxu0 %v5086
    %5833 = vmatprep.subr.mxu0 0.0
    %5834 = vmatpush1.msra.mxu0 %v5087
    %5835 = vmatprep.subr.mxu0 0.0
    %5836 = vmatpush1.msra.mxu0 %v5088
    %5837 = vmatprep.subr.mxu0 0.0
    %5838 = vmatpush1.msra.mxu0 %v5089
    %5839 = vmatprep.subr.mxu0 0.0
    %5840 = vmatpush1.msra.mxu0 0.0
    %5841 = vmatprep.subr.mxu0 0.0
    %5842 = vmatpush1.msra.mxu0 0.0
    %5843 = vmatprep.subr.mxu0 0.0
    %5844 = vmatpush1.msra.mxu0 0.0
    %5845 = vmatprep.subr.mxu0 0.0
    %5846 = vmatpush1.msra.mxu0 0.0
    %5847 = vmatprep.subr.mxu0 0.0
    %5848 = vmatpush1.msra.mxu0 0.0
    %5849 = vmatprep.subr.mxu0 0.0
    %5850 = vmatpush1.msra.mxu0 0.0
    %5851 = vmatprep.subr.mxu0 0.0
    %5852 = vmatpush1.msra.mxu0 0.0
    %5853 = vmatprep.subr.mxu0 0.0
    %5854 = vmatpush1.msra.mxu0 0.0
    %5855 = vmatprep.subr.mxu0 0.0
    %5856 = vmatpush1.msra.mxu0 0.0
    %5857 = vmatprep.subr.mxu0 0.0
    %5858 = vmatpush1.msra.mxu0 0.0
    %5859 = vmatprep.subr.mxu0 0.0
    %5860 = vmatpush1.msra.mxu0 0.0
    %5861 = vmatprep.subr.mxu0 0.0
    %5862 = vmatpush1.msra.mxu0 0.0
    %5863 = vmatprep.subr.mxu0 0.0
    %5864 = vmatpush1.msra.mxu0 0.0
    %5865 = vmatprep.subr.mxu0 0.0
    %5866 = vmatpush1.msra.mxu0 0.0
    %5867 = vmatprep.subr.mxu0 0.0
    %5868 = vmatpush1.msra.mxu0 0.0
    %5869 = vmatprep.subr.mxu0 0.0
    %5870 = vmatpush1.msra.mxu0 0.0
    %5871 = vmatprep.subr.mxu0 0.0
    %5872 = vmatpush1.msra.mxu0 0.0
    %5873 = vmatprep.subr.mxu0 0.0
    %5874 = vmatpush1.msra.mxu0 0.0
    %5875 = vmatprep.subr.mxu0 0.0
    %5876 = vmatpush1.msra.mxu0 0.0
    %5877 = vmatprep.subr.mxu0 0.0
    %5878 = vmatpush1.msra.mxu0 0.0
    %5879 = vmatprep.subr.mxu0 0.0
    %5880 = vmatpush1.msra.mxu0 0.0
    %5881 = vmatprep.subr.mxu0 0.0
    %5882 = vmatpush1.msra.mxu0 0.0
    %5883 = vmatprep.subr.mxu0 0.0
    %5884 = vmatpush1.msra.mxu0 0.0
    %5885 = vmatprep.subr.mxu0 0.0
    %5886 = vmatpush1.msra.mxu0 0.0
    %5887 = vmatprep.subr.mxu0 0.0
    %5888 = vmatpush1.msra.mxu0 0.0
    %5889 = vmatprep.subr.mxu0 0.0
    %5890 = vmatpush1.msra.mxu0 0.0
    %5891 = vmatprep.subr.mxu0 0.0
    %5892 = vmatpush1.msra.mxu0 0.0
    %5893 = vmatprep.subr.mxu0 0.0
    %5894 = vmatpush1.msra.mxu0 0.0
    %5895 = vmatprep.mubr.f32.mxu0 0.0
    %5896 = vmatmul.mubr.f32.gmra.mrb[0].mxu0 %v5829
    %v5897 = vpop.f32.mrb[0].mxu0
    %v5898 = vadd.f32 %v5342, %v5897
    %v5899 = vpop.f32.mrb[0].mxu0
    %5900 = vdwg.mxu0
    %5901 = vmatprep.subr.mxu0 0.0
    %5902 = vmatpush1.msra.mxu0 %v5078
    %5903 = vmatprep.subr.mxu0 0.0
    %5904 = vmatpush1.msra.mxu0 %v5079
    %5905 = vmatprep.subr.mxu0 0.0
    %5906 = vmatpush1.msra.mxu0 %v5080
    %5907 = vmatprep.subr.mxu0 0.0
    %5908 = vmatpush1.msra.mxu0 %v5081
    %5909 = vmatprep.subr.mxu0 0.0
    %5910 = vmatpush1.msra.mxu0 0.0
    %5911 = vmatprep.subr.mxu0 0.0
    %5912 = vmatpush1.msra.mxu0 0.0
    %5913 = vmatprep.subr.mxu0 0.0
    %5914 = vmatpush1.msra.mxu0 0.0
    %5915 = vmatprep.subr.mxu0 0.0
    %5916 = vmatpush1.msra.mxu0 0.0
    %5917 = vmatprep.subr.mxu0 0.0
    %5918 = vmatpush1.msra.mxu0 0.0
    %5919 = vmatprep.subr.mxu0 0.0
    %5920 = vmatpush1.msra.mxu0 0.0
    %5921 = vmatprep.subr.mxu0 0.0
    %5922 = vmatpush1.msra.mxu0 0.0
    %5923 = vmatprep.subr.mxu0 0.0
    %5924 = vmatpush1.msra.mxu0 0.0
    %5925 = vmatprep.subr.mxu0 0.0
    %5926 = vmatpush1.msra.mxu0 0.0
    %5927 = vmatprep.subr.mxu0 0.0
    %5928 = vmatpush1.msra.mxu0 0.0
    %5929 = vmatprep.subr.mxu0 0.0
    %5930 = vmatpush1.msra.mxu0 0.0
    %5931 = vmatprep.subr.mxu0 0.0
    %5932 = vmatpush1.msra.mxu0 0.0
    %5933 = vmatprep.subr.mxu0 0.0
    %5934 = vmatpush1.msra.mxu0 0.0
    %5935 = vmatprep.subr.mxu0 0.0
    %5936 = vmatpush1.msra.mxu0 0.0
    %5937 = vmatprep.subr.mxu0 0.0
    %5938 = vmatpush1.msra.mxu0 0.0
    %5939 = vmatprep.subr.mxu0 0.0
    %5940 = vmatpush1.msra.mxu0 0.0
    %5941 = vmatprep.subr.mxu0 0.0
    %5942 = vmatpush1.msra.mxu0 0.0
    %5943 = vmatprep.subr.mxu0 0.0
    %5944 = vmatpush1.msra.mxu0 0.0
    %5945 = vmatprep.subr.mxu0 0.0
    %5946 = vmatpush1.msra.mxu0 0.0
    %5947 = vmatprep.subr.mxu0 0.0
    %5948 = vmatpush1.msra.mxu0 0.0
    %5949 = vmatprep.subr.mxu0 0.0
    %5950 = vmatpush1.msra.mxu0 0.0
    %5951 = vmatprep.subr.mxu0 0.0
    %5952 = vmatpush1.msra.mxu0 0.0
    %5953 = vmatprep.subr.mxu0 0.0
    %5954 = vmatpush1.msra.mxu0 0.0
    %5955 = vmatprep.subr.mxu0 0.0
    %5956 = vmatpush1.msra.mxu0 0.0
    %5957 = vmatprep.subr.mxu0 0.0
    %5958 = vmatpush1.msra.mxu0 0.0
    %5959 = vmatprep.subr.mxu0 0.0
    %5960 = vmatpush1.msra.mxu0 0.0
    %5961 = vmatprep.subr.mxu0 0.0
    %5962 = vmatpush1.msra.mxu0 0.0
    %5963 = vmatprep.subr.mxu0 0.0
    %5964 = vmatpush1.msra.mxu0 0.0
    %5965 = vmatprep.mubr.f32.mxu0 0.0
    %5966 = vmatmul.mubr.f32.gmra.mrb[0].mxu0 %v4728
    %v5967 = vpop.f32.mrb[0].mxu0
    %v5968 = vadd.f32 0.0, %v5967
    %v5969 = vpop.f32.mrb[0].mxu0
    %5970 = vdwg.mxu0
    %v5971 = vadd.f32 %v5898, %v5968
    %5972 = vmatprep.subr.mxu0 0.0
    %5973 = vmatpush1.msra.mxu0 %v5082
    %5974 = vmatprep.subr.mxu0 0.0
    %5975 = vmatpush1.msra.mxu0 %v5083
    %5976 = vmatprep.subr.mxu0 0.0
    %5977 = vmatpush1.msra.mxu0 %v5084
    %5978 = vmatprep.subr.mxu0 0.0
    %5979 = vmatpush1.msra.mxu0 %v5085
    %5980 = vmatprep.subr.mxu0 0.0
    %5981 = vmatpush1.msra.mxu0 0.0
    %5982 = vmatprep.subr.mxu0 0.0
    %5983 = vmatpush1.msra.mxu0 0.0
    %5984 = vmatprep.subr.mxu0 0.0
    %5985 = vmatpush1.msra.mxu0 0.0
    %5986 = vmatprep.subr.mxu0 0.0
    %5987 = vmatpush1.msra.mxu0 0.0
    %5988 = vmatprep.subr.mxu0 0.0
    %5989 = vmatpush1.msra.mxu0 0.0
    %5990 = vmatprep.subr.mxu0 0.0
    %5991 = vmatpush1.msra.mxu0 0.0
    %5992 = vmatprep.subr.mxu0 0.0
    %5993 = vmatpush1.msra.mxu0 0.0
    %5994 = vmatprep.subr.mxu0 0.0
    %5995 = vmatpush1.msra.mxu0 0.0
    %5996 = vmatprep.subr.mxu0 0.0
    %5997 = vmatpush1.msra.mxu0 0.0
    %5998 = vmatprep.subr.mxu0 0.0
    %5999 = vmatpush1.msra.mxu0 0.0
    %6000 = vmatprep.subr.mxu0 0.0
    %6001 = vmatpush1.msra.mxu0 0.0
    %6002 = vmatprep.subr.mxu0 0.0
    %6003 = vmatpush1.msra.mxu0 0.0
    %6004 = vmatprep.subr.mxu0 0.0
    %6005 = vmatpush1.msra.mxu0 0.0
    %6006 = vmatprep.subr.mxu0 0.0
    %6007 = vmatpush1.msra.mxu0 0.0
    %6008 = vmatprep.subr.mxu0 0.0
    %6009 = vmatpush1.msra.mxu0 0.0
    %6010 = vmatprep.subr.mxu0 0.0
    %6011 = vmatpush1.msra.mxu0 0.0
    %6012 = vmatprep.subr.mxu0 0.0
    %6013 = vmatpush1.msra.mxu0 0.0
    %6014 = vmatprep.subr.mxu0 0.0
    %6015 = vmatpush1.msra.mxu0 0.0
    %6016 = vmatprep.subr.mxu0 0.0
    %6017 = vmatpush1.msra.mxu0 0.0
    %6018 = vmatprep.subr.mxu0 0.0
    %6019 = vmatpush1.msra.mxu0 0.0
    %6020 = vmatprep.subr.mxu0 0.0
    %6021 = vmatpush1.msra.mxu0 0.0
    %6022 = vmatprep.subr.mxu0 0.0
    %6023 = vmatpush1.msra.mxu0 0.0
    %6024 = vmatprep.subr.mxu0 0.0
    %6025 = vmatpush1.msra.mxu0 0.0
    %6026 = vmatprep.subr.mxu0 0.0
    %6027 = vmatpush1.msra.mxu0 0.0
    %6028 = vmatprep.subr.mxu0 0.0
    %6029 = vmatpush1.msra.mxu0 0.0
    %6030 = vmatprep.subr.mxu0 0.0
    %6031 = vmatpush1.msra.mxu0 0.0
    %6032 = vmatprep.subr.mxu0 0.0
    %6033 = vmatpush1.msra.mxu0 0.0
    %6034 = vmatprep.subr.mxu0 0.0
    %6035 = vmatpush1.msra.mxu0 0.0
    %6036 = vmatprep.mubr.f32.mxu0 0.0
    %6037 = vmatmul.mubr.f32.gmra.mrb[0].mxu0 %v4898
    %v6038 = vpop.f32.mrb[0].mxu0
    %v6039 = vadd.f32 0.0, %v6038
    %v6040 = vpop.f32.mrb[0].mxu0
    %6041 = vdwg.mxu0
    %v6042 = vadd.f32 %v5971, %v6039
    %v6043 = vxor.u32 %v6042, 2147483648
    %v6044 = vmul.f32 %v6043, 1.442695
    %v6045 = vpow.pop %v6044
    %v6046 = vadd.f32 %v6045, 1.0
    %v6047 = vrcp.pop %v6046
    %v6048 = vmul.f32 1.0, %v6047
    %v6049 = vtanh.pop %v6042
    %v6050 = vmul.f32 %v6048, %v5578
    %6052 = vrot.lane.b32.xlu0 %v6049, 64
    %v6053 = vpop.permute.xlu0 %6052
    %v6055 = vmul.f32 %v6048, %v6053
    %6057 = vrot.lane.b32.xlu0 %v6055, 32
    %v6058 = vpop.permute.xlu0 %6057
    %v6060 = vadd.f32 %v6050, %v6058
    %v6061 = vtanh.pop %v6060
    %6063 = vrot.lane.b32.xlu0 %v6061, 64
    %v6064 = vpop.permute.xlu0 %6063
    %v6066 = vmul.f32 %v6048, %v6064
    %6068 = vrot.lane.b32.xlu0 %v5825, 32
    %v6069 = vpop.permute.xlu0 %6068
    %v6070 = vsel %vm4029, %v6069, 0
    %6072 = vmatprep.subr.mxu0 0.0
    %6073 = vmatpush1.msra.mxu0 %v5073
    %6074 = vmatprep.subr.mxu0 0.0
    %6075 = vmatpush1.msra.mxu0 %v5074
    %6076 = vmatprep.subr.mxu0 0.0
    %6077 = vmatpush1.msra.mxu0 %v5075
    %6078 = vmatprep.subr.mxu0 0.0
    %6079 = vmatpush1.msra.mxu0 %v5076
    %6080 = vmatprep.subr.mxu0 0.0
    %6081 = vmatpush1.msra.mxu0 0.0
    %6082 = vmatprep.subr.mxu0 0.0
    %6083 = vmatpush1.msra.mxu0 0.0
    %6084 = vmatprep.subr.mxu0 0.0
    %6085 = vmatpush1.msra.mxu0 0.0
    %6086 = vmatprep.subr.mxu0 0.0
    %6087 = vmatpush1.msra.mxu0 0.0
    %6088 = vmatprep.subr.mxu0 0.0
    %6089 = vmatpush1.msra.mxu0 0.0
    %6090 = vmatprep.subr.mxu0 0.0
    %6091 = vmatpush1.msra.mxu0 0.0
    %6092 = vmatprep.subr.mxu0 0.0
    %6093 = vmatpush1.msra.mxu0 0.0
    %6094 = vmatprep.subr.mxu0 0.0
    %6095 = vmatpush1.msra.mxu0 0.0
    %6096 = vmatprep.subr.mxu0 0.0
    %6097 = vmatpush1.msra.mxu0 0.0
    %6098 = vmatprep.subr.mxu0 0.0
    %6099 = vmatpush1.msra.mxu0 0.0
    %6100 = vmatprep.subr.mxu0 0.0
    %6101 = vmatpush1.msra.mxu0 0.0
    %6102 = vmatprep.subr.mxu0 0.0
    %6103 = vmatpush1.msra.mxu0 0.0
    %6104 = vmatprep.subr.mxu0 0.0
    %6105 = vmatpush1.msra.mxu0 0.0
    %6106 = vmatprep.subr.mxu0 0.0
    %6107 = vmatpush1.msra.mxu0 0.0
    %6108 = vmatprep.subr.mxu0 0.0
    %6109 = vmatpush1.msra.mxu0 0.0
    %6110 = vmatprep.subr.mxu0 0.0
    %6111 = vmatpush1.msra.mxu0 0.0
    %6112 = vmatprep.subr.mxu0 0.0
    %6113 = vmatpush1.msra.mxu0 0.0
    %6114 = vmatprep.subr.mxu0 0.0
    %6115 = vmatpush1.msra.mxu0 0.0
    %6116 = vmatprep.subr.mxu0 0.0
    %6117 = vmatpush1.msra.mxu0 0.0
    %6118 = vmatprep.subr.mxu0 0.0
    %6119 = vmatpush1.msra.mxu0 0.0
    %6120 = vmatprep.subr.mxu0 0.0
    %6121 = vmatpush1.msra.mxu0 0.0
    %6122 = vmatprep.subr.mxu0 0.0
    %6123 = vmatpush1.msra.mxu0 0.0
    %6124 = vmatprep.subr.mxu0 0.0
    %6125 = vmatpush1.msra.mxu0 0.0
    %6126 = vmatprep.subr.mxu0 0.0
    %6127 = vmatpush1.msra.mxu0 0.0
    %6128 = vmatprep.subr.mxu0 0.0
    %6129 = vmatpush1.msra.mxu0 0.0
    %6130 = vmatprep.subr.mxu0 0.0
    %6131 = vmatpush1.msra.mxu0 0.0
    %6132 = vmatprep.subr.mxu0 0.0
    %6133 = vmatpush1.msra.mxu0 0.0
    %6134 = vmatprep.subr.mxu0 0.0
    %6135 = vmatpush1.msra.mxu0 0.0
    %6136 = vmatprep.mubr.f32.mxu0 0.0
    %6137 = vmatmul.mubr.f32.gmra.mrb[0].mxu0 %v6070
    %v6138 = vpop.f32.mrb[0].mxu0
    %v6139 = vadd.f32 %v5095, %v6138
    %v6140 = vpop.f32.mrb[0].mxu0
    %6141 = vdwg.mxu0
    %6142 = vmatprep.subr.mxu0 0.0
    %6143 = vmatpush1.msra.mxu0 %v5065
    %6144 = vmatprep.subr.mxu0 0.0
    %6145 = vmatpush1.msra.mxu0 %v5066
    %6146 = vmatprep.subr.mxu0 0.0
    %6147 = vmatpush1.msra.mxu0 %v5067
    %6148 = vmatprep.subr.mxu0 0.0
    %6149 = vmatpush1.msra.mxu0 %v5068
    %6150 = vmatprep.subr.mxu0 0.0
    %6151 = vmatpush1.msra.mxu0 0.0
    %6152 = vmatprep.subr.mxu0 0.0
    %6153 = vmatpush1.msra.mxu0 0.0
    %6154 = vmatprep.subr.mxu0 0.0
    %6155 = vmatpush1.msra.mxu0 0.0
    %6156 = vmatprep.subr.mxu0 0.0
    %6157 = vmatpush1.msra.mxu0 0.0
    %6158 = vmatprep.subr.mxu0 0.0
    %6159 = vmatpush1.msra.mxu0 0.0
    %6160 = vmatprep.subr.mxu0 0.0
    %6161 = vmatpush1.msra.mxu0 0.0
    %6162 = vmatprep.subr.mxu0 0.0
    %6163 = vmatpush1.msra.mxu0 0.0
    %6164 = vmatprep.subr.mxu0 0.0
    %6165 = vmatpush1.msra.mxu0 0.0
    %6166 = vmatprep.subr.mxu0 0.0
    %6167 = vmatpush1.msra.mxu0 0.0
    %6168 = vmatprep.subr.mxu0 0.0
    %6169 = vmatpush1.msra.mxu0 0.0
    %6170 = vmatprep.subr.mxu0 0.0
    %6171 = vmatpush1.msra.mxu0 0.0
    %6172 = vmatprep.subr.mxu0 0.0
    %6173 = vmatpush1.msra.mxu0 0.0
    %6174 = vmatprep.subr.mxu0 0.0
    %6175 = vmatpush1.msra.mxu0 0.0
    %6176 = vmatprep.subr.mxu0 0.0
    %6177 = vmatpush1.msra.mxu0 0.0
    %6178 = vmatprep.subr.mxu0 0.0
    %6179 = vmatpush1.msra.mxu0 0.0
    %6180 = vmatprep.subr.mxu0 0.0
    %6181 = vmatpush1.msra.mxu0 0.0
    %6182 = vmatprep.subr.mxu0 0.0
    %6183 = vmatpush1.msra.mxu0 0.0
    %6184 = vmatprep.subr.mxu0 0.0
    %6185 = vmatpush1.msra.mxu0 0.0
    %6186 = vmatprep.subr.mxu0 0.0
    %6187 = vmatpush1.msra.mxu0 0.0
    %6188 = vmatprep.subr.mxu0 0.0
    %6189 = vmatpush1.msra.mxu0 0.0
    %6190 = vmatprep.subr.mxu0 0.0
    %6191 = vmatpush1.msra.mxu0 0.0
    %6192 = vmatprep.subr.mxu0 0.0
    %6193 = vmatpush1.msra.mxu0 0.0
    %6194 = vmatprep.subr.mxu0 0.0
    %6195 = vmatpush1.msra.mxu0 0.0
    %6196 = vmatprep.subr.mxu0 0.0
    %6197 = vmatpush1.msra.mxu0 0.0
    %6198 = vmatprep.subr.mxu0 0.0
    %6199 = vmatpush1.msra.mxu0 0.0
    %6200 = vmatprep.subr.mxu0 0.0
    %6201 = vmatpush1.msra.mxu0 0.0
    %6202 = vmatprep.subr.mxu0 0.0
    %6203 = vmatpush1.msra.mxu0 0.0
    %6204 = vmatprep.subr.mxu0 0.0
    %6205 = vmatpush1.msra.mxu0 0.0
    %6206 = vmatprep.mubr.f32.mxu0 0.0
    %6207 = vmatmul.mubr.f32.gmra.mrb[0].mxu0 %v5417
    %v6208 = vpop.f32.mrb[0].mxu0
    %v6209 = vadd.f32 0.0, %v6208
    %v6210 = vpop.f32.mrb[0].mxu0
    %6211 = vdwg.mxu0
    %v6212 = vadd.f32 %v6139, %v6209
    %6213 = vmatprep.subr.mxu0 0.0
    %6214 = vmatpush1.msra.mxu0 %v5069
    %6215 = vmatprep.subr.mxu0 0.0
    %6216 = vmatpush1.msra.mxu0 %v5070
    %6217 = vmatprep.subr.mxu0 0.0
    %6218 = vmatpush1.msra.mxu0 %v5071
    %6219 = vmatprep.subr.mxu0 0.0
    %6220 = vmatpush1.msra.mxu0 %v5072
    %6221 = vmatprep.subr.mxu0 0.0
    %6222 = vmatpush1.msra.mxu0 0.0
    %6223 = vmatprep.subr.mxu0 0.0
    %6224 = vmatpush1.msra.mxu0 0.0
    %6225 = vmatprep.subr.mxu0 0.0
    %6226 = vmatpush1.msra.mxu0 0.0
    %6227 = vmatprep.subr.mxu0 0.0
    %6228 = vmatpush1.msra.mxu0 0.0
    %6229 = vmatprep.subr.mxu0 0.0
    %6230 = vmatpush1.msra.mxu0 0.0
    %6231 = vmatprep.subr.mxu0 0.0
    %6232 = vmatpush1.msra.mxu0 0.0
    %6233 = vmatprep.subr.mxu0 0.0
    %6234 = vmatpush1.msra.mxu0 0.0
    %6235 = vmatprep.subr.mxu0 0.0
    %6236 = vmatpush1.msra.mxu0 0.0
    %6237 = vmatprep.subr.mxu0 0.0
    %6238 = vmatpush1.msra.mxu0 0.0
    %6239 = vmatprep.subr.mxu0 0.0
    %6240 = vmatpush1.msra.mxu0 0.0
    %6241 = vmatprep.subr.mxu0 0.0
    %6242 = vmatpush1.msra.mxu0 0.0
    %6243 = vmatprep.subr.mxu0 0.0
    %6244 = vmatpush1.msra.mxu0 0.0
    %6245 = vmatprep.subr.mxu0 0.0
    %6246 = vmatpush1.msra.mxu0 0.0
    %6247 = vmatprep.subr.mxu0 0.0
    %6248 = vmatpush1.msra.mxu0 0.0
    %6249 = vmatprep.subr.mxu0 0.0
    %6250 = vmatpush1.msra.mxu0 0.0
    %6251 = vmatprep.subr.mxu0 0.0
    %6252 = vmatpush1.msra.mxu0 0.0
    %6253 = vmatprep.subr.mxu0 0.0
    %6254 = vmatpush1.msra.mxu0 0.0
    %6255 = vmatprep.subr.mxu0 0.0
    %6256 = vmatpush1.msra.mxu0 0.0
    %6257 = vmatprep.subr.mxu0 0.0
    %6258 = vmatpush1.msra.mxu0 0.0
    %6259 = vmatprep.subr.mxu0 0.0
    %6260 = vmatpush1.msra.mxu0 0.0
    %6261 = vmatprep.subr.mxu0 0.0
    %6262 = vmatpush1.msra.mxu0 0.0
    %6263 = vmatprep.subr.mxu0 0.0
    %6264 = vmatpush1.msra.mxu0 0.0
    %6265 = vmatprep.subr.mxu0 0.0
    %6266 = vmatpush1.msra.mxu0 0.0
    %6267 = vmatprep.subr.mxu0 0.0
    %6268 = vmatpush1.msra.mxu0 0.0
    %6269 = vmatprep.subr.mxu0 0.0
    %6270 = vmatpush1.msra.mxu0 0.0
    %6271 = vmatprep.subr.mxu0 0.0
    %6272 = vmatpush1.msra.mxu0 0.0
    %6273 = vmatprep.subr.mxu0 0.0
    %6274 = vmatpush1.msra.mxu0 0.0
    %6275 = vmatprep.subr.mxu0 0.0
    %6276 = vmatpush1.msra.mxu0 0.0
    %6277 = vmatprep.mubr.f32.mxu0 0.0
    %6278 = vmatmul.mubr.f32.gmra.mrb[0].mxu0 %v4558
    %v6279 = vpop.f32.mrb[0].mxu0
    %v6280 = vadd.f32 0.0, %v6279
    %v6281 = vpop.f32.mrb[0].mxu0
    %6282 = vdwg.mxu0
    %v6283 = vadd.f32 %v6212, %v6280
    %v6284 = vxor.u32 %v6283, 2147483648
    %v6285 = vmul.f32 %v6284, 1.442695
    %v6286 = vpow.pop %v6285
    %v6287 = vadd.f32 %v6286, 1.0
    %v6288 = vrcp.pop %v6287
    %v6289 = vmul.f32 1.0, %v6288
    %v6290 = vtanh.pop %v6283
    %v6291 = vmul.f32 %v6289, %v5819
    %6293 = vrot.lane.b32.xlu0 %v6290, 64
    %v6294 = vpop.permute.xlu0 %6293
    %v6296 = vmul.f32 %v6289, %v6294
    %6298 = vrot.lane.b32.xlu0 %v6296, 32
    %v6299 = vpop.permute.xlu0 %6298
    %v6301 = vadd.f32 %v6291, %v6299
    %v6302 = vtanh.pop %v6301
    %6304 = vrot.lane.b32.xlu0 %v6302, 64
    %v6305 = vpop.permute.xlu0 %6304
    %v6307 = vmul.f32 %v6289, %v6305
    %6309 = vrot.lane.b32.xlu0 %v6066, 32
    %v6310 = vpop.permute.xlu0 %6309
    %v6311 = vsel %vm4029, %v6310, 0
    %6313 = vmatprep.subr.mxu0 0.0
    %6314 = vmatpush1.msra.mxu0 %v5086
    %6315 = vmatprep.subr.mxu0 0.0
    %6316 = vmatpush1.msra.mxu0 %v5087
    %6317 = vmatprep.subr.mxu0 0.0
    %6318 = vmatpush1.msra.mxu0 %v5088
    %6319 = vmatprep.subr.mxu0 0.0
    %6320 = vmatpush1.msra.mxu0 %v5089
    %6321 = vmatprep.subr.mxu0 0.0
    %6322 = vmatpush1.msra.mxu0 0.0
    %6323 = vmatprep.subr.mxu0 0.0
    %6324 = vmatpush1.msra.mxu0 0.0
    %6325 = vmatprep.subr.mxu0 0.0
    %6326 = vmatpush1.msra.mxu0 0.0
    %6327 = vmatprep.subr.mxu0 0.0
    %6328 = vmatpush1.msra.mxu0 0.0
    %6329 = vmatprep.subr.mxu0 0.0
    %6330 = vmatpush1.msra.mxu0 0.0
    %6331 = vmatprep.subr.mxu0 0.0
    %6332 = vmatpush1.msra.mxu0 0.0
    %6333 = vmatprep.subr.mxu0 0.0
    %6334 = vmatpush1.msra.mxu0 0.0
    %6335 = vmatprep.subr.mxu0 0.0
    %6336 = vmatpush1.msra.mxu0 0.0
    %6337 = vmatprep.subr.mxu0 0.0
    %6338 = vmatpush1.msra.mxu0 0.0
    %6339 = vmatprep.subr.mxu0 0.0
    %6340 = vmatpush1.msra.mxu0 0.0
    %6341 = vmatprep.subr.mxu0 0.0
    %6342 = vmatpush1.msra.mxu0 0.0
    %6343 = vmatprep.subr.mxu0 0.0
    %6344 = vmatpush1.msra.mxu0 0.0
    %6345 = vmatprep.subr.mxu0 0.0
    %6346 = vmatpush1.msra.mxu0 0.0
    %6347 = vmatprep.subr.mxu0 0.0
    %6348 = vmatpush1.msra.mxu0 0.0
    %6349 = vmatprep.subr.mxu0 0.0
    %6350 = vmatpush1.msra.mxu0 0.0
    %6351 = vmatprep.subr.mxu0 0.0
    %6352 = vmatpush1.msra.mxu0 0.0
    %6353 = vmatprep.subr.mxu0 0.0
    %6354 = vmatpush1.msra.mxu0 0.0
    %6355 = vmatprep.subr.mxu0 0.0
    %6356 = vmatpush1.msra.mxu0 0.0
    %6357 = vmatprep.subr.mxu0 0.0
    %6358 = vmatpush1.msra.mxu0 0.0
    %6359 = vmatprep.subr.mxu0 0.0
    %6360 = vmatpush1.msra.mxu0 0.0
    %6361 = vmatprep.subr.mxu0 0.0
    %6362 = vmatpush1.msra.mxu0 0.0
    %6363 = vmatprep.subr.mxu0 0.0
    %6364 = vmatpush1.msra.mxu0 0.0
    %6365 = vmatprep.subr.mxu0 0.0
    %6366 = vmatpush1.msra.mxu0 0.0
    %6367 = vmatprep.subr.mxu0 0.0
    %6368 = vmatpush1.msra.mxu0 0.0
    %6369 = vmatprep.subr.mxu0 0.0
    %6370 = vmatpush1.msra.mxu0 0.0
    %6371 = vmatprep.subr.mxu0 0.0
    %6372 = vmatpush1.msra.mxu0 0.0
    %6373 = vmatprep.subr.mxu0 0.0
    %6374 = vmatpush1.msra.mxu0 0.0
    %6375 = vmatprep.subr.mxu0 0.0
    %6376 = vmatpush1.msra.mxu0 0.0
    %6377 = vmatprep.mubr.f32.mxu0 0.0
    %6378 = vmatmul.mubr.f32.gmra.mrb[0].mxu0 %v6311
    %v6379 = vpop.f32.mrb[0].mxu0
    %v6380 = vadd.f32 %v5342, %v6379
    %v6381 = vpop.f32.mrb[0].mxu0
    %6382 = vdwg.mxu0
    %6383 = vmatprep.subr.mxu0 0.0
    %6384 = vmatpush1.msra.mxu0 %v5078
    %6385 = vmatprep.subr.mxu0 0.0
    %6386 = vmatpush1.msra.mxu0 %v5079
    %6387 = vmatprep.subr.mxu0 0.0
    %6388 = vmatpush1.msra.mxu0 %v5080
    %6389 = vmatprep.subr.mxu0 0.0
    %6390 = vmatpush1.msra.mxu0 %v5081
    %6391 = vmatprep.subr.mxu0 0.0
    %6392 = vmatpush1.msra.mxu0 0.0
    %6393 = vmatprep.subr.mxu0 0.0
    %6394 = vmatpush1.msra.mxu0 0.0
    %6395 = vmatprep.subr.mxu0 0.0
    %6396 = vmatpush1.msra.mxu0 0.0
    %6397 = vmatprep.subr.mxu0 0.0
    %6398 = vmatpush1.msra.mxu0 0.0
    %6399 = vmatprep.subr.mxu0 0.0
    %6400 = vmatpush1.msra.mxu0 0.0
    %6401 = vmatprep.subr.mxu0 0.0
    %6402 = vmatpush1.msra.mxu0 0.0
    %6403 = vmatprep.subr.mxu0 0.0
    %6404 = vmatpush1.msra.mxu0 0.0
    %6405 = vmatprep.subr.mxu0 0.0
    %6406 = vmatpush1.msra.mxu0 0.0
    %6407 = vmatprep.subr.mxu0 0.0
    %6408 = vmatpush1.msra.mxu0 0.0
    %6409 = vmatprep.subr.mxu0 0.0
    %6410 = vmatpush1.msra.mxu0 0.0
    %6411 = vmatprep.subr.mxu0 0.0
    %6412 = vmatpush1.msra.mxu0 0.0
    %6413 = vmatprep.subr.mxu0 0.0
    %6414 = vmatpush1.msra.mxu0 0.0
    %6415 = vmatprep.subr.mxu0 0.0
    %6416 = vmatpush1.msra.mxu0 0.0
    %6417 = vmatprep.subr.mxu0 0.0
    %6418 = vmatpush1.msra.mxu0 0.0
    %6419 = vmatprep.subr.mxu0 0.0
    %6420 = vmatpush1.msra.mxu0 0.0
    %6421 = vmatprep.subr.mxu0 0.0
    %6422 = vmatpush1.msra.mxu0 0.0
    %6423 = vmatprep.subr.mxu0 0.0
    %6424 = vmatpush1.msra.mxu0 0.0
    %6425 = vmatprep.subr.mxu0 0.0
    %6426 = vmatpush1.msra.mxu0 0.0
    %6427 = vmatprep.subr.mxu0 0.0
    %6428 = vmatpush1.msra.mxu0 0.0
    %6429 = vmatprep.subr.mxu0 0.0
    %6430 = vmatpush1.msra.mxu0 0.0
    %6431 = vmatprep.subr.mxu0 0.0
    %6432 = vmatpush1.msra.mxu0 0.0
    %6433 = vmatprep.subr.mxu0 0.0
    %6434 = vmatpush1.msra.mxu0 0.0
    %6435 = vmatprep.subr.mxu0 0.0
    %6436 = vmatpush1.msra.mxu0 0.0
    %6437 = vmatprep.subr.mxu0 0.0
    %6438 = vmatpush1.msra.mxu0 0.0
    %6439 = vmatprep.subr.mxu0 0.0
    %6440 = vmatpush1.msra.mxu0 0.0
    %6441 = vmatprep.subr.mxu0 0.0
    %6442 = vmatpush1.msra.mxu0 0.0
    %6443 = vmatprep.subr.mxu0 0.0
    %6444 = vmatpush1.msra.mxu0 0.0
    %6445 = vmatprep.subr.mxu0 0.0
    %6446 = vmatpush1.msra.mxu0 0.0
    %6447 = vmatprep.mubr.f32.mxu0 0.0
    %6448 = vmatmul.mubr.f32.gmra.mrb[0].mxu0 %v4383
    %v6449 = vpop.f32.mrb[0].mxu0
    %v6450 = vadd.f32 0.0, %v6449
    %v6451 = vpop.f32.mrb[0].mxu0
    %6452 = vdwg.mxu0
    %v6453 = vadd.f32 %v6380, %v6450
    %6454 = vmatprep.subr.mxu0 0.0
    %6455 = vmatpush1.msra.mxu0 %v5082
    %6456 = vmatprep.subr.mxu0 0.0
    %6457 = vmatpush1.msra.mxu0 %v5083
    %6458 = vmatprep.subr.mxu0 0.0
    %6459 = vmatpush1.msra.mxu0 %v5084
    %6460 = vmatprep.subr.mxu0 0.0
    %6461 = vmatpush1.msra.mxu0 %v5085
    %6462 = vmatprep.subr.mxu0 0.0
    %6463 = vmatpush1.msra.mxu0 0.0
    %6464 = vmatprep.subr.mxu0 0.0
    %6465 = vmatpush1.msra.mxu0 0.0
    %6466 = vmatprep.subr.mxu0 0.0
    %6467 = vmatpush1.msra.mxu0 0.0
    %6468 = vmatprep.subr.mxu0 0.0
    %6469 = vmatpush1.msra.mxu0 0.0
    %6470 = vmatprep.subr.mxu0 0.0
    %6471 = vmatpush1.msra.mxu0 0.0
    %6472 = vmatprep.subr.mxu0 0.0
    %6473 = vmatpush1.msra.mxu0 0.0
    %6474 = vmatprep.subr.mxu0 0.0
    %6475 = vmatpush1.msra.mxu0 0.0
    %6476 = vmatprep.subr.mxu0 0.0
    %6477 = vmatpush1.msra.mxu0 0.0
    %6478 = vmatprep.subr.mxu0 0.0
    %6479 = vmatpush1.msra.mxu0 0.0
    %6480 = vmatprep.subr.mxu0 0.0
    %6481 = vmatpush1.msra.mxu0 0.0
    %6482 = vmatprep.subr.mxu0 0.0
    %6483 = vmatpush1.msra.mxu0 0.0
    %6484 = vmatprep.subr.mxu0 0.0
    %6485 = vmatpush1.msra.mxu0 0.0
    %6486 = vmatprep.subr.mxu0 0.0
    %6487 = vmatpush1.msra.mxu0 0.0
    %6488 = vmatprep.subr.mxu0 0.0
    %6489 = vmatpush1.msra.mxu0 0.0
    %6490 = vmatprep.subr.mxu0 0.0
    %6491 = vmatpush1.msra.mxu0 0.0
    %6492 = vmatprep.subr.mxu0 0.0
    %6493 = vmatpush1.msra.mxu0 0.0
    %6494 = vmatprep.subr.mxu0 0.0
    %6495 = vmatpush1.msra.mxu0 0.0
    %6496 = vmatprep.subr.mxu0 0.0
    %6497 = vmatpush1.msra.mxu0 0.0
    %6498 = vmatprep.subr.mxu0 0.0
    %6499 = vmatpush1.msra.mxu0 0.0
    %6500 = vmatprep.subr.mxu0 0.0
    %6501 = vmatpush1.msra.mxu0 0.0
    %6502 = vmatprep.subr.mxu0 0.0
    %6503 = vmatpush1.msra.mxu0 0.0
    %6504 = vmatprep.subr.mxu0 0.0
    %6505 = vmatpush1.msra.mxu0 0.0
    %6506 = vmatprep.subr.mxu0 0.0
    %6507 = vmatpush1.msra.mxu0 0.0
    %6508 = vmatprep.subr.mxu0 0.0
    %6509 = vmatpush1.msra.mxu0 0.0
    %6510 = vmatprep.subr.mxu0 0.0
    %6511 = vmatpush1.msra.mxu0 0.0
    %6512 = vmatprep.subr.mxu0 0.0
    %6513 = vmatpush1.msra.mxu0 0.0
    %6514 = vmatprep.subr.mxu0 0.0
    %6515 = vmatpush1.msra.mxu0 0.0
    %6516 = vmatprep.subr.mxu0 0.0
    %6517 = vmatpush1.msra.mxu0 0.0
    %6518 = vmatprep.mubr.f32.mxu0 0.0
    %6519 = vmatmul.mubr.f32.gmra.mrb[0].mxu0 %v5241
    %v6520 = vpop.f32.mrb[0].mxu0
    %v6521 = vadd.f32 0.0, %v6520
    %v6522 = vpop.f32.mrb[0].mxu0
    %6523 = vdwg.mxu0
    %v6524 = vadd.f32 %v6453, %v6521
    %v6525 = vxor.u32 %v6524, 2147483648
    %v6526 = vmul.f32 %v6525, 1.442695
    %v6527 = vpow.pop %v6526
    %v6528 = vadd.f32 %v6527, 1.0
    %v6529 = vrcp.pop %v6528
    %v6530 = vmul.f32 1.0, %v6529
    %v6531 = vtanh.pop %v6524
    %v6532 = vmul.f32 %v6530, %v6060
    %6534 = vrot.lane.b32.xlu0 %v6531, 64
    %v6535 = vpop.permute.xlu0 %6534
    %v6537 = vmul.f32 %v6530, %v6535
    %6539 = vrot.lane.b32.xlu0 %v6537, 32
    %v6540 = vpop.permute.xlu0 %6539
    %v6542 = vadd.f32 %v6532, %v6540
    %v6543 = vtanh.pop %v6542
    %6545 = vrot.lane.b32.xlu0 %v6543, 64
    %v6546 = vpop.permute.xlu0 %6545
    %v6548 = vmul.f32 %v6530, %v6546
    %v6549 = vld [vmem:[%s20] sm:$0xff]
    %v6550 = vld [vmem:[%s20 + $0x8] sm:$0xff]
    %v6551 = vld [vmem:[%s20 + $0x10] sm:$0xff]
    %v6552 = vld [vmem:[%s20 + $0x18] sm:$0xff]
    %v6553 = vld [vmem:[%s20 + $0x20] sm:$0xff]
    %v6554 = vld [vmem:[%s20 + $0x28] sm:$0xff]
    %v6555 = vld [vmem:[%s20 + $0x30] sm:$0xff]
    %v6556 = vld [vmem:[%s20 + $0x38] sm:$0xff]
    %v6557 = vld [vmem:[%s20 + $0x40] sm:$0xff]
    %v6558 = vld [vmem:[%s20 + $0x48] sm:$0xff]
    %v6559 = vld [vmem:[%s20 + $0x50] sm:$0xff]
    %v6560 = vld [vmem:[%s20 + $0x58] sm:$0xff]
    %v6561 = vld [vmem:[%s20 + $0x60] sm:$0xff]
    %v6562 = vld [vmem:[%s20 + $0x68] sm:$0xff]
    %v6563 = vld [vmem:[%s20 + $0x70] sm:$0xff]
    %v6564 = vld [vmem:[%s20 + $0x78] sm:$0xff]
    %v6565 = vld [vmem:[%s21] sm:$0x1]
    %6566 = vmatprep.subr.mxu0 0.0
    %6567 = vmatpush1.msra.mxu0 %v6549
    %6568 = vmatprep.subr.mxu0 0.0
    %6569 = vmatpush1.msra.mxu0 %v6550
    %6570 = vmatprep.subr.mxu0 0.0
    %6571 = vmatpush1.msra.mxu0 %v6551
    %6572 = vmatprep.subr.mxu0 0.0
    %6573 = vmatpush1.msra.mxu0 %v6552
    %6574 = vmatprep.subr.mxu0 0.0
    %6575 = vmatpush1.msra.mxu0 0.0
    %6576 = vmatprep.subr.mxu0 0.0
    %6577 = vmatpush1.msra.mxu0 0.0
    %6578 = vmatprep.subr.mxu0 0.0
    %6579 = vmatpush1.msra.mxu0 0.0
    %6580 = vmatprep.subr.mxu0 0.0
    %6581 = vmatpush1.msra.mxu0 0.0
    %6582 = vmatprep.subr.mxu0 0.0
    %6583 = vmatpush1.msra.mxu0 0.0
    %6584 = vmatprep.subr.mxu0 0.0
    %6585 = vmatpush1.msra.mxu0 0.0
    %6586 = vmatprep.subr.mxu0 0.0
    %6587 = vmatpush1.msra.mxu0 0.0
    %6588 = vmatprep.subr.mxu0 0.0
    %6589 = vmatpush1.msra.mxu0 0.0
    %6590 = vmatprep.subr.mxu0 0.0
    %6591 = vmatpush1.msra.mxu0 0.0
    %6592 = vmatprep.subr.mxu0 0.0
    %6593 = vmatpush1.msra.mxu0 0.0
    %6594 = vmatprep.subr.mxu0 0.0
    %6595 = vmatpush1.msra.mxu0 0.0
    %6596 = vmatprep.subr.mxu0 0.0
    %6597 = vmatpush1.msra.mxu0 0.0
    %6598 = vmatprep.subr.mxu0 0.0
    %6599 = vmatpush1.msra.mxu0 0.0
    %6600 = vmatprep.subr.mxu0 0.0
    %6601 = vmatpush1.msra.mxu0 0.0
    %6602 = vmatprep.subr.mxu0 0.0
    %6603 = vmatpush1.msra.mxu0 0.0
    %6604 = vmatprep.subr.mxu0 0.0
    %6605 = vmatpush1.msra.mxu0 0.0
    %6606 = vmatprep.subr.mxu0 0.0
    %6607 = vmatpush1.msra.mxu0 0.0
    %6608 = vmatprep.subr.mxu0 0.0
    %6609 = vmatpush1.msra.mxu0 0.0
    %6610 = vmatprep.subr.mxu0 0.0
    %6611 = vmatpush1.msra.mxu0 0.0
    %6612 = vmatprep.subr.mxu0 0.0
    %6613 = vmatpush1.msra.mxu0 0.0
    %6614 = vmatprep.subr.mxu0 0.0
    %6615 = vmatpush1.msra.mxu0 0.0
    %6616 = vmatprep.subr.mxu0 0.0
    %6617 = vmatpush1.msra.mxu0 0.0
    %6618 = vmatprep.subr.mxu0 0.0
    %6619 = vmatpush1.msra.mxu0 0.0
    %6620 = vmatprep.subr.mxu0 0.0
    %6621 = vmatpush1.msra.mxu0 0.0
    %6622 = vmatprep.subr.mxu0 0.0
    %6623 = vmatpush1.msra.mxu0 0.0
    %6624 = vmatprep.subr.mxu0 0.0
    %6625 = vmatpush1.msra.mxu0 0.0
    %6626 = vmatprep.subr.mxu0 0.0
    %6627 = vmatpush1.msra.mxu0 0.0
    %6628 = vmatprep.subr.mxu0 0.0
    %6629 = vmatpush1.msra.mxu0 0.0
    %6630 = vmatprep.mubr.f32.mxu0 0.0
    %6631 = vmatmul.mubr.f32.gmra.mrb[0].mxu0 %v5588
    %v6632 = vpop.f32.mrb[0].mxu0
    %v6633 = vadd.f32 0.0, %v6632
    %v6634 = vpop.f32.mrb[0].mxu0
    %6635 = vdwg.mxu0
    %v6637 = vlaneseq
    %v6638 = vshrl.u32 %v6637, 7
    %v6639 = vsub.s32 0, %v6638
    %v6640 = vrot.slane %v6565, %v6639
    %v6642 = vadd.f32 %v6640, %v6633
    %6644 = vrot.lane.b32.xlu0 %v6548, 32
    %v6645 = vpop.permute.xlu0 %6644
    %v6646 = vsel %vm4029, %v6645, 0
    %6648 = vmatprep.subr.mxu0 0.0
    %6649 = vmatpush1.msra.mxu0 %v6553
    %6650 = vmatprep.subr.mxu0 0.0
    %6651 = vmatpush1.msra.mxu0 %v6554
    %6652 = vmatprep.subr.mxu0 0.0
    %6653 = vmatpush1.msra.mxu0 %v6555
    %6654 = vmatprep.subr.mxu0 0.0
    %6655 = vmatpush1.msra.mxu0 %v6556
    %6656 = vmatprep.subr.mxu0 0.0
    %6657 = vmatpush1.msra.mxu0 0.0
    %6658 = vmatprep.subr.mxu0 0.0
    %6659 = vmatpush1.msra.mxu0 0.0
    %6660 = vmatprep.subr.mxu0 0.0
    %6661 = vmatpush1.msra.mxu0 0.0
    %6662 = vmatprep.subr.mxu0 0.0
    %6663 = vmatpush1.msra.mxu0 0.0
    %6664 = vmatprep.subr.mxu0 0.0
    %6665 = vmatpush1.msra.mxu0 0.0
    %6666 = vmatprep.subr.mxu0 0.0
    %6667 = vmatpush1.msra.mxu0 0.0
    %6668 = vmatprep.subr.mxu0 0.0
    %6669 = vmatpush1.msra.mxu0 0.0
    %6670 = vmatprep.subr.mxu0 0.0
    %6671 = vmatpush1.msra.mxu0 0.0
    %6672 = vmatprep.subr.mxu0 0.0
    %6673 = vmatpush1.msra.mxu0 0.0
    %6674 = vmatprep.subr.mxu0 0.0
    %6675 = vmatpush1.msra.mxu0 0.0
    %6676 = vmatprep.subr.mxu0 0.0
    %6677 = vmatpush1.msra.mxu0 0.0
    %6678 = vmatprep.subr.mxu0 0.0
    %6679 = vmatpush1.msra.mxu0 0.0
    %6680 = vmatprep.subr.mxu0 0.0
    %6681 = vmatpush1.msra.mxu0 0.0
    %6682 = vmatprep.subr.mxu0 0.0
    %6683 = vmatpush1.msra.mxu0 0.0
    %6684 = vmatprep.subr.mxu0 0.0
    %6685 = vmatpush1.msra.mxu0 0.0
    %6686 = vmatprep.subr.mxu0 0.0
    %6687 = vmatpush1.msra.mxu0 0.0
    %6688 = vmatprep.subr.mxu0 0.0
    %6689 = vmatpush1.msra.mxu0 0.0
    %6690 = vmatprep.subr.mxu0 0.0
    %6691 = vmatpush1.msra.mxu0 0.0
    %6692 = vmatprep.subr.mxu0 0.0
    %6693 = vmatpush1.msra.mxu0 0.0
    %6694 = vmatprep.subr.mxu0 0.0
    %6695 = vmatpush1.msra.mxu0 0.0
    %6696 = vmatprep.subr.mxu0 0.0
    %6697 = vmatpush1.msra.mxu0 0.0
    %6698 = vmatprep.subr.mxu0 0.0
    %6699 = vmatpush1.msra.mxu0 0.0
    %6700 = vmatprep.subr.mxu0 0.0
    %6701 = vmatpush1.msra.mxu0 0.0
    %6702 = vmatprep.subr.mxu0 0.0
    %6703 = vmatpush1.msra.mxu0 0.0
    %6704 = vmatprep.subr.mxu0 0.0
    %6705 = vmatpush1.msra.mxu0 0.0
    %6706 = vmatprep.subr.mxu0 0.0
    %6707 = vmatpush1.msra.mxu0 0.0
    %6708 = vmatprep.subr.mxu0 0.0
    %6709 = vmatpush1.msra.mxu0 0.0
    %6710 = vmatprep.subr.mxu0 0.0
    %6711 = vmatpush1.msra.mxu0 0.0
    %6712 = vmatprep.mubr.f32.mxu0 0.0
    %6713 = vmatmul.mubr.f32.gmra.mrb[0].mxu0 %v6646
    %v6714 = vpop.f32.mrb[0].mxu0
    %v6715 = vadd.f32 0.0, %v6714
    %v6716 = vpop.f32.mrb[0].mxu0
    %6717 = vdwg.mxu0
    %v6718 = vadd.f32 %v6642, %v6715
    %6720 = vrot.lane.b32.xlu0 %v6307, 32
    %v6721 = vpop.permute.xlu0 %6720
    %v6722 = vsel %vm4029, %v6721, 0
    %6724 = vmatprep.subr.mxu0 0.0
    %6725 = vmatpush1.msra.mxu0 %v6557
    %6726 = vmatprep.subr.mxu0 0.0
    %6727 = vmatpush1.msra.mxu0 %v6558
    %6728 = vmatprep.subr.mxu0 0.0
    %6729 = vmatpush1.msra.mxu0 %v6559
    %6730 = vmatprep.subr.mxu0 0.0
    %6731 = vmatpush1.msra.mxu0 %v6560
    %6732 = vmatprep.subr.mxu0 0.0
    %6733 = vmatpush1.msra.mxu0 0.0
    %6734 = vmatprep.subr.mxu0 0.0
    %6735 = vmatpush1.msra.mxu0 0.0
    %6736 = vmatprep.subr.mxu0 0.0
    %6737 = vmatpush1.msra.mxu0 0.0
    %6738 = vmatprep.subr.mxu0 0.0
    %6739 = vmatpush1.msra.mxu0 0.0
    %6740 = vmatprep.subr.mxu0 0.0
    %6741 = vmatpush1.msra.mxu0 0.0
    %6742 = vmatprep.subr.mxu0 0.0
    %6743 = vmatpush1.msra.mxu0 0.0
    %6744 = vmatprep.subr.mxu0 0.0
    %6745 = vmatpush1.msra.mxu0 0.0
    %6746 = vmatprep.subr.mxu0 0.0
    %6747 = vmatpush1.msra.mxu0 0.0
    %6748 = vmatprep.subr.mxu0 0.0
    %6749 = vmatpush1.msra.mxu0 0.0
    %6750 = vmatprep.subr.mxu0 0.0
    %6751 = vmatpush1.msra.mxu0 0.0
    %6752 = vmatprep.subr.mxu0 0.0
    %6753 = vmatpush1.msra.mxu0 0.0
    %6754 = vmatprep.subr.mxu0 0.0
    %6755 = vmatpush1.msra.mxu0 0.0
    %6756 = vmatprep.subr.mxu0 0.0
    %6757 = vmatpush1.msra.mxu0 0.0
    %6758 = vmatprep.subr.mxu0 0.0
    %6759 = vmatpush1.msra.mxu0 0.0
    %6760 = vmatprep.subr.mxu0 0.0
    %6761 = vmatpush1.msra.mxu0 0.0
    %6762 = vmatprep.subr.mxu0 0.0
    %6763 = vmatpush1.msra.mxu0 0.0
    %6764 = vmatprep.subr.mxu0 0.0
    %6765 = vmatpush1.msra.mxu0 0.0
    %6766 = vmatprep.subr.mxu0 0.0
    %6767 = vmatpush1.msra.mxu0 0.0
    %6768 = vmatprep.subr.mxu0 0.0
    %6769 = vmatpush1.msra.mxu0 0.0
    %6770 = vmatprep.subr.mxu0 0.0
    %6771 = vmatpush1.msra.mxu0 0.0
    %6772 = vmatprep.subr.mxu0 0.0
    %6773 = vmatpush1.msra.mxu0 0.0
    %6774 = vmatprep.subr.mxu0 0.0
    %6775 = vmatpush1.msra.mxu0 0.0
    %6776 = vmatprep.subr.mxu0 0.0
    %6777 = vmatpush1.msra.mxu0 0.0
    %6778 = vmatprep.subr.mxu0 0.0
    %6779 = vmatpush1.msra.mxu0 0.0
    %6780 = vmatprep.subr.mxu0 0.0
    %6781 = vmatpush1.msra.mxu0 0.0
    %6782 = vmatprep.subr.mxu0 0.0
    %6783 = vmatpush1.msra.mxu0 0.0
    %6784 = vmatprep.subr.mxu0 0.0
    %6785 = vmatpush1.msra.mxu0 0.0
    %6786 = vmatprep.subr.mxu0 0.0
    %6787 = vmatpush1.msra.mxu0 0.0
    %6788 = vmatprep.mubr.f32.mxu0 0.0
    %6789 = vmatmul.mubr.f32.gmra.mrb[0].mxu0 %v6722
    %v6790 = vpop.f32.mrb[0].mxu0
    %v6791 = vadd.f32 0.0, %v6790
    %v6792 = vpop.f32.mrb[0].mxu0
    %6793 = vdwg.mxu0
    %v6794 = vadd.f32 %v6718, %v6791
    %6795 = vmatprep.subr.mxu0 0.0
    %6796 = vmatpush1.msra.mxu0 %v6561
    %6797 = vmatprep.subr.mxu0 0.0
    %6798 = vmatpush1.msra.mxu0 %v6562
    %6799 = vmatprep.subr.mxu0 0.0
    %6800 = vmatpush1.msra.mxu0 %v6563
    %6801 = vmatprep.subr.mxu0 0.0
    %6802 = vmatpush1.msra.mxu0 %v6564
    %6803 = vmatprep.subr.mxu0 0.0
    %6804 = vmatpush1.msra.mxu0 0.0
    %6805 = vmatprep.subr.mxu0 0.0
    %6806 = vmatpush1.msra.mxu0 0.0
    %6807 = vmatprep.subr.mxu0 0.0
    %6808 = vmatpush1.msra.mxu0 0.0
    %6809 = vmatprep.subr.mxu0 0.0
    %6810 = vmatpush1.msra.mxu0 0.0
    %6811 = vmatprep.subr.mxu0 0.0
    %6812 = vmatpush1.msra.mxu0 0.0
    %6813 = vmatprep.subr.mxu0 0.0
    %6814 = vmatpush1.msra.mxu0 0.0
    %6815 = vmatprep.subr.mxu0 0.0
    %6816 = vmatpush1.msra.mxu0 0.0
    %6817 = vmatprep.subr.mxu0 0.0
    %6818 = vmatpush1.msra.mxu0 0.0
    %6819 = vmatprep.subr.mxu0 0.0
    %6820 = vmatpush1.msra.mxu0 0.0
    %6821 = vmatprep.subr.mxu0 0.0
    %6822 = vmatpush1.msra.mxu0 0.0
    %6823 = vmatprep.subr.mxu0 0.0
    %6824 = vmatpush1.msra.mxu0 0.0
    %6825 = vmatprep.subr.mxu0 0.0
    %6826 = vmatpush1.msra.mxu0 0.0
    %6827 = vmatprep.subr.mxu0 0.0
    %6828 = vmatpush1.msra.mxu0 0.0
    %6829 = vmatprep.subr.mxu0 0.0
    %6830 = vmatpush1.msra.mxu0 0.0
    %6831 = vmatprep.subr.mxu0 0.0
    %6832 = vmatpush1.msra.mxu0 0.0
    %6833 = vmatprep.subr.mxu0 0.0
    %6834 = vmatpush1.msra.mxu0 0.0
    %6835 = vmatprep.subr.mxu0 0.0
    %6836 = vmatpush1.msra.mxu0 0.0
    %6837 = vmatprep.subr.mxu0 0.0
    %6838 = vmatpush1.msra.mxu0 0.0
    %6839 = vmatprep.subr.mxu0 0.0
    %6840 = vmatpush1.msra.mxu0 0.0
    %6841 = vmatprep.subr.mxu0 0.0
    %6842 = vmatpush1.msra.mxu0 0.0
    %6843 = vmatprep.subr.mxu0 0.0
    %6844 = vmatpush1.msra.mxu0 0.0
    %6845 = vmatprep.subr.mxu0 0.0
    %6846 = vmatpush1.msra.mxu0 0.0
    %6847 = vmatprep.subr.mxu0 0.0
    %6848 = vmatpush1.msra.mxu0 0.0
    %6849 = vmatprep.subr.mxu0 0.0
    %6850 = vmatpush1.msra.mxu0 0.0
    %6851 = vmatprep.subr.mxu0 0.0
    %6852 = vmatpush1.msra.mxu0 0.0
    %6853 = vmatprep.subr.mxu0 0.0
    %6854 = vmatpush1.msra.mxu0 0.0
    %6855 = vmatprep.subr.mxu0 0.0
    %6856 = vmatpush1.msra.mxu0 0.0
    %6857 = vmatprep.subr.mxu0 0.0
    %6858 = vmatpush1.msra.mxu0 0.0
    %6859 = vmatprep.mubr.f32.mxu0 0.0
    %6860 = vmatmul.mubr.f32.gmra.mrb[0].mxu0 %v5829
    %v6861 = vpop.f32.mrb[0].mxu0
    %v6862 = vadd.f32 0.0, %v6861
    %v6863 = vpop.f32.mrb[0].mxu0
    %6864 = vdwg.mxu0
    %v6865 = vadd.f32 %v6794, %v6862
    %vm6866 = vcmask 9216
    %6867 = vst.msk [vmem:[#allocation2] sm:$0x3] %vm6866, %v6865
    // Predicated region
    $region90: #{tpu_custom_call.1} parent=1 // pred_check
      _
    $region91: #{tpu_custom_call.1} parent=1 // pred_check_branch
      %6869 = sbr.rel (0) target = $region93
    $region92: #{tpu_custom_call.1} parent=1 // pred_region
      %s6871 = ssub.s32 32, 32
      %6872 = vsyncadd [#allocation3], %s6871
      %s6874 = sshll.u32 [#allocation2], 4
      %s6875 = int_to_ptr.vmem [resolvable:$true] %s6874
      %6877 = dma.vmem_to_hbm [thread:$0]  %s6875, 32, %s22, [#allocation3]
    $region93: #{tpu_custom_call.1} parent=1 // pred_fallthru
      _
    // Predicated region
    $region94: #{tpu_custom_call.1} parent=1 // pred_check
      _
    $region95: #{tpu_custom_call.1} parent=1 // pred_check_branch
      %6879 = sbr.rel (0) target = $region97
    $region96: #{tpu_custom_call.1} parent=1 // pred_region
      %6880 = dma.done [#allocation3], 32
    $region97: #{tpu_custom_call.1} parent=1 // pred_fallthru
      _
    %6881 = vsyncpa [#allocation3], 1

</llo_original>
